<compile_context>
chip_gen: v6e
topology: v6e:2x2x1
jax: 0.10.0
libtpu: 0.0.40
codegen_flags: <defaults>
</compile_context>

<pallas_src>
import jax
import jax.numpy as jnp
from jax import lax
from jax.experimental import pallas as pl
from jax.experimental.pallas import tpu as pltpu

EPS = 1e-5
LANES = 128
MXU_DTYPE = jnp.bfloat16
VMEM_LIMIT = 32 * 1024 * 1024  # safe on all generations (v7x has 64 MiB physical)


# ---------------------------------------------------------------------------
# Kernels
# ---------------------------------------------------------------------------
def _conv_core(a, w_ref, y_ref, s_ref, ss_ref, xpad, cols):
    """3x3 conv (stride 1, pad 1) of one image + partial BN statistics.

    a      : (H, W, CP) f32 activation of the current image
    w_ref  : (9*CP, CP)  bf16 im2col weights
    y_ref  : (1, H, W, CP) f32 raw conv output (pre-BN)
    s_ref  : (1, 1, CP) f32 per-image channel sum
    ss_ref : (1, 1, CP) f32 per-image channel sum of squares
    xpad   : VMEM (H+2, W+2, CP) f32 scratch (spatial halo built in-kernel)
    cols   : VMEM (H*W, 9*CP) bf16 scratch (im2col patch matrix)
    """
    H, W, CP = a.shape

    # Zero-padded halo in VMEM -- no HBM jnp.pad round-trip.
    xpad[...] = jnp.zeros_like(xpad)
    xpad[1:H + 1, 1:W + 1, :] = a
    xp = xpad[...]

    # im2col: 9 shifted windows -> one lane-aligned (H*W, 9*CP) patch matrix.
    for k in range(9):
        dy, dx = divmod(k, 3)
        patch = xp[dy:dy + H, dx:dx + W, :].reshape(H * W, CP)
        cols[:, k * CP:(k + 1) * CP] = patch.astype(MXU_DTYPE)

    # Single MXU matmul: bf16 operands, f32 accumulation.
    acc = jnp.dot(cols[...], w_ref[...], preferred_element_type=jnp.float32)

    y_ref[0] = acc.reshape(H, W, CP)
    s_ref[0] = jnp.sum(acc, axis=0, keepdims=True)
    ss_ref[0] = jnp.sum(acc * acc, axis=0, keepdims=True)


def _conv_stats_kernel(x_ref, w_ref, y_ref, s_ref, ss_ref, xpad, cols):
    # conv1: operates on the raw input.
    _conv_core(x_ref[0], w_ref, y_ref, s_ref, ss_ref, xpad, cols)


def _bnrelu_conv_stats_kernel(x_ref, sc_ref, sh_ref, w_ref,
                              y_ref, s_ref, ss_ref, xpad, cols):
    # conv2: fused bn1 (scale/shift form) + relu applied to the raw conv1
    # output *before* the halo is built, so the halo stays exactly zero.
    a = jnp.maximum(x_ref[0] * sc_ref[...] + sh_ref[...], 0.0)
    _conv_core(a, w_ref, y_ref, s_ref, ss_ref, xpad, cols)


def _bn_add_relu_kernel(y_ref, id_ref, sc_ref, sh_ref, o_ref):
    # out = relu(bn2(conv2) + identity), elementwise, lane-dense.
    o_ref[...] = jnp.maximum(
        y_ref[...] * sc_ref[...] + sh_ref[...] + id_ref[...], 0.0)


# ---------------------------------------------------------------------------
# pallas_call wrappers
# ---------------------------------------------------------------------------
def _conv_stats_call(x, w, scale=None, shift=None):
    N, H, W, CP = x.shape
    K9 = w.shape[0]

    img_spec = pl.BlockSpec((1, H, W, CP), lambda i: (i, 0, 0, 0))
    vec_spec = pl.BlockSpec((1, CP), lambda i: (0, 0))
    w_spec = pl.BlockSpec((K9, CP), lambda i: (0, 0))
    stat_spec = pl.BlockSpec((1, 1, CP), lambda i: (i, 0, 0))

    if scale is None:
        kernel = _conv_stats_kernel
        operands = (x, w)
        in_specs = [img_spec, w_spec]
    else:
        kernel = _bnrelu_conv_stats_kernel
        operands = (x, scale, shift, w)
        in_specs = [img_spec, vec_spec, vec_spec, w_spec]

    flops = 2 * N * H * W * K9 * CP
    bytes_accessed = 2 * N * H * W * CP * 4 + K9 * CP * 2 + 4 * N * CP * 4

    return pl.pallas_call(
        kernel,
        out_shape=(
            jax.ShapeDtypeStruct((N, H, W, CP), jnp.float32),   # raw conv
            jax.ShapeDtypeStruct((N, 1, CP), jnp.float32),      # partial sum
            jax.ShapeDtypeStruct((N, 1, CP), jnp.float32),      # partial sumsq
        ),
        grid=(N,),
        in_specs=in_specs,
        out_specs=(img_spec, stat_spec, stat_spec),
        scratch_shapes=[
            pltpu.VMEM((H + 2, W + 2, CP), jnp.float32),
            pltpu.VMEM((H * W, K9), MXU_DTYPE),
        ],
        compiler_params=pltpu.CompilerParams(
            dimension_semantics=("parallel",),
            vmem_limit_bytes=VMEM_LIMIT),
        cost_estimate=pl.CostEstimate(
            flops=flops, transcendentals=0, bytes_accessed=bytes_accessed),
    )(*operands)


def _bn_add_relu_call(y, identity, scale, shift):
    N, H, W, CP = y.shape
    img_spec = pl.BlockSpec((1, H, W, CP), lambda i: (i, 0, 0, 0))
    vec_spec = pl.BlockSpec((1, CP), lambda i: (0, 0))
    return pl.pallas_call(
        _bn_add_relu_kernel,
        out_shape=jax.ShapeDtypeStruct((N, H, W, CP), jnp.float32),
        grid=(N,),
        in_specs=[img_spec, img_spec, vec_spec, vec_spec],
        out_specs=img_spec,
        input_output_aliases={1: 0},   # write the result over the residual buf
        compiler_params=pltpu.CompilerParams(
            dimension_semantics=("parallel",),
            vmem_limit_bytes=VMEM_LIMIT),
    )(y, identity, scale, shift)


# ---------------------------------------------------------------------------
# Parameter prep, BN finalize, forward
# ---------------------------------------------------------------------------
def _prep_weight(w_oihw, CP):
    cout, cin = w_oihw.shape[0], w_oihw.shape[1]
    w = jnp.transpose(w_oihw, (2, 3, 1, 0))                         # (3,3,Ci,Co)
    w = jnp.pad(w, ((0, 0), (0, 0), (0, CP - cin), (0, CP - cout)))
    return w.reshape(9 * CP, CP).astype(MXU_DTYPE)


def _pad_vec(v, CP, fill=0.0):
    return jnp.pad(v, (0, CP - v.shape[0]), constant_values=fill).reshape(1, CP)


def _bn_scale_shift(s, ss, gamma, beta, count):
    mean = jnp.sum(s, axis=0) / count            # (1, CP)
    ex2 = jnp.sum(ss, axis=0) / count
    var = jnp.maximum(ex2 - mean * mean, 0.0)    # biased (training-mode) var
    scale = gamma * lax.rsqrt(var + EPS)
    shift = beta - mean * scale
    return scale, shift


def _basic_block_forward(x_nchw, params):
    w1, g1, b1, w2, g2, b2 = params
    N, C, H, W = x_nchw.shape
    CP = -(-C // LANES) * LANES                  # lane-dense channel padding

    # NCHW -> NHWC + channel pad.  TODO(synk): if the surrounding model is
    # already NHWC, these transposes/pads disappear entirely.
    x = jnp.transpose(x_nchw, (0, 2, 3, 1)).astype(jnp.float32)
    x_p = jnp.pad(x, ((0, 0), (0, 0), (0, 0), (0, CP - C)))

    w1_k, w2_k = _prep_weight(w1, CP), _prep_weight(w2, CP)
    g1_p, b1_p = _pad_vec(g1, CP, 1.0), _pad_vec(b1, CP)
    g2_p, b2_p = _pad_vec(g2, CP, 1.0), _pad_vec(b2, CP)
    count = N * H * W

    # Pass 1: conv1 + per-image BN1 partial stats.
    y1, s1, ss1 = _conv_stats_call(x_p, w1_k)
    scale1, shift1 = _bn_scale_shift(s1, ss1, g1_p, b1_p, count)

    # Pass 2: fused bn1+relu, conv2 + per-image BN2 partial stats.
    y2, s2, ss2 = _conv_stats_call(y1, w2_k, scale1, shift1)
    scale2, shift2 = _bn_scale_shift(s2, ss2, g2_p, b2_p, count)

    # Pass 3: bn2 + residual add + relu.
    out_p = _bn_add_relu_call(y2, x_p, scale2, shift2)

    return jnp.transpose(out_p[..., :C], (0, 3, 1, 2))


basic_block_forward = jax.jit(_basic_block_forward)


# ---------------------------------------------------------------------------
# Params + pure-JAX reference + test
# ---------------------------------------------------------------------------
def make_params(key, inplanes, planes):
    k1, k2, k3, k4, k5, k6 = jax.random.split(key, 6)
    w1 = 0.1 * jax.random.normal(k1, (planes, inplanes, 3, 3), jnp.float32)
    w2 = 0.1 * jax.random.normal(k2, (planes, planes, 3, 3), jnp.float32)
    g1 = 1.0 + 0.1 * jax.random.normal(k3, (planes,), jnp.float32)
    b1 = 0.05 * jax.random.normal(k4, (planes,), jnp.float32)
    g2 = 1.0 + 0.1 * jax.random.normal(k5, (planes,), jnp.float32)
    b2 = 0.05 * jax.random.normal(k6, (planes,), jnp.float32)
    return (w1, g1, b1, w2, g2, b2)


def reference_forward(x_nchw, params):
    """Pure-JAX f32 reference matching the PyTorch BasicBlock (training BN)."""
    w1, g1, b1, w2, g2, b2 = params
    x = jnp.transpose(x_nchw, (0, 2, 3, 1)).astype(jnp.float32)

    def conv(a, w_oihw):
        w_hwio = jnp.transpose(w_oihw, (2, 3, 1, 0))
        return lax.conv_general_dilated(
            a, w_hwio, window_strides=(1, 1), padding="SAME",
            dimension_numbers=("NHWC", "HWIO", "NHWC"))

    def bn(a, g, b):
        m = jnp.mean(a, axis=(0, 1, 2), keepdims=True)
        v = jnp.mean((a - m) ** 2, axis=(0, 1, 2), keepdims=True)
        return (a - m) * lax.rsqrt(v + EPS) * g.reshape(1, 1, 1, -1) \
            + b.reshape(1, 1, 1, -1)

    y = jax.nn.relu(bn(conv(x, w1), g1, b1))
    y = jax.nn.relu(bn(conv(y, w2), g2, b2) + x)
    return jnp.transpose(y, (0, 3, 1, 2))


if __name__ == "__main__":
    key = jax.random.PRNGKey(0)
    k_x, k_p = jax.random.split(key)

    N, C, H, W = 2, 4, 16, 16            # inplanes == planes (downsample=None)
    x = jax.random.normal(k_x, (N, C, H, W), jnp.float32)
    params = make_params(k_p, inplanes=C, planes=C)

    out = jax.block_until_ready(basic_block_forward(x, params))
    ref = jax.block_until_ready(reference_forward(x, params))

    assert out.shape == (N, C, H, W)
    err = float(jnp.max(jnp.abs(out - ref)))
    # bf16 MXU operands (f32 accumulation) vs. pure-f32 reference -> ~1e-2.
    assert jnp.allclose(out, ref, atol=5e-2, rtol=5e-2), f"max abs err {err}"
    print("KERNEL_OK")
</pallas_src>

<mosaic_0001>
module attributes {stable_mosaic.version = 11 : i64} {
  func.func @_conv_stats_kernel(%arg0: i32, %arg1: memref<1x16x16x128xf32, #tpu.memory_space<vmem>>, %arg2: memref<1152x128xbf16, #tpu.memory_space<vmem>>, %arg3: memref<1x16x16x128xf32, #tpu.memory_space<vmem>>, %arg4: memref<1x1x128xf32, #tpu.memory_space<vmem>>, %arg5: memref<1x1x128xf32, #tpu.memory_space<vmem>>, %arg6: memref<18x18x128xf32, #tpu.memory_space<vmem>>, %arg7: memref<256x1152xbf16, #tpu.memory_space<vmem>>) attributes {dimension_semantics = [#tpu.dimension_semantics<parallel>], iteration_bounds = array<i64: 2>, scalar_prefetch = 0 : i64, scratch_operands = 2 : i64, tpu.core_type = #tpu.core_type<tc>, window_params = [{transform_indices = @transform_0, window_bounds = array<i64: 1, 16, 16, 128>}, {pipeline_mode = #tpu.pipeline_mode<synchronous>, transform_indices = @transform_1, window_bounds = array<i64: 1152, 128>}, {transform_indices = @transform_2, window_bounds = array<i64: 1, 16, 16, 128>}, {transform_indices = @transform_3, window_bounds = array<i64: 1, 1, 128>}, {transform_indices = @transform_4, window_bounds = array<i64: 1, 1, 128>}]} {
    %c0 = arith.constant 0 : index
    %c0_0 = arith.constant 0 : index
    %c0_1 = arith.constant 0 : index
    %c0_2 = arith.constant 0 : index
    %0 = vector.load %arg1[%c0, %c0_0, %c0_1, %c0_2] : memref<1x16x16x128xf32, #tpu.memory_space<vmem>>, vector<1x16x16x128xf32>
    %1 = vector.shape_cast %0 : vector<1x16x16x128xf32> to vector<16x16x128xf32>
    %cst = arith.constant 0.000000e+00 : f32
    %2 = vector.broadcast %cst : f32 to vector<18x18x128xf32>
    %c0_3 = arith.constant 0 : index
    %c0_4 = arith.constant 0 : index
    %c0_5 = arith.constant 0 : index
    %3 = vector.load %arg6[%c0_3, %c0_4, %c0_5] : memref<18x18x128xf32, #tpu.memory_space<vmem>>, vector<18x18x128xf32>
    tpu.vector_store %arg6[%c0_3, %c0_4, %c0_5], %2 {strides = array<i32>} : memref<18x18x128xf32, #tpu.memory_space<vmem>>, vector<18x18x128xf32>,
    %c1 = arith.constant 1 : index
    %c1_6 = arith.constant 1 : index
    %c0_7 = arith.constant 0 : index
    %4 = vector.load %arg6[%c1, %c1_6, %c0_7] : memref<18x18x128xf32, #tpu.memory_space<vmem>>, vector<16x16x128xf32>
    tpu.vector_store %arg6[%c1, %c1_6, %c0_7], %1 {strides = array<i32>} : memref<18x18x128xf32, #tpu.memory_space<vmem>>, vector<16x16x128xf32>,
    %c0_8 = arith.constant 0 : index
    %c0_9 = arith.constant 0 : index
    %c0_10 = arith.constant 0 : index
    %5 = vector.load %arg6[%c0_8, %c0_9, %c0_10] : memref<18x18x128xf32, #tpu.memory_space<vmem>>, vector<18x18x128xf32>
    %6 = vector.extract_strided_slice %5 {offsets = [0, 0, 0], sizes = [16, 16, 128], strides = [1, 1, 1]} : vector<18x18x128xf32> to vector<16x16x128xf32>
    %7 = vector.shape_cast %6 : vector<16x16x128xf32> to vector<256x128xf32>
    %8 = arith.truncf %7 : vector<256x128xf32> to vector<256x128xbf16>
    %c0_11 = arith.constant 0 : index
    %c0_12 = arith.constant 0 : index
    %9 = vector.load %arg7[%c0_11, %c0_12] : memref<256x1152xbf16, #tpu.memory_space<vmem>>, vector<256x128xbf16>
    tpu.vector_store %arg7[%c0_11, %c0_12], %8 {strides = array<i32>} : memref<256x1152xbf16, #tpu.memory_space<vmem>>, vector<256x128xbf16>,
    %10 = vector.extract_strided_slice %5 {offsets = [0, 1, 0], sizes = [16, 16, 128], strides = [1, 1, 1]} : vector<18x18x128xf32> to vector<16x16x128xf32>
    %11 = vector.shape_cast %10 : vector<16x16x128xf32> to vector<256x128xf32>
    %12 = arith.truncf %11 : vector<256x128xf32> to vector<256x128xbf16>
    %c0_13 = arith.constant 0 : index
    %c128 = arith.constant 128 : index
    %13 = vector.load %arg7[%c0_13, %c128] : memref<256x1152xbf16, #tpu.memory_space<vmem>>, vector<256x128xbf16>
    tpu.vector_store %arg7[%c0_13, %c128], %12 {strides = array<i32>} : memref<256x1152xbf16, #tpu.memory_space<vmem>>, vector<256x128xbf16>,
    %14 = vector.extract_strided_slice %5 {offsets = [0, 2, 0], sizes = [16, 16, 128], strides = [1, 1, 1]} : vector<18x18x128xf32> to vector<16x16x128xf32>
    %15 = vector.shape_cast %14 : vector<16x16x128xf32> to vector<256x128xf32>
    %16 = arith.truncf %15 : vector<256x128xf32> to vector<256x128xbf16>
    %c0_14 = arith.constant 0 : index
    %c256 = arith.constant 256 : index
    %17 = vector.load %arg7[%c0_14, %c256] : memref<256x1152xbf16, #tpu.memory_space<vmem>>, vector<256x128xbf16>
    tpu.vector_store %arg7[%c0_14, %c256], %16 {strides = array<i32>} : memref<256x1152xbf16, #tpu.memory_space<vmem>>, vector<256x128xbf16>,
    %18 = vector.extract_strided_slice %5 {offsets = [1, 0, 0], sizes = [16, 16, 128], strides = [1, 1, 1]} : vector<18x18x128xf32> to vector<16x16x128xf32>
    %19 = vector.shape_cast %18 : vector<16x16x128xf32> to vector<256x128xf32>
    %20 = arith.truncf %19 : vector<256x128xf32> to vector<256x128xbf16>
    %c0_15 = arith.constant 0 : index
    %c384 = arith.constant 384 : index
    %21 = vector.load %arg7[%c0_15, %c384] : memref<256x1152xbf16, #tpu.memory_space<vmem>>, vector<256x128xbf16>
    tpu.vector_store %arg7[%c0_15, %c384], %20 {strides = array<i32>} : memref<256x1152xbf16, #tpu.memory_space<vmem>>, vector<256x128xbf16>,
    %22 = vector.extract_strided_slice %5 {offsets = [1, 1, 0], sizes = [16, 16, 128], strides = [1, 1, 1]} : vector<18x18x128xf32> to vector<16x16x128xf32>
    %23 = vector.shape_cast %22 : vector<16x16x128xf32> to vector<256x128xf32>
    %24 = arith.truncf %23 : vector<256x128xf32> to vector<256x128xbf16>
    %c0_16 = arith.constant 0 : index
    %c512 = arith.constant 512 : index
    %25 = vector.load %arg7[%c0_16, %c512] : memref<256x1152xbf16, #tpu.memory_space<vmem>>, vector<256x128xbf16>
    tpu.vector_store %arg7[%c0_16, %c512], %24 {strides = array<i32>} : memref<256x1152xbf16, #tpu.memory_space<vmem>>, vector<256x128xbf16>,
    %26 = vector.extract_strided_slice %5 {offsets = [1, 2, 0], sizes = [16, 16, 128], strides = [1, 1, 1]} : vector<18x18x128xf32> to vector<16x16x128xf32>
    %27 = vector.shape_cast %26 : vector<16x16x128xf32> to vector<256x128xf32>
    %28 = arith.truncf %27 : vector<256x128xf32> to vector<256x128xbf16>
    %c0_17 = arith.constant 0 : index
    %c640 = arith.constant 640 : index
    %29 = vector.load %arg7[%c0_17, %c640] : memref<256x1152xbf16, #tpu.memory_space<vmem>>, vector<256x128xbf16>
    tpu.vector_store %arg7[%c0_17, %c640], %28 {strides = array<i32>} : memref<256x1152xbf16, #tpu.memory_space<vmem>>, vector<256x128xbf16>,
    %30 = vector.extract_strided_slice %5 {offsets = [2, 0, 0], sizes = [16, 16, 128], strides = [1, 1, 1]} : vector<18x18x128xf32> to vector<16x16x128xf32>
    %31 = vector.shape_cast %30 : vector<16x16x128xf32> to vector<256x128xf32>
    %32 = arith.truncf %31 : vector<256x128xf32> to vector<256x128xbf16>
    %c0_18 = arith.constant 0 : index
    %c768 = arith.constant 768 : index
    %33 = vector.load %arg7[%c0_18, %c768] : memref<256x1152xbf16, #tpu.memory_space<vmem>>, vector<256x128xbf16>
    tpu.vector_store %arg7[%c0_18, %c768], %32 {strides = array<i32>} : memref<256x1152xbf16, #tpu.memory_space<vmem>>, vector<256x128xbf16>,
    %34 = vector.extract_strided_slice %5 {offsets = [2, 1, 0], sizes = [16, 16, 128], strides = [1, 1, 1]} : vector<18x18x128xf32> to vector<16x16x128xf32>
    %35 = vector.shape_cast %34 : vector<16x16x128xf32> to vector<256x128xf32>
    %36 = arith.truncf %35 : vector<256x128xf32> to vector<256x128xbf16>
    %c0_19 = arith.constant 0 : index
    %c896 = arith.constant 896 : index
    %37 = vector.load %arg7[%c0_19, %c896] : memref<256x1152xbf16, #tpu.memory_space<vmem>>, vector<256x128xbf16>
    tpu.vector_store %arg7[%c0_19, %c896], %36 {strides = array<i32>} : memref<256x1152xbf16, #tpu.memory_space<vmem>>, vector<256x128xbf16>,
    %38 = vector.extract_strided_slice %5 {offsets = [2, 2, 0], sizes = [16, 16, 128], strides = [1, 1, 1]} : vector<18x18x128xf32> to vector<16x16x128xf32>
    %39 = vector.shape_cast %38 : vector<16x16x128xf32> to vector<256x128xf32>
    %40 = arith.truncf %39 : vector<256x128xf32> to vector<256x128xbf16>
    %c0_20 = arith.constant 0 : index
    %c1024 = arith.constant 1024 : index
    %41 = vector.load %arg7[%c0_20, %c1024] : memref<256x1152xbf16, #tpu.memory_space<vmem>>, vector<256x128xbf16>
    tpu.vector_store %arg7[%c0_20, %c1024], %40 {strides = array<i32>} : memref<256x1152xbf16, #tpu.memory_space<vmem>>, vector<256x128xbf16>,
    %c0_21 = arith.constant 0 : index
    %c0_22 = arith.constant 0 : index
    %42 = vector.load %arg7[%c0_21, %c0_22] : memref<256x1152xbf16, #tpu.memory_space<vmem>>, vector<256x1152xbf16>
    %c0_23 = arith.constant 0 : index
    %c0_24 = arith.constant 0 : index
    %43 = vector.load %arg2[%c0_23, %c0_24] : memref<1152x128xbf16, #tpu.memory_space<vmem>>, vector<1152x128xbf16>
    %cst_25 = arith.constant dense<0.000000e+00> : vector<256x128xf32>
    %44 = tpu.matmul %42, %43, %cst_25 {dimension_numbers = #tpu.dot_dimension_numbers<[1], [0], [0], [1], [0, 0, 1, 1], [], []>} : vector<256x1152xbf16>, vector<1152x128xbf16>, vector<256x128xf32> -> vector<256x128xf32>
    %45 = vector.shape_cast %44 : vector<256x128xf32> to vector<16x16x128xf32>
    %c0_26 = arith.constant 0 : index
    %c0_27 = arith.constant 0 : index
    %c0_28 = arith.constant 0 : index
    %c0_29 = arith.constant 0 : index
    %46 = vector.load %arg3[%c0_26, %c0_27, %c0_28, %c0_29] : memref<1x16x16x128xf32, #tpu.memory_space<vmem>>, vector<1x16x16x128xf32>
    %47 = vector.shape_cast %46 : vector<1x16x16x128xf32> to vector<16x16x128xf32>
    %48 = vector.shape_cast %45 : vector<16x16x128xf32> to vector<1x16x16x128xf32>
    tpu.vector_store %arg3[%c0_26, %c0_27, %c0_28, %c0_29], %48 {strides = array<i32>} : memref<1x16x16x128xf32, #tpu.memory_space<vmem>>, vector<1x16x16x128xf32>,
    %cst_30 = arith.constant dense<0.000000e+00> : vector<128xf32>
    %49 = vector.multi_reduction <add>, %44, %cst_30 [0] : vector<256x128xf32> to vector<128xf32>
    %50 = vector.shape_cast %49 : vector<128xf32> to vector<1x128xf32>
    %c0_31 = arith.constant 0 : index
    %c0_32 = arith.constant 0 : index
    %c0_33 = arith.constant 0 : index
    %51 = vector.load %arg4[%c0_31, %c0_32, %c0_33] : memref<1x1x128xf32, #tpu.memory_space<vmem>>, vector<1x1x128xf32>
    %52 = vector.shape_cast %51 : vector<1x1x128xf32> to vector<1x128xf32>
    %53 = vector.shape_cast %50 : vector<1x128xf32> to vector<1x1x128xf32>
    tpu.vector_store %arg4[%c0_31, %c0_32, %c0_33], %53 {strides = array<i32>} : memref<1x1x128xf32, #tpu.memory_space<vmem>>, vector<1x1x128xf32>,
    %54 = arith.mulf %44, %44 : vector<256x128xf32>
    %cst_34 = arith.constant dense<0.000000e+00> : vector<128xf32>
    %55 = vector.multi_reduction <add>, %54, %cst_34 [0] : vector<256x128xf32> to vector<128xf32>
    %56 = vector.shape_cast %55 : vector<128xf32> to vector<1x128xf32>
    %c0_35 = arith.constant 0 : index
    %c0_36 = arith.constant 0 : index
    %c0_37 = arith.constant 0 : index
    %57 = vector.load %arg5[%c0_35, %c0_36, %c0_37] : memref<1x1x128xf32, #tpu.memory_space<vmem>>, vector<1x1x128xf32>
    %58 = vector.shape_cast %57 : vector<1x1x128xf32> to vector<1x128xf32>
    %59 = vector.shape_cast %56 : vector<1x128xf32> to vector<1x1x128xf32>
    tpu.vector_store %arg5[%c0_35, %c0_36, %c0_37], %59 {strides = array<i32>} : memref<1x1x128xf32, #tpu.memory_space<vmem>>, vector<1x1x128xf32>,
    return
  }
  func.func @transform_0(%arg0: i32) -> (i32, i32, i32, i32) {
    %c0_i32 = arith.constant 0 : i32
    %c0_i32_0 = arith.constant 0 : i32
    %c0_i32_1 = arith.constant 0 : i32
    %c0_i32_2 = arith.constant 0 : i32
    return %arg0, %c0_i32, %c0_i32_0, %c0_i32_1 : i32, i32, i32, i32
  }
  func.func @transform_1(%arg0: i32) -> (i32, i32) {
    %c0_i32 = arith.constant 0 : i32
    %c0_i32_0 = arith.constant 0 : i32
    %c0_i32_1 = arith.constant 0 : i32
    return %c0_i32, %c0_i32_0 : i32, i32
  }
  func.func @transform_2(%arg0: i32) -> (i32, i32, i32, i32) {
    %c0_i32 = arith.constant 0 : i32
    %c0_i32_0 = arith.constant 0 : i32
    %c0_i32_1 = arith.constant 0 : i32
    %c0_i32_2 = arith.constant 0 : i32
    return %arg0, %c0_i32, %c0_i32_0, %c0_i32_1 : i32, i32, i32, i32
  }
  func.func @transform_3(%arg0: i32) -> (i32, i32, i32) {
    %c0_i32 = arith.constant 0 : i32
    %c0_i32_0 = arith.constant 0 : i32
    %c0_i32_1 = arith.constant 0 : i32
    return %arg0, %c0_i32, %c0_i32_0 : i32, i32, i32
  }
  func.func @transform_4(%arg0: i32) -> (i32, i32, i32) {
    %c0_i32 = arith.constant 0 : i32
    %c0_i32_0 = arith.constant 0 : i32
    %c0_i32_1 = arith.constant 0 : i32
    return %arg0, %c0_i32, %c0_i32_0 : i32, i32, i32
  }
}

module attributes {stable_mosaic.version = 11 : i64} {
  func.func @_bnrelu_conv_stats_kernel(%arg0: i32, %arg1: memref<1x16x16x128xf32, #tpu.memory_space<vmem>>, %arg2: memref<1x128xf32, #tpu.memory_space<vmem>>, %arg3: memref<1x128xf32, #tpu.memory_space<vmem>>, %arg4: memref<1152x128xbf16, #tpu.memory_space<vmem>>, %arg5: memref<1x16x16x128xf32, #tpu.memory_space<vmem>>, %arg6: memref<1x1x128xf32, #tpu.memory_space<vmem>>, %arg7: memref<1x1x128xf32, #tpu.memory_space<vmem>>, %arg8: memref<18x18x128xf32, #tpu.memory_space<vmem>>, %arg9: memref<256x1152xbf16, #tpu.memory_space<vmem>>) attributes {dimension_semantics = [#tpu.dimension_semantics<parallel>], iteration_bounds = array<i64: 2>, scalar_prefetch = 0 : i64, scratch_operands = 2 : i64, tpu.core_type = #tpu.core_type<tc>, window_params = [{transform_indices = @transform_0, window_bounds = array<i64: 1, 16, 16, 128>}, {pipeline_mode = #tpu.pipeline_mode<synchronous>, transform_indices = @transform_1, window_bounds = array<i64: 1, 128>}, {pipeline_mode = #tpu.pipeline_mode<synchronous>, transform_indices = @transform_2, window_bounds = array<i64: 1, 128>}, {pipeline_mode = #tpu.pipeline_mode<synchronous>, transform_indices = @transform_3, window_bounds = array<i64: 1152, 128>}, {transform_indices = @transform_4, window_bounds = array<i64: 1, 16, 16, 128>}, {transform_indices = @transform_5, window_bounds = array<i64: 1, 1, 128>}, {transform_indices = @transform_6, window_bounds = array<i64: 1, 1, 128>}]} {
    %c0 = arith.constant 0 : index
    %c0_0 = arith.constant 0 : index
    %c0_1 = arith.constant 0 : index
    %c0_2 = arith.constant 0 : index
    %0 = vector.load %arg1[%c0, %c0_0, %c0_1, %c0_2] : memref<1x16x16x128xf32, #tpu.memory_space<vmem>>, vector<1x16x16x128xf32>
    %1 = vector.shape_cast %0 : vector<1x16x16x128xf32> to vector<16x16x128xf32>
    %c0_3 = arith.constant 0 : index
    %c0_4 = arith.constant 0 : index
    %2 = vector.load %arg2[%c0_3, %c0_4] : memref<1x128xf32, #tpu.memory_space<vmem>>, vector<1x128xf32>
    %3 = vector.shape_cast %2 : vector<1x128xf32> to vector<1x1x128xf32>
    %4 = vector.broadcast %3 : vector<1x1x128xf32> to vector<16x16x128xf32>
    %5 = arith.mulf %1, %4 : vector<16x16x128xf32>
    %c0_5 = arith.constant 0 : index
    %c0_6 = arith.constant 0 : index
    %6 = vector.load %arg3[%c0_5, %c0_6] : memref<1x128xf32, #tpu.memory_space<vmem>>, vector<1x128xf32>
    %7 = vector.shape_cast %6 : vector<1x128xf32> to vector<1x1x128xf32>
    %8 = vector.broadcast %7 : vector<1x1x128xf32> to vector<16x16x128xf32>
    %9 = arith.addf %5, %8 : vector<16x16x128xf32>
    %cst = arith.constant 0.000000e+00 : f32
    %10 = vector.broadcast %cst : f32 to vector<16x16x128xf32>
    %11 = arith.maximumf %9, %10 : vector<16x16x128xf32>
    %cst_7 = arith.constant 0.000000e+00 : f32
    %12 = vector.broadcast %cst_7 : f32 to vector<18x18x128xf32>
    %c0_8 = arith.constant 0 : index
    %c0_9 = arith.constant 0 : index
    %c0_10 = arith.constant 0 : index
    %13 = vector.load %arg8[%c0_8, %c0_9, %c0_10] : memref<18x18x128xf32, #tpu.memory_space<vmem>>, vector<18x18x128xf32>
    tpu.vector_store %arg8[%c0_8, %c0_9, %c0_10], %12 {strides = array<i32>} : memref<18x18x128xf32, #tpu.memory_space<vmem>>, vector<18x18x128xf32>,
    %c1 = arith.constant 1 : index
    %c1_11 = arith.constant 1 : index
    %c0_12 = arith.constant 0 : index
    %14 = vector.load %arg8[%c1, %c1_11, %c0_12] : memref<18x18x128xf32, #tpu.memory_space<vmem>>, vector<16x16x128xf32>
    tpu.vector_store %arg8[%c1, %c1_11, %c0_12], %11 {strides = array<i32>} : memref<18x18x128xf32, #tpu.memory_space<vmem>>, vector<16x16x128xf32>,
    %c0_13 = arith.constant 0 : index
    %c0_14 = arith.constant 0 : index
    %c0_15 = arith.constant 0 : index
    %15 = vector.load %arg8[%c0_13, %c0_14, %c0_15] : memref<18x18x128xf32, #tpu.memory_space<vmem>>, vector<18x18x128xf32>
    %16 = vector.extract_strided_slice %15 {offsets = [0, 0, 0], sizes = [16, 16, 128], strides = [1, 1, 1]} : vector<18x18x128xf32> to vector<16x16x128xf32>
    %17 = vector.shape_cast %16 : vector<16x16x128xf32> to vector<256x128xf32>
    %18 = arith.truncf %17 : vector<256x128xf32> to vector<256x128xbf16>
    %c0_16 = arith.constant 0 : index
    %c0_17 = arith.constant 0 : index
    %19 = vector.load %arg9[%c0_16, %c0_17] : memref<256x1152xbf16, #tpu.memory_space<vmem>>, vector<256x128xbf16>
    tpu.vector_store %arg9[%c0_16, %c0_17], %18 {strides = array<i32>} : memref<256x1152xbf16, #tpu.memory_space<vmem>>, vector<256x128xbf16>,
    %20 = vector.extract_strided_slice %15 {offsets = [0, 1, 0], sizes = [16, 16, 128], strides = [1, 1, 1]} : vector<18x18x128xf32> to vector<16x16x128xf32>
    %21 = vector.shape_cast %20 : vector<16x16x128xf32> to vector<256x128xf32>
    %22 = arith.truncf %21 : vector<256x128xf32> to vector<256x128xbf16>
    %c0_18 = arith.constant 0 : index
    %c128 = arith.constant 128 : index
    %23 = vector.load %arg9[%c0_18, %c128] : memref<256x1152xbf16, #tpu.memory_space<vmem>>, vector<256x128xbf16>
    tpu.vector_store %arg9[%c0_18, %c128], %22 {strides = array<i32>} : memref<256x1152xbf16, #tpu.memory_space<vmem>>, vector<256x128xbf16>,
    %24 = vector.extract_strided_slice %15 {offsets = [0, 2, 0], sizes = [16, 16, 128], strides = [1, 1, 1]} : vector<18x18x128xf32> to vector<16x16x128xf32>
    %25 = vector.shape_cast %24 : vector<16x16x128xf32> to vector<256x128xf32>
    %26 = arith.truncf %25 : vector<256x128xf32> to vector<256x128xbf16>
    %c0_19 = arith.constant 0 : index
    %c256 = arith.constant 256 : index
    %27 = vector.load %arg9[%c0_19, %c256] : memref<256x1152xbf16, #tpu.memory_space<vmem>>, vector<256x128xbf16>
    tpu.vector_store %arg9[%c0_19, %c256], %26 {strides = array<i32>} : memref<256x1152xbf16, #tpu.memory_space<vmem>>, vector<256x128xbf16>,
    %28 = vector.extract_strided_slice %15 {offsets = [1, 0, 0], sizes = [16, 16, 128], strides = [1, 1, 1]} : vector<18x18x128xf32> to vector<16x16x128xf32>
    %29 = vector.shape_cast %28 : vector<16x16x128xf32> to vector<256x128xf32>
    %30 = arith.truncf %29 : vector<256x128xf32> to vector<256x128xbf16>
    %c0_20 = arith.constant 0 : index
    %c384 = arith.constant 384 : index
    %31 = vector.load %arg9[%c0_20, %c384] : memref<256x1152xbf16, #tpu.memory_space<vmem>>, vector<256x128xbf16>
    tpu.vector_store %arg9[%c0_20, %c384], %30 {strides = array<i32>} : memref<256x1152xbf16, #tpu.memory_space<vmem>>, vector<256x128xbf16>,
    %32 = vector.extract_strided_slice %15 {offsets = [1, 1, 0], sizes = [16, 16, 128], strides = [1, 1, 1]} : vector<18x18x128xf32> to vector<16x16x128xf32>
    %33 = vector.shape_cast %32 : vector<16x16x128xf32> to vector<256x128xf32>
    %34 = arith.truncf %33 : vector<256x128xf32> to vector<256x128xbf16>
    %c0_21 = arith.constant 0 : index
    %c512 = arith.constant 512 : index
    %35 = vector.load %arg9[%c0_21, %c512] : memref<256x1152xbf16, #tpu.memory_space<vmem>>, vector<256x128xbf16>
    tpu.vector_store %arg9[%c0_21, %c512], %34 {strides = array<i32>} : memref<256x1152xbf16, #tpu.memory_space<vmem>>, vector<256x128xbf16>,
    %36 = vector.extract_strided_slice %15 {offsets = [1, 2, 0], sizes = [16, 16, 128], strides = [1, 1, 1]} : vector<18x18x128xf32> to vector<16x16x128xf32>
    %37 = vector.shape_cast %36 : vector<16x16x128xf32> to vector<256x128xf32>
    %38 = arith.truncf %37 : vector<256x128xf32> to vector<256x128xbf16>
    %c0_22 = arith.constant 0 : index
    %c640 = arith.constant 640 : index
    %39 = vector.load %arg9[%c0_22, %c640] : memref<256x1152xbf16, #tpu.memory_space<vmem>>, vector<256x128xbf16>
    tpu.vector_store %arg9[%c0_22, %c640], %38 {strides = array<i32>} : memref<256x1152xbf16, #tpu.memory_space<vmem>>, vector<256x128xbf16>,
    %40 = vector.extract_strided_slice %15 {offsets = [2, 0, 0], sizes = [16, 16, 128], strides = [1, 1, 1]} : vector<18x18x128xf32> to vector<16x16x128xf32>
    %41 = vector.shape_cast %40 : vector<16x16x128xf32> to vector<256x128xf32>
    %42 = arith.truncf %41 : vector<256x128xf32> to vector<256x128xbf16>
    %c0_23 = arith.constant 0 : index
    %c768 = arith.constant 768 : index
    %43 = vector.load %arg9[%c0_23, %c768] : memref<256x1152xbf16, #tpu.memory_space<vmem>>, vector<256x128xbf16>
    tpu.vector_store %arg9[%c0_23, %c768], %42 {strides = array<i32>} : memref<256x1152xbf16, #tpu.memory_space<vmem>>, vector<256x128xbf16>,
    %44 = vector.extract_strided_slice %15 {offsets = [2, 1, 0], sizes = [16, 16, 128], strides = [1, 1, 1]} : vector<18x18x128xf32> to vector<16x16x128xf32>
    %45 = vector.shape_cast %44 : vector<16x16x128xf32> to vector<256x128xf32>
    %46 = arith.truncf %45 : vector<256x128xf32> to vector<256x128xbf16>
    %c0_24 = arith.constant 0 : index
    %c896 = arith.constant 896 : index
    %47 = vector.load %arg9[%c0_24, %c896] : memref<256x1152xbf16, #tpu.memory_space<vmem>>, vector<256x128xbf16>
    tpu.vector_store %arg9[%c0_24, %c896], %46 {strides = array<i32>} : memref<256x1152xbf16, #tpu.memory_space<vmem>>, vector<256x128xbf16>,
    %48 = vector.extract_strided_slice %15 {offsets = [2, 2, 0], sizes = [16, 16, 128], strides = [1, 1, 1]} : vector<18x18x128xf32> to vector<16x16x128xf32>
    %49 = vector.shape_cast %48 : vector<16x16x128xf32> to vector<256x128xf32>
    %50 = arith.truncf %49 : vector<256x128xf32> to vector<256x128xbf16>
    %c0_25 = arith.constant 0 : index
    %c1024 = arith.constant 1024 : index
    %51 = vector.load %arg9[%c0_25, %c1024] : memref<256x1152xbf16, #tpu.memory_space<vmem>>, vector<256x128xbf16>
    tpu.vector_store %arg9[%c0_25, %c1024], %50 {strides = array<i32>} : memref<256x1152xbf16, #tpu.memory_space<vmem>>, vector<256x128xbf16>,
    %c0_26 = arith.constant 0 : index
    %c0_27 = arith.constant 0 : index
    %52 = vector.load %arg9[%c0_26, %c0_27] : memref<256x1152xbf16, #tpu.memory_space<vmem>>, vector<256x1152xbf16>
    %c0_28 = arith.constant 0 : index
    %c0_29 = arith.constant 0 : index
    %53 = vector.load %arg4[%c0_28, %c0_29] : memref<1152x128xbf16, #tpu.memory_space<vmem>>, vector<1152x128xbf16>
    %cst_30 = arith.constant dense<0.000000e+00> : vector<256x128xf32>
    %54 = tpu.matmul %52, %53, %cst_30 {dimension_numbers = #tpu.dot_dimension_numbers<[1], [0], [0], [1], [0, 0, 1, 1], [], []>} : vector<256x1152xbf16>, vector<1152x128xbf16>, vector<256x128xf32> -> vector<256x128xf32>
    %55 = vector.shape_cast %54 : vector<256x128xf32> to vector<16x16x128xf32>
    %c0_31 = arith.constant 0 : index
    %c0_32 = arith.constant 0 : index
    %c0_33 = arith.constant 0 : index
    %c0_34 = arith.constant 0 : index
    %56 = vector.load %arg5[%c0_31, %c0_32, %c0_33, %c0_34] : memref<1x16x16x128xf32, #tpu.memory_space<vmem>>, vector<1x16x16x128xf32>
    %57 = vector.shape_cast %56 : vector<1x16x16x128xf32> to vector<16x16x128xf32>
    %58 = vector.shape_cast %55 : vector<16x16x128xf32> to vector<1x16x16x128xf32>
    tpu.vector_store %arg5[%c0_31, %c0_32, %c0_33, %c0_34], %58 {strides = array<i32>} : memref<1x16x16x128xf32, #tpu.memory_space<vmem>>, vector<1x16x16x128xf32>,
    %cst_35 = arith.constant dense<0.000000e+00> : vector<128xf32>
    %59 = vector.multi_reduction <add>, %54, %cst_35 [0] : vector<256x128xf32> to vector<128xf32>
    %60 = vector.shape_cast %59 : vector<128xf32> to vector<1x128xf32>
    %c0_36 = arith.constant 0 : index
    %c0_37 = arith.constant 0 : index
    %c0_38 = arith.constant 0 : index
    %61 = vector.load %arg6[%c0_36, %c0_37, %c0_38] : memref<1x1x128xf32, #tpu.memory_space<vmem>>, vector<1x1x128xf32>
    %62 = vector.shape_cast %61 : vector<1x1x128xf32> to vector<1x128xf32>
    %63 = vector.shape_cast %60 : vector<1x128xf32> to vector<1x1x128xf32>
    tpu.vector_store %arg6[%c0_36, %c0_37, %c0_38], %63 {strides = array<i32>} : memref<1x1x128xf32, #tpu.memory_space<vmem>>, vector<1x1x128xf32>,
    %64 = arith.mulf %54, %54 : vector<256x128xf32>
    %cst_39 = arith.constant dense<0.000000e+00> : vector<128xf32>
    %65 = vector.multi_reduction <add>, %64, %cst_39 [0] : vector<256x128xf32> to vector<128xf32>
    %66 = vector.shape_cast %65 : vector<128xf32> to vector<1x128xf32>
    %c0_40 = arith.constant 0 : index
    %c0_41 = arith.constant 0 : index
    %c0_42 = arith.constant 0 : index
    %67 = vector.load %arg7[%c0_40, %c0_41, %c0_42] : memref<1x1x128xf32, #tpu.memory_space<vmem>>, vector<1x1x128xf32>
    %68 = vector.shape_cast %67 : vector<1x1x128xf32> to vector<1x128xf32>
    %69 = vector.shape_cast %66 : vector<1x128xf32> to vector<1x1x128xf32>
    tpu.vector_store %arg7[%c0_40, %c0_41, %c0_42], %69 {strides = array<i32>} : memref<1x1x128xf32, #tpu.memory_space<vmem>>, vector<1x1x128xf32>,
    return
  }
  func.func @transform_0(%arg0: i32) -> (i32, i32, i32, i32) {
    %c0_i32 = arith.constant 0 : i32
    %c0_i32_0 = arith.constant 0 : i32
    %c0_i32_1 = arith.constant 0 : i32
    %c0_i32_2 = arith.constant 0 : i32
    return %arg0, %c0_i32, %c0_i32_0, %c0_i32_1 : i32, i32, i32, i32
  }
  func.func @transform_1(%arg0: i32) -> (i32, i32) {
    %c0_i32 = arith.constant 0 : i32
    %c0_i32_0 = arith.constant 0 : i32
    %c0_i32_1 = arith.constant 0 : i32
    return %c0_i32, %c0_i32_0 : i32, i32
  }
  func.func @transform_2(%arg0: i32) -> (i32, i32) {
    %c0_i32 = arith.constant 0 : i32
    %c0_i32_0 = arith.constant 0 : i32
    %c0_i32_1 = arith.constant 0 : i32
    return %c0_i32, %c0_i32_0 : i32, i32
  }
  func.func @transform_3(%arg0: i32) -> (i32, i32) {
    %c0_i32 = arith.constant 0 : i32
    %c0_i32_0 = arith.constant 0 : i32
    %c0_i32_1 = arith.constant 0 : i32
    return %c0_i32, %c0_i32_0 : i32, i32
  }
  func.func @transform_4(%arg0: i32) -> (i32, i32, i32, i32) {
    %c0_i32 = arith.constant 0 : i32
    %c0_i32_0 = arith.constant 0 : i32
    %c0_i32_1 = arith.constant 0 : i32
    %c0_i32_2 = arith.constant 0 : i32
    return %arg0, %c0_i32, %c0_i32_0, %c0_i32_1 : i32, i32, i32, i32
  }
  func.func @transform_5(%arg0: i32) -> (i32, i32, i32) {
    %c0_i32 = arith.constant 0 : i32
    %c0_i32_0 = arith.constant 0 : i32
    %c0_i32_1 = arith.constant 0 : i32
    return %arg0, %c0_i32, %c0_i32_0 : i32, i32, i32
  }
  func.func @transform_6(%arg0: i32) -> (i32, i32, i32) {
    %c0_i32 = arith.constant 0 : i32
    %c0_i32_0 = arith.constant 0 : i32
    %c0_i32_1 = arith.constant 0 : i32
    return %arg0, %c0_i32, %c0_i32_0 : i32, i32, i32
  }
}

module attributes {stable_mosaic.version = 11 : i64} {
  func.func @_bn_add_relu_kernel(%arg0: i32, %arg1: memref<1x16x16x128xf32, #tpu.memory_space<vmem>>, %arg2: memref<1x16x16x128xf32, #tpu.memory_space<vmem>>, %arg3: memref<1x128xf32, #tpu.memory_space<vmem>>, %arg4: memref<1x128xf32, #tpu.memory_space<vmem>>, %arg5: memref<1x16x16x128xf32, #tpu.memory_space<vmem>>) attributes {dimension_semantics = [#tpu.dimension_semantics<parallel>], iteration_bounds = array<i64: 2>, scalar_prefetch = 0 : i64, scratch_operands = 0 : i64, tpu.core_type = #tpu.core_type<tc>, window_params = [{transform_indices = @transform_0, window_bounds = array<i64: 1, 16, 16, 128>}, {transform_indices = @transform_1, window_bounds = array<i64: 1, 16, 16, 128>}, {pipeline_mode = #tpu.pipeline_mode<synchronous>, transform_indices = @transform_2, window_bounds = array<i64: 1, 128>}, {pipeline_mode = #tpu.pipeline_mode<synchronous>, transform_indices = @transform_3, window_bounds = array<i64: 1, 128>}, {transform_indices = @transform_4, window_bounds = array<i64: 1, 16, 16, 128>}]} {
    %c0 = arith.constant 0 : index
    %c0_0 = arith.constant 0 : index
    %c0_1 = arith.constant 0 : index
    %c0_2 = arith.constant 0 : index
    %0 = vector.load %arg1[%c0, %c0_0, %c0_1, %c0_2] : memref<1x16x16x128xf32, #tpu.memory_space<vmem>>, vector<1x16x16x128xf32>
    %c0_3 = arith.constant 0 : index
    %c0_4 = arith.constant 0 : index
    %1 = vector.load %arg3[%c0_3, %c0_4] : memref<1x128xf32, #tpu.memory_space<vmem>>, vector<1x128xf32>
    %2 = vector.shape_cast %1 : vector<1x128xf32> to vector<1x1x1x128xf32>
    %3 = vector.broadcast %2 : vector<1x1x1x128xf32> to vector<1x16x16x128xf32>
    %4 = arith.mulf %0, %3 : vector<1x16x16x128xf32>
    %c0_5 = arith.constant 0 : index
    %c0_6 = arith.constant 0 : index
    %5 = vector.load %arg4[%c0_5, %c0_6] : memref<1x128xf32, #tpu.memory_space<vmem>>, vector<1x128xf32>
    %6 = vector.shape_cast %5 : vector<1x128xf32> to vector<1x1x1x128xf32>
    %7 = vector.broadcast %6 : vector<1x1x1x128xf32> to vector<1x16x16x128xf32>
    %8 = arith.addf %4, %7 : vector<1x16x16x128xf32>
    %c0_7 = arith.constant 0 : index
    %c0_8 = arith.constant 0 : index
    %c0_9 = arith.constant 0 : index
    %c0_10 = arith.constant 0 : index
    %9 = vector.load %arg2[%c0_7, %c0_8, %c0_9, %c0_10] : memref<1x16x16x128xf32, #tpu.memory_space<vmem>>, vector<1x16x16x128xf32>
    %10 = arith.addf %8, %9 : vector<1x16x16x128xf32>
    %cst = arith.constant 0.000000e+00 : f32
    %11 = vector.broadcast %cst : f32 to vector<1x16x16x128xf32>
    %12 = arith.maximumf %10, %11 : vector<1x16x16x128xf32>
    %c0_11 = arith.constant 0 : index
    %c0_12 = arith.constant 0 : index
    %c0_13 = arith.constant 0 : index
    %c0_14 = arith.constant 0 : index
    %13 = vector.load %arg5[%c0_11, %c0_12, %c0_13, %c0_14] : memref<1x16x16x128xf32, #tpu.memory_space<vmem>>, vector<1x16x16x128xf32>
    tpu.vector_store %arg5[%c0_11, %c0_12, %c0_13, %c0_14], %12 {strides = array<i32>} : memref<1x16x16x128xf32, #tpu.memory_space<vmem>>, vector<1x16x16x128xf32>,
    return
  }
  func.func @transform_0(%arg0: i32) -> (i32, i32, i32, i32) {
    %c0_i32 = arith.constant 0 : i32
    %c0_i32_0 = arith.constant 0 : i32
    %c0_i32_1 = arith.constant 0 : i32
    %c0_i32_2 = arith.constant 0 : i32
    return %arg0, %c0_i32, %c0_i32_0, %c0_i32_1 : i32, i32, i32, i32
  }
  func.func @transform_1(%arg0: i32) -> (i32, i32, i32, i32) {
    %c0_i32 = arith.constant 0 : i32
    %c0_i32_0 = arith.constant 0 : i32
    %c0_i32_1 = arith.constant 0 : i32
    %c0_i32_2 = arith.constant 0 : i32
    return %arg0, %c0_i32, %c0_i32_0, %c0_i32_1 : i32, i32, i32, i32
  }
  func.func @transform_2(%arg0: i32) -> (i32, i32) {
    %c0_i32 = arith.constant 0 : i32
    %c0_i32_0 = arith.constant 0 : i32
    %c0_i32_1 = arith.constant 0 : i32
    return %c0_i32, %c0_i32_0 : i32, i32
  }
  func.func @transform_3(%arg0: i32) -> (i32, i32) {
    %c0_i32 = arith.constant 0 : i32
    %c0_i32_0 = arith.constant 0 : i32
    %c0_i32_1 = arith.constant 0 : i32
    return %c0_i32, %c0_i32_0 : i32, i32
  }
  func.func @transform_4(%arg0: i32) -> (i32, i32, i32, i32) {
    %c0_i32 = arith.constant 0 : i32
    %c0_i32_0 = arith.constant 0 : i32
    %c0_i32_1 = arith.constant 0 : i32
    %c0_i32_2 = arith.constant 0 : i32
    return %arg0, %c0_i32, %c0_i32_0, %c0_i32_1 : i32, i32, i32, i32
  }
}

</mosaic_0001>

<llo_original>
// kernel: _basic_block_forward.5
$region0: #{_basic_block_forward.5}
  #allocation0 [shape = 'u32[]', space=smem, size = 0x4, offset = 0x4, fixed_abs, tag = 'smem constant byte address 0x4 - core index']
  #allocation1 [shape = 'u32[144,128]{1,0:T(1,128)}', space=vmem, size = 0x12000, scoped, tag = 'internal scratch']
  %s0 = inlined_call_operand.vmem [shape: f32[2,16,16,128], index: 0, kind: input, shape index: {}]
  %s1 = inlined_call_operand.vmem [shape: f32[2,16,16,128], index: 1, kind: input, shape index: {}, may-alias: {1,4}]
  %s2 = inlined_call_operand.vmem [shape: f32[1,128], index: 2, kind: input, shape index: {}]
  %s3 = inlined_call_operand.vmem [shape: f32[1,128], index: 3, kind: input, shape index: {}]
  %s4 = inlined_call_operand.vmem [shape: f32[2,16,16,128], index: 4, kind: output, shape index: {}, may-alias: {1,4}]
  %s5 = sld [smem:[#allocation0]]
  $region49: #{_basic_block_forward.5} parent=0
    _
  %s7 = ssub.s32 1, %s5
  %s8 = scalar_select 0, %s7, %s5
  loop: start=0, step=1, limit=4
  $region2: #{_basic_block_forward.5} parent=0 // loop_pre_header
    _
  $region3: #{_basic_block_forward.5} parent=0 // loop_header
    %s10 = sphi 0, %s14
    %p11 = scmp.ge.s32.totalorder %s10, 4
    %s20 = sphi 0, %s22
    %s23 = sphi 0, %s20
    %s24 = sphi 0, %s23
    %s40 = sphi 0, %s24
    %s46 = sphi 0, %s48
    %s49 = sphi 0, %s46
    %s50 = sphi 0, %s49
    %s66 = sphi 0, %s50
    %s70 = sphi 0, %s70
    %s72 = sphi 0, %s70
    %s73 = sphi 0, %s72
    %s87 = sphi 0, %s73
    %s91 = sphi 0, %s91
    %s93 = sphi 0, %s91
    %s94 = sphi 0, %s93
    %s108 = sphi 0, %s94
    %s114 = sphi 0, %s116
    %s117 = sphi 0, %s114
    %s118 = sphi 0, %s117
    %s134 = sphi 0, %s118
  $region4: #{_basic_block_forward.5} parent=0 // loop_header_branch
    %13 = sbr.rel (%p11) target = $region8
  $region5: #{_basic_block_forward.5} parent=0 // loop_body
    %s15 = ssub.s32 %s10, 1
    %s16 = ssub.s32 %s10, 2
    %s17 = sadd.s32 %s10, 1
    %s18 = ssub.s32 %s10, %s17
    %p19 = scmp.eq.s32.totalorder %s18, 0
    %s21 = sadd.s32 %s20, 1
    %s22 = scalar_select %p19, %s20, %s21
    %p25 = pneg %p19
    %p26 = scmp.eq.s32.totalorder %s10, 1
    %p27 = por %p25, %p26
    %p28 = scmp.ne.s32.totalorder %s20, %s23
    %p29 = scmp.eq.s32.totalorder %s10, 0
    %p30 = por %p28, %p29
    %p31 = scmp.ne.s32.totalorder %s20, %s23
    %p32 = scmp.eq.s32.totalorder %s15, 1
    %p33 = por %p31, %p32
    %p34 = scmp.ne.s32.totalorder %s23, %s24
    %p35 = scmp.eq.s32.totalorder %s15, 0
    %p36 = por %p34, %p35
    %p37 = scmp.ne.s32.totalorder %s23, %s24
    %p38 = scmp.eq.s32.totalorder %s16, 1
    %p39 = por %p37, %p38
    %p41 = scmp.ne.s32.totalorder %s24, %s40
    %p42 = scmp.eq.s32.totalorder %s16, 0
    %p43 = por %p41, %p42
    %s44 = ssub.s32 %s10, %s17
    %p45 = scmp.eq.s32.totalorder %s44, 0
    %s47 = sadd.s32 %s46, 1
    %s48 = scalar_select %p45, %s46, %s47
    %p51 = pneg %p45
    %p52 = scmp.eq.s32.totalorder %s10, 1
    %p53 = por %p51, %p52
    %p54 = scmp.ne.s32.totalorder %s46, %s49
    %p55 = scmp.eq.s32.totalorder %s10, 0
    %p56 = por %p54, %p55
    %p57 = scmp.ne.s32.totalorder %s46, %s49
    %p58 = scmp.eq.s32.totalorder %s15, 1
    %p59 = por %p57, %p58
    %p60 = scmp.ne.s32.totalorder %s49, %s50
    %p61 = scmp.eq.s32.totalorder %s15, 0
    %p62 = por %p60, %p61
    %p63 = scmp.ne.s32.totalorder %s49, %s50
    %p64 = scmp.eq.s32.totalorder %s16, 1
    %p65 = por %p63, %p64
    %p67 = scmp.ne.s32.totalorder %s50, %s66
    %p68 = scmp.eq.s32.totalorder %s16, 0
    %p69 = por %p67, %p68
    %s71 = sadd.s32 %s70, 1
    %p74 = scmp.eq.s32.totalorder %s10, 1
    %p75 = scmp.ne.s32.totalorder %s70, %s72
    %p76 = scmp.eq.s32.totalorder %s10, 0
    %p77 = por %p75, %p76
    %p78 = scmp.ne.s32.totalorder %s70, %s72
    %p79 = scmp.eq.s32.totalorder %s15, 1
    %p80 = por %p78, %p79
    %p81 = scmp.ne.s32.totalorder %s72, %s73
    %p82 = scmp.eq.s32.totalorder %s15, 0
    %p83 = por %p81, %p82
    %p84 = scmp.ne.s32.totalorder %s72, %s73
    %p85 = scmp.eq.s32.totalorder %s16, 1
    %p86 = por %p84, %p85
    %p88 = scmp.ne.s32.totalorder %s73, %s87
    %p89 = scmp.eq.s32.totalorder %s16, 0
    %p90 = por %p88, %p89
    %s92 = sadd.s32 %s91, 1
    %p95 = scmp.eq.s32.totalorder %s10, 1
    %p96 = scmp.ne.s32.totalorder %s91, %s93
    %p97 = scmp.eq.s32.totalorder %s10, 0
    %p98 = por %p96, %p97
    %p99 = scmp.ne.s32.totalorder %s91, %s93
    %p100 = scmp.eq.s32.totalorder %s15, 1
    %p101 = por %p99, %p100
    %p102 = scmp.ne.s32.totalorder %s93, %s94
    %p103 = scmp.eq.s32.totalorder %s15, 0
    %p104 = por %p102, %p103
    %p105 = scmp.ne.s32.totalorder %s93, %s94
    %p106 = scmp.eq.s32.totalorder %s16, 1
    %p107 = por %p105, %p106
    %p109 = scmp.ne.s32.totalorder %s94, %s108
    %p110 = scmp.eq.s32.totalorder %s16, 0
    %p111 = por %p109, %p110
    %s112 = ssub.s32 %s10, %s17
    %p113 = scmp.eq.s32.totalorder %s112, 0
    %s115 = sadd.s32 %s114, 1
    %s116 = scalar_select %p113, %s114, %s115
    %p119 = pneg %p113
    %p120 = scmp.eq.s32.totalorder %s10, 1
    %p121 = por %p119, %p120
    %p122 = scmp.ne.s32.totalorder %s114, %s117
    %p123 = scmp.eq.s32.totalorder %s10, 0
    %p124 = por %p122, %p123
    %p125 = scmp.ne.s32.totalorder %s114, %s117
    %p126 = scmp.eq.s32.totalorder %s15, 1
    %p127 = por %p125, %p126
    %p128 = scmp.ne.s32.totalorder %s117, %s118
    %p129 = scmp.eq.s32.totalorder %s15, 0
    %p130 = por %p128, %p129
    %p131 = scmp.ne.s32.totalorder %s117, %s118
    %p132 = scmp.eq.s32.totalorder %s16, 1
    %p133 = por %p131, %p132
    %p135 = scmp.ne.s32.totalorder %s118, %s134
    %p136 = scmp.eq.s32.totalorder %s16, 0
    %p137 = por %p135, %p136
    %p138 = scmp.le.s32.totalorder 1, %s10
    %p139 = scmp.lt.s32.totalorder %s10, 3
    %p140 = pnand %p138, %p139
    %p141 = pneg %p140
    // Predicated region
    $region9: #{_basic_block_forward.5} parent=5 // pred_check
      _
    $region10: #{_basic_block_forward.5} parent=5 // pred_check_branch
      %143 = sbr.rel (%p140) target = $region12
    $region11: #{_basic_block_forward.5} parent=5 // pred_region
      %s144 = ssub.s32 %s10, 1
      // Predicated region
      $region13: #{_basic_block_forward.5} parent=11 // pred_check
        %p145 = pneg %p83
      $region14: #{_basic_block_forward.5} parent=11 // pred_check_branch
        %147 = sbr.rel (%p145) target = $region16
      $region15: #{_basic_block_forward.5} parent=11 // pred_region
        _
      $region16: #{_basic_block_forward.5} parent=11 // pred_fallthru
        _
      // Predicated region
      $region17: #{_basic_block_forward.5} parent=11 // pred_check
        %p148 = pneg %p104
      $region18: #{_basic_block_forward.5} parent=11 // pred_check_branch
        %150 = sbr.rel (%p148) target = $region20
      $region19: #{_basic_block_forward.5} parent=11 // pred_region
        _
      $region20: #{_basic_block_forward.5} parent=11 // pred_fallthru
        _
    $region12: #{_basic_block_forward.5} parent=5 // pred_fallthru
      _
    %p151 = scmp.lt.s32.totalorder %s10, 2
    // Predicated region
    $region21: #{_basic_block_forward.5} parent=5 // pred_check
      %p152 = pneg %p151
    $region22: #{_basic_block_forward.5} parent=5 // pred_check_branch
      %154 = sbr.rel (%p152) target = $region24
    $region23: #{_basic_block_forward.5} parent=5 // pred_region
      // Predicated region
      $region25: #{_basic_block_forward.5} parent=23 // pred_check
        %p155 = pneg %p30
      $region26: #{_basic_block_forward.5} parent=23 // pred_check_branch
        %157 = sbr.rel (%p155) target = $region28
      $region27: #{_basic_block_forward.5} parent=23 // pred_region
        %p158 = scmp.lt.s32.totalorder %s10, 1
        %s159 = scalar_select %p158, %s10, 1
        %s160 = smul.addr %s159, 32
        %s161 = smul.addr %s160, 8
        %s162 = scalar_lea.vmem %s0, %s161
      $region28: #{_basic_block_forward.5} parent=23 // pred_fallthru
        _
      // Predicated region
      $region29: #{_basic_block_forward.5} parent=23 // pred_check
        %p163 = pneg %p56
      $region30: #{_basic_block_forward.5} parent=23 // pred_check_branch
        %165 = sbr.rel (%p163) target = $region32
      $region31: #{_basic_block_forward.5} parent=23 // pred_region
        %p166 = scmp.lt.s32.totalorder %s10, 1
        %s167 = scalar_select %p166, %s10, 1
        %s168 = smul.addr %s167, 32
        %s169 = smul.addr %s168, 8
        %s170 = scalar_lea.vmem %s1, %s169
      $region32: #{_basic_block_forward.5} parent=23 // pred_fallthru
        _
    $region24: #{_basic_block_forward.5} parent=5 // pred_fallthru
      _
    %p171 = scmp.le.s32.totalorder 1, %s10
    %p172 = scmp.lt.s32.totalorder %s10, 3
    %p173 = pnand %p171, %p172
    %p174 = pneg %p173
    // Predicated region
    $region33: #{_basic_block_forward.5} parent=5 // pred_check
      _
    $region34: #{_basic_block_forward.5} parent=5 // pred_check_branch
      %176 = sbr.rel (%p173) target = $region36
    $region35: #{_basic_block_forward.5} parent=5 // pred_region
      %s177 = ssub.s32 %s10, 1
      %p178 = scmp.lt.s32.totalorder %s15, 1
      %s179 = scalar_select %p178, %s15, 1
      %s180 = smul.addr %s179, 32
      %s181 = smul.addr %s180, 8
      %s182 = scalar_lea.vmem %s0, %s181
      %p183 = pneg %p36
      %p184 = pneg %p33
      %p185 = scmp.lt.s32.totalorder %s15, 1
      %s186 = scalar_select %p185, %s15, 1
      %s187 = smul.addr %s186, 32
      %s188 = smul.addr %s187, 8
      %s189 = scalar_lea.vmem %s1, %s188
      %p190 = pneg %p62
      %p191 = pneg %p59
      %p192 = pneg %p83
      %p193 = pneg %p80
      %p194 = pneg %p104
      %p195 = pneg %p101
      %p196 = pneg %p130
      %p197 = pneg %p127
      %p198 = scmp.lt.s32.totalorder %s15, 1
      %s199 = scalar_select %p198, %s15, 1
      %s200 = smul.addr %s199, 32
      %s201 = smul.addr %s200, 8
      %s202 = scalar_lea.vmem %s4, %s201
      %p203 = scmp.lt.s32.totalorder %s15, 1
      %s204 = scalar_select %p203, %s15, 1
      %s205 = smul.addr %s204, 32
      %s206 = smul.addr %s205, 8
      %s207 = scalar_lea.vmem %s0, %s206
      %p208 = scmp.lt.s32.totalorder %s15, 1
      %s209 = scalar_select %p208, %s15, 1
      %s210 = smul.addr %s209, 32
      %s211 = smul.addr %s210, 8
      %s212 = scalar_lea.vmem %s1, %s211
      %p213 = scmp.lt.s32.totalorder %s15, 1
      %s214 = scalar_select %p213, %s15, 1
      %s215 = smul.addr %s214, 32
      %s216 = smul.addr %s215, 8
      %s217 = scalar_lea.vmem %s4, %s216
      %v218 = vld [vmem:[%s207] sm:$0xff]
      %v219 = vld [vmem:[%s207 + $0x8] sm:$0xff]
      %v220 = vld [vmem:[%s207 + $0x10] sm:$0xff]
      %v221 = vld [vmem:[%s207 + $0x18] sm:$0xff]
      %v222 = vld [vmem:[%s207 + $0x20] sm:$0xff]
      %v223 = vld [vmem:[%s207 + $0x28] sm:$0xff]
      %v224 = vld [vmem:[%s207 + $0x30] sm:$0xff]
      %v225 = vld [vmem:[%s207 + $0x38] sm:$0xff]
      %v226 = vld [vmem:[%s207 + $0x40] sm:$0xff]
      %v227 = vld [vmem:[%s207 + $0x48] sm:$0xff]
      %v228 = vld [vmem:[%s207 + $0x50] sm:$0xff]
      %v229 = vld [vmem:[%s207 + $0x58] sm:$0xff]
      %v230 = vld [vmem:[%s207 + $0x60] sm:$0xff]
      %v231 = vld [vmem:[%s207 + $0x68] sm:$0xff]
      %v232 = vld [vmem:[%s207 + $0x70] sm:$0xff]
      %v233 = vld [vmem:[%s207 + $0x78] sm:$0xff]
      %v234 = vld [vmem:[%s207 + $0x80] sm:$0xff]
      %v235 = vld [vmem:[%s207 + $0x88] sm:$0xff]
      %v236 = vld [vmem:[%s207 + $0x90] sm:$0xff]
      %v237 = vld [vmem:[%s207 + $0x98] sm:$0xff]
      %v238 = vld [vmem:[%s207 + $0xa0] sm:$0xff]
      %v239 = vld [vmem:[%s207 + $0xa8] sm:$0xff]
      %v240 = vld [vmem:[%s207 + $0xb0] sm:$0xff]
      %v241 = vld [vmem:[%s207 + $0xb8] sm:$0xff]
      %v242 = vld [vmem:[%s207 + $0xc0] sm:$0xff]
      %v243 = vld [vmem:[%s207 + $0xc8] sm:$0xff]
      %v244 = vld [vmem:[%s207 + $0xd0] sm:$0xff]
      %v245 = vld [vmem:[%s207 + $0xd8] sm:$0xff]
      %v246 = vld [vmem:[%s207 + $0xe0] sm:$0xff]
      %v247 = vld [vmem:[%s207 + $0xe8] sm:$0xff]
      %v248 = vld [vmem:[%s207 + $0xf0] sm:$0xff]
      %v249 = vld [vmem:[%s207 + $0xf8] sm:$0xff]
      %v250 = vld [vmem:[%s2] sm:$0x1]
      %v252 = vlaneseq
      %v253 = vshrl.u32 %v252, 7
      %v254 = vsub.s32 0, %v253
      %v255 = vrot.slane %v250, %v254
      %v257 = vmul.f32 %v218, %v255
      %v258 = vmul.f32 %v219, %v255
      %v259 = vmul.f32 %v220, %v255
      %v260 = vmul.f32 %v221, %v255
      %v261 = vmul.f32 %v222, %v255
      %v262 = vmul.f32 %v223, %v255
      %v263 = vmul.f32 %v224, %v255
      %v264 = vmul.f32 %v225, %v255
      %v265 = vmul.f32 %v226, %v255
      %v266 = vmul.f32 %v227, %v255
      %v267 = vmul.f32 %v228, %v255
      %v268 = vmul.f32 %v229, %v255
      %v269 = vmul.f32 %v230, %v255
      %v270 = vmul.f32 %v231, %v255
      %v271 = vmul.f32 %v232, %v255
      %v272 = vmul.f32 %v233, %v255
      %v273 = vmul.f32 %v234, %v255
      %v274 = vmul.f32 %v235, %v255
      %v275 = vmul.f32 %v236, %v255
      %v276 = vmul.f32 %v237, %v255
      %v277 = vmul.f32 %v238, %v255
      %v278 = vmul.f32 %v239, %v255
      %v279 = vmul.f32 %v240, %v255
      %v280 = vmul.f32 %v241, %v255
      %v281 = vmul.f32 %v242, %v255
      %v282 = vmul.f32 %v243, %v255
      %v283 = vmul.f32 %v244, %v255
      %v284 = vmul.f32 %v245, %v255
      %v285 = vmul.f32 %v246, %v255
      %v286 = vmul.f32 %v247, %v255
      %v287 = vmul.f32 %v248, %v255
      %v288 = vmul.f32 %v249, %v255
      %v289 = vld [vmem:[%s3] sm:$0x1]
      %v291 = vlaneseq
      %v292 = vshrl.u32 %v291, 7
      %v293 = vsub.s32 0, %v292
      %v294 = vrot.slane %v289, %v293
      %v296 = vadd.f32 %v257, %v294
      %v297 = vadd.f32 %v258, %v294
      %v298 = vadd.f32 %v259, %v294
      %v299 = vadd.f32 %v260, %v294
      %v300 = vadd.f32 %v261, %v294
      %v301 = vadd.f32 %v262, %v294
      %v302 = vadd.f32 %v263, %v294
      %v303 = vadd.f32 %v264, %v294
      %v304 = vadd.f32 %v265, %v294
      %v305 = vadd.f32 %v266, %v294
      %v306 = vadd.f32 %v267, %v294
      %v307 = vadd.f32 %v268, %v294
      %v308 = vadd.f32 %v269, %v294
      %v309 = vadd.f32 %v270, %v294
      %v310 = vadd.f32 %v271, %v294
      %v311 = vadd.f32 %v272, %v294
      %v312 = vadd.f32 %v273, %v294
      %v313 = vadd.f32 %v274, %v294
      %v314 = vadd.f32 %v275, %v294
      %v315 = vadd.f32 %v276, %v294
      %v316 = vadd.f32 %v277, %v294
      %v317 = vadd.f32 %v278, %v294
      %v318 = vadd.f32 %v279, %v294
      %v319 = vadd.f32 %v280, %v294
      %v320 = vadd.f32 %v281, %v294
      %v321 = vadd.f32 %v282, %v294
      %v322 = vadd.f32 %v283, %v294
      %v323 = vadd.f32 %v284, %v294
      %v324 = vadd.f32 %v285, %v294
      %v325 = vadd.f32 %v286, %v294
      %v326 = vadd.f32 %v287, %v294
      %v327 = vadd.f32 %v288, %v294
      %v328 = vld [vmem:[%s212] sm:$0xff]
      %v329 = vld [vmem:[%s212 + $0x8] sm:$0xff]
      %v330 = vld [vmem:[%s212 + $0x10] sm:$0xff]
      %v331 = vld [vmem:[%s212 + $0x18] sm:$0xff]
      %v332 = vld [vmem:[%s212 + $0x20] sm:$0xff]
      %v333 = vld [vmem:[%s212 + $0x28] sm:$0xff]
      %v334 = vld [vmem:[%s212 + $0x30] sm:$0xff]
      %v335 = vld [vmem:[%s212 + $0x38] sm:$0xff]
      %v336 = vld [vmem:[%s212 + $0x40] sm:$0xff]
      %v337 = vld [vmem:[%s212 + $0x48] sm:$0xff]
      %v338 = vld [vmem:[%s212 + $0x50] sm:$0xff]
      %v339 = vld [vmem:[%s212 + $0x58] sm:$0xff]
      %v340 = vld [vmem:[%s212 + $0x60] sm:$0xff]
      %v341 = vld [vmem:[%s212 + $0x68] sm:$0xff]
      %v342 = vld [vmem:[%s212 + $0x70] sm:$0xff]
      %v343 = vld [vmem:[%s212 + $0x78] sm:$0xff]
      %v344 = vld [vmem:[%s212 + $0x80] sm:$0xff]
      %v345 = vld [vmem:[%s212 + $0x88] sm:$0xff]
      %v346 = vld [vmem:[%s212 + $0x90] sm:$0xff]
      %v347 = vld [vmem:[%s212 + $0x98] sm:$0xff]
      %v348 = vld [vmem:[%s212 + $0xa0] sm:$0xff]
      %v349 = vld [vmem:[%s212 + $0xa8] sm:$0xff]
      %v350 = vld [vmem:[%s212 + $0xb0] sm:$0xff]
      %v351 = vld [vmem:[%s212 + $0xb8] sm:$0xff]
      %v352 = vld [vmem:[%s212 + $0xc0] sm:$0xff]
      %v353 = vld [vmem:[%s212 + $0xc8] sm:$0xff]
      %v354 = vld [vmem:[%s212 + $0xd0] sm:$0xff]
      %v355 = vld [vmem:[%s212 + $0xd8] sm:$0xff]
      %v356 = vld [vmem:[%s212 + $0xe0] sm:$0xff]
      %v357 = vld [vmem:[%s212 + $0xe8] sm:$0xff]
      %v358 = vld [vmem:[%s212 + $0xf0] sm:$0xff]
      %v359 = vld [vmem:[%s212 + $0xf8] sm:$0xff]
      %v360 = vadd.f32 %v296, %v328
      %v361 = vadd.f32 %v297, %v329
      %v362 = vadd.f32 %v298, %v330
      %v363 = vadd.f32 %v299, %v331
      %v364 = vadd.f32 %v300, %v332
      %v365 = vadd.f32 %v301, %v333
      %v366 = vadd.f32 %v302, %v334
      %v367 = vadd.f32 %v303, %v335
      %v368 = vadd.f32 %v304, %v336
      %v369 = vadd.f32 %v305, %v337
      %v370 = vadd.f32 %v306, %v338
      %v371 = vadd.f32 %v307, %v339
      %v372 = vadd.f32 %v308, %v340
      %v373 = vadd.f32 %v309, %v341
      %v374 = vadd.f32 %v310, %v342
      %v375 = vadd.f32 %v311, %v343
      %v376 = vadd.f32 %v312, %v344
      %v377 = vadd.f32 %v313, %v345
      %v378 = vadd.f32 %v314, %v346
      %v379 = vadd.f32 %v315, %v347
      %v380 = vadd.f32 %v316, %v348
      %v381 = vadd.f32 %v317, %v349
      %v382 = vadd.f32 %v318, %v350
      %v383 = vadd.f32 %v319, %v351
      %v384 = vadd.f32 %v320, %v352
      %v385 = vadd.f32 %v321, %v353
      %v386 = vadd.f32 %v322, %v354
      %v387 = vadd.f32 %v323, %v355
      %v388 = vadd.f32 %v324, %v356
      %v389 = vadd.f32 %v325, %v357
      %v390 = vadd.f32 %v326, %v358
      %v391 = vadd.f32 %v327, %v359
      %v392 = vmax.f32 %v360, 0.0
      %v393 = vmax.f32 %v361, 0.0
      %v394 = vmax.f32 %v362, 0.0
      %v395 = vmax.f32 %v363, 0.0
      %v396 = vmax.f32 %v364, 0.0
      %v397 = vmax.f32 %v365, 0.0
      %v398 = vmax.f32 %v366, 0.0
      %v399 = vmax.f32 %v367, 0.0
      %v400 = vmax.f32 %v368, 0.0
      %v401 = vmax.f32 %v369, 0.0
      %v402 = vmax.f32 %v370, 0.0
      %v403 = vmax.f32 %v371, 0.0
      %v404 = vmax.f32 %v372, 0.0
      %v405 = vmax.f32 %v373, 0.0
      %v406 = vmax.f32 %v374, 0.0
      %v407 = vmax.f32 %v375, 0.0
      %v408 = vmax.f32 %v376, 0.0
      %v409 = vmax.f32 %v377, 0.0
      %v410 = vmax.f32 %v378, 0.0
      %v411 = vmax.f32 %v379, 0.0
      %v412 = vmax.f32 %v380, 0.0
      %v413 = vmax.f32 %v381, 0.0
      %v414 = vmax.f32 %v382, 0.0
      %v415 = vmax.f32 %v383, 0.0
      %v416 = vmax.f32 %v384, 0.0
      %v417 = vmax.f32 %v385, 0.0
      %v418 = vmax.f32 %v386, 0.0
      %v419 = vmax.f32 %v387, 0.0
      %v420 = vmax.f32 %v388, 0.0
      %v421 = vmax.f32 %v389, 0.0
      %v422 = vmax.f32 %v390, 0.0
      %v423 = vmax.f32 %v391, 0.0
      %424 = vst [vmem:[%s217] sm:$0xff] %v392
      %425 = vst [vmem:[%s217 + $0x8] sm:$0xff] %v393
      %426 = vst [vmem:[%s217 + $0x10] sm:$0xff] %v394
      %427 = vst [vmem:[%s217 + $0x18] sm:$0xff] %v395
      %428 = vst [vmem:[%s217 + $0x20] sm:$0xff] %v396
      %429 = vst [vmem:[%s217 + $0x28] sm:$0xff] %v397
      %430 = vst [vmem:[%s217 + $0x30] sm:$0xff] %v398
      %431 = vst [vmem:[%s217 + $0x38] sm:$0xff] %v399
      %432 = vst [vmem:[%s217 + $0x40] sm:$0xff] %v400
      %433 = vst [vmem:[%s217 + $0x48] sm:$0xff] %v401
      %434 = vst [vmem:[%s217 + $0x50] sm:$0xff] %v402
      %435 = vst [vmem:[%s217 + $0x58] sm:$0xff] %v403
      %436 = vst [vmem:[%s217 + $0x60] sm:$0xff] %v404
      %437 = vst [vmem:[%s217 + $0x68] sm:$0xff] %v405
      %438 = vst [vmem:[%s217 + $0x70] sm:$0xff] %v406
      %439 = vst [vmem:[%s217 + $0x78] sm:$0xff] %v407
      %440 = vst [vmem:[%s217 + $0x80] sm:$0xff] %v408
      %441 = vst [vmem:[%s217 + $0x88] sm:$0xff] %v409
      %442 = vst [vmem:[%s217 + $0x90] sm:$0xff] %v410
      %443 = vst [vmem:[%s217 + $0x98] sm:$0xff] %v411
      %444 = vst [vmem:[%s217 + $0xa0] sm:$0xff] %v412
      %445 = vst [vmem:[%s217 + $0xa8] sm:$0xff] %v413
      %446 = vst [vmem:[%s217 + $0xb0] sm:$0xff] %v414
      %447 = vst [vmem:[%s217 + $0xb8] sm:$0xff] %v415
      %448 = vst [vmem:[%s217 + $0xc0] sm:$0xff] %v416
      %449 = vst [vmem:[%s217 + $0xc8] sm:$0xff] %v417
      %450 = vst [vmem:[%s217 + $0xd0] sm:$0xff] %v418
      %451 = vst [vmem:[%s217 + $0xd8] sm:$0xff] %v419
      %452 = vst [vmem:[%s217 + $0xe0] sm:$0xff] %v420
      %453 = vst [vmem:[%s217 + $0xe8] sm:$0xff] %v421
      %454 = vst [vmem:[%s217 + $0xf0] sm:$0xff] %v422
      %455 = vst [vmem:[%s217 + $0xf8] sm:$0xff] %v423
      %p456 = scmp.lt.s32.totalorder %s15, 1
      %s457 = scalar_select %p456, %s15, 1
      %s458 = smul.addr %s457, 32
      %s459 = smul.addr %s458, 8
      %s460 = scalar_lea.vmem %s4, %s459
      // Predicated region
      $region37: #{_basic_block_forward.5} parent=35 // pred_check
        %p461 = pneg %p127
      $region38: #{_basic_block_forward.5} parent=35 // pred_check_branch
        %463 = sbr.rel (%p461) target = $region40
      $region39: #{_basic_block_forward.5} parent=35 // pred_region
        _
      $region40: #{_basic_block_forward.5} parent=35 // pred_fallthru
        _
    $region36: #{_basic_block_forward.5} parent=5 // pred_fallthru
      _
    %p464 = scmp.le.s32.totalorder 2, %s10
    // Predicated region
    $region41: #{_basic_block_forward.5} parent=5 // pred_check
      %p465 = pneg %p464
    $region42: #{_basic_block_forward.5} parent=5 // pred_check_branch
      %467 = sbr.rel (%p465) target = $region44
    $region43: #{_basic_block_forward.5} parent=5 // pred_region
      %s468 = ssub.s32 %s10, 2
      // Predicated region
      $region45: #{_basic_block_forward.5} parent=43 // pred_check
        %p469 = pneg %p133
      $region46: #{_basic_block_forward.5} parent=43 // pred_check_branch
        %471 = sbr.rel (%p469) target = $region48
      $region47: #{_basic_block_forward.5} parent=43 // pred_region
        %p472 = scmp.lt.s32.totalorder %s16, 1
        %s473 = scalar_select %p472, %s16, 1
        %s474 = smul.addr %s473, 32
        %s475 = smul.addr %s474, 8
        %s476 = scalar_lea.vmem %s4, %s475
      $region48: #{_basic_block_forward.5} parent=43 // pred_fallthru
        _
    $region44: #{_basic_block_forward.5} parent=5 // pred_fallthru
      _
  $region6: #{_basic_block_forward.5} parent=0 // loop_footer
    %s14 = sadd.s32 1, %s10
  $region7: #{_basic_block_forward.5} parent=0 // loop_footer_branch
    %9 = sbr.rel target = $region3
  $region8: #{_basic_block_forward.5} parent=0 // loop_exit
    _

// kernel: _basic_block_forward.4
$region0: #{_basic_block_forward.4}
  #allocation0 [shape = 'u32[]', space=smem, size = 0x4, offset = 0x4, fixed_abs, tag = 'smem constant byte address 0x4 - core index']
  #allocation1 [shape = 'u32[144,128]{1,0:T(1,128)}', space=vmem, size = 0x12000, scoped, tag = 'internal scratch']
  #allocation2 [shape = 'f32[18,18,128]{2,1,0:T(8,128)}', space=vmem, size = 0x36000, scoped, tag = 'scratch operand']
  #allocation3 [shape = 'bf16[256,1152]{1,0:T(8,128)(2,1)}', space=vmem, size = 0x90000, scoped, tag = 'scratch operand']
  %s0 = inlined_call_operand.vmem [shape: f32[2,16,16,128], index: 0, kind: input, shape index: {}]
  %s1 = inlined_call_operand.vmem [shape: f32[1,128], index: 1, kind: input, shape index: {}]
  %s2 = inlined_call_operand.vmem [shape: f32[1,128], index: 2, kind: input, shape index: {}]
  %s3 = inlined_call_operand.vmem [shape: bf16[1152,128], index: 3, kind: input, shape index: {}]
  %s4 = inlined_call_operand.vmem [shape: f32[2,16,16,128], index: 4, kind: output, shape index: {0}]
  %s5 = inlined_call_operand.vmem [shape: f32[2,1,128], index: 5, kind: output, shape index: {1}]
  %s6 = inlined_call_operand.vmem [shape: f32[2,1,128], index: 6, kind: output, shape index: {2}]
  %7 = xla_tuple %s4, %s5, %s6
  %s8 = sld [smem:[#allocation0]]
  $region65: #{_basic_block_forward.4} parent=0
    _
  %s10 = ssub.s32 1, %s8
  %s11 = scalar_select 0, %s10, %s8
  loop: start=0, step=1, limit=4
  $region2: #{_basic_block_forward.4} parent=0 // loop_pre_header
    _
  $region3: #{_basic_block_forward.4} parent=0 // loop_header
    %s13 = sphi 0, %s17
    %p14 = scmp.ge.s32.totalorder %s13, 4
    %s23 = sphi 0, %s25
    %s26 = sphi 0, %s23
    %s27 = sphi 0, %s26
    %s43 = sphi 0, %s27
    %s47 = sphi 0, %s47
    %s49 = sphi 0, %s47
    %s50 = sphi 0, %s49
    %s64 = sphi 0, %s50
    %s68 = sphi 0, %s68
    %s70 = sphi 0, %s68
    %s71 = sphi 0, %s70
    %s85 = sphi 0, %s71
    %s89 = sphi 0, %s89
    %s91 = sphi 0, %s89
    %s92 = sphi 0, %s91
    %s106 = sphi 0, %s92
    %s112 = sphi 0, %s114
    %s115 = sphi 0, %s112
    %s116 = sphi 0, %s115
    %s132 = sphi 0, %s116
    %s138 = sphi 0, %s140
    %s141 = sphi 0, %s138
    %s142 = sphi 0, %s141
    %s158 = sphi 0, %s142
    %s164 = sphi 0, %s166
    %s167 = sphi 0, %s164
    %s168 = sphi 0, %s167
    %s184 = sphi 0, %s168
  $region4: #{_basic_block_forward.4} parent=0 // loop_header_branch
    %16 = sbr.rel (%p14) target = $region8
  $region5: #{_basic_block_forward.4} parent=0 // loop_body
    %s18 = ssub.s32 %s13, 1
    %s19 = ssub.s32 %s13, 2
    %s20 = sadd.s32 %s13, 1
    %s21 = ssub.s32 %s13, %s20
    %p22 = scmp.eq.s32.totalorder %s21, 0
    %s24 = sadd.s32 %s23, 1
    %s25 = scalar_select %p22, %s23, %s24
    %p28 = pneg %p22
    %p29 = scmp.eq.s32.totalorder %s13, 1
    %p30 = por %p28, %p29
    %p31 = scmp.ne.s32.totalorder %s23, %s26
    %p32 = scmp.eq.s32.totalorder %s13, 0
    %p33 = por %p31, %p32
    %p34 = scmp.ne.s32.totalorder %s23, %s26
    %p35 = scmp.eq.s32.totalorder %s18, 1
    %p36 = por %p34, %p35
    %p37 = scmp.ne.s32.totalorder %s26, %s27
    %p38 = scmp.eq.s32.totalorder %s18, 0
    %p39 = por %p37, %p38
    %p40 = scmp.ne.s32.totalorder %s26, %s27
    %p41 = scmp.eq.s32.totalorder %s19, 1
    %p42 = por %p40, %p41
    %p44 = scmp.ne.s32.totalorder %s27, %s43
    %p45 = scmp.eq.s32.totalorder %s19, 0
    %p46 = por %p44, %p45
    %s48 = sadd.s32 %s47, 1
    %p51 = scmp.eq.s32.totalorder %s13, 1
    %p52 = scmp.ne.s32.totalorder %s47, %s49
    %p53 = scmp.eq.s32.totalorder %s13, 0
    %p54 = por %p52, %p53
    %p55 = scmp.ne.s32.totalorder %s47, %s49
    %p56 = scmp.eq.s32.totalorder %s18, 1
    %p57 = por %p55, %p56
    %p58 = scmp.ne.s32.totalorder %s49, %s50
    %p59 = scmp.eq.s32.totalorder %s18, 0
    %p60 = por %p58, %p59
    %p61 = scmp.ne.s32.totalorder %s49, %s50
    %p62 = scmp.eq.s32.totalorder %s19, 1
    %p63 = por %p61, %p62
    %p65 = scmp.ne.s32.totalorder %s50, %s64
    %p66 = scmp.eq.s32.totalorder %s19, 0
    %p67 = por %p65, %p66
    %s69 = sadd.s32 %s68, 1
    %p72 = scmp.eq.s32.totalorder %s13, 1
    %p73 = scmp.ne.s32.totalorder %s68, %s70
    %p74 = scmp.eq.s32.totalorder %s13, 0
    %p75 = por %p73, %p74
    %p76 = scmp.ne.s32.totalorder %s68, %s70
    %p77 = scmp.eq.s32.totalorder %s18, 1
    %p78 = por %p76, %p77
    %p79 = scmp.ne.s32.totalorder %s70, %s71
    %p80 = scmp.eq.s32.totalorder %s18, 0
    %p81 = por %p79, %p80
    %p82 = scmp.ne.s32.totalorder %s70, %s71
    %p83 = scmp.eq.s32.totalorder %s19, 1
    %p84 = por %p82, %p83
    %p86 = scmp.ne.s32.totalorder %s71, %s85
    %p87 = scmp.eq.s32.totalorder %s19, 0
    %p88 = por %p86, %p87
    %s90 = sadd.s32 %s89, 1
    %p93 = scmp.eq.s32.totalorder %s13, 1
    %p94 = scmp.ne.s32.totalorder %s89, %s91
    %p95 = scmp.eq.s32.totalorder %s13, 0
    %p96 = por %p94, %p95
    %p97 = scmp.ne.s32.totalorder %s89, %s91
    %p98 = scmp.eq.s32.totalorder %s18, 1
    %p99 = por %p97, %p98
    %p100 = scmp.ne.s32.totalorder %s91, %s92
    %p101 = scmp.eq.s32.totalorder %s18, 0
    %p102 = por %p100, %p101
    %p103 = scmp.ne.s32.totalorder %s91, %s92
    %p104 = scmp.eq.s32.totalorder %s19, 1
    %p105 = por %p103, %p104
    %p107 = scmp.ne.s32.totalorder %s92, %s106
    %p108 = scmp.eq.s32.totalorder %s19, 0
    %p109 = por %p107, %p108
    %s110 = ssub.s32 %s13, %s20
    %p111 = scmp.eq.s32.totalorder %s110, 0
    %s113 = sadd.s32 %s112, 1
    %s114 = scalar_select %p111, %s112, %s113
    %p117 = pneg %p111
    %p118 = scmp.eq.s32.totalorder %s13, 1
    %p119 = por %p117, %p118
    %p120 = scmp.ne.s32.totalorder %s112, %s115
    %p121 = scmp.eq.s32.totalorder %s13, 0
    %p122 = por %p120, %p121
    %p123 = scmp.ne.s32.totalorder %s112, %s115
    %p124 = scmp.eq.s32.totalorder %s18, 1
    %p125 = por %p123, %p124
    %p126 = scmp.ne.s32.totalorder %s115, %s116
    %p127 = scmp.eq.s32.totalorder %s18, 0
    %p128 = por %p126, %p127
    %p129 = scmp.ne.s32.totalorder %s115, %s116
    %p130 = scmp.eq.s32.totalorder %s19, 1
    %p131 = por %p129, %p130
    %p133 = scmp.ne.s32.totalorder %s116, %s132
    %p134 = scmp.eq.s32.totalorder %s19, 0
    %p135 = por %p133, %p134
    %s136 = ssub.s32 %s13, %s20
    %p137 = scmp.eq.s32.totalorder %s136, 0
    %s139 = sadd.s32 %s138, 1
    %s140 = scalar_select %p137, %s138, %s139
    %p143 = pneg %p137
    %p144 = scmp.eq.s32.totalorder %s13, 1
    %p145 = por %p143, %p144
    %p146 = scmp.ne.s32.totalorder %s138, %s141
    %p147 = scmp.eq.s32.totalorder %s13, 0
    %p148 = por %p146, %p147
    %p149 = scmp.ne.s32.totalorder %s138, %s141
    %p150 = scmp.eq.s32.totalorder %s18, 1
    %p151 = por %p149, %p150
    %p152 = scmp.ne.s32.totalorder %s141, %s142
    %p153 = scmp.eq.s32.totalorder %s18, 0
    %p154 = por %p152, %p153
    %p155 = scmp.ne.s32.totalorder %s141, %s142
    %p156 = scmp.eq.s32.totalorder %s19, 1
    %p157 = por %p155, %p156
    %p159 = scmp.ne.s32.totalorder %s142, %s158
    %p160 = scmp.eq.s32.totalorder %s19, 0
    %p161 = por %p159, %p160
    %s162 = ssub.s32 %s13, %s20
    %p163 = scmp.eq.s32.totalorder %s162, 0
    %s165 = sadd.s32 %s164, 1
    %s166 = scalar_select %p163, %s164, %s165
    %p169 = pneg %p163
    %p170 = scmp.eq.s32.totalorder %s13, 1
    %p171 = por %p169, %p170
    %p172 = scmp.ne.s32.totalorder %s164, %s167
    %p173 = scmp.eq.s32.totalorder %s13, 0
    %p174 = por %p172, %p173
    %p175 = scmp.ne.s32.totalorder %s164, %s167
    %p176 = scmp.eq.s32.totalorder %s18, 1
    %p177 = por %p175, %p176
    %p178 = scmp.ne.s32.totalorder %s167, %s168
    %p179 = scmp.eq.s32.totalorder %s18, 0
    %p180 = por %p178, %p179
    %p181 = scmp.ne.s32.totalorder %s167, %s168
    %p182 = scmp.eq.s32.totalorder %s19, 1
    %p183 = por %p181, %p182
    %p185 = scmp.ne.s32.totalorder %s168, %s184
    %p186 = scmp.eq.s32.totalorder %s19, 0
    %p187 = por %p185, %p186
    %p188 = scmp.le.s32.totalorder 1, %s13
    %p189 = scmp.lt.s32.totalorder %s13, 3
    %p190 = pnand %p188, %p189
    %p191 = pneg %p190
    // Predicated region
    $region9: #{_basic_block_forward.4} parent=5 // pred_check
      _
    $region10: #{_basic_block_forward.4} parent=5 // pred_check_branch
      %193 = sbr.rel (%p190) target = $region12
    $region11: #{_basic_block_forward.4} parent=5 // pred_region
      %s194 = ssub.s32 %s13, 1
      // Predicated region
      $region13: #{_basic_block_forward.4} parent=11 // pred_check
        %p195 = pneg %p60
      $region14: #{_basic_block_forward.4} parent=11 // pred_check_branch
        %197 = sbr.rel (%p195) target = $region16
      $region15: #{_basic_block_forward.4} parent=11 // pred_region
        _
      $region16: #{_basic_block_forward.4} parent=11 // pred_fallthru
        _
      // Predicated region
      $region17: #{_basic_block_forward.4} parent=11 // pred_check
        %p198 = pneg %p81
      $region18: #{_basic_block_forward.4} parent=11 // pred_check_branch
        %200 = sbr.rel (%p198) target = $region20
      $region19: #{_basic_block_forward.4} parent=11 // pred_region
        _
      $region20: #{_basic_block_forward.4} parent=11 // pred_fallthru
        _
      // Predicated region
      $region21: #{_basic_block_forward.4} parent=11 // pred_check
        %p201 = pneg %p102
      $region22: #{_basic_block_forward.4} parent=11 // pred_check_branch
        %203 = sbr.rel (%p201) target = $region24
      $region23: #{_basic_block_forward.4} parent=11 // pred_region
        _
      $region24: #{_basic_block_forward.4} parent=11 // pred_fallthru
        _
    $region12: #{_basic_block_forward.4} parent=5 // pred_fallthru
      _
    %p204 = scmp.lt.s32.totalorder %s13, 2
    // Predicated region
    $region25: #{_basic_block_forward.4} parent=5 // pred_check
      %p205 = pneg %p204
    $region26: #{_basic_block_forward.4} parent=5 // pred_check_branch
      %207 = sbr.rel (%p205) target = $region28
    $region27: #{_basic_block_forward.4} parent=5 // pred_region
      // Predicated region
      $region29: #{_basic_block_forward.4} parent=27 // pred_check
        %p208 = pneg %p33
      $region30: #{_basic_block_forward.4} parent=27 // pred_check_branch
        %210 = sbr.rel (%p208) target = $region32
      $region31: #{_basic_block_forward.4} parent=27 // pred_region
        %p211 = scmp.lt.s32.totalorder %s13, 1
        %s212 = scalar_select %p211, %s13, 1
        %s213 = smul.addr %s212, 32
        %s214 = smul.addr %s213, 8
        %s215 = scalar_lea.vmem %s0, %s214
      $region32: #{_basic_block_forward.4} parent=27 // pred_fallthru
        _
    $region28: #{_basic_block_forward.4} parent=5 // pred_fallthru
      _
    %p216 = scmp.le.s32.totalorder 1, %s13
    %p217 = scmp.lt.s32.totalorder %s13, 3
    %p218 = pnand %p216, %p217
    %p219 = pneg %p218
    // Predicated region
    $region33: #{_basic_block_forward.4} parent=5 // pred_check
      _
    $region34: #{_basic_block_forward.4} parent=5 // pred_check_branch
      %221 = sbr.rel (%p218) target = $region36
    $region35: #{_basic_block_forward.4} parent=5 // pred_region
      %s222 = ssub.s32 %s13, 1
      %p223 = scmp.lt.s32.totalorder %s18, 1
      %s224 = scalar_select %p223, %s18, 1
      %s225 = smul.addr %s224, 32
      %s226 = smul.addr %s225, 8
      %s227 = scalar_lea.vmem %s0, %s226
      %p228 = pneg %p39
      %p229 = pneg %p36
      %p230 = pneg %p60
      %p231 = pneg %p57
      %p232 = pneg %p81
      %p233 = pneg %p78
      %p234 = pneg %p102
      %p235 = pneg %p99
      %p236 = pneg %p128
      %p237 = pneg %p125
      %p238 = scmp.lt.s32.totalorder %s18, 1
      %s239 = scalar_select %p238, %s18, 1
      %s240 = smul.addr %s239, 32
      %s241 = smul.addr %s240, 8
      %s242 = scalar_lea.vmem %s4, %s241
      %p243 = pneg %p154
      %p244 = pneg %p151
      %p245 = scmp.lt.s32.totalorder %s18, 1
      %s246 = scalar_select %p245, %s18, 1
      %s247 = scalar_lea.vmem %s5, %s246
      %p248 = pneg %p180
      %p249 = pneg %p177
      %p250 = scmp.lt.s32.totalorder %s18, 1
      %s251 = scalar_select %p250, %s18, 1
      %s252 = scalar_lea.vmem %s6, %s251
      %p253 = scmp.lt.s32.totalorder %s18, 1
      %s254 = scalar_select %p253, %s18, 1
      %s255 = smul.addr %s254, 32
      %s256 = smul.addr %s255, 8
      %s257 = scalar_lea.vmem %s0, %s256
      %p258 = scmp.lt.s32.totalorder %s18, 1
      %s259 = scalar_select %p258, %s18, 1
      %s260 = smul.addr %s259, 32
      %s261 = smul.addr %s260, 8
      %s262 = scalar_lea.vmem %s4, %s261
      %p263 = scmp.lt.s32.totalorder %s18, 1
      %s264 = scalar_select %p263, %s18, 1
      %s265 = scalar_lea.vmem %s5, %s264
      %p266 = scmp.lt.s32.totalorder %s18, 1
      %s267 = scalar_select %p266, %s18, 1
      %s268 = scalar_lea.vmem %s6, %s267
      %v270 = vld [vmem:[%s257] sm:$0xff]
      %v271 = vld [vmem:[%s257 + $0x8] sm:$0xff]
      %v272 = vld [vmem:[%s257 + $0x10] sm:$0xff]
      %v273 = vld [vmem:[%s257 + $0x18] sm:$0xff]
      %v274 = vld [vmem:[%s257 + $0x20] sm:$0xff]
      %v275 = vld [vmem:[%s257 + $0x28] sm:$0xff]
      %v276 = vld [vmem:[%s257 + $0x30] sm:$0xff]
      %v277 = vld [vmem:[%s257 + $0x38] sm:$0xff]
      %v278 = vld [vmem:[%s257 + $0x40] sm:$0xff]
      %v279 = vld [vmem:[%s257 + $0x48] sm:$0xff]
      %v280 = vld [vmem:[%s257 + $0x50] sm:$0xff]
      %v281 = vld [vmem:[%s257 + $0x58] sm:$0xff]
      %v282 = vld [vmem:[%s257 + $0x60] sm:$0xff]
      %v283 = vld [vmem:[%s257 + $0x68] sm:$0xff]
      %v284 = vld [vmem:[%s257 + $0x70] sm:$0xff]
      %v285 = vld [vmem:[%s257 + $0x78] sm:$0xff]
      %v286 = vld [vmem:[%s257 + $0x80] sm:$0xff]
      %v287 = vld [vmem:[%s257 + $0x88] sm:$0xff]
      %v288 = vld [vmem:[%s257 + $0x90] sm:$0xff]
      %v289 = vld [vmem:[%s257 + $0x98] sm:$0xff]
      %v290 = vld [vmem:[%s257 + $0xa0] sm:$0xff]
      %v291 = vld [vmem:[%s257 + $0xa8] sm:$0xff]
      %v292 = vld [vmem:[%s257 + $0xb0] sm:$0xff]
      %v293 = vld [vmem:[%s257 + $0xb8] sm:$0xff]
      %v294 = vld [vmem:[%s257 + $0xc0] sm:$0xff]
      %v295 = vld [vmem:[%s257 + $0xc8] sm:$0xff]
      %v296 = vld [vmem:[%s257 + $0xd0] sm:$0xff]
      %v297 = vld [vmem:[%s257 + $0xd8] sm:$0xff]
      %v298 = vld [vmem:[%s257 + $0xe0] sm:$0xff]
      %v299 = vld [vmem:[%s257 + $0xe8] sm:$0xff]
      %v300 = vld [vmem:[%s257 + $0xf0] sm:$0xff]
      %v301 = vld [vmem:[%s257 + $0xf8] sm:$0xff]
      %v302 = vld [vmem:[%s1] sm:$0x1]
      %v304 = vlaneseq
      %v305 = vshrl.u32 %v304, 7
      %v306 = vsub.s32 0, %v305
      %v307 = vrot.slane %v302, %v306
      %v309 = vmul.f32 %v270, %v307
      %v310 = vmul.f32 %v271, %v307
      %v311 = vmul.f32 %v272, %v307
      %v312 = vmul.f32 %v273, %v307
      %v313 = vmul.f32 %v274, %v307
      %v314 = vmul.f32 %v275, %v307
      %v315 = vmul.f32 %v276, %v307
      %v316 = vmul.f32 %v277, %v307
      %v317 = vmul.f32 %v278, %v307
      %v318 = vmul.f32 %v279, %v307
      %v319 = vmul.f32 %v280, %v307
      %v320 = vmul.f32 %v281, %v307
      %v321 = vmul.f32 %v282, %v307
      %v322 = vmul.f32 %v283, %v307
      %v323 = vmul.f32 %v284, %v307
      %v324 = vmul.f32 %v285, %v307
      %v325 = vmul.f32 %v286, %v307
      %v326 = vmul.f32 %v287, %v307
      %v327 = vmul.f32 %v288, %v307
      %v328 = vmul.f32 %v289, %v307
      %v329 = vmul.f32 %v290, %v307
      %v330 = vmul.f32 %v291, %v307
      %v331 = vmul.f32 %v292, %v307
      %v332 = vmul.f32 %v293, %v307
      %v333 = vmul.f32 %v294, %v307
      %v334 = vmul.f32 %v295, %v307
      %v335 = vmul.f32 %v296, %v307
      %v336 = vmul.f32 %v297, %v307
      %v337 = vmul.f32 %v298, %v307
      %v338 = vmul.f32 %v299, %v307
      %v339 = vmul.f32 %v300, %v307
      %v340 = vmul.f32 %v301, %v307
      %v341 = vld [vmem:[%s2] sm:$0x1]
      %v343 = vlaneseq
      %v344 = vshrl.u32 %v343, 7
      %v345 = vsub.s32 0, %v344
      %v346 = vrot.slane %v341, %v345
      %v348 = vadd.f32 %v309, %v346
      %v349 = vadd.f32 %v310, %v346
      %v350 = vadd.f32 %v311, %v346
      %v351 = vadd.f32 %v312, %v346
      %v352 = vadd.f32 %v313, %v346
      %v353 = vadd.f32 %v314, %v346
      %v354 = vadd.f32 %v315, %v346
      %v355 = vadd.f32 %v316, %v346
      %v356 = vadd.f32 %v317, %v346
      %v357 = vadd.f32 %v318, %v346
      %v358 = vadd.f32 %v319, %v346
      %v359 = vadd.f32 %v320, %v346
      %v360 = vadd.f32 %v321, %v346
      %v361 = vadd.f32 %v322, %v346
      %v362 = vadd.f32 %v323, %v346
      %v363 = vadd.f32 %v324, %v346
      %v364 = vadd.f32 %v325, %v346
      %v365 = vadd.f32 %v326, %v346
      %v366 = vadd.f32 %v327, %v346
      %v367 = vadd.f32 %v328, %v346
      %v368 = vadd.f32 %v329, %v346
      %v369 = vadd.f32 %v330, %v346
      %v370 = vadd.f32 %v331, %v346
      %v371 = vadd.f32 %v332, %v346
      %v372 = vadd.f32 %v333, %v346
      %v373 = vadd.f32 %v334, %v346
      %v374 = vadd.f32 %v335, %v346
      %v375 = vadd.f32 %v336, %v346
      %v376 = vadd.f32 %v337, %v346
      %v377 = vadd.f32 %v338, %v346
      %v378 = vadd.f32 %v339, %v346
      %v379 = vadd.f32 %v340, %v346
      %v380 = vmax.f32 %v348, 0.0
      %v381 = vmax.f32 %v349, 0.0
      %v382 = vmax.f32 %v350, 0.0
      %v383 = vmax.f32 %v351, 0.0
      %v384 = vmax.f32 %v352, 0.0
      %v385 = vmax.f32 %v353, 0.0
      %v386 = vmax.f32 %v354, 0.0
      %v387 = vmax.f32 %v355, 0.0
      %v388 = vmax.f32 %v356, 0.0
      %v389 = vmax.f32 %v357, 0.0
      %v390 = vmax.f32 %v358, 0.0
      %v391 = vmax.f32 %v359, 0.0
      %v392 = vmax.f32 %v360, 0.0
      %v393 = vmax.f32 %v361, 0.0
      %v394 = vmax.f32 %v362, 0.0
      %v395 = vmax.f32 %v363, 0.0
      %v396 = vmax.f32 %v364, 0.0
      %v397 = vmax.f32 %v365, 0.0
      %v398 = vmax.f32 %v366, 0.0
      %v399 = vmax.f32 %v367, 0.0
      %v400 = vmax.f32 %v368, 0.0
      %v401 = vmax.f32 %v369, 0.0
      %v402 = vmax.f32 %v370, 0.0
      %v403 = vmax.f32 %v371, 0.0
      %v404 = vmax.f32 %v372, 0.0
      %v405 = vmax.f32 %v373, 0.0
      %v406 = vmax.f32 %v374, 0.0
      %v407 = vmax.f32 %v375, 0.0
      %v408 = vmax.f32 %v376, 0.0
      %v409 = vmax.f32 %v377, 0.0
      %v410 = vmax.f32 %v378, 0.0
      %v411 = vmax.f32 %v379, 0.0
      %412 = vst [vmem:[#allocation2] sm:$0xff] 0.0
      %413 = vst [vmem:[#allocation2 + $0x8] sm:$0xff] 0.0
      %414 = vst [vmem:[#allocation2 + $0x10] sm:$0x3] 0.0
      %415 = vst [vmem:[#allocation2 + $0x18] sm:$0xff] 0.0
      %416 = vst [vmem:[#allocation2 + $0x20] sm:$0xff] 0.0
      %417 = vst [vmem:[#allocation2 + $0x28] sm:$0x3] 0.0
      %418 = vst [vmem:[#allocation2 + $0x30] sm:$0xff] 0.0
      %419 = vst [vmem:[#allocation2 + $0x38] sm:$0xff] 0.0
      %420 = vst [vmem:[#allocation2 + $0x40] sm:$0x3] 0.0
      %421 = vst [vmem:[#allocation2 + $0x48] sm:$0xff] 0.0
      %422 = vst [vmem:[#allocation2 + $0x50] sm:$0xff] 0.0
      %423 = vst [vmem:[#allocation2 + $0x58] sm:$0x3] 0.0
      %424 = vst [vmem:[#allocation2 + $0x60] sm:$0xff] 0.0
      %425 = vst [vmem:[#allocation2 + $0x68] sm:$0xff] 0.0
      %426 = vst [vmem:[#allocation2 + $0x70] sm:$0x3] 0.0
      %427 = vst [vmem:[#allocation2 + $0x78] sm:$0xff] 0.0
      %428 = vst [vmem:[#allocation2 + $0x80] sm:$0xff] 0.0
      %429 = vst [vmem:[#allocation2 + $0x88] sm:$0x3] 0.0
      %430 = vst [vmem:[#allocation2 + $0x90] sm:$0xff] 0.0
      %431 = vst [vmem:[#allocation2 + $0x98] sm:$0xff] 0.0
      %432 = vst [vmem:[#allocation2 + $0xa0] sm:$0x3] 0.0
      %433 = vst [vmem:[#allocation2 + $0xa8] sm:$0xff] 0.0
      %434 = vst [vmem:[#allocation2 + $0xb0] sm:$0xff] 0.0
      %435 = vst [vmem:[#allocation2 + $0xb8] sm:$0x3] 0.0
      %436 = vst [vmem:[#allocation2 + $0xc0] sm:$0xff] 0.0
      %437 = vst [vmem:[#allocation2 + $0xc8] sm:$0xff] 0.0
      %438 = vst [vmem:[#allocation2 + $0xd0] sm:$0x3] 0.0
      %439 = vst [vmem:[#allocation2 + $0xd8] sm:$0xff] 0.0
      %440 = vst [vmem:[#allocation2 + $0xe0] sm:$0xff] 0.0
      %441 = vst [vmem:[#allocation2 + $0xe8] sm:$0x3] 0.0
      %442 = vst [vmem:[#allocation2 + $0xf0] sm:$0xff] 0.0
      %443 = vst [vmem:[#allocation2 + $0xf8] sm:$0xff] 0.0
      %444 = vst [vmem:[#allocation2 + $0x100] sm:$0x3] 0.0
      %445 = vst [vmem:[#allocation2 + $0x108] sm:$0xff] 0.0
      %446 = vst [vmem:[#allocation2 + $0x110] sm:$0xff] 0.0
      %447 = vst [vmem:[#allocation2 + $0x118] sm:$0x3] 0.0
      %448 = vst [vmem:[#allocation2 + $0x120] sm:$0xff] 0.0
      %449 = vst [vmem:[#allocation2 + $0x128] sm:$0xff] 0.0
      %450 = vst [vmem:[#allocation2 + $0x130] sm:$0x3] 0.0
      %451 = vst [vmem:[#allocation2 + $0x138] sm:$0xff] 0.0
      %452 = vst [vmem:[#allocation2 + $0x140] sm:$0xff] 0.0
      %453 = vst [vmem:[#allocation2 + $0x148] sm:$0x3] 0.0
      %454 = vst [vmem:[#allocation2 + $0x150] sm:$0xff] 0.0
      %455 = vst [vmem:[#allocation2 + $0x158] sm:$0xff] 0.0
      %456 = vst [vmem:[#allocation2 + $0x160] sm:$0x3] 0.0
      %457 = vst [vmem:[#allocation2 + $0x168] sm:$0xff] 0.0
      %458 = vst [vmem:[#allocation2 + $0x170] sm:$0xff] 0.0
      %459 = vst [vmem:[#allocation2 + $0x178] sm:$0x3] 0.0
      %460 = vst [vmem:[#allocation2 + $0x180] sm:$0xff] 0.0
      %461 = vst [vmem:[#allocation2 + $0x188] sm:$0xff] 0.0
      %462 = vst [vmem:[#allocation2 + $0x190] sm:$0x3] 0.0
      %463 = vst [vmem:[#allocation2 + $0x198] sm:$0xff] 0.0
      %464 = vst [vmem:[#allocation2 + $0x1a0] sm:$0xff] 0.0
      %465 = vst [vmem:[#allocation2 + $0x1a8] sm:$0x3] 0.0
      %s466 = scalar_lea.vmem [#allocation2], 24
      %467 = vst [vmem:[%s466 + $0x1] sm:$0xff] %v380
      %468 = vst [vmem:[%s466 + $0x9] sm:$0xff] %v381
      %469 = vst [vmem:[%s466 + $0x19] sm:$0xff] %v382
      %470 = vst [vmem:[%s466 + $0x21] sm:$0xff] %v383
      %471 = vst [vmem:[%s466 + $0x31] sm:$0xff] %v384
      %472 = vst [vmem:[%s466 + $0x39] sm:$0xff] %v385
      %473 = vst [vmem:[%s466 + $0x49] sm:$0xff] %v386
      %474 = vst [vmem:[%s466 + $0x51] sm:$0xff] %v387
      %475 = vst [vmem:[%s466 + $0x61] sm:$0xff] %v388
      %476 = vst [vmem:[%s466 + $0x69] sm:$0xff] %v389
      %477 = vst [vmem:[%s466 + $0x79] sm:$0xff] %v390
      %478 = vst [vmem:[%s466 + $0x81] sm:$0xff] %v391
      %479 = vst [vmem:[%s466 + $0x91] sm:$0xff] %v392
      %480 = vst [vmem:[%s466 + $0x99] sm:$0xff] %v393
      %481 = vst [vmem:[%s466 + $0xa9] sm:$0xff] %v394
      %482 = vst [vmem:[%s466 + $0xb1] sm:$0xff] %v395
      %483 = vst [vmem:[%s466 + $0xc1] sm:$0xff] %v396
      %484 = vst [vmem:[%s466 + $0xc9] sm:$0xff] %v397
      %485 = vst [vmem:[%s466 + $0xd9] sm:$0xff] %v398
      %486 = vst [vmem:[%s466 + $0xe1] sm:$0xff] %v399
      %487 = vst [vmem:[%s466 + $0xf1] sm:$0xff] %v400
      %488 = vst [vmem:[%s466 + $0xf9] sm:$0xff] %v401
      %489 = vst [vmem:[%s466 + $0x109] sm:$0xff] %v402
      %490 = vst [vmem:[%s466 + $0x111] sm:$0xff] %v403
      %491 = vst [vmem:[%s466 + $0x121] sm:$0xff] %v404
      %492 = vst [vmem:[%s466 + $0x129] sm:$0xff] %v405
      %493 = vst [vmem:[%s466 + $0x139] sm:$0xff] %v406
      %494 = vst [vmem:[%s466 + $0x141] sm:$0xff] %v407
      %495 = vst [vmem:[%s466 + $0x151] sm:$0xff] %v408
      %496 = vst [vmem:[%s466 + $0x159] sm:$0xff] %v409
      %497 = vst [vmem:[%s466 + $0x169] sm:$0xff] %v410
      %498 = vst [vmem:[%s466 + $0x171] sm:$0xff] %v411
      %v499 = vld [vmem:[#allocation2] sm:$0xff]
      %v500 = vld [vmem:[#allocation2 + $0x8] sm:$0xff]
      %v501 = vld [vmem:[#allocation2 + $0x10] sm:$0x3]
      %v502 = vld [vmem:[#allocation2 + $0x18] sm:$0xff]
      %v503 = vld [vmem:[#allocation2 + $0x20] sm:$0xff]
      %v504 = vld [vmem:[#allocation2 + $0x28] sm:$0x3]
      %v505 = vld [vmem:[#allocation2 + $0x30] sm:$0xff]
      %v506 = vld [vmem:[#allocation2 + $0x38] sm:$0xff]
      %v507 = vld [vmem:[#allocation2 + $0x40] sm:$0x3]
      %v508 = vld [vmem:[#allocation2 + $0x48] sm:$0xff]
      %v509 = vld [vmem:[#allocation2 + $0x50] sm:$0xff]
      %v510 = vld [vmem:[#allocation2 + $0x58] sm:$0x3]
      %v511 = vld [vmem:[#allocation2 + $0x60] sm:$0xff]
      %v512 = vld [vmem:[#allocation2 + $0x68] sm:$0xff]
      %v513 = vld [vmem:[#allocation2 + $0x70] sm:$0x3]
      %v514 = vld [vmem:[#allocation2 + $0x78] sm:$0xff]
      %v515 = vld [vmem:[#allocation2 + $0x80] sm:$0xff]
      %v516 = vld [vmem:[#allocation2 + $0x88] sm:$0x3]
      %v517 = vld [vmem:[#allocation2 + $0x90] sm:$0xff]
      %v518 = vld [vmem:[#allocation2 + $0x98] sm:$0xff]
      %v519 = vld [vmem:[#allocation2 + $0xa0] sm:$0x3]
      %v520 = vld [vmem:[#allocation2 + $0xa8] sm:$0xff]
      %v521 = vld [vmem:[#allocation2 + $0xb0] sm:$0xff]
      %v522 = vld [vmem:[#allocation2 + $0xb8] sm:$0x3]
      %v523 = vld [vmem:[#allocation2 + $0xc0] sm:$0xff]
      %v524 = vld [vmem:[#allocation2 + $0xc8] sm:$0xff]
      %v525 = vld [vmem:[#allocation2 + $0xd0] sm:$0x3]
      %v526 = vld [vmem:[#allocation2 + $0xd8] sm:$0xff]
      %v527 = vld [vmem:[#allocation2 + $0xe0] sm:$0xff]
      %v528 = vld [vmem:[#allocation2 + $0xe8] sm:$0x3]
      %v529 = vld [vmem:[#allocation2 + $0xf0] sm:$0xff]
      %v530 = vld [vmem:[#allocation2 + $0xf8] sm:$0xff]
      %v531 = vld [vmem:[#allocation2 + $0x100] sm:$0x3]
      %v532 = vld [vmem:[#allocation2 + $0x108] sm:$0xff]
      %v533 = vld [vmem:[#allocation2 + $0x110] sm:$0xff]
      %v534 = vld [vmem:[#allocation2 + $0x118] sm:$0x3]
      %v535 = vld [vmem:[#allocation2 + $0x120] sm:$0xff]
      %v536 = vld [vmem:[#allocation2 + $0x128] sm:$0xff]
      %v537 = vld [vmem:[#allocation2 + $0x130] sm:$0x3]
      %v538 = vld [vmem:[#allocation2 + $0x138] sm:$0xff]
      %v539 = vld [vmem:[#allocation2 + $0x140] sm:$0xff]
      %v540 = vld [vmem:[#allocation2 + $0x148] sm:$0x3]
      %v541 = vld [vmem:[#allocation2 + $0x150] sm:$0xff]
      %v542 = vld [vmem:[#allocation2 + $0x158] sm:$0xff]
      %v543 = vld [vmem:[#allocation2 + $0x160] sm:$0x3]
      %v544 = vld [vmem:[#allocation2 + $0x168] sm:$0xff]
      %v545 = vld [vmem:[#allocation2 + $0x170] sm:$0xff]
      %v546 = vld [vmem:[#allocation2 + $0x178] sm:$0x3]
      %v547 = vld [vmem:[#allocation2 + $0x180] sm:$0xff]
      %v548 = vld [vmem:[#allocation2 + $0x188] sm:$0xff]
      %v549 = vld [vmem:[#allocation2 + $0x190] sm:$0x3]
      %v550 = vld [vmem:[#allocation2 + $0x198] sm:$0xff]
      %v551 = vld [vmem:[#allocation2 + $0x1a0] sm:$0xff]
      %v552 = vld [vmem:[#allocation2 + $0x1a8] sm:$0x3]
      %v553 = vpack.c.bf16 %v500, %v499
      %v554 = vpack.c.bf16 %v503, %v502
      %v555 = vpack.c.bf16 %v506, %v505
      %v556 = vpack.c.bf16 %v509, %v508
      %v557 = vpack.c.bf16 %v512, %v511
      %v558 = vpack.c.bf16 %v515, %v514
      %v559 = vpack.c.bf16 %v518, %v517
      %v560 = vpack.c.bf16 %v521, %v520
      %v561 = vpack.c.bf16 %v524, %v523
      %v562 = vpack.c.bf16 %v527, %v526
      %v563 = vpack.c.bf16 %v530, %v529
      %v564 = vpack.c.bf16 %v533, %v532
      %v565 = vpack.c.bf16 %v536, %v535
      %v566 = vpack.c.bf16 %v539, %v538
      %v567 = vpack.c.bf16 %v542, %v541
      %v568 = vpack.c.bf16 %v545, %v544
      %v585 = vunpack.c.l.b16 %v553
      %v586 = vunpack.c.h.b16 %v553
      %v587 = vunpack.c.l.b16 %v554
      %v588 = vunpack.c.h.b16 %v554
      %v589 = vunpack.c.l.b16 %v555
      %v590 = vunpack.c.h.b16 %v555
      %v591 = vunpack.c.l.b16 %v556
      %v592 = vunpack.c.h.b16 %v556
      %v593 = vunpack.c.l.b16 %v557
      %v594 = vunpack.c.h.b16 %v557
      %v595 = vunpack.c.l.b16 %v558
      %v596 = vunpack.c.h.b16 %v558
      %v597 = vunpack.c.l.b16 %v559
      %v598 = vunpack.c.h.b16 %v559
      %v599 = vunpack.c.l.b16 %v560
      %v600 = vunpack.c.h.b16 %v560
      %v601 = vunpack.c.l.b16 %v561
      %v602 = vunpack.c.h.b16 %v561
      %v603 = vunpack.c.l.b16 %v562
      %v604 = vunpack.c.h.b16 %v562
      %v605 = vunpack.c.l.b16 %v563
      %v606 = vunpack.c.h.b16 %v563
      %v607 = vunpack.c.l.b16 %v564
      %v608 = vunpack.c.h.b16 %v564
      %v609 = vunpack.c.l.b16 %v565
      %v610 = vunpack.c.h.b16 %v565
      %v611 = vunpack.c.l.b16 %v566
      %v612 = vunpack.c.h.b16 %v566
      %v613 = vunpack.c.l.b16 %v567
      %v614 = vunpack.c.h.b16 %v567
      %v615 = vunpack.c.l.b16 %v568
      %v616 = vunpack.c.h.b16 %v568
      %v617 = vpack.c.b16 %v585, %v585
      %v618 = vpack.c.b16 %v586, %v586
      %v619 = vpack.c.b16 %v587, %v587
      %v620 = vpack.c.b16 %v588, %v588
      %v621 = vpack.c.b16 %v589, %v589
      %v622 = vpack.c.b16 %v590, %v590
      %v623 = vpack.c.b16 %v591, %v591
      %v624 = vpack.c.b16 %v592, %v592
      %v625 = vpack.c.b16 %v593, %v593
      %v626 = vpack.c.b16 %v594, %v594
      %v627 = vpack.c.b16 %v595, %v595
      %v628 = vpack.c.b16 %v596, %v596
      %v629 = vpack.c.b16 %v597, %v597
      %v630 = vpack.c.b16 %v598, %v598
      %v631 = vpack.c.b16 %v599, %v599
      %v632 = vpack.c.b16 %v600, %v600
      %v633 = vpack.c.b16 %v601, %v601
      %v634 = vpack.c.b16 %v602, %v602
      %v635 = vpack.c.b16 %v603, %v603
      %v636 = vpack.c.b16 %v604, %v604
      %v637 = vpack.c.b16 %v605, %v605
      %v638 = vpack.c.b16 %v606, %v606
      %v639 = vpack.c.b16 %v607, %v607
      %v640 = vpack.c.b16 %v608, %v608
      %v641 = vpack.c.b16 %v609, %v609
      %v642 = vpack.c.b16 %v610, %v610
      %v643 = vpack.c.b16 %v611, %v611
      %v644 = vpack.c.b16 %v612, %v612
      %v645 = vpack.c.b16 %v613, %v613
      %v646 = vpack.c.b16 %v614, %v614
      %v647 = vpack.c.b16 %v615, %v615
      %v648 = vpack.c.b16 %v616, %v616
      %681 = vst [vmem:[#allocation3] sm:$0xf] %v617
      %682 = vst [vmem:[#allocation3 + $0x24] sm:$0xf] %v618
      %683 = vst [vmem:[#allocation3 + $0x48] sm:$0xf] %v619
      %684 = vst [vmem:[#allocation3 + $0x6c] sm:$0xf] %v620
      %685 = vst [vmem:[#allocation3 + $0x90] sm:$0xf] %v621
      %686 = vst [vmem:[#allocation3 + $0xb4] sm:$0xf] %v622
      %687 = vst [vmem:[#allocation3 + $0xd8] sm:$0xf] %v623
      %688 = vst [vmem:[#allocation3 + $0xfc] sm:$0xf] %v624
      %689 = vst [vmem:[#allocation3 + $0x120] sm:$0xf] %v625
      %690 = vst [vmem:[#allocation3 + $0x144] sm:$0xf] %v626
      %691 = vst [vmem:[#allocation3 + $0x168] sm:$0xf] %v627
      %692 = vst [vmem:[#allocation3 + $0x18c] sm:$0xf] %v628
      %693 = vst [vmem:[#allocation3 + $0x1b0] sm:$0xf] %v629
      %694 = vst [vmem:[#allocation3 + $0x1d4] sm:$0xf] %v630
      %695 = vst [vmem:[#allocation3 + $0x1f8] sm:$0xf] %v631
      %696 = vst [vmem:[#allocation3 + $0x21c] sm:$0xf] %v632
      %697 = vst [vmem:[#allocation3 + $0x240] sm:$0xf] %v633
      %698 = vst [vmem:[#allocation3 + $0x264] sm:$0xf] %v634
      %699 = vst [vmem:[#allocation3 + $0x288] sm:$0xf] %v635
      %700 = vst [vmem:[#allocation3 + $0x2ac] sm:$0xf] %v636
      %701 = vst [vmem:[#allocation3 + $0x2d0] sm:$0xf] %v637
      %702 = vst [vmem:[#allocation3 + $0x2f4] sm:$0xf] %v638
      %703 = vst [vmem:[#allocation3 + $0x318] sm:$0xf] %v639
      %704 = vst [vmem:[#allocation3 + $0x33c] sm:$0xf] %v640
      %705 = vst [vmem:[#allocation3 + $0x360] sm:$0xf] %v641
      %706 = vst [vmem:[#allocation3 + $0x384] sm:$0xf] %v642
      %707 = vst [vmem:[#allocation3 + $0x3a8] sm:$0xf] %v643
      %708 = vst [vmem:[#allocation3 + $0x3cc] sm:$0xf] %v644
      %709 = vst [vmem:[#allocation3 + $0x3f0] sm:$0xf] %v645
      %710 = vst [vmem:[#allocation3 + $0x414] sm:$0xf] %v646
      %711 = vst [vmem:[#allocation3 + $0x438] sm:$0xf] %v647
      %712 = vst [vmem:[#allocation3 + $0x45c] sm:$0xf] %v648
      %vm761 = vcmask 1046528
      %v762 = vrot.slane %v499, 1
      %v763 = vrot.slane %v500, 1
      %v764 = vsel %vm761, %v762, %v763
      %v765 = vrot.slane %v501, 1
      %v766 = vsel %vm761, %v763, %v765
      %v767 = vrot.slane %v502, 1
      %v768 = vrot.slane %v503, 1
      %v769 = vsel %vm761, %v767, %v768
      %v770 = vrot.slane %v504, 1
      %v771 = vsel %vm761, %v768, %v770
      %v772 = vrot.slane %v505, 1
      %v773 = vrot.slane %v506, 1
      %v774 = vsel %vm761, %v772, %v773
      %v775 = vrot.slane %v507, 1
      %v776 = vsel %vm761, %v773, %v775
      %v777 = vrot.slane %v508, 1
      %v778 = vrot.slane %v509, 1
      %v779 = vsel %vm761, %v777, %v778
      %v780 = vrot.slane %v510, 1
      %v781 = vsel %vm761, %v778, %v780
      %v782 = vrot.slane %v511, 1
      %v783 = vrot.slane %v512, 1
      %v784 = vsel %vm761, %v782, %v783
      %v785 = vrot.slane %v513, 1
      %v786 = vsel %vm761, %v783, %v785
      %v787 = vrot.slane %v514, 1
      %v788 = vrot.slane %v515, 1
      %v789 = vsel %vm761, %v787, %v788
      %v790 = vrot.slane %v516, 1
      %v791 = vsel %vm761, %v788, %v790
      %v792 = vrot.slane %v517, 1
      %v793 = vrot.slane %v518, 1
      %v794 = vsel %vm761, %v792, %v793
      %v795 = vrot.slane %v519, 1
      %v796 = vsel %vm761, %v793, %v795
      %v797 = vrot.slane %v520, 1
      %v798 = vrot.slane %v521, 1
      %v799 = vsel %vm761, %v797, %v798
      %v800 = vrot.slane %v522, 1
      %v801 = vsel %vm761, %v798, %v800
      %v802 = vrot.slane %v523, 1
      %v803 = vrot.slane %v524, 1
      %v804 = vsel %vm761, %v802, %v803
      %v805 = vrot.slane %v525, 1
      %v806 = vsel %vm761, %v803, %v805
      %v807 = vrot.slane %v526, 1
      %v808 = vrot.slane %v527, 1
      %v809 = vsel %vm761, %v807, %v808
      %v810 = vrot.slane %v528, 1
      %v811 = vsel %vm761, %v808, %v810
      %v812 = vrot.slane %v529, 1
      %v813 = vrot.slane %v530, 1
      %v814 = vsel %vm761, %v812, %v813
      %v815 = vrot.slane %v531, 1
      %v816 = vsel %vm761, %v813, %v815
      %v817 = vrot.slane %v532, 1
      %v818 = vrot.slane %v533, 1
      %v819 = vsel %vm761, %v817, %v818
      %v820 = vrot.slane %v534, 1
      %v821 = vsel %vm761, %v818, %v820
      %v822 = vrot.slane %v535, 1
      %v823 = vrot.slane %v536, 1
      %v824 = vsel %vm761, %v822, %v823
      %v825 = vrot.slane %v537, 1
      %v826 = vsel %vm761, %v823, %v825
      %v827 = vrot.slane %v538, 1
      %v828 = vrot.slane %v539, 1
      %v829 = vsel %vm761, %v827, %v828
      %v830 = vrot.slane %v540, 1
      %v831 = vsel %vm761, %v828, %v830
      %v832 = vrot.slane %v541, 1
      %v833 = vrot.slane %v542, 1
      %v834 = vsel %vm761, %v832, %v833
      %v835 = vrot.slane %v543, 1
      %v836 = vsel %vm761, %v833, %v835
      %v837 = vrot.slane %v544, 1
      %v838 = vrot.slane %v545, 1
      %v839 = vsel %vm761, %v837, %v838
      %v840 = vrot.slane %v546, 1
      %v841 = vsel %vm761, %v838, %v840
      %v874 = vpack.c.bf16 %v766, %v764
      %v875 = vpack.c.bf16 %v771, %v769
      %v876 = vpack.c.bf16 %v776, %v774
      %v877 = vpack.c.bf16 %v781, %v779
      %v878 = vpack.c.bf16 %v786, %v784
      %v879 = vpack.c.bf16 %v791, %v789
      %v880 = vpack.c.bf16 %v796, %v794
      %v881 = vpack.c.bf16 %v801, %v799
      %v882 = vpack.c.bf16 %v806, %v804
      %v883 = vpack.c.bf16 %v811, %v809
      %v884 = vpack.c.bf16 %v816, %v814
      %v885 = vpack.c.bf16 %v821, %v819
      %v886 = vpack.c.bf16 %v826, %v824
      %v887 = vpack.c.bf16 %v831, %v829
      %v888 = vpack.c.bf16 %v836, %v834
      %v889 = vpack.c.bf16 %v841, %v839
      %v906 = vunpack.c.l.b16 %v874
      %v907 = vunpack.c.h.b16 %v874
      %v908 = vunpack.c.l.b16 %v875
      %v909 = vunpack.c.h.b16 %v875
      %v910 = vunpack.c.l.b16 %v876
      %v911 = vunpack.c.h.b16 %v876
      %v912 = vunpack.c.l.b16 %v877
      %v913 = vunpack.c.h.b16 %v877
      %v914 = vunpack.c.l.b16 %v878
      %v915 = vunpack.c.h.b16 %v878
      %v916 = vunpack.c.l.b16 %v879
      %v917 = vunpack.c.h.b16 %v879
      %v918 = vunpack.c.l.b16 %v880
      %v919 = vunpack.c.h.b16 %v880
      %v920 = vunpack.c.l.b16 %v881
      %v921 = vunpack.c.h.b16 %v881
      %v922 = vunpack.c.l.b16 %v882
      %v923 = vunpack.c.h.b16 %v882
      %v924 = vunpack.c.l.b16 %v883
      %v925 = vunpack.c.h.b16 %v883
      %v926 = vunpack.c.l.b16 %v884
      %v927 = vunpack.c.h.b16 %v884
      %v928 = vunpack.c.l.b16 %v885
      %v929 = vunpack.c.h.b16 %v885
      %v930 = vunpack.c.l.b16 %v886
      %v931 = vunpack.c.h.b16 %v886
      %v932 = vunpack.c.l.b16 %v887
      %v933 = vunpack.c.h.b16 %v887
      %v934 = vunpack.c.l.b16 %v888
      %v935 = vunpack.c.h.b16 %v888
      %v936 = vunpack.c.l.b16 %v889
      %v937 = vunpack.c.h.b16 %v889
      %v938 = vpack.c.b16 %v906, %v906
      %v939 = vpack.c.b16 %v907, %v907
      %v940 = vpack.c.b16 %v908, %v908
      %v941 = vpack.c.b16 %v909, %v909
      %v942 = vpack.c.b16 %v910, %v910
      %v943 = vpack.c.b16 %v911, %v911
      %v944 = vpack.c.b16 %v912, %v912
      %v945 = vpack.c.b16 %v913, %v913
      %v946 = vpack.c.b16 %v914, %v914
      %v947 = vpack.c.b16 %v915, %v915
      %v948 = vpack.c.b16 %v916, %v916
      %v949 = vpack.c.b16 %v917, %v917
      %v950 = vpack.c.b16 %v918, %v918
      %v951 = vpack.c.b16 %v919, %v919
      %v952 = vpack.c.b16 %v920, %v920
      %v953 = vpack.c.b16 %v921, %v921
      %v954 = vpack.c.b16 %v922, %v922
      %v955 = vpack.c.b16 %v923, %v923
      %v956 = vpack.c.b16 %v924, %v924
      %v957 = vpack.c.b16 %v925, %v925
      %v958 = vpack.c.b16 %v926, %v926
      %v959 = vpack.c.b16 %v927, %v927
      %v960 = vpack.c.b16 %v928, %v928
      %v961 = vpack.c.b16 %v929, %v929
      %v962 = vpack.c.b16 %v930, %v930
      %v963 = vpack.c.b16 %v931, %v931
      %v964 = vpack.c.b16 %v932, %v932
      %v965 = vpack.c.b16 %v933, %v933
      %v966 = vpack.c.b16 %v934, %v934
      %v967 = vpack.c.b16 %v935, %v935
      %v968 = vpack.c.b16 %v936, %v936
      %v969 = vpack.c.b16 %v937, %v937
      %1002 = vst [vmem:[#allocation3 + $0x4] sm:$0xf] %v938
      %1003 = vst [vmem:[#allocation3 + $0x28] sm:$0xf] %v939
      %1004 = vst [vmem:[#allocation3 + $0x4c] sm:$0xf] %v940
      %1005 = vst [vmem:[#allocation3 + $0x70] sm:$0xf] %v941
      %1006 = vst [vmem:[#allocation3 + $0x94] sm:$0xf] %v942
      %1007 = vst [vmem:[#allocation3 + $0xb8] sm:$0xf] %v943
      %1008 = vst [vmem:[#allocation3 + $0xdc] sm:$0xf] %v944
      %1009 = vst [vmem:[#allocation3 + $0x100] sm:$0xf] %v945
      %1010 = vst [vmem:[#allocation3 + $0x124] sm:$0xf] %v946
      %1011 = vst [vmem:[#allocation3 + $0x148] sm:$0xf] %v947
      %1012 = vst [vmem:[#allocation3 + $0x16c] sm:$0xf] %v948
      %1013 = vst [vmem:[#allocation3 + $0x190] sm:$0xf] %v949
      %1014 = vst [vmem:[#allocation3 + $0x1b4] sm:$0xf] %v950
      %1015 = vst [vmem:[#allocation3 + $0x1d8] sm:$0xf] %v951
      %1016 = vst [vmem:[#allocation3 + $0x1fc] sm:$0xf] %v952
      %1017 = vst [vmem:[#allocation3 + $0x220] sm:$0xf] %v953
      %1018 = vst [vmem:[#allocation3 + $0x244] sm:$0xf] %v954
      %1019 = vst [vmem:[#allocation3 + $0x268] sm:$0xf] %v955
      %1020 = vst [vmem:[#allocation3 + $0x28c] sm:$0xf] %v956
      %1021 = vst [vmem:[#allocation3 + $0x2b0] sm:$0xf] %v957
      %1022 = vst [vmem:[#allocation3 + $0x2d4] sm:$0xf] %v958
      %1023 = vst [vmem:[#allocation3 + $0x2f8] sm:$0xf] %v959
      %1024 = vst [vmem:[#allocation3 + $0x31c] sm:$0xf] %v960
      %1025 = vst [vmem:[#allocation3 + $0x340] sm:$0xf] %v961
      %1026 = vst [vmem:[#allocation3 + $0x364] sm:$0xf] %v962
      %1027 = vst [vmem:[#allocation3 + $0x388] sm:$0xf] %v963
      %1028 = vst [vmem:[#allocation3 + $0x3ac] sm:$0xf] %v964
      %1029 = vst [vmem:[#allocation3 + $0x3d0] sm:$0xf] %v965
      %1030 = vst [vmem:[#allocation3 + $0x3f4] sm:$0xf] %v966
      %1031 = vst [vmem:[#allocation3 + $0x418] sm:$0xf] %v967
      %1032 = vst [vmem:[#allocation3 + $0x43c] sm:$0xf] %v968
      %1033 = vst [vmem:[#allocation3 + $0x460] sm:$0xf] %v969
      %vm1034 = vcmask 1045504
      %v1035 = vrot.slane %v499, 2
      %v1036 = vrot.slane %v500, 2
      %v1037 = vsel %vm1034, %v1035, %v1036
      %v1038 = vrot.slane %v501, 2
      %v1039 = vsel %vm1034, %v1036, %v1038
      %v1040 = vrot.slane %v502, 2
      %v1041 = vrot.slane %v503, 2
      %v1042 = vsel %vm1034, %v1040, %v1041
      %v1043 = vrot.slane %v504, 2
      %v1044 = vsel %vm1034, %v1041, %v1043
      %v1045 = vrot.slane %v505, 2
      %v1046 = vrot.slane %v506, 2
      %v1047 = vsel %vm1034, %v1045, %v1046
      %v1048 = vrot.slane %v507, 2
      %v1049 = vsel %vm1034, %v1046, %v1048
      %v1050 = vrot.slane %v508, 2
      %v1051 = vrot.slane %v509, 2
      %v1052 = vsel %vm1034, %v1050, %v1051
      %v1053 = vrot.slane %v510, 2
      %v1054 = vsel %vm1034, %v1051, %v1053
      %v1055 = vrot.slane %v511, 2
      %v1056 = vrot.slane %v512, 2
      %v1057 = vsel %vm1034, %v1055, %v1056
      %v1058 = vrot.slane %v513, 2
      %v1059 = vsel %vm1034, %v1056, %v1058
      %v1060 = vrot.slane %v514, 2
      %v1061 = vrot.slane %v515, 2
      %v1062 = vsel %vm1034, %v1060, %v1061
      %v1063 = vrot.slane %v516, 2
      %v1064 = vsel %vm1034, %v1061, %v1063
      %v1065 = vrot.slane %v517, 2
      %v1066 = vrot.slane %v518, 2
      %v1067 = vsel %vm1034, %v1065, %v1066
      %v1068 = vrot.slane %v519, 2
      %v1069 = vsel %vm1034, %v1066, %v1068
      %v1070 = vrot.slane %v520, 2
      %v1071 = vrot.slane %v521, 2
      %v1072 = vsel %vm1034, %v1070, %v1071
      %v1073 = vrot.slane %v522, 2
      %v1074 = vsel %vm1034, %v1071, %v1073
      %v1075 = vrot.slane %v523, 2
      %v1076 = vrot.slane %v524, 2
      %v1077 = vsel %vm1034, %v1075, %v1076
      %v1078 = vrot.slane %v525, 2
      %v1079 = vsel %vm1034, %v1076, %v1078
      %v1080 = vrot.slane %v526, 2
      %v1081 = vrot.slane %v527, 2
      %v1082 = vsel %vm1034, %v1080, %v1081
      %v1083 = vrot.slane %v528, 2
      %v1084 = vsel %vm1034, %v1081, %v1083
      %v1085 = vrot.slane %v529, 2
      %v1086 = vrot.slane %v530, 2
      %v1087 = vsel %vm1034, %v1085, %v1086
      %v1088 = vrot.slane %v531, 2
      %v1089 = vsel %vm1034, %v1086, %v1088
      %v1090 = vrot.slane %v532, 2
      %v1091 = vrot.slane %v533, 2
      %v1092 = vsel %vm1034, %v1090, %v1091
      %v1093 = vrot.slane %v534, 2
      %v1094 = vsel %vm1034, %v1091, %v1093
      %v1095 = vrot.slane %v535, 2
      %v1096 = vrot.slane %v536, 2
      %v1097 = vsel %vm1034, %v1095, %v1096
      %v1098 = vrot.slane %v537, 2
      %v1099 = vsel %vm1034, %v1096, %v1098
      %v1100 = vrot.slane %v538, 2
      %v1101 = vrot.slane %v539, 2
      %v1102 = vsel %vm1034, %v1100, %v1101
      %v1103 = vrot.slane %v540, 2
      %v1104 = vsel %vm1034, %v1101, %v1103
      %v1105 = vrot.slane %v541, 2
      %v1106 = vrot.slane %v542, 2
      %v1107 = vsel %vm1034, %v1105, %v1106
      %v1108 = vrot.slane %v543, 2
      %v1109 = vsel %vm1034, %v1106, %v1108
      %v1110 = vrot.slane %v544, 2
      %v1111 = vrot.slane %v545, 2
      %v1112 = vsel %vm1034, %v1110, %v1111
      %v1113 = vrot.slane %v546, 2
      %v1114 = vsel %vm1034, %v1111, %v1113
      %v1147 = vpack.c.bf16 %v1039, %v1037
      %v1148 = vpack.c.bf16 %v1044, %v1042
      %v1149 = vpack.c.bf16 %v1049, %v1047
      %v1150 = vpack.c.bf16 %v1054, %v1052
      %v1151 = vpack.c.bf16 %v1059, %v1057
      %v1152 = vpack.c.bf16 %v1064, %v1062
      %v1153 = vpack.c.bf16 %v1069, %v1067
      %v1154 = vpack.c.bf16 %v1074, %v1072
      %v1155 = vpack.c.bf16 %v1079, %v1077
      %v1156 = vpack.c.bf16 %v1084, %v1082
      %v1157 = vpack.c.bf16 %v1089, %v1087
      %v1158 = vpack.c.bf16 %v1094, %v1092
      %v1159 = vpack.c.bf16 %v1099, %v1097
      %v1160 = vpack.c.bf16 %v1104, %v1102
      %v1161 = vpack.c.bf16 %v1109, %v1107
      %v1162 = vpack.c.bf16 %v1114, %v1112
      %v1179 = vunpack.c.l.b16 %v1147
      %v1180 = vunpack.c.h.b16 %v1147
      %v1181 = vunpack.c.l.b16 %v1148
      %v1182 = vunpack.c.h.b16 %v1148
      %v1183 = vunpack.c.l.b16 %v1149
      %v1184 = vunpack.c.h.b16 %v1149
      %v1185 = vunpack.c.l.b16 %v1150
      %v1186 = vunpack.c.h.b16 %v1150
      %v1187 = vunpack.c.l.b16 %v1151
      %v1188 = vunpack.c.h.b16 %v1151
      %v1189 = vunpack.c.l.b16 %v1152
      %v1190 = vunpack.c.h.b16 %v1152
      %v1191 = vunpack.c.l.b16 %v1153
      %v1192 = vunpack.c.h.b16 %v1153
      %v1193 = vunpack.c.l.b16 %v1154
      %v1194 = vunpack.c.h.b16 %v1154
      %v1195 = vunpack.c.l.b16 %v1155
      %v1196 = vunpack.c.h.b16 %v1155
      %v1197 = vunpack.c.l.b16 %v1156
      %v1198 = vunpack.c.h.b16 %v1156
      %v1199 = vunpack.c.l.b16 %v1157
      %v1200 = vunpack.c.h.b16 %v1157
      %v1201 = vunpack.c.l.b16 %v1158
      %v1202 = vunpack.c.h.b16 %v1158
      %v1203 = vunpack.c.l.b16 %v1159
      %v1204 = vunpack.c.h.b16 %v1159
      %v1205 = vunpack.c.l.b16 %v1160
      %v1206 = vunpack.c.h.b16 %v1160
      %v1207 = vunpack.c.l.b16 %v1161
      %v1208 = vunpack.c.h.b16 %v1161
      %v1209 = vunpack.c.l.b16 %v1162
      %v1210 = vunpack.c.h.b16 %v1162
      %v1211 = vpack.c.b16 %v1179, %v1179
      %v1212 = vpack.c.b16 %v1180, %v1180
      %v1213 = vpack.c.b16 %v1181, %v1181
      %v1214 = vpack.c.b16 %v1182, %v1182
      %v1215 = vpack.c.b16 %v1183, %v1183
      %v1216 = vpack.c.b16 %v1184, %v1184
      %v1217 = vpack.c.b16 %v1185, %v1185
      %v1218 = vpack.c.b16 %v1186, %v1186
      %v1219 = vpack.c.b16 %v1187, %v1187
      %v1220 = vpack.c.b16 %v1188, %v1188
      %v1221 = vpack.c.b16 %v1189, %v1189
      %v1222 = vpack.c.b16 %v1190, %v1190
      %v1223 = vpack.c.b16 %v1191, %v1191
      %v1224 = vpack.c.b16 %v1192, %v1192
      %v1225 = vpack.c.b16 %v1193, %v1193
      %v1226 = vpack.c.b16 %v1194, %v1194
      %v1227 = vpack.c.b16 %v1195, %v1195
      %v1228 = vpack.c.b16 %v1196, %v1196
      %v1229 = vpack.c.b16 %v1197, %v1197
      %v1230 = vpack.c.b16 %v1198, %v1198
      %v1231 = vpack.c.b16 %v1199, %v1199
      %v1232 = vpack.c.b16 %v1200, %v1200
      %v1233 = vpack.c.b16 %v1201, %v1201
      %v1234 = vpack.c.b16 %v1202, %v1202
      %v1235 = vpack.c.b16 %v1203, %v1203
      %v1236 = vpack.c.b16 %v1204, %v1204
      %v1237 = vpack.c.b16 %v1205, %v1205
      %v1238 = vpack.c.b16 %v1206, %v1206
      %v1239 = vpack.c.b16 %v1207, %v1207
      %v1240 = vpack.c.b16 %v1208, %v1208
      %v1241 = vpack.c.b16 %v1209, %v1209
      %v1242 = vpack.c.b16 %v1210, %v1210
      %1275 = vst [vmem:[#allocation3 + $0x8] sm:$0xf] %v1211
      %1276 = vst [vmem:[#allocation3 + $0x2c] sm:$0xf] %v1212
      %1277 = vst [vmem:[#allocation3 + $0x50] sm:$0xf] %v1213
      %1278 = vst [vmem:[#allocation3 + $0x74] sm:$0xf] %v1214
      %1279 = vst [vmem:[#allocation3 + $0x98] sm:$0xf] %v1215
      %1280 = vst [vmem:[#allocation3 + $0xbc] sm:$0xf] %v1216
      %1281 = vst [vmem:[#allocation3 + $0xe0] sm:$0xf] %v1217
      %1282 = vst [vmem:[#allocation3 + $0x104] sm:$0xf] %v1218
      %1283 = vst [vmem:[#allocation3 + $0x128] sm:$0xf] %v1219
      %1284 = vst [vmem:[#allocation3 + $0x14c] sm:$0xf] %v1220
      %1285 = vst [vmem:[#allocation3 + $0x170] sm:$0xf] %v1221
      %1286 = vst [vmem:[#allocation3 + $0x194] sm:$0xf] %v1222
      %1287 = vst [vmem:[#allocation3 + $0x1b8] sm:$0xf] %v1223
      %1288 = vst [vmem:[#allocation3 + $0x1dc] sm:$0xf] %v1224
      %1289 = vst [vmem:[#allocation3 + $0x200] sm:$0xf] %v1225
      %1290 = vst [vmem:[#allocation3 + $0x224] sm:$0xf] %v1226
      %1291 = vst [vmem:[#allocation3 + $0x248] sm:$0xf] %v1227
      %1292 = vst [vmem:[#allocation3 + $0x26c] sm:$0xf] %v1228
      %1293 = vst [vmem:[#allocation3 + $0x290] sm:$0xf] %v1229
      %1294 = vst [vmem:[#allocation3 + $0x2b4] sm:$0xf] %v1230
      %1295 = vst [vmem:[#allocation3 + $0x2d8] sm:$0xf] %v1231
      %1296 = vst [vmem:[#allocation3 + $0x2fc] sm:$0xf] %v1232
      %1297 = vst [vmem:[#allocation3 + $0x320] sm:$0xf] %v1233
      %1298 = vst [vmem:[#allocation3 + $0x344] sm:$0xf] %v1234
      %1299 = vst [vmem:[#allocation3 + $0x368] sm:$0xf] %v1235
      %1300 = vst [vmem:[#allocation3 + $0x38c] sm:$0xf] %v1236
      %1301 = vst [vmem:[#allocation3 + $0x3b0] sm:$0xf] %v1237
      %1302 = vst [vmem:[#allocation3 + $0x3d4] sm:$0xf] %v1238
      %1303 = vst [vmem:[#allocation3 + $0x3f8] sm:$0xf] %v1239
      %1304 = vst [vmem:[#allocation3 + $0x41c] sm:$0xf] %v1240
      %1305 = vst [vmem:[#allocation3 + $0x440] sm:$0xf] %v1241
      %1306 = vst [vmem:[#allocation3 + $0x464] sm:$0xf] %v1242
      %v1307 = vpack.c.bf16 %v548, %v547
      %v1309 = vunpack.c.l.b16 %v1307
      %v1310 = vunpack.c.h.b16 %v1307
      %v1311 = vpack.c.b16 %v1309, %v1309
      %v1312 = vpack.c.b16 %v1310, %v1310
      %1315 = vst [vmem:[#allocation3 + $0xc] sm:$0xf] %v619
      %1316 = vst [vmem:[#allocation3 + $0x30] sm:$0xf] %v620
      %1317 = vst [vmem:[#allocation3 + $0x54] sm:$0xf] %v621
      %1318 = vst [vmem:[#allocation3 + $0x78] sm:$0xf] %v622
      %1319 = vst [vmem:[#allocation3 + $0x9c] sm:$0xf] %v623
      %1320 = vst [vmem:[#allocation3 + $0xc0] sm:$0xf] %v624
      %1321 = vst [vmem:[#allocation3 + $0xe4] sm:$0xf] %v625
      %1322 = vst [vmem:[#allocation3 + $0x108] sm:$0xf] %v626
      %1323 = vst [vmem:[#allocation3 + $0x12c] sm:$0xf] %v627
      %1324 = vst [vmem:[#allocation3 + $0x150] sm:$0xf] %v628
      %1325 = vst [vmem:[#allocation3 + $0x174] sm:$0xf] %v629
      %1326 = vst [vmem:[#allocation3 + $0x198] sm:$0xf] %v630
      %1327 = vst [vmem:[#allocation3 + $0x1bc] sm:$0xf] %v631
      %1328 = vst [vmem:[#allocation3 + $0x1e0] sm:$0xf] %v632
      %1329 = vst [vmem:[#allocation3 + $0x204] sm:$0xf] %v633
      %1330 = vst [vmem:[#allocation3 + $0x228] sm:$0xf] %v634
      %1331 = vst [vmem:[#allocation3 + $0x24c] sm:$0xf] %v635
      %1332 = vst [vmem:[#allocation3 + $0x270] sm:$0xf] %v636
      %1333 = vst [vmem:[#allocation3 + $0x294] sm:$0xf] %v637
      %1334 = vst [vmem:[#allocation3 + $0x2b8] sm:$0xf] %v638
      %1335 = vst [vmem:[#allocation3 + $0x2dc] sm:$0xf] %v639
      %1336 = vst [vmem:[#allocation3 + $0x300] sm:$0xf] %v640
      %1337 = vst [vmem:[#allocation3 + $0x324] sm:$0xf] %v641
      %1338 = vst [vmem:[#allocation3 + $0x348] sm:$0xf] %v642
      %1339 = vst [vmem:[#allocation3 + $0x36c] sm:$0xf] %v643
      %1340 = vst [vmem:[#allocation3 + $0x390] sm:$0xf] %v644
      %1341 = vst [vmem:[#allocation3 + $0x3b4] sm:$0xf] %v645
      %1342 = vst [vmem:[#allocation3 + $0x3d8] sm:$0xf] %v646
      %1343 = vst [vmem:[#allocation3 + $0x3fc] sm:$0xf] %v647
      %1344 = vst [vmem:[#allocation3 + $0x420] sm:$0xf] %v648
      %1345 = vst [vmem:[#allocation3 + $0x444] sm:$0xf] %v1311
      %1346 = vst [vmem:[#allocation3 + $0x468] sm:$0xf] %v1312
      %v1350 = vrot.slane %v547, 1
      %v1351 = vrot.slane %v548, 1
      %v1352 = vsel %vm761, %v1350, %v1351
      %v1353 = vrot.slane %v549, 1
      %v1354 = vsel %vm761, %v1351, %v1353
      %v1357 = vpack.c.bf16 %v1354, %v1352
      %v1359 = vunpack.c.l.b16 %v1357
      %v1360 = vunpack.c.h.b16 %v1357
      %v1361 = vpack.c.b16 %v1359, %v1359
      %v1362 = vpack.c.b16 %v1360, %v1360
      %1365 = vst [vmem:[#allocation3 + $0x10] sm:$0xf] %v940
      %1366 = vst [vmem:[#allocation3 + $0x34] sm:$0xf] %v941
      %1367 = vst [vmem:[#allocation3 + $0x58] sm:$0xf] %v942
      %1368 = vst [vmem:[#allocation3 + $0x7c] sm:$0xf] %v943
      %1369 = vst [vmem:[#allocation3 + $0xa0] sm:$0xf] %v944
      %1370 = vst [vmem:[#allocation3 + $0xc4] sm:$0xf] %v945
      %1371 = vst [vmem:[#allocation3 + $0xe8] sm:$0xf] %v946
      %1372 = vst [vmem:[#allocation3 + $0x10c] sm:$0xf] %v947
      %1373 = vst [vmem:[#allocation3 + $0x130] sm:$0xf] %v948
      %1374 = vst [vmem:[#allocation3 + $0x154] sm:$0xf] %v949
      %1375 = vst [vmem:[#allocation3 + $0x178] sm:$0xf] %v950
      %1376 = vst [vmem:[#allocation3 + $0x19c] sm:$0xf] %v951
      %1377 = vst [vmem:[#allocation3 + $0x1c0] sm:$0xf] %v952
      %1378 = vst [vmem:[#allocation3 + $0x1e4] sm:$0xf] %v953
      %1379 = vst [vmem:[#allocation3 + $0x208] sm:$0xf] %v954
      %1380 = vst [vmem:[#allocation3 + $0x22c] sm:$0xf] %v955
      %1381 = vst [vmem:[#allocation3 + $0x250] sm:$0xf] %v956
      %1382 = vst [vmem:[#allocation3 + $0x274] sm:$0xf] %v957
      %1383 = vst [vmem:[#allocation3 + $0x298] sm:$0xf] %v958
      %1384 = vst [vmem:[#allocation3 + $0x2bc] sm:$0xf] %v959
      %1385 = vst [vmem:[#allocation3 + $0x2e0] sm:$0xf] %v960
      %1386 = vst [vmem:[#allocation3 + $0x304] sm:$0xf] %v961
      %1387 = vst [vmem:[#allocation3 + $0x328] sm:$0xf] %v962
      %1388 = vst [vmem:[#allocation3 + $0x34c] sm:$0xf] %v963
      %1389 = vst [vmem:[#allocation3 + $0x370] sm:$0xf] %v964
      %1390 = vst [vmem:[#allocation3 + $0x394] sm:$0xf] %v965
      %1391 = vst [vmem:[#allocation3 + $0x3b8] sm:$0xf] %v966
      %1392 = vst [vmem:[#allocation3 + $0x3dc] sm:$0xf] %v967
      %1393 = vst [vmem:[#allocation3 + $0x400] sm:$0xf] %v968
      %1394 = vst [vmem:[#allocation3 + $0x424] sm:$0xf] %v969
      %1395 = vst [vmem:[#allocation3 + $0x448] sm:$0xf] %v1361
      %1396 = vst [vmem:[#allocation3 + $0x46c] sm:$0xf] %v1362
      %v1397 = vrot.slane %v547, 2
      %v1398 = vrot.slane %v548, 2
      %v1399 = vsel %vm1034, %v1397, %v1398
      %v1400 = vrot.slane %v549, 2
      %v1401 = vsel %vm1034, %v1398, %v1400
      %v1404 = vpack.c.bf16 %v1401, %v1399
      %v1406 = vunpack.c.l.b16 %v1404
      %v1407 = vunpack.c.h.b16 %v1404
      %v1408 = vpack.c.b16 %v1406, %v1406
      %v1409 = vpack.c.b16 %v1407, %v1407
      %1412 = vst [vmem:[#allocation3 + $0x14] sm:$0xf] %v1213
      %1413 = vst [vmem:[#allocation3 + $0x38] sm:$0xf] %v1214
      %1414 = vst [vmem:[#allocation3 + $0x5c] sm:$0xf] %v1215
      %1415 = vst [vmem:[#allocation3 + $0x80] sm:$0xf] %v1216
      %1416 = vst [vmem:[#allocation3 + $0xa4] sm:$0xf] %v1217
      %1417 = vst [vmem:[#allocation3 + $0xc8] sm:$0xf] %v1218
      %1418 = vst [vmem:[#allocation3 + $0xec] sm:$0xf] %v1219
      %1419 = vst [vmem:[#allocation3 + $0x110] sm:$0xf] %v1220
      %1420 = vst [vmem:[#allocation3 + $0x134] sm:$0xf] %v1221
      %1421 = vst [vmem:[#allocation3 + $0x158] sm:$0xf] %v1222
      %1422 = vst [vmem:[#allocation3 + $0x17c] sm:$0xf] %v1223
      %1423 = vst [vmem:[#allocation3 + $0x1a0] sm:$0xf] %v1224
      %1424 = vst [vmem:[#allocation3 + $0x1c4] sm:$0xf] %v1225
      %1425 = vst [vmem:[#allocation3 + $0x1e8] sm:$0xf] %v1226
      %1426 = vst [vmem:[#allocation3 + $0x20c] sm:$0xf] %v1227
      %1427 = vst [vmem:[#allocation3 + $0x230] sm:$0xf] %v1228
      %1428 = vst [vmem:[#allocation3 + $0x254] sm:$0xf] %v1229
      %1429 = vst [vmem:[#allocation3 + $0x278] sm:$0xf] %v1230
      %1430 = vst [vmem:[#allocation3 + $0x29c] sm:$0xf] %v1231
      %1431 = vst [vmem:[#allocation3 + $0x2c0] sm:$0xf] %v1232
      %1432 = vst [vmem:[#allocation3 + $0x2e4] sm:$0xf] %v1233
      %1433 = vst [vmem:[#allocation3 + $0x308] sm:$0xf] %v1234
      %1434 = vst [vmem:[#allocation3 + $0x32c] sm:$0xf] %v1235
      %1435 = vst [vmem:[#allocation3 + $0x350] sm:$0xf] %v1236
      %1436 = vst [vmem:[#allocation3 + $0x374] sm:$0xf] %v1237
      %1437 = vst [vmem:[#allocation3 + $0x398] sm:$0xf] %v1238
      %1438 = vst [vmem:[#allocation3 + $0x3bc] sm:$0xf] %v1239
      %1439 = vst [vmem:[#allocation3 + $0x3e0] sm:$0xf] %v1240
      %1440 = vst [vmem:[#allocation3 + $0x404] sm:$0xf] %v1241
      %1441 = vst [vmem:[#allocation3 + $0x428] sm:$0xf] %v1242
      %1442 = vst [vmem:[#allocation3 + $0x44c] sm:$0xf] %v1408
      %1443 = vst [vmem:[#allocation3 + $0x470] sm:$0xf] %v1409
      %v1444 = vpack.c.bf16 %v551, %v550
      %v1446 = vunpack.c.l.b16 %v1444
      %v1447 = vunpack.c.h.b16 %v1444
      %v1448 = vpack.c.b16 %v1446, %v1446
      %v1449 = vpack.c.b16 %v1447, %v1447
      %1452 = vst [vmem:[#allocation3 + $0x18] sm:$0xf] %v621
      %1453 = vst [vmem:[#allocation3 + $0x3c] sm:$0xf] %v622
      %1454 = vst [vmem:[#allocation3 + $0x60] sm:$0xf] %v623
      %1455 = vst [vmem:[#allocation3 + $0x84] sm:$0xf] %v624
      %1456 = vst [vmem:[#allocation3 + $0xa8] sm:$0xf] %v625
      %1457 = vst [vmem:[#allocation3 + $0xcc] sm:$0xf] %v626
      %1458 = vst [vmem:[#allocation3 + $0xf0] sm:$0xf] %v627
      %1459 = vst [vmem:[#allocation3 + $0x114] sm:$0xf] %v628
      %1460 = vst [vmem:[#allocation3 + $0x138] sm:$0xf] %v629
      %1461 = vst [vmem:[#allocation3 + $0x15c] sm:$0xf] %v630
      %1462 = vst [vmem:[#allocation3 + $0x180] sm:$0xf] %v631
      %1463 = vst [vmem:[#allocation3 + $0x1a4] sm:$0xf] %v632
      %1464 = vst [vmem:[#allocation3 + $0x1c8] sm:$0xf] %v633
      %1465 = vst [vmem:[#allocation3 + $0x1ec] sm:$0xf] %v634
      %1466 = vst [vmem:[#allocation3 + $0x210] sm:$0xf] %v635
      %1467 = vst [vmem:[#allocation3 + $0x234] sm:$0xf] %v636
      %1468 = vst [vmem:[#allocation3 + $0x258] sm:$0xf] %v637
      %1469 = vst [vmem:[#allocation3 + $0x27c] sm:$0xf] %v638
      %1470 = vst [vmem:[#allocation3 + $0x2a0] sm:$0xf] %v639
      %1471 = vst [vmem:[#allocation3 + $0x2c4] sm:$0xf] %v640
      %1472 = vst [vmem:[#allocation3 + $0x2e8] sm:$0xf] %v641
      %1473 = vst [vmem:[#allocation3 + $0x30c] sm:$0xf] %v642
      %1474 = vst [vmem:[#allocation3 + $0x330] sm:$0xf] %v643
      %1475 = vst [vmem:[#allocation3 + $0x354] sm:$0xf] %v644
      %1476 = vst [vmem:[#allocation3 + $0x378] sm:$0xf] %v645
      %1477 = vst [vmem:[#allocation3 + $0x39c] sm:$0xf] %v646
      %1478 = vst [vmem:[#allocation3 + $0x3c0] sm:$0xf] %v647
      %1479 = vst [vmem:[#allocation3 + $0x3e4] sm:$0xf] %v648
      %1480 = vst [vmem:[#allocation3 + $0x408] sm:$0xf] %v1311
      %1481 = vst [vmem:[#allocation3 + $0x42c] sm:$0xf] %v1312
      %1482 = vst [vmem:[#allocation3 + $0x450] sm:$0xf] %v1448
      %1483 = vst [vmem:[#allocation3 + $0x474] sm:$0xf] %v1449
      %v1487 = vrot.slane %v550, 1
      %v1488 = vrot.slane %v551, 1
      %v1489 = vsel %vm761, %v1487, %v1488
      %v1490 = vrot.slane %v552, 1
      %v1491 = vsel %vm761, %v1488, %v1490
      %v1494 = vpack.c.bf16 %v1491, %v1489
      %v1496 = vunpack.c.l.b16 %v1494
      %v1497 = vunpack.c.h.b16 %v1494
      %v1498 = vpack.c.b16 %v1496, %v1496
      %v1499 = vpack.c.b16 %v1497, %v1497
      %1502 = vst [vmem:[#allocation3 + $0x1c] sm:$0xf] %v942
      %1503 = vst [vmem:[#allocation3 + $0x40] sm:$0xf] %v943
      %1504 = vst [vmem:[#allocation3 + $0x64] sm:$0xf] %v944
      %1505 = vst [vmem:[#allocation3 + $0x88] sm:$0xf] %v945
      %1506 = vst [vmem:[#allocation3 + $0xac] sm:$0xf] %v946
      %1507 = vst [vmem:[#allocation3 + $0xd0] sm:$0xf] %v947
      %1508 = vst [vmem:[#allocation3 + $0xf4] sm:$0xf] %v948
      %1509 = vst [vmem:[#allocation3 + $0x118] sm:$0xf] %v949
      %1510 = vst [vmem:[#allocation3 + $0x13c] sm:$0xf] %v950
      %1511 = vst [vmem:[#allocation3 + $0x160] sm:$0xf] %v951
      %1512 = vst [vmem:[#allocation3 + $0x184] sm:$0xf] %v952
      %1513 = vst [vmem:[#allocation3 + $0x1a8] sm:$0xf] %v953
      %1514 = vst [vmem:[#allocation3 + $0x1cc] sm:$0xf] %v954
      %1515 = vst [vmem:[#allocation3 + $0x1f0] sm:$0xf] %v955
      %1516 = vst [vmem:[#allocation3 + $0x214] sm:$0xf] %v956
      %1517 = vst [vmem:[#allocation3 + $0x238] sm:$0xf] %v957
      %1518 = vst [vmem:[#allocation3 + $0x25c] sm:$0xf] %v958
      %1519 = vst [vmem:[#allocation3 + $0x280] sm:$0xf] %v959
      %1520 = vst [vmem:[#allocation3 + $0x2a4] sm:$0xf] %v960
      %1521 = vst [vmem:[#allocation3 + $0x2c8] sm:$0xf] %v961
      %1522 = vst [vmem:[#allocation3 + $0x2ec] sm:$0xf] %v962
      %1523 = vst [vmem:[#allocation3 + $0x310] sm:$0xf] %v963
      %1524 = vst [vmem:[#allocation3 + $0x334] sm:$0xf] %v964
      %1525 = vst [vmem:[#allocation3 + $0x358] sm:$0xf] %v965
      %1526 = vst [vmem:[#allocation3 + $0x37c] sm:$0xf] %v966
      %1527 = vst [vmem:[#allocation3 + $0x3a0] sm:$0xf] %v967
      %1528 = vst [vmem:[#allocation3 + $0x3c4] sm:$0xf] %v968
      %1529 = vst [vmem:[#allocation3 + $0x3e8] sm:$0xf] %v969
      %1530 = vst [vmem:[#allocation3 + $0x40c] sm:$0xf] %v1361
      %1531 = vst [vmem:[#allocation3 + $0x430] sm:$0xf] %v1362
      %1532 = vst [vmem:[#allocation3 + $0x454] sm:$0xf] %v1498
      %1533 = vst [vmem:[#allocation3 + $0x478] sm:$0xf] %v1499
      %v1534 = vrot.slane %v550, 2
      %v1535 = vrot.slane %v551, 2
      %v1536 = vsel %vm1034, %v1534, %v1535
      %v1537 = vrot.slane %v552, 2
      %v1538 = vsel %vm1034, %v1535, %v1537
      %v1541 = vpack.c.bf16 %v1538, %v1536
      %v1543 = vunpack.c.l.b16 %v1541
      %v1544 = vunpack.c.h.b16 %v1541
      %v1545 = vpack.c.b16 %v1543, %v1543
      %v1546 = vpack.c.b16 %v1544, %v1544
      %1549 = vst [vmem:[#allocation3 + $0x20] sm:$0xf] %v1215
      %1550 = vst [vmem:[#allocation3 + $0x44] sm:$0xf] %v1216
      %1551 = vst [vmem:[#allocation3 + $0x68] sm:$0xf] %v1217
      %1552 = vst [vmem:[#allocation3 + $0x8c] sm:$0xf] %v1218
      %1553 = vst [vmem:[#allocation3 + $0xb0] sm:$0xf] %v1219
      %1554 = vst [vmem:[#allocation3 + $0xd4] sm:$0xf] %v1220
      %1555 = vst [vmem:[#allocation3 + $0xf8] sm:$0xf] %v1221
      %1556 = vst [vmem:[#allocation3 + $0x11c] sm:$0xf] %v1222
      %1557 = vst [vmem:[#allocation3 + $0x140] sm:$0xf] %v1223
      %1558 = vst [vmem:[#allocation3 + $0x164] sm:$0xf] %v1224
      %1559 = vst [vmem:[#allocation3 + $0x188] sm:$0xf] %v1225
      %1560 = vst [vmem:[#allocation3 + $0x1ac] sm:$0xf] %v1226
      %1561 = vst [vmem:[#allocation3 + $0x1d0] sm:$0xf] %v1227
      %1562 = vst [vmem:[#allocation3 + $0x1f4] sm:$0xf] %v1228
      %1563 = vst [vmem:[#allocation3 + $0x218] sm:$0xf] %v1229
      %1564 = vst [vmem:[#allocation3 + $0x23c] sm:$0xf] %v1230
      %1565 = vst [vmem:[#allocation3 + $0x260] sm:$0xf] %v1231
      %1566 = vst [vmem:[#allocation3 + $0x284] sm:$0xf] %v1232
      %1567 = vst [vmem:[#allocation3 + $0x2a8] sm:$0xf] %v1233
      %1568 = vst [vmem:[#allocation3 + $0x2cc] sm:$0xf] %v1234
      %1569 = vst [vmem:[#allocation3 + $0x2f0] sm:$0xf] %v1235
      %1570 = vst [vmem:[#allocation3 + $0x314] sm:$0xf] %v1236
      %1571 = vst [vmem:[#allocation3 + $0x338] sm:$0xf] %v1237
      %1572 = vst [vmem:[#allocation3 + $0x35c] sm:$0xf] %v1238
      %1573 = vst [vmem:[#allocation3 + $0x380] sm:$0xf] %v1239
      %1574 = vst [vmem:[#allocation3 + $0x3a4] sm:$0xf] %v1240
      %1575 = vst [vmem:[#allocation3 + $0x3c8] sm:$0xf] %v1241
      %1576 = vst [vmem:[#allocation3 + $0x3ec] sm:$0xf] %v1242
      %1577 = vst [vmem:[#allocation3 + $0x410] sm:$0xf] %v1408
      %1578 = vst [vmem:[#allocation3 + $0x434] sm:$0xf] %v1409
      %1579 = vst [vmem:[#allocation3 + $0x458] sm:$0xf] %v1545
      %1580 = vst [vmem:[#allocation3 + $0x47c] sm:$0xf] %v1546
      %v1581 = vld [vmem:[#allocation3] sm:$0xff]
      %v1582 = vld [vmem:[#allocation3 + $0x8] sm:$0xff]
      %v1583 = vld [vmem:[#allocation3 + $0x10] sm:$0xff]
      %v1584 = vld [vmem:[#allocation3 + $0x18] sm:$0xff]
      %v1585 = vld [vmem:[#allocation3 + $0x20] sm:$0xf]
      %v1586 = vld [vmem:[#allocation3 + $0x24] sm:$0xff]
      %v1587 = vld [vmem:[#allocation3 + $0x2c] sm:$0xff]
      %v1588 = vld [vmem:[#allocation3 + $0x34] sm:$0xff]
      %v1589 = vld [vmem:[#allocation3 + $0x3c] sm:$0xff]
      %v1590 = vld [vmem:[#allocation3 + $0x44] sm:$0xf]
      %v1591 = vld [vmem:[#allocation3 + $0x48] sm:$0xff]
      %v1592 = vld [vmem:[#allocation3 + $0x50] sm:$0xff]
      %v1593 = vld [vmem:[#allocation3 + $0x58] sm:$0xff]
      %v1594 = vld [vmem:[#allocation3 + $0x60] sm:$0xff]
      %v1595 = vld [vmem:[#allocation3 + $0x68] sm:$0xf]
      %v1596 = vld [vmem:[#allocation3 + $0x6c] sm:$0xff]
      %v1597 = vld [vmem:[#allocation3 + $0x74] sm:$0xff]
      %v1598 = vld [vmem:[#allocation3 + $0x7c] sm:$0xff]
      %v1599 = vld [vmem:[#allocation3 + $0x84] sm:$0xff]
      %v1600 = vld [vmem:[#allocation3 + $0x8c] sm:$0xf]
      %v1601 = vld [vmem:[#allocation3 + $0x90] sm:$0xff]
      %v1602 = vld [vmem:[#allocation3 + $0x98] sm:$0xff]
      %v1603 = vld [vmem:[#allocation3 + $0xa0] sm:$0xff]
      %v1604 = vld [vmem:[#allocation3 + $0xa8] sm:$0xff]
      %v1605 = vld [vmem:[#allocation3 + $0xb0] sm:$0xf]
      %v1606 = vld [vmem:[#allocation3 + $0xb4] sm:$0xff]
      %v1607 = vld [vmem:[#allocation3 + $0xbc] sm:$0xff]
      %v1608 = vld [vmem:[#allocation3 + $0xc4] sm:$0xff]
      %v1609 = vld [vmem:[#allocation3 + $0xcc] sm:$0xff]
      %v1610 = vld [vmem:[#allocation3 + $0xd4] sm:$0xf]
      %v1611 = vld [vmem:[#allocation3 + $0xd8] sm:$0xff]
      %v1612 = vld [vmem:[#allocation3 + $0xe0] sm:$0xff]
      %v1613 = vld [vmem:[#allocation3 + $0xe8] sm:$0xff]
      %v1614 = vld [vmem:[#allocation3 + $0xf0] sm:$0xff]
      %v1615 = vld [vmem:[#allocation3 + $0xf8] sm:$0xf]
      %v1616 = vld [vmem:[#allocation3 + $0xfc] sm:$0xff]
      %v1617 = vld [vmem:[#allocation3 + $0x104] sm:$0xff]
      %v1618 = vld [vmem:[#allocation3 + $0x10c] sm:$0xff]
      %v1619 = vld [vmem:[#allocation3 + $0x114] sm:$0xff]
      %v1620 = vld [vmem:[#allocation3 + $0x11c] sm:$0xf]
      %v1621 = vld [vmem:[#allocation3 + $0x120] sm:$0xff]
      %v1622 = vld [vmem:[#allocation3 + $0x128] sm:$0xff]
      %v1623 = vld [vmem:[#allocation3 + $0x130] sm:$0xff]
      %v1624 = vld [vmem:[#allocation3 + $0x138] sm:$0xff]
      %v1625 = vld [vmem:[#allocation3 + $0x140] sm:$0xf]
      %v1626 = vld [vmem:[#allocation3 + $0x144] sm:$0xff]
      %v1627 = vld [vmem:[#allocation3 + $0x14c] sm:$0xff]
      %v1628 = vld [vmem:[#allocation3 + $0x154] sm:$0xff]
      %v1629 = vld [vmem:[#allocation3 + $0x15c] sm:$0xff]
      %v1630 = vld [vmem:[#allocation3 + $0x164] sm:$0xf]
      %v1631 = vld [vmem:[#allocation3 + $0x168] sm:$0xff]
      %v1632 = vld [vmem:[#allocation3 + $0x170] sm:$0xff]
      %v1633 = vld [vmem:[#allocation3 + $0x178] sm:$0xff]
      %v1634 = vld [vmem:[#allocation3 + $0x180] sm:$0xff]
      %v1635 = vld [vmem:[#allocation3 + $0x188] sm:$0xf]
      %v1636 = vld [vmem:[#allocation3 + $0x18c] sm:$0xff]
      %v1637 = vld [vmem:[#allocation3 + $0x194] sm:$0xff]
      %v1638 = vld [vmem:[#allocation3 + $0x19c] sm:$0xff]
      %v1639 = vld [vmem:[#allocation3 + $0x1a4] sm:$0xff]
      %v1640 = vld [vmem:[#allocation3 + $0x1ac] sm:$0xf]
      %v1641 = vld [vmem:[#allocation3 + $0x1b0] sm:$0xff]
      %v1642 = vld [vmem:[#allocation3 + $0x1b8] sm:$0xff]
      %v1643 = vld [vmem:[#allocation3 + $0x1c0] sm:$0xff]
      %v1644 = vld [vmem:[#allocation3 + $0x1c8] sm:$0xff]
      %v1645 = vld [vmem:[#allocation3 + $0x1d0] sm:$0xf]
      %v1646 = vld [vmem:[#allocation3 + $0x1d4] sm:$0xff]
      %v1647 = vld [vmem:[#allocation3 + $0x1dc] sm:$0xff]
      %v1648 = vld [vmem:[#allocation3 + $0x1e4] sm:$0xff]
      %v1649 = vld [vmem:[#allocation3 + $0x1ec] sm:$0xff]
      %v1650 = vld [vmem:[#allocation3 + $0x1f4] sm:$0xf]
      %v1651 = vld [vmem:[#allocation3 + $0x1f8] sm:$0xff]
      %v1652 = vld [vmem:[#allocation3 + $0x200] sm:$0xff]
      %v1653 = vld [vmem:[#allocation3 + $0x208] sm:$0xff]
      %v1654 = vld [vmem:[#allocation3 + $0x210] sm:$0xff]
      %v1655 = vld [vmem:[#allocation3 + $0x218] sm:$0xf]
      %v1656 = vld [vmem:[#allocation3 + $0x21c] sm:$0xff]
      %v1657 = vld [vmem:[#allocation3 + $0x224] sm:$0xff]
      %v1658 = vld [vmem:[#allocation3 + $0x22c] sm:$0xff]
      %v1659 = vld [vmem:[#allocation3 + $0x234] sm:$0xff]
      %v1660 = vld [vmem:[#allocation3 + $0x23c] sm:$0xf]
      %v1661 = vld [vmem:[#allocation3 + $0x240] sm:$0xff]
      %v1662 = vld [vmem:[#allocation3 + $0x248] sm:$0xff]
      %v1663 = vld [vmem:[#allocation3 + $0x250] sm:$0xff]
      %v1664 = vld [vmem:[#allocation3 + $0x258] sm:$0xff]
      %v1665 = vld [vmem:[#allocation3 + $0x260] sm:$0xf]
      %v1666 = vld [vmem:[#allocation3 + $0x264] sm:$0xff]
      %v1667 = vld [vmem:[#allocation3 + $0x26c] sm:$0xff]
      %v1668 = vld [vmem:[#allocation3 + $0x274] sm:$0xff]
      %v1669 = vld [vmem:[#allocation3 + $0x27c] sm:$0xff]
      %v1670 = vld [vmem:[#allocation3 + $0x284] sm:$0xf]
      %v1671 = vld [vmem:[#allocation3 + $0x288] sm:$0xff]
      %v1672 = vld [vmem:[#allocation3 + $0x290] sm:$0xff]
      %v1673 = vld [vmem:[#allocation3 + $0x298] sm:$0xff]
      %v1674 = vld [vmem:[#allocation3 + $0x2a0] sm:$0xff]
      %v1675 = vld [vmem:[#allocation3 + $0x2a8] sm:$0xf]
      %v1676 = vld [vmem:[#allocation3 + $0x2ac] sm:$0xff]
      %v1677 = vld [vmem:[#allocation3 + $0x2b4] sm:$0xff]
      %v1678 = vld [vmem:[#allocation3 + $0x2bc] sm:$0xff]
      %v1679 = vld [vmem:[#allocation3 + $0x2c4] sm:$0xff]
      %v1680 = vld [vmem:[#allocation3 + $0x2cc] sm:$0xf]
      %v1681 = vld [vmem:[#allocation3 + $0x2d0] sm:$0xff]
      %v1682 = vld [vmem:[#allocation3 + $0x2d8] sm:$0xff]
      %v1683 = vld [vmem:[#allocation3 + $0x2e0] sm:$0xff]
      %v1684 = vld [vmem:[#allocation3 + $0x2e8] sm:$0xff]
      %v1685 = vld [vmem:[#allocation3 + $0x2f0] sm:$0xf]
      %v1686 = vld [vmem:[#allocation3 + $0x2f4] sm:$0xff]
      %v1687 = vld [vmem:[#allocation3 + $0x2fc] sm:$0xff]
      %v1688 = vld [vmem:[#allocation3 + $0x304] sm:$0xff]
      %v1689 = vld [vmem:[#allocation3 + $0x30c] sm:$0xff]
      %v1690 = vld [vmem:[#allocation3 + $0x314] sm:$0xf]
      %v1691 = vld [vmem:[#allocation3 + $0x318] sm:$0xff]
      %v1692 = vld [vmem:[#allocation3 + $0x320] sm:$0xff]
      %v1693 = vld [vmem:[#allocation3 + $0x328] sm:$0xff]
      %v1694 = vld [vmem:[#allocation3 + $0x330] sm:$0xff]
      %v1695 = vld [vmem:[#allocation3 + $0x338] sm:$0xf]
      %v1696 = vld [vmem:[#allocation3 + $0x33c] sm:$0xff]
      %v1697 = vld [vmem:[#allocation3 + $0x344] sm:$0xff]
      %v1698 = vld [vmem:[#allocation3 + $0x34c] sm:$0xff]
      %v1699 = vld [vmem:[#allocation3 + $0x354] sm:$0xff]
      %v1700 = vld [vmem:[#allocation3 + $0x35c] sm:$0xf]
      %v1701 = vld [vmem:[#allocation3 + $0x360] sm:$0xff]
      %v1702 = vld [vmem:[#allocation3 + $0x368] sm:$0xff]
      %v1703 = vld [vmem:[#allocation3 + $0x370] sm:$0xff]
      %v1704 = vld [vmem:[#allocation3 + $0x378] sm:$0xff]
      %v1705 = vld [vmem:[#allocation3 + $0x380] sm:$0xf]
      %v1706 = vld [vmem:[#allocation3 + $0x384] sm:$0xff]
      %v1707 = vld [vmem:[#allocation3 + $0x38c] sm:$0xff]
      %v1708 = vld [vmem:[#allocation3 + $0x394] sm:$0xff]
      %v1709 = vld [vmem:[#allocation3 + $0x39c] sm:$0xff]
      %v1710 = vld [vmem:[#allocation3 + $0x3a4] sm:$0xf]
      %v1711 = vld [vmem:[#allocation3 + $0x3a8] sm:$0xff]
      %v1712 = vld [vmem:[#allocation3 + $0x3b0] sm:$0xff]
      %v1713 = vld [vmem:[#allocation3 + $0x3b8] sm:$0xff]
      %v1714 = vld [vmem:[#allocation3 + $0x3c0] sm:$0xff]
      %v1715 = vld [vmem:[#allocation3 + $0x3c8] sm:$0xf]
      %v1716 = vld [vmem:[#allocation3 + $0x3cc] sm:$0xff]
      %v1717 = vld [vmem:[#allocation3 + $0x3d4] sm:$0xff]
      %v1718 = vld [vmem:[#allocation3 + $0x3dc] sm:$0xff]
      %v1719 = vld [vmem:[#allocation3 + $0x3e4] sm:$0xff]
      %v1720 = vld [vmem:[#allocation3 + $0x3ec] sm:$0xf]
      %v1721 = vld [vmem:[#allocation3 + $0x3f0] sm:$0xff]
      %v1722 = vld [vmem:[#allocation3 + $0x3f8] sm:$0xff]
      %v1723 = vld [vmem:[#allocation3 + $0x400] sm:$0xff]
      %v1724 = vld [vmem:[#allocation3 + $0x408] sm:$0xff]
      %v1725 = vld [vmem:[#allocation3 + $0x410] sm:$0xf]
      %v1726 = vld [vmem:[#allocation3 + $0x414] sm:$0xff]
      %v1727 = vld [vmem:[#allocation3 + $0x41c] sm:$0xff]
      %v1728 = vld [vmem:[#allocation3 + $0x424] sm:$0xff]
      %v1729 = vld [vmem:[#allocation3 + $0x42c] sm:$0xff]
      %v1730 = vld [vmem:[#allocation3 + $0x434] sm:$0xf]
      %v1731 = vld [vmem:[#allocation3 + $0x438] sm:$0xff]
      %v1732 = vld [vmem:[#allocation3 + $0x440] sm:$0xff]
      %v1733 = vld [vmem:[#allocation3 + $0x448] sm:$0xff]
      %v1734 = vld [vmem:[#allocation3 + $0x450] sm:$0xff]
      %v1735 = vld [vmem:[#allocation3 + $0x458] sm:$0xf]
      %v1736 = vld [vmem:[#allocation3 + $0x45c] sm:$0xff]
      %v1737 = vld [vmem:[#allocation3 + $0x464] sm:$0xff]
      %v1738 = vld [vmem:[#allocation3 + $0x46c] sm:$0xff]
      %v1739 = vld [vmem:[#allocation3 + $0x474] sm:$0xff]
      %v1740 = vld [vmem:[#allocation3 + $0x47c] sm:$0xf]
      %v1741 = vld [vmem:[%s3] sm:$0xf]
      %v1742 = vld [vmem:[%s3 + $0x4] sm:$0xf]
      %v1743 = vld [vmem:[%s3 + $0x8] sm:$0xf]
      %v1744 = vld [vmem:[%s3 + $0xc] sm:$0xf]
      %v1745 = vld [vmem:[%s3 + $0x10] sm:$0xf]
      %v1746 = vld [vmem:[%s3 + $0x14] sm:$0xf]
      %v1747 = vld [vmem:[%s3 + $0x18] sm:$0xf]
      %v1748 = vld [vmem:[%s3 + $0x1c] sm:$0xf]
      %v1749 = vld [vmem:[%s3 + $0x20] sm:$0xf]
      %v1750 = vld [vmem:[%s3 + $0x24] sm:$0xf]
      %v1751 = vld [vmem:[%s3 + $0x28] sm:$0xf]
      %v1752 = vld [vmem:[%s3 + $0x2c] sm:$0xf]
      %v1753 = vld [vmem:[%s3 + $0x30] sm:$0xf]
      %v1754 = vld [vmem:[%s3 + $0x34] sm:$0xf]
      %v1755 = vld [vmem:[%s3 + $0x38] sm:$0xf]
      %v1756 = vld [vmem:[%s3 + $0x3c] sm:$0xf]
      %v1757 = vld [vmem:[%s3 + $0x40] sm:$0xf]
      %v1758 = vld [vmem:[%s3 + $0x44] sm:$0xf]
      %v1759 = vld [vmem:[%s3 + $0x48] sm:$0xf]
      %v1760 = vld [vmem:[%s3 + $0x4c] sm:$0xf]
      %v1761 = vld [vmem:[%s3 + $0x50] sm:$0xf]
      %v1762 = vld [vmem:[%s3 + $0x54] sm:$0xf]
      %v1763 = vld [vmem:[%s3 + $0x58] sm:$0xf]
      %v1764 = vld [vmem:[%s3 + $0x5c] sm:$0xf]
      %v1765 = vld [vmem:[%s3 + $0x60] sm:$0xf]
      %v1766 = vld [vmem:[%s3 + $0x64] sm:$0xf]
      %v1767 = vld [vmem:[%s3 + $0x68] sm:$0xf]
      %v1768 = vld [vmem:[%s3 + $0x6c] sm:$0xf]
      %v1769 = vld [vmem:[%s3 + $0x70] sm:$0xf]
      %v1770 = vld [vmem:[%s3 + $0x74] sm:$0xf]
      %v1771 = vld [vmem:[%s3 + $0x78] sm:$0xf]
      %v1772 = vld [vmem:[%s3 + $0x7c] sm:$0xf]
      %v1773 = vld [vmem:[%s3 + $0x80] sm:$0xf]
      %v1774 = vld [vmem:[%s3 + $0x84] sm:$0xf]
      %v1775 = vld [vmem:[%s3 + $0x88] sm:$0xf]
      %v1776 = vld [vmem:[%s3 + $0x8c] sm:$0xf]
      %v1777 = vld [vmem:[%s3 + $0x90] sm:$0xf]
      %v1778 = vld [vmem:[%s3 + $0x94] sm:$0xf]
      %v1779 = vld [vmem:[%s3 + $0x98] sm:$0xf]
      %v1780 = vld [vmem:[%s3 + $0x9c] sm:$0xf]
      %v1781 = vld [vmem:[%s3 + $0xa0] sm:$0xf]
      %v1782 = vld [vmem:[%s3 + $0xa4] sm:$0xf]
      %v1783 = vld [vmem:[%s3 + $0xa8] sm:$0xf]
      %v1784 = vld [vmem:[%s3 + $0xac] sm:$0xf]
      %v1785 = vld [vmem:[%s3 + $0xb0] sm:$0xf]
      %v1786 = vld [vmem:[%s3 + $0xb4] sm:$0xf]
      %v1787 = vld [vmem:[%s3 + $0xb8] sm:$0xf]
      %v1788 = vld [vmem:[%s3 + $0xbc] sm:$0xf]
      %v1789 = vld [vmem:[%s3 + $0xc0] sm:$0xf]
      %v1790 = vld [vmem:[%s3 + $0xc4] sm:$0xf]
      %v1791 = vld [vmem:[%s3 + $0xc8] sm:$0xf]
      %v1792 = vld [vmem:[%s3 + $0xcc] sm:$0xf]
      %v1793 = vld [vmem:[%s3 + $0xd0] sm:$0xf]
      %v1794 = vld [vmem:[%s3 + $0xd4] sm:$0xf]
      %v1795 = vld [vmem:[%s3 + $0xd8] sm:$0xf]
      %v1796 = vld [vmem:[%s3 + $0xdc] sm:$0xf]
      %v1797 = vld [vmem:[%s3 + $0xe0] sm:$0xf]
      %v1798 = vld [vmem:[%s3 + $0xe4] sm:$0xf]
      %v1799 = vld [vmem:[%s3 + $0xe8] sm:$0xf]
      %v1800 = vld [vmem:[%s3 + $0xec] sm:$0xf]
      %v1801 = vld [vmem:[%s3 + $0xf0] sm:$0xf]
      %v1802 = vld [vmem:[%s3 + $0xf4] sm:$0xf]
      %v1803 = vld [vmem:[%s3 + $0xf8] sm:$0xf]
      %v1804 = vld [vmem:[%s3 + $0xfc] sm:$0xf]
      %v1805 = vld [vmem:[%s3 + $0x100] sm:$0xf]
      %v1806 = vld [vmem:[%s3 + $0x104] sm:$0xf]
      %v1807 = vld [vmem:[%s3 + $0x108] sm:$0xf]
      %v1808 = vld [vmem:[%s3 + $0x10c] sm:$0xf]
      %v1809 = vld [vmem:[%s3 + $0x110] sm:$0xf]
      %v1810 = vld [vmem:[%s3 + $0x114] sm:$0xf]
      %v1811 = vld [vmem:[%s3 + $0x118] sm:$0xf]
      %v1812 = vld [vmem:[%s3 + $0x11c] sm:$0xf]
      %v1813 = vld [vmem:[%s3 + $0x120] sm:$0xf]
      %v1814 = vld [vmem:[%s3 + $0x124] sm:$0xf]
      %v1815 = vld [vmem:[%s3 + $0x128] sm:$0xf]
      %v1816 = vld [vmem:[%s3 + $0x12c] sm:$0xf]
      %v1817 = vld [vmem:[%s3 + $0x130] sm:$0xf]
      %v1818 = vld [vmem:[%s3 + $0x134] sm:$0xf]
      %v1819 = vld [vmem:[%s3 + $0x138] sm:$0xf]
      %v1820 = vld [vmem:[%s3 + $0x13c] sm:$0xf]
      %v1821 = vld [vmem:[%s3 + $0x140] sm:$0xf]
      %v1822 = vld [vmem:[%s3 + $0x144] sm:$0xf]
      %v1823 = vld [vmem:[%s3 + $0x148] sm:$0xf]
      %v1824 = vld [vmem:[%s3 + $0x14c] sm:$0xf]
      %v1825 = vld [vmem:[%s3 + $0x150] sm:$0xf]
      %v1826 = vld [vmem:[%s3 + $0x154] sm:$0xf]
      %v1827 = vld [vmem:[%s3 + $0x158] sm:$0xf]
      %v1828 = vld [vmem:[%s3 + $0x15c] sm:$0xf]
      %v1829 = vld [vmem:[%s3 + $0x160] sm:$0xf]
      %v1830 = vld [vmem:[%s3 + $0x164] sm:$0xf]
      %v1831 = vld [vmem:[%s3 + $0x168] sm:$0xf]
      %v1832 = vld [vmem:[%s3 + $0x16c] sm:$0xf]
      %v1833 = vld [vmem:[%s3 + $0x170] sm:$0xf]
      %v1834 = vld [vmem:[%s3 + $0x174] sm:$0xf]
      %v1835 = vld [vmem:[%s3 + $0x178] sm:$0xf]
      %v1836 = vld [vmem:[%s3 + $0x17c] sm:$0xf]
      %v1837 = vld [vmem:[%s3 + $0x180] sm:$0xf]
      %v1838 = vld [vmem:[%s3 + $0x184] sm:$0xf]
      %v1839 = vld [vmem:[%s3 + $0x188] sm:$0xf]
      %v1840 = vld [vmem:[%s3 + $0x18c] sm:$0xf]
      %v1841 = vld [vmem:[%s3 + $0x190] sm:$0xf]
      %v1842 = vld [vmem:[%s3 + $0x194] sm:$0xf]
      %v1843 = vld [vmem:[%s3 + $0x198] sm:$0xf]
      %v1844 = vld [vmem:[%s3 + $0x19c] sm:$0xf]
      %v1845 = vld [vmem:[%s3 + $0x1a0] sm:$0xf]
      %v1846 = vld [vmem:[%s3 + $0x1a4] sm:$0xf]
      %v1847 = vld [vmem:[%s3 + $0x1a8] sm:$0xf]
      %v1848 = vld [vmem:[%s3 + $0x1ac] sm:$0xf]
      %v1849 = vld [vmem:[%s3 + $0x1b0] sm:$0xf]
      %v1850 = vld [vmem:[%s3 + $0x1b4] sm:$0xf]
      %v1851 = vld [vmem:[%s3 + $0x1b8] sm:$0xf]
      %v1852 = vld [vmem:[%s3 + $0x1bc] sm:$0xf]
      %v1853 = vld [vmem:[%s3 + $0x1c0] sm:$0xf]
      %v1854 = vld [vmem:[%s3 + $0x1c4] sm:$0xf]
      %v1855 = vld [vmem:[%s3 + $0x1c8] sm:$0xf]
      %v1856 = vld [vmem:[%s3 + $0x1cc] sm:$0xf]
      %v1857 = vld [vmem:[%s3 + $0x1d0] sm:$0xf]
      %v1858 = vld [vmem:[%s3 + $0x1d4] sm:$0xf]
      %v1859 = vld [vmem:[%s3 + $0x1d8] sm:$0xf]
      %v1860 = vld [vmem:[%s3 + $0x1dc] sm:$0xf]
      %v1861 = vld [vmem:[%s3 + $0x1e0] sm:$0xf]
      %v1862 = vld [vmem:[%s3 + $0x1e4] sm:$0xf]
      %v1863 = vld [vmem:[%s3 + $0x1e8] sm:$0xf]
      %v1864 = vld [vmem:[%s3 + $0x1ec] sm:$0xf]
      %v1865 = vld [vmem:[%s3 + $0x1f0] sm:$0xf]
      %v1866 = vld [vmem:[%s3 + $0x1f4] sm:$0xf]
      %v1867 = vld [vmem:[%s3 + $0x1f8] sm:$0xf]
      %v1868 = vld [vmem:[%s3 + $0x1fc] sm:$0xf]
      %v1869 = vld [vmem:[%s3 + $0x200] sm:$0xf]
      %v1870 = vld [vmem:[%s3 + $0x204] sm:$0xf]
      %v1871 = vld [vmem:[%s3 + $0x208] sm:$0xf]
      %v1872 = vld [vmem:[%s3 + $0x20c] sm:$0xf]
      %v1873 = vld [vmem:[%s3 + $0x210] sm:$0xf]
      %v1874 = vld [vmem:[%s3 + $0x214] sm:$0xf]
      %v1875 = vld [vmem:[%s3 + $0x218] sm:$0xf]
      %v1876 = vld [vmem:[%s3 + $0x21c] sm:$0xf]
      %v1877 = vld [vmem:[%s3 + $0x220] sm:$0xf]
      %v1878 = vld [vmem:[%s3 + $0x224] sm:$0xf]
      %v1879 = vld [vmem:[%s3 + $0x228] sm:$0xf]
      %v1880 = vld [vmem:[%s3 + $0x22c] sm:$0xf]
      %v1881 = vld [vmem:[%s3 + $0x230] sm:$0xf]
      %v1882 = vld [vmem:[%s3 + $0x234] sm:$0xf]
      %v1883 = vld [vmem:[%s3 + $0x238] sm:$0xf]
      %v1884 = vld [vmem:[%s3 + $0x23c] sm:$0xf]
      %v2045 = vunpack.c.l.b16 %v1581
      %v2046 = vunpack.c.h.b16 %v1581
      %v2047 = vunpack.c.l.b16 %v1582
      %v2048 = vunpack.c.h.b16 %v1582
      %v2049 = vunpack.c.l.b16 %v1583
      %v2050 = vunpack.c.h.b16 %v1583
      %v2051 = vunpack.c.l.b16 %v1584
      %v2052 = vunpack.c.h.b16 %v1584
      %v2053 = vunpack.c.l.b16 %v1585
      %v2054 = vunpack.c.l.b16 %v1586
      %v2055 = vunpack.c.h.b16 %v1586
      %v2056 = vunpack.c.l.b16 %v1587
      %v2057 = vunpack.c.h.b16 %v1587
      %v2058 = vunpack.c.l.b16 %v1588
      %v2059 = vunpack.c.h.b16 %v1588
      %v2060 = vunpack.c.l.b16 %v1589
      %v2061 = vunpack.c.h.b16 %v1589
      %v2062 = vunpack.c.l.b16 %v1590
      %v2063 = vunpack.c.l.b16 %v1591
      %v2064 = vunpack.c.h.b16 %v1591
      %v2065 = vunpack.c.l.b16 %v1592
      %v2066 = vunpack.c.h.b16 %v1592
      %v2067 = vunpack.c.l.b16 %v1593
      %v2068 = vunpack.c.h.b16 %v1593
      %v2069 = vunpack.c.l.b16 %v1594
      %v2070 = vunpack.c.h.b16 %v1594
      %v2071 = vunpack.c.l.b16 %v1595
      %v2072 = vunpack.c.l.b16 %v1596
      %v2073 = vunpack.c.h.b16 %v1596
      %v2074 = vunpack.c.l.b16 %v1597
      %v2075 = vunpack.c.h.b16 %v1597
      %v2076 = vunpack.c.l.b16 %v1598
      %v2077 = vunpack.c.h.b16 %v1598
      %v2078 = vunpack.c.l.b16 %v1599
      %v2079 = vunpack.c.h.b16 %v1599
      %v2080 = vunpack.c.l.b16 %v1600
      %v2081 = vunpack.c.l.b16 %v1601
      %v2082 = vunpack.c.h.b16 %v1601
      %v2083 = vunpack.c.l.b16 %v1602
      %v2084 = vunpack.c.h.b16 %v1602
      %v2085 = vunpack.c.l.b16 %v1603
      %v2086 = vunpack.c.h.b16 %v1603
      %v2087 = vunpack.c.l.b16 %v1604
      %v2088 = vunpack.c.h.b16 %v1604
      %v2089 = vunpack.c.l.b16 %v1605
      %v2090 = vunpack.c.l.b16 %v1606
      %v2091 = vunpack.c.h.b16 %v1606
      %v2092 = vunpack.c.l.b16 %v1607
      %v2093 = vunpack.c.h.b16 %v1607
      %v2094 = vunpack.c.l.b16 %v1608
      %v2095 = vunpack.c.h.b16 %v1608
      %v2096 = vunpack.c.l.b16 %v1609
      %v2097 = vunpack.c.h.b16 %v1609
      %v2098 = vunpack.c.l.b16 %v1610
      %v2099 = vunpack.c.l.b16 %v1611
      %v2100 = vunpack.c.h.b16 %v1611
      %v2101 = vunpack.c.l.b16 %v1612
      %v2102 = vunpack.c.h.b16 %v1612
      %v2103 = vunpack.c.l.b16 %v1613
      %v2104 = vunpack.c.h.b16 %v1613
      %v2105 = vunpack.c.l.b16 %v1614
      %v2106 = vunpack.c.h.b16 %v1614
      %v2107 = vunpack.c.l.b16 %v1615
      %v2108 = vunpack.c.l.b16 %v1616
      %v2109 = vunpack.c.h.b16 %v1616
      %v2110 = vunpack.c.l.b16 %v1617
      %v2111 = vunpack.c.h.b16 %v1617
      %v2112 = vunpack.c.l.b16 %v1618
      %v2113 = vunpack.c.h.b16 %v1618
      %v2114 = vunpack.c.l.b16 %v1619
      %v2115 = vunpack.c.h.b16 %v1619
      %v2116 = vunpack.c.l.b16 %v1620
      %v2117 = vunpack.c.l.b16 %v1621
      %v2118 = vunpack.c.h.b16 %v1621
      %v2119 = vunpack.c.l.b16 %v1622
      %v2120 = vunpack.c.h.b16 %v1622
      %v2121 = vunpack.c.l.b16 %v1623
      %v2122 = vunpack.c.h.b16 %v1623
      %v2123 = vunpack.c.l.b16 %v1624
      %v2124 = vunpack.c.h.b16 %v1624
      %v2125 = vunpack.c.l.b16 %v1625
      %v2126 = vunpack.c.l.b16 %v1626
      %v2127 = vunpack.c.h.b16 %v1626
      %v2128 = vunpack.c.l.b16 %v1627
      %v2129 = vunpack.c.h.b16 %v1627
      %v2130 = vunpack.c.l.b16 %v1628
      %v2131 = vunpack.c.h.b16 %v1628
      %v2132 = vunpack.c.l.b16 %v1629
      %v2133 = vunpack.c.h.b16 %v1629
      %v2134 = vunpack.c.l.b16 %v1630
      %v2135 = vunpack.c.l.b16 %v1631
      %v2136 = vunpack.c.h.b16 %v1631
      %v2137 = vunpack.c.l.b16 %v1632
      %v2138 = vunpack.c.h.b16 %v1632
      %v2139 = vunpack.c.l.b16 %v1633
      %v2140 = vunpack.c.h.b16 %v1633
      %v2141 = vunpack.c.l.b16 %v1634
      %v2142 = vunpack.c.h.b16 %v1634
      %v2143 = vunpack.c.l.b16 %v1635
      %v2144 = vunpack.c.l.b16 %v1636
      %v2145 = vunpack.c.h.b16 %v1636
      %v2146 = vunpack.c.l.b16 %v1637
      %v2147 = vunpack.c.h.b16 %v1637
      %v2148 = vunpack.c.l.b16 %v1638
      %v2149 = vunpack.c.h.b16 %v1638
      %v2150 = vunpack.c.l.b16 %v1639
      %v2151 = vunpack.c.h.b16 %v1639
      %v2152 = vunpack.c.l.b16 %v1640
      %v2153 = vunpack.c.l.b16 %v1641
      %v2154 = vunpack.c.h.b16 %v1641
      %v2155 = vunpack.c.l.b16 %v1642
      %v2156 = vunpack.c.h.b16 %v1642
      %v2157 = vunpack.c.l.b16 %v1643
      %v2158 = vunpack.c.h.b16 %v1643
      %v2159 = vunpack.c.l.b16 %v1644
      %v2160 = vunpack.c.h.b16 %v1644
      %v2161 = vunpack.c.l.b16 %v1645
      %v2162 = vunpack.c.l.b16 %v1646
      %v2163 = vunpack.c.h.b16 %v1646
      %v2164 = vunpack.c.l.b16 %v1647
      %v2165 = vunpack.c.h.b16 %v1647
      %v2166 = vunpack.c.l.b16 %v1648
      %v2167 = vunpack.c.h.b16 %v1648
      %v2168 = vunpack.c.l.b16 %v1649
      %v2169 = vunpack.c.h.b16 %v1649
      %v2170 = vunpack.c.l.b16 %v1650
      %v2171 = vunpack.c.l.b16 %v1651
      %v2172 = vunpack.c.h.b16 %v1651
      %v2173 = vunpack.c.l.b16 %v1652
      %v2174 = vunpack.c.h.b16 %v1652
      %v2175 = vunpack.c.l.b16 %v1653
      %v2176 = vunpack.c.h.b16 %v1653
      %v2177 = vunpack.c.l.b16 %v1654
      %v2178 = vunpack.c.h.b16 %v1654
      %v2179 = vunpack.c.l.b16 %v1655
      %v2180 = vunpack.c.l.b16 %v1656
      %v2181 = vunpack.c.h.b16 %v1656
      %v2182 = vunpack.c.l.b16 %v1657
      %v2183 = vunpack.c.h.b16 %v1657
      %v2184 = vunpack.c.l.b16 %v1658
      %v2185 = vunpack.c.h.b16 %v1658
      %v2186 = vunpack.c.l.b16 %v1659
      %v2187 = vunpack.c.h.b16 %v1659
      %v2188 = vunpack.c.l.b16 %v1660
      %v2189 = vunpack.c.l.b16 %v1661
      %v2190 = vunpack.c.h.b16 %v1661
      %v2191 = vunpack.c.l.b16 %v1662
      %v2192 = vunpack.c.h.b16 %v1662
      %v2193 = vunpack.c.l.b16 %v1663
      %v2194 = vunpack.c.h.b16 %v1663
      %v2195 = vunpack.c.l.b16 %v1664
      %v2196 = vunpack.c.h.b16 %v1664
      %v2197 = vunpack.c.l.b16 %v1665
      %v2198 = vunpack.c.l.b16 %v1666
      %v2199 = vunpack.c.h.b16 %v1666
      %v2200 = vunpack.c.l.b16 %v1667
      %v2201 = vunpack.c.h.b16 %v1667
      %v2202 = vunpack.c.l.b16 %v1668
      %v2203 = vunpack.c.h.b16 %v1668
      %v2204 = vunpack.c.l.b16 %v1669
      %v2205 = vunpack.c.h.b16 %v1669
      %v2206 = vunpack.c.l.b16 %v1670
      %v2207 = vunpack.c.l.b16 %v1671
      %v2208 = vunpack.c.h.b16 %v1671
      %v2209 = vunpack.c.l.b16 %v1672
      %v2210 = vunpack.c.h.b16 %v1672
      %v2211 = vunpack.c.l.b16 %v1673
      %v2212 = vunpack.c.h.b16 %v1673
      %v2213 = vunpack.c.l.b16 %v1674
      %v2214 = vunpack.c.h.b16 %v1674
      %v2215 = vunpack.c.l.b16 %v1675
      %v2216 = vunpack.c.l.b16 %v1676
      %v2217 = vunpack.c.h.b16 %v1676
      %v2218 = vunpack.c.l.b16 %v1677
      %v2219 = vunpack.c.h.b16 %v1677
      %v2220 = vunpack.c.l.b16 %v1678
      %v2221 = vunpack.c.h.b16 %v1678
      %v2222 = vunpack.c.l.b16 %v1679
      %v2223 = vunpack.c.h.b16 %v1679
      %v2224 = vunpack.c.l.b16 %v1680
      %v2225 = vunpack.c.l.b16 %v1681
      %v2226 = vunpack.c.h.b16 %v1681
      %v2227 = vunpack.c.l.b16 %v1682
      %v2228 = vunpack.c.h.b16 %v1682
      %v2229 = vunpack.c.l.b16 %v1683
      %v2230 = vunpack.c.h.b16 %v1683
      %v2231 = vunpack.c.l.b16 %v1684
      %v2232 = vunpack.c.h.b16 %v1684
      %v2233 = vunpack.c.l.b16 %v1685
      %v2234 = vunpack.c.l.b16 %v1686
      %v2235 = vunpack.c.h.b16 %v1686
      %v2236 = vunpack.c.l.b16 %v1687
      %v2237 = vunpack.c.h.b16 %v1687
      %v2238 = vunpack.c.l.b16 %v1688
      %v2239 = vunpack.c.h.b16 %v1688
      %v2240 = vunpack.c.l.b16 %v1689
      %v2241 = vunpack.c.h.b16 %v1689
      %v2242 = vunpack.c.l.b16 %v1690
      %v2243 = vunpack.c.l.b16 %v1691
      %v2244 = vunpack.c.h.b16 %v1691
      %v2245 = vunpack.c.l.b16 %v1692
      %v2246 = vunpack.c.h.b16 %v1692
      %v2247 = vunpack.c.l.b16 %v1693
      %v2248 = vunpack.c.h.b16 %v1693
      %v2249 = vunpack.c.l.b16 %v1694
      %v2250 = vunpack.c.h.b16 %v1694
      %v2251 = vunpack.c.l.b16 %v1695
      %v2252 = vunpack.c.l.b16 %v1696
      %v2253 = vunpack.c.h.b16 %v1696
      %v2254 = vunpack.c.l.b16 %v1697
      %v2255 = vunpack.c.h.b16 %v1697
      %v2256 = vunpack.c.l.b16 %v1698
      %v2257 = vunpack.c.h.b16 %v1698
      %v2258 = vunpack.c.l.b16 %v1699
      %v2259 = vunpack.c.h.b16 %v1699
      %v2260 = vunpack.c.l.b16 %v1700
      %v2261 = vunpack.c.l.b16 %v1701
      %v2262 = vunpack.c.h.b16 %v1701
      %v2263 = vunpack.c.l.b16 %v1702
      %v2264 = vunpack.c.h.b16 %v1702
      %v2265 = vunpack.c.l.b16 %v1703
      %v2266 = vunpack.c.h.b16 %v1703
      %v2267 = vunpack.c.l.b16 %v1704
      %v2268 = vunpack.c.h.b16 %v1704
      %v2269 = vunpack.c.l.b16 %v1705
      %v2270 = vunpack.c.l.b16 %v1706
      %v2271 = vunpack.c.h.b16 %v1706
      %v2272 = vunpack.c.l.b16 %v1707
      %v2273 = vunpack.c.h.b16 %v1707
      %v2274 = vunpack.c.l.b16 %v1708
      %v2275 = vunpack.c.h.b16 %v1708
      %v2276 = vunpack.c.l.b16 %v1709
      %v2277 = vunpack.c.h.b16 %v1709
      %v2278 = vunpack.c.l.b16 %v1710
      %v2279 = vunpack.c.l.b16 %v1711
      %v2280 = vunpack.c.h.b16 %v1711
      %v2281 = vunpack.c.l.b16 %v1712
      %v2282 = vunpack.c.h.b16 %v1712
      %v2283 = vunpack.c.l.b16 %v1713
      %v2284 = vunpack.c.h.b16 %v1713
      %v2285 = vunpack.c.l.b16 %v1714
      %v2286 = vunpack.c.h.b16 %v1714
      %v2287 = vunpack.c.l.b16 %v1715
      %v2288 = vunpack.c.l.b16 %v1716
      %v2289 = vunpack.c.h.b16 %v1716
      %v2290 = vunpack.c.l.b16 %v1717
      %v2291 = vunpack.c.h.b16 %v1717
      %v2292 = vunpack.c.l.b16 %v1718
      %v2293 = vunpack.c.h.b16 %v1718
      %v2294 = vunpack.c.l.b16 %v1719
      %v2295 = vunpack.c.h.b16 %v1719
      %v2296 = vunpack.c.l.b16 %v1720
      %v2297 = vunpack.c.l.b16 %v1721
      %v2298 = vunpack.c.h.b16 %v1721
      %v2299 = vunpack.c.l.b16 %v1722
      %v2300 = vunpack.c.h.b16 %v1722
      %v2301 = vunpack.c.l.b16 %v1723
      %v2302 = vunpack.c.h.b16 %v1723
      %v2303 = vunpack.c.l.b16 %v1724
      %v2304 = vunpack.c.h.b16 %v1724
      %v2305 = vunpack.c.l.b16 %v1725
      %v2306 = vunpack.c.l.b16 %v1726
      %v2307 = vunpack.c.h.b16 %v1726
      %v2308 = vunpack.c.l.b16 %v1727
      %v2309 = vunpack.c.h.b16 %v1727
      %v2310 = vunpack.c.l.b16 %v1728
      %v2311 = vunpack.c.h.b16 %v1728
      %v2312 = vunpack.c.l.b16 %v1729
      %v2313 = vunpack.c.h.b16 %v1729
      %v2314 = vunpack.c.l.b16 %v1730
      %v2315 = vunpack.c.l.b16 %v1731
      %v2316 = vunpack.c.h.b16 %v1731
      %v2317 = vunpack.c.l.b16 %v1732
      %v2318 = vunpack.c.h.b16 %v1732
      %v2319 = vunpack.c.l.b16 %v1733
      %v2320 = vunpack.c.h.b16 %v1733
      %v2321 = vunpack.c.l.b16 %v1734
      %v2322 = vunpack.c.h.b16 %v1734
      %v2323 = vunpack.c.l.b16 %v1735
      %v2324 = vunpack.c.l.b16 %v1736
      %v2325 = vunpack.c.h.b16 %v1736
      %v2326 = vunpack.c.l.b16 %v1737
      %v2327 = vunpack.c.h.b16 %v1737
      %v2328 = vunpack.c.l.b16 %v1738
      %v2329 = vunpack.c.h.b16 %v1738
      %v2330 = vunpack.c.l.b16 %v1739
      %v2331 = vunpack.c.h.b16 %v1739
      %v2332 = vunpack.c.l.b16 %v1740
      %v2333 = vpack.c.b16 %v2054, %v2045
      %v2334 = vpack.c.b16 %v2055, %v2046
      %v2335 = vpack.c.b16 %v2056, %v2047
      %v2336 = vpack.c.b16 %v2057, %v2048
      %v2337 = vpack.c.b16 %v2058, %v2049
      %v2338 = vpack.c.b16 %v2059, %v2050
      %v2339 = vpack.c.b16 %v2060, %v2051
      %v2340 = vpack.c.b16 %v2061, %v2052
      %v2341 = vpack.c.b16 %v2062, %v2053
      %v2342 = vpack.c.b16 %v2072, %v2063
      %v2343 = vpack.c.b16 %v2073, %v2064
      %v2344 = vpack.c.b16 %v2074, %v2065
      %v2345 = vpack.c.b16 %v2075, %v2066
      %v2346 = vpack.c.b16 %v2076, %v2067
      %v2347 = vpack.c.b16 %v2077, %v2068
      %v2348 = vpack.c.b16 %v2078, %v2069
      %v2349 = vpack.c.b16 %v2079, %v2070
      %v2350 = vpack.c.b16 %v2080, %v2071
      %v2351 = vpack.c.b16 %v2090, %v2081
      %v2352 = vpack.c.b16 %v2091, %v2082
      %v2353 = vpack.c.b16 %v2092, %v2083
      %v2354 = vpack.c.b16 %v2093, %v2084
      %v2355 = vpack.c.b16 %v2094, %v2085
      %v2356 = vpack.c.b16 %v2095, %v2086
      %v2357 = vpack.c.b16 %v2096, %v2087
      %v2358 = vpack.c.b16 %v2097, %v2088
      %v2359 = vpack.c.b16 %v2098, %v2089
      %v2360 = vpack.c.b16 %v2108, %v2099
      %v2361 = vpack.c.b16 %v2109, %v2100
      %v2362 = vpack.c.b16 %v2110, %v2101
      %v2363 = vpack.c.b16 %v2111, %v2102
      %v2364 = vpack.c.b16 %v2112, %v2103
      %v2365 = vpack.c.b16 %v2113, %v2104
      %v2366 = vpack.c.b16 %v2114, %v2105
      %v2367 = vpack.c.b16 %v2115, %v2106
      %v2368 = vpack.c.b16 %v2116, %v2107
      %v2369 = vpack.c.b16 %v2126, %v2117
      %v2370 = vpack.c.b16 %v2127, %v2118
      %v2371 = vpack.c.b16 %v2128, %v2119
      %v2372 = vpack.c.b16 %v2129, %v2120
      %v2373 = vpack.c.b16 %v2130, %v2121
      %v2374 = vpack.c.b16 %v2131, %v2122
      %v2375 = vpack.c.b16 %v2132, %v2123
      %v2376 = vpack.c.b16 %v2133, %v2124
      %v2377 = vpack.c.b16 %v2134, %v2125
      %v2378 = vpack.c.b16 %v2144, %v2135
      %v2379 = vpack.c.b16 %v2145, %v2136
      %v2380 = vpack.c.b16 %v2146, %v2137
      %v2381 = vpack.c.b16 %v2147, %v2138
      %v2382 = vpack.c.b16 %v2148, %v2139
      %v2383 = vpack.c.b16 %v2149, %v2140
      %v2384 = vpack.c.b16 %v2150, %v2141
      %v2385 = vpack.c.b16 %v2151, %v2142
      %v2386 = vpack.c.b16 %v2152, %v2143
      %v2387 = vpack.c.b16 %v2162, %v2153
      %v2388 = vpack.c.b16 %v2163, %v2154
      %v2389 = vpack.c.b16 %v2164, %v2155
      %v2390 = vpack.c.b16 %v2165, %v2156
      %v2391 = vpack.c.b16 %v2166, %v2157
      %v2392 = vpack.c.b16 %v2167, %v2158
      %v2393 = vpack.c.b16 %v2168, %v2159
      %v2394 = vpack.c.b16 %v2169, %v2160
      %v2395 = vpack.c.b16 %v2170, %v2161
      %v2396 = vpack.c.b16 %v2180, %v2171
      %v2397 = vpack.c.b16 %v2181, %v2172
      %v2398 = vpack.c.b16 %v2182, %v2173
      %v2399 = vpack.c.b16 %v2183, %v2174
      %v2400 = vpack.c.b16 %v2184, %v2175
      %v2401 = vpack.c.b16 %v2185, %v2176
      %v2402 = vpack.c.b16 %v2186, %v2177
      %v2403 = vpack.c.b16 %v2187, %v2178
      %v2404 = vpack.c.b16 %v2188, %v2179
      %v2405 = vpack.c.b16 %v2198, %v2189
      %v2406 = vpack.c.b16 %v2199, %v2190
      %v2407 = vpack.c.b16 %v2200, %v2191
      %v2408 = vpack.c.b16 %v2201, %v2192
      %v2409 = vpack.c.b16 %v2202, %v2193
      %v2410 = vpack.c.b16 %v2203, %v2194
      %v2411 = vpack.c.b16 %v2204, %v2195
      %v2412 = vpack.c.b16 %v2205, %v2196
      %v2413 = vpack.c.b16 %v2206, %v2197
      %v2414 = vpack.c.b16 %v2216, %v2207
      %v2415 = vpack.c.b16 %v2217, %v2208
      %v2416 = vpack.c.b16 %v2218, %v2209
      %v2417 = vpack.c.b16 %v2219, %v2210
      %v2418 = vpack.c.b16 %v2220, %v2211
      %v2419 = vpack.c.b16 %v2221, %v2212
      %v2420 = vpack.c.b16 %v2222, %v2213
      %v2421 = vpack.c.b16 %v2223, %v2214
      %v2422 = vpack.c.b16 %v2224, %v2215
      %v2423 = vpack.c.b16 %v2234, %v2225
      %v2424 = vpack.c.b16 %v2235, %v2226
      %v2425 = vpack.c.b16 %v2236, %v2227
      %v2426 = vpack.c.b16 %v2237, %v2228
      %v2427 = vpack.c.b16 %v2238, %v2229
      %v2428 = vpack.c.b16 %v2239, %v2230
      %v2429 = vpack.c.b16 %v2240, %v2231
      %v2430 = vpack.c.b16 %v2241, %v2232
      %v2431 = vpack.c.b16 %v2242, %v2233
      %v2432 = vpack.c.b16 %v2252, %v2243
      %v2433 = vpack.c.b16 %v2253, %v2244
      %v2434 = vpack.c.b16 %v2254, %v2245
      %v2435 = vpack.c.b16 %v2255, %v2246
      %v2436 = vpack.c.b16 %v2256, %v2247
      %v2437 = vpack.c.b16 %v2257, %v2248
      %v2438 = vpack.c.b16 %v2258, %v2249
      %v2439 = vpack.c.b16 %v2259, %v2250
      %v2440 = vpack.c.b16 %v2260, %v2251
      %v2441 = vpack.c.b16 %v2270, %v2261
      %v2442 = vpack.c.b16 %v2271, %v2262
      %v2443 = vpack.c.b16 %v2272, %v2263
      %v2444 = vpack.c.b16 %v2273, %v2264
      %v2445 = vpack.c.b16 %v2274, %v2265
      %v2446 = vpack.c.b16 %v2275, %v2266
      %v2447 = vpack.c.b16 %v2276, %v2267
      %v2448 = vpack.c.b16 %v2277, %v2268
      %v2449 = vpack.c.b16 %v2278, %v2269
      %v2450 = vpack.c.b16 %v2288, %v2279
      %v2451 = vpack.c.b16 %v2289, %v2280
      %v2452 = vpack.c.b16 %v2290, %v2281
      %v2453 = vpack.c.b16 %v2291, %v2282
      %v2454 = vpack.c.b16 %v2292, %v2283
      %v2455 = vpack.c.b16 %v2293, %v2284
      %v2456 = vpack.c.b16 %v2294, %v2285
      %v2457 = vpack.c.b16 %v2295, %v2286
      %v2458 = vpack.c.b16 %v2296, %v2287
      %v2459 = vpack.c.b16 %v2306, %v2297
      %v2460 = vpack.c.b16 %v2307, %v2298
      %v2461 = vpack.c.b16 %v2308, %v2299
      %v2462 = vpack.c.b16 %v2309, %v2300
      %v2463 = vpack.c.b16 %v2310, %v2301
      %v2464 = vpack.c.b16 %v2311, %v2302
      %v2465 = vpack.c.b16 %v2312, %v2303
      %v2466 = vpack.c.b16 %v2313, %v2304
      %v2467 = vpack.c.b16 %v2314, %v2305
      %v2468 = vpack.c.b16 %v2324, %v2315
      %v2469 = vpack.c.b16 %v2325, %v2316
      %v2470 = vpack.c.b16 %v2326, %v2317
      %v2471 = vpack.c.b16 %v2327, %v2318
      %v2472 = vpack.c.b16 %v2328, %v2319
      %v2473 = vpack.c.b16 %v2329, %v2320
      %v2474 = vpack.c.b16 %v2330, %v2321
      %v2475 = vpack.c.b16 %v2331, %v2322
      %v2476 = vpack.c.b16 %v2332, %v2323
      %v2765 = vunpack.c.l.b16 %v1741
      %v2766 = vunpack.c.l.b16 %v1742
      %v2767 = vunpack.c.l.b16 %v1743
      %v2768 = vunpack.c.l.b16 %v1744
      %v2769 = vunpack.c.l.b16 %v1745
      %v2770 = vunpack.c.l.b16 %v1746
      %v2771 = vunpack.c.l.b16 %v1747
      %v2772 = vunpack.c.l.b16 %v1748
      %v2773 = vunpack.c.l.b16 %v1749
      %v2774 = vunpack.c.l.b16 %v1750
      %v2775 = vunpack.c.l.b16 %v1751
      %v2776 = vunpack.c.l.b16 %v1752
      %v2777 = vunpack.c.l.b16 %v1753
      %v2778 = vunpack.c.l.b16 %v1754
      %v2779 = vunpack.c.l.b16 %v1755
      %v2780 = vunpack.c.l.b16 %v1756
      %v2781 = vunpack.c.l.b16 %v1757
      %v2782 = vunpack.c.l.b16 %v1758
      %v2783 = vunpack.c.l.b16 %v1759
      %v2784 = vunpack.c.l.b16 %v1760
      %v2785 = vunpack.c.l.b16 %v1761
      %v2786 = vunpack.c.l.b16 %v1762
      %v2787 = vunpack.c.l.b16 %v1763
      %v2788 = vunpack.c.l.b16 %v1764
      %v2789 = vunpack.c.l.b16 %v1765
      %v2790 = vunpack.c.l.b16 %v1766
      %v2791 = vunpack.c.l.b16 %v1767
      %v2792 = vunpack.c.l.b16 %v1768
      %v2793 = vunpack.c.l.b16 %v1769
      %v2794 = vunpack.c.l.b16 %v1770
      %v2795 = vunpack.c.l.b16 %v1771
      %v2796 = vunpack.c.l.b16 %v1772
      %v2797 = vunpack.c.l.b16 %v1773
      %v2798 = vunpack.c.l.b16 %v1774
      %v2799 = vunpack.c.l.b16 %v1775
      %v2800 = vunpack.c.l.b16 %v1776
      %v2801 = vunpack.c.l.b16 %v1777
      %v2802 = vunpack.c.l.b16 %v1778
      %v2803 = vunpack.c.l.b16 %v1779
      %v2804 = vunpack.c.l.b16 %v1780
      %v2805 = vunpack.c.l.b16 %v1781
      %v2806 = vunpack.c.l.b16 %v1782
      %v2807 = vunpack.c.l.b16 %v1783
      %v2808 = vunpack.c.l.b16 %v1784
      %v2809 = vunpack.c.l.b16 %v1785
      %v2810 = vunpack.c.l.b16 %v1786
      %v2811 = vunpack.c.l.b16 %v1787
      %v2812 = vunpack.c.l.b16 %v1788
      %v2813 = vunpack.c.l.b16 %v1789
      %v2814 = vunpack.c.l.b16 %v1790
      %v2815 = vunpack.c.l.b16 %v1791
      %v2816 = vunpack.c.l.b16 %v1792
      %v2817 = vunpack.c.l.b16 %v1793
      %v2818 = vunpack.c.l.b16 %v1794
      %v2819 = vunpack.c.l.b16 %v1795
      %v2820 = vunpack.c.l.b16 %v1796
      %v2821 = vunpack.c.l.b16 %v1797
      %v2822 = vunpack.c.l.b16 %v1798
      %v2823 = vunpack.c.l.b16 %v1799
      %v2824 = vunpack.c.l.b16 %v1800
      %v2825 = vunpack.c.l.b16 %v1801
      %v2826 = vunpack.c.l.b16 %v1802
      %v2827 = vunpack.c.l.b16 %v1803
      %v2828 = vunpack.c.l.b16 %v1804
      %v2829 = vunpack.c.l.b16 %v1805
      %v2830 = vunpack.c.l.b16 %v1806
      %v2831 = vunpack.c.l.b16 %v1807
      %v2832 = vunpack.c.l.b16 %v1808
      %v2833 = vunpack.c.l.b16 %v1809
      %v2834 = vunpack.c.l.b16 %v1810
      %v2835 = vunpack.c.l.b16 %v1811
      %v2836 = vunpack.c.l.b16 %v1812
      %v2837 = vunpack.c.l.b16 %v1813
      %v2838 = vunpack.c.l.b16 %v1814
      %v2839 = vunpack.c.l.b16 %v1815
      %v2840 = vunpack.c.l.b16 %v1816
      %v2841 = vunpack.c.l.b16 %v1817
      %v2842 = vunpack.c.l.b16 %v1818
      %v2843 = vunpack.c.l.b16 %v1819
      %v2844 = vunpack.c.l.b16 %v1820
      %v2845 = vunpack.c.l.b16 %v1821
      %v2846 = vunpack.c.l.b16 %v1822
      %v2847 = vunpack.c.l.b16 %v1823
      %v2848 = vunpack.c.l.b16 %v1824
      %v2849 = vunpack.c.l.b16 %v1825
      %v2850 = vunpack.c.l.b16 %v1826
      %v2851 = vunpack.c.l.b16 %v1827
      %v2852 = vunpack.c.l.b16 %v1828
      %v2853 = vunpack.c.l.b16 %v1829
      %v2854 = vunpack.c.l.b16 %v1830
      %v2855 = vunpack.c.l.b16 %v1831
      %v2856 = vunpack.c.l.b16 %v1832
      %v2857 = vunpack.c.l.b16 %v1833
      %v2858 = vunpack.c.l.b16 %v1834
      %v2859 = vunpack.c.l.b16 %v1835
      %v2860 = vunpack.c.l.b16 %v1836
      %v2861 = vunpack.c.l.b16 %v1837
      %v2862 = vunpack.c.l.b16 %v1838
      %v2863 = vunpack.c.l.b16 %v1839
      %v2864 = vunpack.c.l.b16 %v1840
      %v2865 = vunpack.c.l.b16 %v1841
      %v2866 = vunpack.c.l.b16 %v1842
      %v2867 = vunpack.c.l.b16 %v1843
      %v2868 = vunpack.c.l.b16 %v1844
      %v2869 = vunpack.c.l.b16 %v1845
      %v2870 = vunpack.c.l.b16 %v1846
      %v2871 = vunpack.c.l.b16 %v1847
      %v2872 = vunpack.c.l.b16 %v1848
      %v2873 = vunpack.c.l.b16 %v1849
      %v2874 = vunpack.c.l.b16 %v1850
      %v2875 = vunpack.c.l.b16 %v1851
      %v2876 = vunpack.c.l.b16 %v1852
      %v2877 = vunpack.c.l.b16 %v1853
      %v2878 = vunpack.c.l.b16 %v1854
      %v2879 = vunpack.c.l.b16 %v1855
      %v2880 = vunpack.c.l.b16 %v1856
      %v2881 = vunpack.c.l.b16 %v1857
      %v2882 = vunpack.c.l.b16 %v1858
      %v2883 = vunpack.c.l.b16 %v1859
      %v2884 = vunpack.c.l.b16 %v1860
      %v2885 = vunpack.c.l.b16 %v1861
      %v2886 = vunpack.c.l.b16 %v1862
      %v2887 = vunpack.c.l.b16 %v1863
      %v2888 = vunpack.c.l.b16 %v1864
      %v2889 = vunpack.c.l.b16 %v1865
      %v2890 = vunpack.c.l.b16 %v1866
      %v2891 = vunpack.c.l.b16 %v1867
      %v2892 = vunpack.c.l.b16 %v1868
      %v2893 = vunpack.c.l.b16 %v1869
      %v2894 = vunpack.c.l.b16 %v1870
      %v2895 = vunpack.c.l.b16 %v1871
      %v2896 = vunpack.c.l.b16 %v1872
      %v2897 = vunpack.c.l.b16 %v1873
      %v2898 = vunpack.c.l.b16 %v1874
      %v2899 = vunpack.c.l.b16 %v1875
      %v2900 = vunpack.c.l.b16 %v1876
      %v2901 = vunpack.c.l.b16 %v1877
      %v2902 = vunpack.c.l.b16 %v1878
      %v2903 = vunpack.c.l.b16 %v1879
      %v2904 = vunpack.c.l.b16 %v1880
      %v2905 = vunpack.c.l.b16 %v1881
      %v2906 = vunpack.c.l.b16 %v1882
      %v2907 = vunpack.c.l.b16 %v1883
      %v2908 = vunpack.c.l.b16 %v1884
      %v2909 = vpack.c.b16 %v2766, %v2765
      %v2910 = vpack.c.b16 %v2768, %v2767
      %v2911 = vpack.c.b16 %v2770, %v2769
      %v2912 = vpack.c.b16 %v2772, %v2771
      %v2913 = vpack.c.b16 %v2774, %v2773
      %v2914 = vpack.c.b16 %v2776, %v2775
      %v2915 = vpack.c.b16 %v2778, %v2777
      %v2916 = vpack.c.b16 %v2780, %v2779
      %v2917 = vpack.c.b16 %v2782, %v2781
      %v2918 = vpack.c.b16 %v2784, %v2783
      %v2919 = vpack.c.b16 %v2786, %v2785
      %v2920 = vpack.c.b16 %v2788, %v2787
      %v2921 = vpack.c.b16 %v2790, %v2789
      %v2922 = vpack.c.b16 %v2792, %v2791
      %v2923 = vpack.c.b16 %v2794, %v2793
      %v2924 = vpack.c.b16 %v2796, %v2795
      %v2925 = vpack.c.b16 %v2798, %v2797
      %v2926 = vpack.c.b16 %v2800, %v2799
      %v2927 = vpack.c.b16 %v2802, %v2801
      %v2928 = vpack.c.b16 %v2804, %v2803
      %v2929 = vpack.c.b16 %v2806, %v2805
      %v2930 = vpack.c.b16 %v2808, %v2807
      %v2931 = vpack.c.b16 %v2810, %v2809
      %v2932 = vpack.c.b16 %v2812, %v2811
      %v2933 = vpack.c.b16 %v2814, %v2813
      %v2934 = vpack.c.b16 %v2816, %v2815
      %v2935 = vpack.c.b16 %v2818, %v2817
      %v2936 = vpack.c.b16 %v2820, %v2819
      %v2937 = vpack.c.b16 %v2822, %v2821
      %v2938 = vpack.c.b16 %v2824, %v2823
      %v2939 = vpack.c.b16 %v2826, %v2825
      %v2940 = vpack.c.b16 %v2828, %v2827
      %v2941 = vpack.c.b16 %v2830, %v2829
      %v2942 = vpack.c.b16 %v2832, %v2831
      %v2943 = vpack.c.b16 %v2834, %v2833
      %v2944 = vpack.c.b16 %v2836, %v2835
      %v2945 = vpack.c.b16 %v2838, %v2837
      %v2946 = vpack.c.b16 %v2840, %v2839
      %v2947 = vpack.c.b16 %v2842, %v2841
      %v2948 = vpack.c.b16 %v2844, %v2843
      %v2949 = vpack.c.b16 %v2846, %v2845
      %v2950 = vpack.c.b16 %v2848, %v2847
      %v2951 = vpack.c.b16 %v2850, %v2849
      %v2952 = vpack.c.b16 %v2852, %v2851
      %v2953 = vpack.c.b16 %v2854, %v2853
      %v2954 = vpack.c.b16 %v2856, %v2855
      %v2955 = vpack.c.b16 %v2858, %v2857
      %v2956 = vpack.c.b16 %v2860, %v2859
      %v2957 = vpack.c.b16 %v2862, %v2861
      %v2958 = vpack.c.b16 %v2864, %v2863
      %v2959 = vpack.c.b16 %v2866, %v2865
      %v2960 = vpack.c.b16 %v2868, %v2867
      %v2961 = vpack.c.b16 %v2870, %v2869
      %v2962 = vpack.c.b16 %v2872, %v2871
      %v2963 = vpack.c.b16 %v2874, %v2873
      %v2964 = vpack.c.b16 %v2876, %v2875
      %v2965 = vpack.c.b16 %v2878, %v2877
      %v2966 = vpack.c.b16 %v2880, %v2879
      %v2967 = vpack.c.b16 %v2882, %v2881
      %v2968 = vpack.c.b16 %v2884, %v2883
      %v2969 = vpack.c.b16 %v2886, %v2885
      %v2970 = vpack.c.b16 %v2888, %v2887
      %v2971 = vpack.c.b16 %v2890, %v2889
      %v2972 = vpack.c.b16 %v2892, %v2891
      %v2973 = vpack.c.b16 %v2894, %v2893
      %v2974 = vpack.c.b16 %v2896, %v2895
      %v2975 = vpack.c.b16 %v2898, %v2897
      %v2976 = vpack.c.b16 %v2900, %v2899
      %v2977 = vpack.c.b16 %v2902, %v2901
      %v2978 = vpack.c.b16 %v2904, %v2903
      %v2979 = vpack.c.b16 %v2906, %v2905
      %v2980 = vpack.c.b16 %v2908, %v2907
      %3053 = vmatprep.subr.bf16.mxu0 0
      %3054 = vmatpush1.bf16.msra.mxu0 %v2916
      %3055 = vmatprep.subr.bf16.mxu0 0
      %3056 = vmatpush1.bf16.msra.mxu0 %v2915
      %3057 = vmatprep.subr.bf16.mxu0 0
      %3058 = vmatpush1.bf16.msra.mxu0 %v2914
      %3059 = vmatprep.subr.bf16.mxu0 0
      %3060 = vmatpush1.bf16.msra.mxu0 %v2913
      %3061 = vmatprep.subr.bf16.mxu0 0
      %3062 = vmatpush1.bf16.msra.mxu0 %v2912
      %3063 = vmatprep.subr.bf16.mxu0 0
      %3064 = vmatpush1.bf16.msra.mxu0 %v2911
      %3065 = vmatprep.subr.bf16.mxu0 0
      %3066 = vmatpush1.bf16.msra.mxu0 %v2910
      %3067 = vmatprep.subr.bf16.mxu0 0
      %3068 = vmatpush1.bf16.msra.mxu0 %v2909
      %3069 = vmatprep.subr.bf16.mxu0 0
      %3070 = vmatpush2.bf16.msra.mxu0 %v2924
      %3071 = vmatprep.subr.bf16.mxu0 0
      %3072 = vmatpush2.bf16.msra.mxu0 %v2923
      %3073 = vmatprep.subr.bf16.mxu0 0
      %3074 = vmatpush2.bf16.msra.mxu0 %v2922
      %3075 = vmatprep.subr.bf16.mxu0 0
      %3076 = vmatpush2.bf16.msra.mxu0 %v2921
      %3077 = vmatprep.subr.bf16.mxu0 0
      %3078 = vmatpush2.bf16.msra.mxu0 %v2920
      %3079 = vmatprep.subr.bf16.mxu0 0
      %3080 = vmatpush2.bf16.msra.mxu0 %v2919
      %3081 = vmatprep.subr.bf16.mxu0 0
      %3082 = vmatpush2.bf16.msra.mxu0 %v2918
      %3083 = vmatprep.subr.bf16.mxu0 0
      %3084 = vmatpush2.bf16.msra.mxu0 %v2917
      %3085 = vmatprep.mubr.bf16.mxu0 %v2334
      %3086 = vmatmul.mubr.bf16.gmra.mxu0 %v2333
      %v3087 = vpop.f32.mrf.mxu0
      %v3088 = vadd.f32 0.0, %v3087
      %v3089 = vpop.f32.mrf.mxu0
      %v3090 = vpop.f32.mrf.mxu0
      %v3091 = vadd.f32 0.0, %v3090
      %v3092 = vpop.f32.mrf.mxu0
      %3093 = vmatprep.mubr.bf16.mxu0 %v2343
      %3094 = vmatmul.mubr.bf16.gmra.mxu0 %v2342
      %v3095 = vpop.f32.mrf.mxu0
      %v3096 = vadd.f32 0.0, %v3095
      %v3097 = vpop.f32.mrf.mxu0
      %v3098 = vpop.f32.mrf.mxu0
      %v3099 = vadd.f32 0.0, %v3098
      %v3100 = vpop.f32.mrf.mxu0
      %3101 = vmatprep.mubr.bf16.mxu0 %v2352
      %3102 = vmatmul.mubr.bf16.gmra.mxu0 %v2351
      %v3103 = vpop.f32.mrf.mxu0
      %v3104 = vadd.f32 0.0, %v3103
      %v3105 = vpop.f32.mrf.mxu0
      %v3106 = vpop.f32.mrf.mxu0
      %v3107 = vadd.f32 0.0, %v3106
      %v3108 = vpop.f32.mrf.mxu0
      %3109 = vmatprep.mubr.bf16.mxu0 %v2361
      %3110 = vmatmul.mubr.bf16.gmra.mxu0 %v2360
      %v3111 = vpop.f32.mrf.mxu0
      %v3112 = vadd.f32 0.0, %v3111
      %v3113 = vpop.f32.mrf.mxu0
      %v3114 = vpop.f32.mrf.mxu0
      %v3115 = vadd.f32 0.0, %v3114
      %v3116 = vpop.f32.mrf.mxu0
      %3117 = vmatprep.mubr.bf16.mxu0 %v2370
      %3118 = vmatmul.mubr.bf16.gmra.mxu0 %v2369
      %v3119 = vpop.f32.mrf.mxu0
      %v3120 = vadd.f32 0.0, %v3119
      %v3121 = vpop.f32.mrf.mxu0
      %v3122 = vpop.f32.mrf.mxu0
      %v3123 = vadd.f32 0.0, %v3122
      %v3124 = vpop.f32.mrf.mxu0
      %3125 = vmatprep.mubr.bf16.mxu0 %v2379
      %3126 = vmatmul.mubr.bf16.gmra.mxu0 %v2378
      %v3127 = vpop.f32.mrf.mxu0
      %v3128 = vadd.f32 0.0, %v3127
      %v3129 = vpop.f32.mrf.mxu0
      %v3130 = vpop.f32.mrf.mxu0
      %v3131 = vadd.f32 0.0, %v3130
      %v3132 = vpop.f32.mrf.mxu0
      %3133 = vmatprep.mubr.bf16.mxu0 %v2388
      %3134 = vmatmul.mubr.bf16.gmra.mxu0 %v2387
      %v3135 = vpop.f32.mrf.mxu0
      %v3136 = vadd.f32 0.0, %v3135
      %v3137 = vpop.f32.mrf.mxu0
      %v3138 = vpop.f32.mrf.mxu0
      %v3139 = vadd.f32 0.0, %v3138
      %v3140 = vpop.f32.mrf.mxu0
      %3141 = vmatprep.mubr.bf16.mxu0 %v2397
      %3142 = vmatmul.mubr.bf16.gmra.mxu0 %v2396
      %v3143 = vpop.f32.mrf.mxu0
      %v3144 = vadd.f32 0.0, %v3143
      %v3145 = vpop.f32.mrf.mxu0
      %v3146 = vpop.f32.mrf.mxu0
      %v3147 = vadd.f32 0.0, %v3146
      %v3148 = vpop.f32.mrf.mxu0
      %3149 = vmatprep.mubr.bf16.mxu0 %v2406
      %3150 = vmatmul.mubr.bf16.gmra.mxu0 %v2405
      %v3151 = vpop.f32.mrf.mxu0
      %v3152 = vadd.f32 0.0, %v3151
      %v3153 = vpop.f32.mrf.mxu0
      %v3154 = vpop.f32.mrf.mxu0
      %v3155 = vadd.f32 0.0, %v3154
      %v3156 = vpop.f32.mrf.mxu0
      %3157 = vmatprep.mubr.bf16.mxu0 %v2415
      %3158 = vmatmul.mubr.bf16.gmra.mxu0 %v2414
      %v3159 = vpop.f32.mrf.mxu0
      %v3160 = vadd.f32 0.0, %v3159
      %v3161 = vpop.f32.mrf.mxu0
      %v3162 = vpop.f32.mrf.mxu0
      %v3163 = vadd.f32 0.0, %v3162
      %v3164 = vpop.f32.mrf.mxu0
      %3165 = vmatprep.mubr.bf16.mxu0 %v2424
      %3166 = vmatmul.mubr.bf16.gmra.mxu0 %v2423
      %v3167 = vpop.f32.mrf.mxu0
      %v3168 = vadd.f32 0.0, %v3167
      %v3169 = vpop.f32.mrf.mxu0
      %v3170 = vpop.f32.mrf.mxu0
      %v3171 = vadd.f32 0.0, %v3170
      %v3172 = vpop.f32.mrf.mxu0
      %3173 = vmatprep.mubr.bf16.mxu0 %v2433
      %3174 = vmatmul.mubr.bf16.gmra.mxu0 %v2432
      %v3175 = vpop.f32.mrf.mxu0
      %v3176 = vadd.f32 0.0, %v3175
      %v3177 = vpop.f32.mrf.mxu0
      %v3178 = vpop.f32.mrf.mxu0
      %v3179 = vadd.f32 0.0, %v3178
      %v3180 = vpop.f32.mrf.mxu0
      %3181 = vmatprep.mubr.bf16.mxu0 %v2442
      %3182 = vmatmul.mubr.bf16.gmra.mxu0 %v2441
      %v3183 = vpop.f32.mrf.mxu0
      %v3184 = vadd.f32 0.0, %v3183
      %v3185 = vpop.f32.mrf.mxu0
      %v3186 = vpop.f32.mrf.mxu0
      %v3187 = vadd.f32 0.0, %v3186
      %v3188 = vpop.f32.mrf.mxu0
      %3189 = vmatprep.mubr.bf16.mxu0 %v2451
      %3190 = vmatmul.mubr.bf16.gmra.mxu0 %v2450
      %v3191 = vpop.f32.mrf.mxu0
      %v3192 = vadd.f32 0.0, %v3191
      %v3193 = vpop.f32.mrf.mxu0
      %v3194 = vpop.f32.mrf.mxu0
      %v3195 = vadd.f32 0.0, %v3194
      %v3196 = vpop.f32.mrf.mxu0
      %3197 = vmatprep.mubr.bf16.mxu0 %v2460
      %3198 = vmatmul.mubr.bf16.gmra.mxu0 %v2459
      %v3199 = vpop.f32.mrf.mxu0
      %v3200 = vadd.f32 0.0, %v3199
      %v3201 = vpop.f32.mrf.mxu0
      %v3202 = vpop.f32.mrf.mxu0
      %v3203 = vadd.f32 0.0, %v3202
      %v3204 = vpop.f32.mrf.mxu0
      %3205 = vmatprep.mubr.bf16.mxu0 %v2469
      %3206 = vmatmul.mubr.bf16.gmra.mxu0 %v2468
      %v3207 = vpop.f32.mrf.mxu0
      %v3208 = vadd.f32 0.0, %v3207
      %v3209 = vpop.f32.mrf.mxu0
      %v3210 = vpop.f32.mrf.mxu0
      %v3211 = vadd.f32 0.0, %v3210
      %v3212 = vpop.f32.mrf.mxu0
      %3213 = vdwg.mxu0
      %3214 = vmatprep.subr.bf16.mxu0 0
      %3215 = vmatpush1.bf16.msra.mxu0 %v2932
      %3216 = vmatprep.subr.bf16.mxu0 0
      %3217 = vmatpush1.bf16.msra.mxu0 %v2931
      %3218 = vmatprep.subr.bf16.mxu0 0
      %3219 = vmatpush1.bf16.msra.mxu0 %v2930
      %3220 = vmatprep.subr.bf16.mxu0 0
      %3221 = vmatpush1.bf16.msra.mxu0 %v2929
      %3222 = vmatprep.subr.bf16.mxu0 0
      %3223 = vmatpush1.bf16.msra.mxu0 %v2928
      %3224 = vmatprep.subr.bf16.mxu0 0
      %3225 = vmatpush1.bf16.msra.mxu0 %v2927
      %3226 = vmatprep.subr.bf16.mxu0 0
      %3227 = vmatpush1.bf16.msra.mxu0 %v2926
      %3228 = vmatprep.subr.bf16.mxu0 0
      %3229 = vmatpush1.bf16.msra.mxu0 %v2925
      %3230 = vmatprep.subr.bf16.mxu0 0
      %3231 = vmatpush2.bf16.msra.mxu0 %v2940
      %3232 = vmatprep.subr.bf16.mxu0 0
      %3233 = vmatpush2.bf16.msra.mxu0 %v2939
      %3234 = vmatprep.subr.bf16.mxu0 0
      %3235 = vmatpush2.bf16.msra.mxu0 %v2938
      %3236 = vmatprep.subr.bf16.mxu0 0
      %3237 = vmatpush2.bf16.msra.mxu0 %v2937
      %3238 = vmatprep.subr.bf16.mxu0 0
      %3239 = vmatpush2.bf16.msra.mxu0 %v2936
      %3240 = vmatprep.subr.bf16.mxu0 0
      %3241 = vmatpush2.bf16.msra.mxu0 %v2935
      %3242 = vmatprep.subr.bf16.mxu0 0
      %3243 = vmatpush2.bf16.msra.mxu0 %v2934
      %3244 = vmatprep.subr.bf16.mxu0 0
      %3245 = vmatpush2.bf16.msra.mxu0 %v2933
      %3246 = vmatprep.mubr.bf16.mxu0 %v2336
      %3247 = vmatmul.mubr.bf16.gmra.mxu0 %v2335
      %v3248 = vpop.f32.mrf.mxu0
      %v3249 = vadd.f32 %v3088, %v3248
      %v3250 = vpop.f32.mrf.mxu0
      %v3251 = vpop.f32.mrf.mxu0
      %v3252 = vadd.f32 %v3091, %v3251
      %v3253 = vpop.f32.mrf.mxu0
      %3254 = vmatprep.mubr.bf16.mxu0 %v2345
      %3255 = vmatmul.mubr.bf16.gmra.mxu0 %v2344
      %v3256 = vpop.f32.mrf.mxu0
      %v3257 = vadd.f32 %v3096, %v3256
      %v3258 = vpop.f32.mrf.mxu0
      %v3259 = vpop.f32.mrf.mxu0
      %v3260 = vadd.f32 %v3099, %v3259
      %v3261 = vpop.f32.mrf.mxu0
      %3262 = vmatprep.mubr.bf16.mxu0 %v2354
      %3263 = vmatmul.mubr.bf16.gmra.mxu0 %v2353
      %v3264 = vpop.f32.mrf.mxu0
      %v3265 = vadd.f32 %v3104, %v3264
      %v3266 = vpop.f32.mrf.mxu0
      %v3267 = vpop.f32.mrf.mxu0
      %v3268 = vadd.f32 %v3107, %v3267
      %v3269 = vpop.f32.mrf.mxu0
      %3270 = vmatprep.mubr.bf16.mxu0 %v2363
      %3271 = vmatmul.mubr.bf16.gmra.mxu0 %v2362
      %v3272 = vpop.f32.mrf.mxu0
      %v3273 = vadd.f32 %v3112, %v3272
      %v3274 = vpop.f32.mrf.mxu0
      %v3275 = vpop.f32.mrf.mxu0
      %v3276 = vadd.f32 %v3115, %v3275
      %v3277 = vpop.f32.mrf.mxu0
      %3278 = vmatprep.mubr.bf16.mxu0 %v2372
      %3279 = vmatmul.mubr.bf16.gmra.mxu0 %v2371
      %v3280 = vpop.f32.mrf.mxu0
      %v3281 = vadd.f32 %v3120, %v3280
      %v3282 = vpop.f32.mrf.mxu0
      %v3283 = vpop.f32.mrf.mxu0
      %v3284 = vadd.f32 %v3123, %v3283
      %v3285 = vpop.f32.mrf.mxu0
      %3286 = vmatprep.mubr.bf16.mxu0 %v2381
      %3287 = vmatmul.mubr.bf16.gmra.mxu0 %v2380
      %v3288 = vpop.f32.mrf.mxu0
      %v3289 = vadd.f32 %v3128, %v3288
      %v3290 = vpop.f32.mrf.mxu0
      %v3291 = vpop.f32.mrf.mxu0
      %v3292 = vadd.f32 %v3131, %v3291
      %v3293 = vpop.f32.mrf.mxu0
      %3294 = vmatprep.mubr.bf16.mxu0 %v2390
      %3295 = vmatmul.mubr.bf16.gmra.mxu0 %v2389
      %v3296 = vpop.f32.mrf.mxu0
      %v3297 = vadd.f32 %v3136, %v3296
      %v3298 = vpop.f32.mrf.mxu0
      %v3299 = vpop.f32.mrf.mxu0
      %v3300 = vadd.f32 %v3139, %v3299
      %v3301 = vpop.f32.mrf.mxu0
      %3302 = vmatprep.mubr.bf16.mxu0 %v2399
      %3303 = vmatmul.mubr.bf16.gmra.mxu0 %v2398
      %v3304 = vpop.f32.mrf.mxu0
      %v3305 = vadd.f32 %v3144, %v3304
      %v3306 = vpop.f32.mrf.mxu0
      %v3307 = vpop.f32.mrf.mxu0
      %v3308 = vadd.f32 %v3147, %v3307
      %v3309 = vpop.f32.mrf.mxu0
      %3310 = vmatprep.mubr.bf16.mxu0 %v2408
      %3311 = vmatmul.mubr.bf16.gmra.mxu0 %v2407
      %v3312 = vpop.f32.mrf.mxu0
      %v3313 = vadd.f32 %v3152, %v3312
      %v3314 = vpop.f32.mrf.mxu0
      %v3315 = vpop.f32.mrf.mxu0
      %v3316 = vadd.f32 %v3155, %v3315
      %v3317 = vpop.f32.mrf.mxu0
      %3318 = vmatprep.mubr.bf16.mxu0 %v2417
      %3319 = vmatmul.mubr.bf16.gmra.mxu0 %v2416
      %v3320 = vpop.f32.mrf.mxu0
      %v3321 = vadd.f32 %v3160, %v3320
      %v3322 = vpop.f32.mrf.mxu0
      %v3323 = vpop.f32.mrf.mxu0
      %v3324 = vadd.f32 %v3163, %v3323
      %v3325 = vpop.f32.mrf.mxu0
      %3326 = vmatprep.mubr.bf16.mxu0 %v2426
      %3327 = vmatmul.mubr.bf16.gmra.mxu0 %v2425
      %v3328 = vpop.f32.mrf.mxu0
      %v3329 = vadd.f32 %v3168, %v3328
      %v3330 = vpop.f32.mrf.mxu0
      %v3331 = vpop.f32.mrf.mxu0
      %v3332 = vadd.f32 %v3171, %v3331
      %v3333 = vpop.f32.mrf.mxu0
      %3334 = vmatprep.mubr.bf16.mxu0 %v2435
      %3335 = vmatmul.mubr.bf16.gmra.mxu0 %v2434
      %v3336 = vpop.f32.mrf.mxu0
      %v3337 = vadd.f32 %v3176, %v3336
      %v3338 = vpop.f32.mrf.mxu0
      %v3339 = vpop.f32.mrf.mxu0
      %v3340 = vadd.f32 %v3179, %v3339
      %v3341 = vpop.f32.mrf.mxu0
      %3342 = vmatprep.mubr.bf16.mxu0 %v2444
      %3343 = vmatmul.mubr.bf16.gmra.mxu0 %v2443
      %v3344 = vpop.f32.mrf.mxu0
      %v3345 = vadd.f32 %v3184, %v3344
      %v3346 = vpop.f32.mrf.mxu0
      %v3347 = vpop.f32.mrf.mxu0
      %v3348 = vadd.f32 %v3187, %v3347
      %v3349 = vpop.f32.mrf.mxu0
      %3350 = vmatprep.mubr.bf16.mxu0 %v2453
      %3351 = vmatmul.mubr.bf16.gmra.mxu0 %v2452
      %v3352 = vpop.f32.mrf.mxu0
      %v3353 = vadd.f32 %v3192, %v3352
      %v3354 = vpop.f32.mrf.mxu0
      %v3355 = vpop.f32.mrf.mxu0
      %v3356 = vadd.f32 %v3195, %v3355
      %v3357 = vpop.f32.mrf.mxu0
      %3358 = vmatprep.mubr.bf16.mxu0 %v2462
      %3359 = vmatmul.mubr.bf16.gmra.mxu0 %v2461
      %v3360 = vpop.f32.mrf.mxu0
      %v3361 = vadd.f32 %v3200, %v3360
      %v3362 = vpop.f32.mrf.mxu0
      %v3363 = vpop.f32.mrf.mxu0
      %v3364 = vadd.f32 %v3203, %v3363
      %v3365 = vpop.f32.mrf.mxu0
      %3366 = vmatprep.mubr.bf16.mxu0 %v2471
      %3367 = vmatmul.mubr.bf16.gmra.mxu0 %v2470
      %v3368 = vpop.f32.mrf.mxu0
      %v3369 = vadd.f32 %v3208, %v3368
      %v3370 = vpop.f32.mrf.mxu0
      %v3371 = vpop.f32.mrf.mxu0
      %v3372 = vadd.f32 %v3211, %v3371
      %v3373 = vpop.f32.mrf.mxu0
      %3374 = vdwg.mxu0
      %3375 = vmatprep.subr.bf16.mxu0 0
      %3376 = vmatpush1.bf16.msra.mxu0 %v2948
      %3377 = vmatprep.subr.bf16.mxu0 0
      %3378 = vmatpush1.bf16.msra.mxu0 %v2947
      %3379 = vmatprep.subr.bf16.mxu0 0
      %3380 = vmatpush1.bf16.msra.mxu0 %v2946
      %3381 = vmatprep.subr.bf16.mxu0 0
      %3382 = vmatpush1.bf16.msra.mxu0 %v2945
      %3383 = vmatprep.subr.bf16.mxu0 0
      %3384 = vmatpush1.bf16.msra.mxu0 %v2944
      %3385 = vmatprep.subr.bf16.mxu0 0
      %3386 = vmatpush1.bf16.msra.mxu0 %v2943
      %3387 = vmatprep.subr.bf16.mxu0 0
      %3388 = vmatpush1.bf16.msra.mxu0 %v2942
      %3389 = vmatprep.subr.bf16.mxu0 0
      %3390 = vmatpush1.bf16.msra.mxu0 %v2941
      %3391 = vmatprep.subr.bf16.mxu0 0
      %3392 = vmatpush2.bf16.msra.mxu0 %v2956
      %3393 = vmatprep.subr.bf16.mxu0 0
      %3394 = vmatpush2.bf16.msra.mxu0 %v2955
      %3395 = vmatprep.subr.bf16.mxu0 0
      %3396 = vmatpush2.bf16.msra.mxu0 %v2954
      %3397 = vmatprep.subr.bf16.mxu0 0
      %3398 = vmatpush2.bf16.msra.mxu0 %v2953
      %3399 = vmatprep.subr.bf16.mxu0 0
      %3400 = vmatpush2.bf16.msra.mxu0 %v2952
      %3401 = vmatprep.subr.bf16.mxu0 0
      %3402 = vmatpush2.bf16.msra.mxu0 %v2951
      %3403 = vmatprep.subr.bf16.mxu0 0
      %3404 = vmatpush2.bf16.msra.mxu0 %v2950
      %3405 = vmatprep.subr.bf16.mxu0 0
      %3406 = vmatpush2.bf16.msra.mxu0 %v2949
      %3407 = vmatprep.mubr.bf16.mxu0 %v2338
      %3408 = vmatmul.mubr.bf16.gmra.mxu0 %v2337
      %v3409 = vpop.f32.mrf.mxu0
      %v3410 = vadd.f32 %v3249, %v3409
      %v3411 = vpop.f32.mrf.mxu0
      %v3412 = vpop.f32.mrf.mxu0
      %v3413 = vadd.f32 %v3252, %v3412
      %v3414 = vpop.f32.mrf.mxu0
      %3415 = vmatprep.mubr.bf16.mxu0 %v2347
      %3416 = vmatmul.mubr.bf16.gmra.mxu0 %v2346
      %v3417 = vpop.f32.mrf.mxu0
      %v3418 = vadd.f32 %v3257, %v3417
      %v3419 = vpop.f32.mrf.mxu0
      %v3420 = vpop.f32.mrf.mxu0
      %v3421 = vadd.f32 %v3260, %v3420
      %v3422 = vpop.f32.mrf.mxu0
      %3423 = vmatprep.mubr.bf16.mxu0 %v2356
      %3424 = vmatmul.mubr.bf16.gmra.mxu0 %v2355
      %v3425 = vpop.f32.mrf.mxu0
      %v3426 = vadd.f32 %v3265, %v3425
      %v3427 = vpop.f32.mrf.mxu0
      %v3428 = vpop.f32.mrf.mxu0
      %v3429 = vadd.f32 %v3268, %v3428
      %v3430 = vpop.f32.mrf.mxu0
      %3431 = vmatprep.mubr.bf16.mxu0 %v2365
      %3432 = vmatmul.mubr.bf16.gmra.mxu0 %v2364
      %v3433 = vpop.f32.mrf.mxu0
      %v3434 = vadd.f32 %v3273, %v3433
      %v3435 = vpop.f32.mrf.mxu0
      %v3436 = vpop.f32.mrf.mxu0
      %v3437 = vadd.f32 %v3276, %v3436
      %v3438 = vpop.f32.mrf.mxu0
      %3439 = vmatprep.mubr.bf16.mxu0 %v2374
      %3440 = vmatmul.mubr.bf16.gmra.mxu0 %v2373
      %v3441 = vpop.f32.mrf.mxu0
      %v3442 = vadd.f32 %v3281, %v3441
      %v3443 = vpop.f32.mrf.mxu0
      %v3444 = vpop.f32.mrf.mxu0
      %v3445 = vadd.f32 %v3284, %v3444
      %v3446 = vpop.f32.mrf.mxu0
      %3447 = vmatprep.mubr.bf16.mxu0 %v2383
      %3448 = vmatmul.mubr.bf16.gmra.mxu0 %v2382
      %v3449 = vpop.f32.mrf.mxu0
      %v3450 = vadd.f32 %v3289, %v3449
      %v3451 = vpop.f32.mrf.mxu0
      %v3452 = vpop.f32.mrf.mxu0
      %v3453 = vadd.f32 %v3292, %v3452
      %v3454 = vpop.f32.mrf.mxu0
      %3455 = vmatprep.mubr.bf16.mxu0 %v2392
      %3456 = vmatmul.mubr.bf16.gmra.mxu0 %v2391
      %v3457 = vpop.f32.mrf.mxu0
      %v3458 = vadd.f32 %v3297, %v3457
      %v3459 = vpop.f32.mrf.mxu0
      %v3460 = vpop.f32.mrf.mxu0
      %v3461 = vadd.f32 %v3300, %v3460
      %v3462 = vpop.f32.mrf.mxu0
      %3463 = vmatprep.mubr.bf16.mxu0 %v2401
      %3464 = vmatmul.mubr.bf16.gmra.mxu0 %v2400
      %v3465 = vpop.f32.mrf.mxu0
      %v3466 = vadd.f32 %v3305, %v3465
      %v3467 = vpop.f32.mrf.mxu0
      %v3468 = vpop.f32.mrf.mxu0
      %v3469 = vadd.f32 %v3308, %v3468
      %v3470 = vpop.f32.mrf.mxu0
      %3471 = vmatprep.mubr.bf16.mxu0 %v2410
      %3472 = vmatmul.mubr.bf16.gmra.mxu0 %v2409
      %v3473 = vpop.f32.mrf.mxu0
      %v3474 = vadd.f32 %v3313, %v3473
      %v3475 = vpop.f32.mrf.mxu0
      %v3476 = vpop.f32.mrf.mxu0
      %v3477 = vadd.f32 %v3316, %v3476
      %v3478 = vpop.f32.mrf.mxu0
      %3479 = vmatprep.mubr.bf16.mxu0 %v2419
      %3480 = vmatmul.mubr.bf16.gmra.mxu0 %v2418
      %v3481 = vpop.f32.mrf.mxu0
      %v3482 = vadd.f32 %v3321, %v3481
      %v3483 = vpop.f32.mrf.mxu0
      %v3484 = vpop.f32.mrf.mxu0
      %v3485 = vadd.f32 %v3324, %v3484
      %v3486 = vpop.f32.mrf.mxu0
      %3487 = vmatprep.mubr.bf16.mxu0 %v2428
      %3488 = vmatmul.mubr.bf16.gmra.mxu0 %v2427
      %v3489 = vpop.f32.mrf.mxu0
      %v3490 = vadd.f32 %v3329, %v3489
      %v3491 = vpop.f32.mrf.mxu0
      %v3492 = vpop.f32.mrf.mxu0
      %v3493 = vadd.f32 %v3332, %v3492
      %v3494 = vpop.f32.mrf.mxu0
      %3495 = vmatprep.mubr.bf16.mxu0 %v2437
      %3496 = vmatmul.mubr.bf16.gmra.mxu0 %v2436
      %v3497 = vpop.f32.mrf.mxu0
      %v3498 = vadd.f32 %v3337, %v3497
      %v3499 = vpop.f32.mrf.mxu0
      %v3500 = vpop.f32.mrf.mxu0
      %v3501 = vadd.f32 %v3340, %v3500
      %v3502 = vpop.f32.mrf.mxu0
      %3503 = vmatprep.mubr.bf16.mxu0 %v2446
      %3504 = vmatmul.mubr.bf16.gmra.mxu0 %v2445
      %v3505 = vpop.f32.mrf.mxu0
      %v3506 = vadd.f32 %v3345, %v3505
      %v3507 = vpop.f32.mrf.mxu0
      %v3508 = vpop.f32.mrf.mxu0
      %v3509 = vadd.f32 %v3348, %v3508
      %v3510 = vpop.f32.mrf.mxu0
      %3511 = vmatprep.mubr.bf16.mxu0 %v2455
      %3512 = vmatmul.mubr.bf16.gmra.mxu0 %v2454
      %v3513 = vpop.f32.mrf.mxu0
      %v3514 = vadd.f32 %v3353, %v3513
      %v3515 = vpop.f32.mrf.mxu0
      %v3516 = vpop.f32.mrf.mxu0
      %v3517 = vadd.f32 %v3356, %v3516
      %v3518 = vpop.f32.mrf.mxu0
      %3519 = vmatprep.mubr.bf16.mxu0 %v2464
      %3520 = vmatmul.mubr.bf16.gmra.mxu0 %v2463
      %v3521 = vpop.f32.mrf.mxu0
      %v3522 = vadd.f32 %v3361, %v3521
      %v3523 = vpop.f32.mrf.mxu0
      %v3524 = vpop.f32.mrf.mxu0
      %v3525 = vadd.f32 %v3364, %v3524
      %v3526 = vpop.f32.mrf.mxu0
      %3527 = vmatprep.mubr.bf16.mxu0 %v2473
      %3528 = vmatmul.mubr.bf16.gmra.mxu0 %v2472
      %v3529 = vpop.f32.mrf.mxu0
      %v3530 = vadd.f32 %v3369, %v3529
      %v3531 = vpop.f32.mrf.mxu0
      %v3532 = vpop.f32.mrf.mxu0
      %v3533 = vadd.f32 %v3372, %v3532
      %v3534 = vpop.f32.mrf.mxu0
      %3535 = vdwg.mxu0
      %3536 = vmatprep.subr.bf16.mxu0 0
      %3537 = vmatpush1.bf16.msra.mxu0 %v2964
      %3538 = vmatprep.subr.bf16.mxu0 0
      %3539 = vmatpush1.bf16.msra.mxu0 %v2963
      %3540 = vmatprep.subr.bf16.mxu0 0
      %3541 = vmatpush1.bf16.msra.mxu0 %v2962
      %3542 = vmatprep.subr.bf16.mxu0 0
      %3543 = vmatpush1.bf16.msra.mxu0 %v2961
      %3544 = vmatprep.subr.bf16.mxu0 0
      %3545 = vmatpush1.bf16.msra.mxu0 %v2960
      %3546 = vmatprep.subr.bf16.mxu0 0
      %3547 = vmatpush1.bf16.msra.mxu0 %v2959
      %3548 = vmatprep.subr.bf16.mxu0 0
      %3549 = vmatpush1.bf16.msra.mxu0 %v2958
      %3550 = vmatprep.subr.bf16.mxu0 0
      %3551 = vmatpush1.bf16.msra.mxu0 %v2957
      %3552 = vmatprep.subr.bf16.mxu0 0
      %3553 = vmatpush2.bf16.msra.mxu0 %v2972
      %3554 = vmatprep.subr.bf16.mxu0 0
      %3555 = vmatpush2.bf16.msra.mxu0 %v2971
      %3556 = vmatprep.subr.bf16.mxu0 0
      %3557 = vmatpush2.bf16.msra.mxu0 %v2970
      %3558 = vmatprep.subr.bf16.mxu0 0
      %3559 = vmatpush2.bf16.msra.mxu0 %v2969
      %3560 = vmatprep.subr.bf16.mxu0 0
      %3561 = vmatpush2.bf16.msra.mxu0 %v2968
      %3562 = vmatprep.subr.bf16.mxu0 0
      %3563 = vmatpush2.bf16.msra.mxu0 %v2967
      %3564 = vmatprep.subr.bf16.mxu0 0
      %3565 = vmatpush2.bf16.msra.mxu0 %v2966
      %3566 = vmatprep.subr.bf16.mxu0 0
      %3567 = vmatpush2.bf16.msra.mxu0 %v2965
      %3568 = vmatprep.mubr.bf16.mxu0 %v2340
      %3569 = vmatmul.mubr.bf16.gmra.mxu0 %v2339
      %v3570 = vpop.f32.mrf.mxu0
      %v3571 = vadd.f32 %v3410, %v3570
      %v3572 = vpop.f32.mrf.mxu0
      %v3573 = vpop.f32.mrf.mxu0
      %v3574 = vadd.f32 %v3413, %v3573
      %v3575 = vpop.f32.mrf.mxu0
      %3576 = vmatprep.mubr.bf16.mxu0 %v2349
      %3577 = vmatmul.mubr.bf16.gmra.mxu0 %v2348
      %v3578 = vpop.f32.mrf.mxu0
      %v3579 = vadd.f32 %v3418, %v3578
      %v3580 = vpop.f32.mrf.mxu0
      %v3581 = vpop.f32.mrf.mxu0
      %v3582 = vadd.f32 %v3421, %v3581
      %v3583 = vpop.f32.mrf.mxu0
      %3584 = vmatprep.mubr.bf16.mxu0 %v2358
      %3585 = vmatmul.mubr.bf16.gmra.mxu0 %v2357
      %v3586 = vpop.f32.mrf.mxu0
      %v3587 = vadd.f32 %v3426, %v3586
      %v3588 = vpop.f32.mrf.mxu0
      %v3589 = vpop.f32.mrf.mxu0
      %v3590 = vadd.f32 %v3429, %v3589
      %v3591 = vpop.f32.mrf.mxu0
      %3592 = vmatprep.mubr.bf16.mxu0 %v2367
      %3593 = vmatmul.mubr.bf16.gmra.mxu0 %v2366
      %v3594 = vpop.f32.mrf.mxu0
      %v3595 = vadd.f32 %v3434, %v3594
      %v3596 = vpop.f32.mrf.mxu0
      %v3597 = vpop.f32.mrf.mxu0
      %v3598 = vadd.f32 %v3437, %v3597
      %v3599 = vpop.f32.mrf.mxu0
      %3600 = vmatprep.mubr.bf16.mxu0 %v2376
      %3601 = vmatmul.mubr.bf16.gmra.mxu0 %v2375
      %v3602 = vpop.f32.mrf.mxu0
      %v3603 = vadd.f32 %v3442, %v3602
      %v3604 = vpop.f32.mrf.mxu0
      %v3605 = vpop.f32.mrf.mxu0
      %v3606 = vadd.f32 %v3445, %v3605
      %v3607 = vpop.f32.mrf.mxu0
      %3608 = vmatprep.mubr.bf16.mxu0 %v2385
      %3609 = vmatmul.mubr.bf16.gmra.mxu0 %v2384
      %v3610 = vpop.f32.mrf.mxu0
      %v3611 = vadd.f32 %v3450, %v3610
      %v3612 = vpop.f32.mrf.mxu0
      %v3613 = vpop.f32.mrf.mxu0
      %v3614 = vadd.f32 %v3453, %v3613
      %v3615 = vpop.f32.mrf.mxu0
      %3616 = vmatprep.mubr.bf16.mxu0 %v2394
      %3617 = vmatmul.mubr.bf16.gmra.mxu0 %v2393
      %v3618 = vpop.f32.mrf.mxu0
      %v3619 = vadd.f32 %v3458, %v3618
      %v3620 = vpop.f32.mrf.mxu0
      %v3621 = vpop.f32.mrf.mxu0
      %v3622 = vadd.f32 %v3461, %v3621
      %v3623 = vpop.f32.mrf.mxu0
      %3624 = vmatprep.mubr.bf16.mxu0 %v2403
      %3625 = vmatmul.mubr.bf16.gmra.mxu0 %v2402
      %v3626 = vpop.f32.mrf.mxu0
      %v3627 = vadd.f32 %v3466, %v3626
      %v3628 = vpop.f32.mrf.mxu0
      %v3629 = vpop.f32.mrf.mxu0
      %v3630 = vadd.f32 %v3469, %v3629
      %v3631 = vpop.f32.mrf.mxu0
      %3632 = vmatprep.mubr.bf16.mxu0 %v2412
      %3633 = vmatmul.mubr.bf16.gmra.mxu0 %v2411
      %v3634 = vpop.f32.mrf.mxu0
      %v3635 = vadd.f32 %v3474, %v3634
      %v3636 = vpop.f32.mrf.mxu0
      %v3637 = vpop.f32.mrf.mxu0
      %v3638 = vadd.f32 %v3477, %v3637
      %v3639 = vpop.f32.mrf.mxu0
      %3640 = vmatprep.mubr.bf16.mxu0 %v2421
      %3641 = vmatmul.mubr.bf16.gmra.mxu0 %v2420
      %v3642 = vpop.f32.mrf.mxu0
      %v3643 = vadd.f32 %v3482, %v3642
      %v3644 = vpop.f32.mrf.mxu0
      %v3645 = vpop.f32.mrf.mxu0
      %v3646 = vadd.f32 %v3485, %v3645
      %v3647 = vpop.f32.mrf.mxu0
      %3648 = vmatprep.mubr.bf16.mxu0 %v2430
      %3649 = vmatmul.mubr.bf16.gmra.mxu0 %v2429
      %v3650 = vpop.f32.mrf.mxu0
      %v3651 = vadd.f32 %v3490, %v3650
      %v3652 = vpop.f32.mrf.mxu0
      %v3653 = vpop.f32.mrf.mxu0
      %v3654 = vadd.f32 %v3493, %v3653
      %v3655 = vpop.f32.mrf.mxu0
      %3656 = vmatprep.mubr.bf16.mxu0 %v2439
      %3657 = vmatmul.mubr.bf16.gmra.mxu0 %v2438
      %v3658 = vpop.f32.mrf.mxu0
      %v3659 = vadd.f32 %v3498, %v3658
      %v3660 = vpop.f32.mrf.mxu0
      %v3661 = vpop.f32.mrf.mxu0
      %v3662 = vadd.f32 %v3501, %v3661
      %v3663 = vpop.f32.mrf.mxu0
      %3664 = vmatprep.mubr.bf16.mxu0 %v2448
      %3665 = vmatmul.mubr.bf16.gmra.mxu0 %v2447
      %v3666 = vpop.f32.mrf.mxu0
      %v3667 = vadd.f32 %v3506, %v3666
      %v3668 = vpop.f32.mrf.mxu0
      %v3669 = vpop.f32.mrf.mxu0
      %v3670 = vadd.f32 %v3509, %v3669
      %v3671 = vpop.f32.mrf.mxu0
      %3672 = vmatprep.mubr.bf16.mxu0 %v2457
      %3673 = vmatmul.mubr.bf16.gmra.mxu0 %v2456
      %v3674 = vpop.f32.mrf.mxu0
      %v3675 = vadd.f32 %v3514, %v3674
      %v3676 = vpop.f32.mrf.mxu0
      %v3677 = vpop.f32.mrf.mxu0
      %v3678 = vadd.f32 %v3517, %v3677
      %v3679 = vpop.f32.mrf.mxu0
      %3680 = vmatprep.mubr.bf16.mxu0 %v2466
      %3681 = vmatmul.mubr.bf16.gmra.mxu0 %v2465
      %v3682 = vpop.f32.mrf.mxu0
      %v3683 = vadd.f32 %v3522, %v3682
      %v3684 = vpop.f32.mrf.mxu0
      %v3685 = vpop.f32.mrf.mxu0
      %v3686 = vadd.f32 %v3525, %v3685
      %v3687 = vpop.f32.mrf.mxu0
      %3688 = vmatprep.mubr.bf16.mxu0 %v2475
      %3689 = vmatmul.mubr.bf16.gmra.mxu0 %v2474
      %v3690 = vpop.f32.mrf.mxu0
      %v3691 = vadd.f32 %v3530, %v3690
      %v3692 = vpop.f32.mrf.mxu0
      %v3693 = vpop.f32.mrf.mxu0
      %v3694 = vadd.f32 %v3533, %v3693
      %v3695 = vpop.f32.mrf.mxu0
      %3696 = vdwg.mxu0
      %3697 = vmatprep.subr.bf16.mxu0 0
      %3698 = vmatpush1.bf16.msra.mxu0 %v2980
      %3699 = vmatprep.subr.bf16.mxu0 0
      %3700 = vmatpush1.bf16.msra.mxu0 %v2979
      %3701 = vmatprep.subr.bf16.mxu0 0
      %3702 = vmatpush1.bf16.msra.mxu0 %v2978
      %3703 = vmatprep.subr.bf16.mxu0 0
      %3704 = vmatpush1.bf16.msra.mxu0 %v2977
      %3705 = vmatprep.subr.bf16.mxu0 0
      %3706 = vmatpush1.bf16.msra.mxu0 %v2976
      %3707 = vmatprep.subr.bf16.mxu0 0
      %3708 = vmatpush1.bf16.msra.mxu0 %v2975
      %3709 = vmatprep.subr.bf16.mxu0 0
      %3710 = vmatpush1.bf16.msra.mxu0 %v2974
      %3711 = vmatprep.subr.bf16.mxu0 0
      %3712 = vmatpush1.bf16.msra.mxu0 %v2973
      %3713 = vmatprep.subr.bf16.mxu0 0
      %3714 = vmatpush2.bf16.msra.mxu0 0
      %3715 = vmatprep.subr.bf16.mxu0 0
      %3716 = vmatpush2.bf16.msra.mxu0 0
      %3717 = vmatprep.subr.bf16.mxu0 0
      %3718 = vmatpush2.bf16.msra.mxu0 0
      %3719 = vmatprep.subr.bf16.mxu0 0
      %3720 = vmatpush2.bf16.msra.mxu0 0
      %3721 = vmatprep.subr.bf16.mxu0 0
      %3722 = vmatpush2.bf16.msra.mxu0 0
      %3723 = vmatprep.subr.bf16.mxu0 0
      %3724 = vmatpush2.bf16.msra.mxu0 0
      %3725 = vmatprep.subr.bf16.mxu0 0
      %3726 = vmatpush2.bf16.msra.mxu0 0
      %3727 = vmatprep.subr.bf16.mxu0 0
      %3728 = vmatpush2.bf16.msra.mxu0 0
      %3729 = vmatprep.mubr.bf16.mxu0 0
      %3730 = vmatmul.mubr.bf16.gmra.mxu0 %v2341
      %v3731 = vpop.f32.mrf.mxu0
      %v3732 = vadd.f32 %v3571, %v3731
      %v3733 = vpop.f32.mrf.mxu0
      %v3734 = vpop.f32.mrf.mxu0
      %v3735 = vadd.f32 %v3574, %v3734
      %v3736 = vpop.f32.mrf.mxu0
      %3737 = vmatprep.mubr.bf16.mxu0 0
      %3738 = vmatmul.mubr.bf16.gmra.mxu0 %v2350
      %v3739 = vpop.f32.mrf.mxu0
      %v3740 = vadd.f32 %v3579, %v3739
      %v3741 = vpop.f32.mrf.mxu0
      %v3742 = vpop.f32.mrf.mxu0
      %v3743 = vadd.f32 %v3582, %v3742
      %v3744 = vpop.f32.mrf.mxu0
      %3745 = vmatprep.mubr.bf16.mxu0 0
      %3746 = vmatmul.mubr.bf16.gmra.mxu0 %v2359
      %v3747 = vpop.f32.mrf.mxu0
      %v3748 = vadd.f32 %v3587, %v3747
      %v3749 = vpop.f32.mrf.mxu0
      %v3750 = vpop.f32.mrf.mxu0
      %v3751 = vadd.f32 %v3590, %v3750
      %v3752 = vpop.f32.mrf.mxu0
      %3753 = vmatprep.mubr.bf16.mxu0 0
      %3754 = vmatmul.mubr.bf16.gmra.mxu0 %v2368
      %v3755 = vpop.f32.mrf.mxu0
      %v3756 = vadd.f32 %v3595, %v3755
      %v3757 = vpop.f32.mrf.mxu0
      %v3758 = vpop.f32.mrf.mxu0
      %v3759 = vadd.f32 %v3598, %v3758
      %v3760 = vpop.f32.mrf.mxu0
      %3761 = vmatprep.mubr.bf16.mxu0 0
      %3762 = vmatmul.mubr.bf16.gmra.mxu0 %v2377
      %v3763 = vpop.f32.mrf.mxu0
      %v3764 = vadd.f32 %v3603, %v3763
      %v3765 = vpop.f32.mrf.mxu0
      %v3766 = vpop.f32.mrf.mxu0
      %v3767 = vadd.f32 %v3606, %v3766
      %v3768 = vpop.f32.mrf.mxu0
      %3769 = vmatprep.mubr.bf16.mxu0 0
      %3770 = vmatmul.mubr.bf16.gmra.mxu0 %v2386
      %v3771 = vpop.f32.mrf.mxu0
      %v3772 = vadd.f32 %v3611, %v3771
      %v3773 = vpop.f32.mrf.mxu0
      %v3774 = vpop.f32.mrf.mxu0
      %v3775 = vadd.f32 %v3614, %v3774
      %v3776 = vpop.f32.mrf.mxu0
      %3777 = vmatprep.mubr.bf16.mxu0 0
      %3778 = vmatmul.mubr.bf16.gmra.mxu0 %v2395
      %v3779 = vpop.f32.mrf.mxu0
      %v3780 = vadd.f32 %v3619, %v3779
      %v3781 = vpop.f32.mrf.mxu0
      %v3782 = vpop.f32.mrf.mxu0
      %v3783 = vadd.f32 %v3622, %v3782
      %v3784 = vpop.f32.mrf.mxu0
      %3785 = vmatprep.mubr.bf16.mxu0 0
      %3786 = vmatmul.mubr.bf16.gmra.mxu0 %v2404
      %v3787 = vpop.f32.mrf.mxu0
      %v3788 = vadd.f32 %v3627, %v3787
      %v3789 = vpop.f32.mrf.mxu0
      %v3790 = vpop.f32.mrf.mxu0
      %v3791 = vadd.f32 %v3630, %v3790
      %v3792 = vpop.f32.mrf.mxu0
      %3793 = vmatprep.mubr.bf16.mxu0 0
      %3794 = vmatmul.mubr.bf16.gmra.mxu0 %v2413
      %v3795 = vpop.f32.mrf.mxu0
      %v3796 = vadd.f32 %v3635, %v3795
      %v3797 = vpop.f32.mrf.mxu0
      %v3798 = vpop.f32.mrf.mxu0
      %v3799 = vadd.f32 %v3638, %v3798
      %v3800 = vpop.f32.mrf.mxu0
      %3801 = vmatprep.mubr.bf16.mxu0 0
      %3802 = vmatmul.mubr.bf16.gmra.mxu0 %v2422
      %v3803 = vpop.f32.mrf.mxu0
      %v3804 = vadd.f32 %v3643, %v3803
      %v3805 = vpop.f32.mrf.mxu0
      %v3806 = vpop.f32.mrf.mxu0
      %v3807 = vadd.f32 %v3646, %v3806
      %v3808 = vpop.f32.mrf.mxu0
      %3809 = vmatprep.mubr.bf16.mxu0 0
      %3810 = vmatmul.mubr.bf16.gmra.mxu0 %v2431
      %v3811 = vpop.f32.mrf.mxu0
      %v3812 = vadd.f32 %v3651, %v3811
      %v3813 = vpop.f32.mrf.mxu0
      %v3814 = vpop.f32.mrf.mxu0
      %v3815 = vadd.f32 %v3654, %v3814
      %v3816 = vpop.f32.mrf.mxu0
      %3817 = vmatprep.mubr.bf16.mxu0 0
      %3818 = vmatmul.mubr.bf16.gmra.mxu0 %v2440
      %v3819 = vpop.f32.mrf.mxu0
      %v3820 = vadd.f32 %v3659, %v3819
      %v3821 = vpop.f32.mrf.mxu0
      %v3822 = vpop.f32.mrf.mxu0
      %v3823 = vadd.f32 %v3662, %v3822
      %v3824 = vpop.f32.mrf.mxu0
      %3825 = vmatprep.mubr.bf16.mxu0 0
      %3826 = vmatmul.mubr.bf16.gmra.mxu0 %v2449
      %v3827 = vpop.f32.mrf.mxu0
      %v3828 = vadd.f32 %v3667, %v3827
      %v3829 = vpop.f32.mrf.mxu0
      %v3830 = vpop.f32.mrf.mxu0
      %v3831 = vadd.f32 %v3670, %v3830
      %v3832 = vpop.f32.mrf.mxu0
      %3833 = vmatprep.mubr.bf16.mxu0 0
      %3834 = vmatmul.mubr.bf16.gmra.mxu0 %v2458
      %v3835 = vpop.f32.mrf.mxu0
      %v3836 = vadd.f32 %v3675, %v3835
      %v3837 = vpop.f32.mrf.mxu0
      %v3838 = vpop.f32.mrf.mxu0
      %v3839 = vadd.f32 %v3678, %v3838
      %v3840 = vpop.f32.mrf.mxu0
      %3841 = vmatprep.mubr.bf16.mxu0 0
      %3842 = vmatmul.mubr.bf16.gmra.mxu0 %v2467
      %v3843 = vpop.f32.mrf.mxu0
      %v3844 = vadd.f32 %v3683, %v3843
      %v3845 = vpop.f32.mrf.mxu0
      %v3846 = vpop.f32.mrf.mxu0
      %v3847 = vadd.f32 %v3686, %v3846
      %v3848 = vpop.f32.mrf.mxu0
      %3849 = vmatprep.mubr.bf16.mxu0 0
      %3850 = vmatmul.mubr.bf16.gmra.mxu0 %v2476
      %v3851 = vpop.f32.mrf.mxu0
      %v3852 = vadd.f32 %v3691, %v3851
      %v3853 = vpop.f32.mrf.mxu0
      %v3854 = vpop.f32.mrf.mxu0
      %v3855 = vadd.f32 %v3694, %v3854
      %v3856 = vpop.f32.mrf.mxu0
      %3857 = vdwg.mxu0
      %3858 = vst [vmem:[%s262] sm:$0xff] %v3732
      %3859 = vst [vmem:[%s262 + $0x8] sm:$0xff] %v3735
      %3860 = vst [vmem:[%s262 + $0x10] sm:$0xff] %v3740
      %3861 = vst [vmem:[%s262 + $0x18] sm:$0xff] %v3743
      %3862 = vst [vmem:[%s262 + $0x20] sm:$0xff] %v3748
      %3863 = vst [vmem:[%s262 + $0x28] sm:$0xff] %v3751
      %3864 = vst [vmem:[%s262 + $0x30] sm:$0xff] %v3756
      %3865 = vst [vmem:[%s262 + $0x38] sm:$0xff] %v3759
      %3866 = vst [vmem:[%s262 + $0x40] sm:$0xff] %v3764
      %3867 = vst [vmem:[%s262 + $0x48] sm:$0xff] %v3767
      %3868 = vst [vmem:[%s262 + $0x50] sm:$0xff] %v3772
      %3869 = vst [vmem:[%s262 + $0x58] sm:$0xff] %v3775
      %3870 = vst [vmem:[%s262 + $0x60] sm:$0xff] %v3780
      %3871 = vst [vmem:[%s262 + $0x68] sm:$0xff] %v3783
      %3872 = vst [vmem:[%s262 + $0x70] sm:$0xff] %v3788
      %3873 = vst [vmem:[%s262 + $0x78] sm:$0xff] %v3791
      %3874 = vst [vmem:[%s262 + $0x80] sm:$0xff] %v3796
      %3875 = vst [vmem:[%s262 + $0x88] sm:$0xff] %v3799
      %3876 = vst [vmem:[%s262 + $0x90] sm:$0xff] %v3804
      %3877 = vst [vmem:[%s262 + $0x98] sm:$0xff] %v3807
      %3878 = vst [vmem:[%s262 + $0xa0] sm:$0xff] %v3812
      %3879 = vst [vmem:[%s262 + $0xa8] sm:$0xff] %v3815
      %3880 = vst [vmem:[%s262 + $0xb0] sm:$0xff] %v3820
      %3881 = vst [vmem:[%s262 + $0xb8] sm:$0xff] %v3823
      %3882 = vst [vmem:[%s262 + $0xc0] sm:$0xff] %v3828
      %3883 = vst [vmem:[%s262 + $0xc8] sm:$0xff] %v3831
      %3884 = vst [vmem:[%s262 + $0xd0] sm:$0xff] %v3836
      %3885 = vst [vmem:[%s262 + $0xd8] sm:$0xff] %v3839
      %3886 = vst [vmem:[%s262 + $0xe0] sm:$0xff] %v3844
      %3887 = vst [vmem:[%s262 + $0xe8] sm:$0xff] %v3847
      %3888 = vst [vmem:[%s262 + $0xf0] sm:$0xff] %v3852
      %3889 = vst [vmem:[%s262 + $0xf8] sm:$0xff] %v3855
      %v3890 = vadd.f32 %v3732, %v3735
      %v3891 = vadd.f32 %v3890, %v3740
      %v3892 = vadd.f32 %v3891, %v3743
      %v3893 = vadd.f32 %v3892, %v3748
      %v3894 = vadd.f32 %v3893, %v3751
      %v3895 = vadd.f32 %v3894, %v3756
      %v3896 = vadd.f32 %v3895, %v3759
      %v3897 = vadd.f32 %v3896, %v3764
      %v3898 = vadd.f32 %v3897, %v3767
      %v3899 = vadd.f32 %v3898, %v3772
      %v3900 = vadd.f32 %v3899, %v3775
      %v3901 = vadd.f32 %v3900, %v3780
      %v3902 = vadd.f32 %v3901, %v3783
      %v3903 = vadd.f32 %v3902, %v3788
      %v3904 = vadd.f32 %v3903, %v3791
      %v3905 = vadd.f32 %v3904, %v3796
      %v3906 = vadd.f32 %v3905, %v3799
      %v3907 = vadd.f32 %v3906, %v3804
      %v3908 = vadd.f32 %v3907, %v3807
      %v3909 = vadd.f32 %v3908, %v3812
      %v3910 = vadd.f32 %v3909, %v3815
      %v3911 = vadd.f32 %v3910, %v3820
      %v3912 = vadd.f32 %v3911, %v3823
      %v3913 = vadd.f32 %v3912, %v3828
      %v3914 = vadd.f32 %v3913, %v3831
      %v3915 = vadd.f32 %v3914, %v3836
      %v3916 = vadd.f32 %v3915, %v3839
      %v3917 = vadd.f32 %v3916, %v3844
      %v3918 = vadd.f32 %v3917, %v3847
      %v3919 = vadd.f32 %v3918, %v3852
      %v3920 = vadd.f32 %v3919, %v3855
      %v3921 = vrot.slane %v3920, 4
      %v3922 = vadd.f32 %v3920, %v3921
      %v3923 = vrot.slane %v3922, 2
      %v3924 = vadd.f32 %v3922, %v3923
      %v3925 = vrot.slane %v3924, 1
      %v3926 = vadd.f32 %v3924, %v3925
      %3927 = vst [vmem:[%s265] sm:$0x1] %v3926
      %v3928 = vmul.f32 %v3732, %v3732
      %v3929 = vmul.f32 %v3735, %v3735
      %v3930 = vmul.f32 %v3740, %v3740
      %v3931 = vmul.f32 %v3743, %v3743
      %v3932 = vmul.f32 %v3748, %v3748
      %v3933 = vmul.f32 %v3751, %v3751
      %v3934 = vmul.f32 %v3756, %v3756
      %v3935 = vmul.f32 %v3759, %v3759
      %v3936 = vmul.f32 %v3764, %v3764
      %v3937 = vmul.f32 %v3767, %v3767
      %v3938 = vmul.f32 %v3772, %v3772
      %v3939 = vmul.f32 %v3775, %v3775
      %v3940 = vmul.f32 %v3780, %v3780
      %v3941 = vmul.f32 %v3783, %v3783
      %v3942 = vmul.f32 %v3788, %v3788
      %v3943 = vmul.f32 %v3791, %v3791
      %v3944 = vmul.f32 %v3796, %v3796
      %v3945 = vmul.f32 %v3799, %v3799
      %v3946 = vmul.f32 %v3804, %v3804
      %v3947 = vmul.f32 %v3807, %v3807
      %v3948 = vmul.f32 %v3812, %v3812
      %v3949 = vmul.f32 %v3815, %v3815
      %v3950 = vmul.f32 %v3820, %v3820
      %v3951 = vmul.f32 %v3823, %v3823
      %v3952 = vmul.f32 %v3828, %v3828
      %v3953 = vmul.f32 %v3831, %v3831
      %v3954 = vmul.f32 %v3836, %v3836
      %v3955 = vmul.f32 %v3839, %v3839
      %v3956 = vmul.f32 %v3844, %v3844
      %v3957 = vmul.f32 %v3847, %v3847
      %v3958 = vmul.f32 %v3852, %v3852
      %v3959 = vmul.f32 %v3855, %v3855
      %v3960 = vadd.f32 %v3928, %v3929
      %v3961 = vadd.f32 %v3960, %v3930
      %v3962 = vadd.f32 %v3961, %v3931
      %v3963 = vadd.f32 %v3962, %v3932
      %v3964 = vadd.f32 %v3963, %v3933
      %v3965 = vadd.f32 %v3964, %v3934
      %v3966 = vadd.f32 %v3965, %v3935
      %v3967 = vadd.f32 %v3966, %v3936
      %v3968 = vadd.f32 %v3967, %v3937
      %v3969 = vadd.f32 %v3968, %v3938
      %v3970 = vadd.f32 %v3969, %v3939
      %v3971 = vadd.f32 %v3970, %v3940
      %v3972 = vadd.f32 %v3971, %v3941
      %v3973 = vadd.f32 %v3972, %v3942
      %v3974 = vadd.f32 %v3973, %v3943
      %v3975 = vadd.f32 %v3974, %v3944
      %v3976 = vadd.f32 %v3975, %v3945
      %v3977 = vadd.f32 %v3976, %v3946
      %v3978 = vadd.f32 %v3977, %v3947
      %v3979 = vadd.f32 %v3978, %v3948
      %v3980 = vadd.f32 %v3979, %v3949
      %v3981 = vadd.f32 %v3980, %v3950
      %v3982 = vadd.f32 %v3981, %v3951
      %v3983 = vadd.f32 %v3982, %v3952
      %v3984 = vadd.f32 %v3983, %v3953
      %v3985 = vadd.f32 %v3984, %v3954
      %v3986 = vadd.f32 %v3985, %v3955
      %v3987 = vadd.f32 %v3986, %v3956
      %v3988 = vadd.f32 %v3987, %v3957
      %v3989 = vadd.f32 %v3988, %v3958
      %v3990 = vadd.f32 %v3989, %v3959
      %v3991 = vrot.slane %v3990, 4
      %v3992 = vadd.f32 %v3990, %v3991
      %v3993 = vrot.slane %v3992, 2
      %v3994 = vadd.f32 %v3992, %v3993
      %v3995 = vrot.slane %v3994, 1
      %v3996 = vadd.f32 %v3994, %v3995
      %3997 = vst [vmem:[%s268] sm:$0x1] %v3996
      %p3998 = scmp.lt.s32.totalorder %s18, 1
      %s3999 = scalar_select %p3998, %s18, 1
      %s4000 = smul.addr %s3999, 32
      %s4001 = smul.addr %s4000, 8
      %s4002 = scalar_lea.vmem %s4, %s4001
      %p4003 = scmp.lt.s32.totalorder %s18, 1
      %s4004 = scalar_select %p4003, %s18, 1
      %s4005 = scalar_lea.vmem %s5, %s4004
      %p4006 = scmp.lt.s32.totalorder %s18, 1
      %s4007 = scalar_select %p4006, %s18, 1
      %s4008 = scalar_lea.vmem %s6, %s4007
      // Predicated region
      $region37: #{_basic_block_forward.4} parent=35 // pred_check
        %p4009 = pneg %p125
      $region38: #{_basic_block_forward.4} parent=35 // pred_check_branch
        %4011 = sbr.rel (%p4009) target = $region40
      $region39: #{_basic_block_forward.4} parent=35 // pred_region
        _
      $region40: #{_basic_block_forward.4} parent=35 // pred_fallthru
        _
      // Predicated region
      $region41: #{_basic_block_forward.4} parent=35 // pred_check
        %p4012 = pneg %p151
      $region42: #{_basic_block_forward.4} parent=35 // pred_check_branch
        %4014 = sbr.rel (%p4012) target = $region44
      $region43: #{_basic_block_forward.4} parent=35 // pred_region
        _
      $region44: #{_basic_block_forward.4} parent=35 // pred_fallthru
        _
      // Predicated region
      $region45: #{_basic_block_forward.4} parent=35 // pred_check
        %p4015 = pneg %p177
      $region46: #{_basic_block_forward.4} parent=35 // pred_check_branch
        %4017 = sbr.rel (%p4015) target = $region48
      $region47: #{_basic_block_forward.4} parent=35 // pred_region
        _
      $region48: #{_basic_block_forward.4} parent=35 // pred_fallthru
        _
    $region36: #{_basic_block_forward.4} parent=5 // pred_fallthru
      _
    %p4018 = scmp.le.s32.totalorder 2, %s13
    // Predicated region
    $region49: #{_basic_block_forward.4} parent=5 // pred_check
      %p4019 = pneg %p4018
    $region50: #{_basic_block_forward.4} parent=5 // pred_check_branch
      %4021 = sbr.rel (%p4019) target = $region52
    $region51: #{_basic_block_forward.4} parent=5 // pred_region
      %s4022 = ssub.s32 %s13, 2
      // Predicated region
      $region53: #{_basic_block_forward.4} parent=51 // pred_check
        %p4023 = pneg %p131
      $region54: #{_basic_block_forward.4} parent=51 // pred_check_branch
        %4025 = sbr.rel (%p4023) target = $region56
      $region55: #{_basic_block_forward.4} parent=51 // pred_region
        %p4026 = scmp.lt.s32.totalorder %s19, 1
        %s4027 = scalar_select %p4026, %s19, 1
        %s4028 = smul.addr %s4027, 32
        %s4029 = smul.addr %s4028, 8
        %s4030 = scalar_lea.vmem %s4, %s4029
      $region56: #{_basic_block_forward.4} parent=51 // pred_fallthru
        _
      // Predicated region
      $region57: #{_basic_block_forward.4} parent=51 // pred_check
        %p4031 = pneg %p157
      $region58: #{_basic_block_forward.4} parent=51 // pred_check_branch
        %4033 = sbr.rel (%p4031) target = $region60
      $region59: #{_basic_block_forward.4} parent=51 // pred_region
        %p4034 = scmp.lt.s32.totalorder %s19, 1
        %s4035 = scalar_select %p4034, %s19, 1
        %s4036 = scalar_lea.vmem %s5, %s4035
      $region60: #{_basic_block_forward.4} parent=51 // pred_fallthru
        _
      // Predicated region
      $region61: #{_basic_block_forward.4} parent=51 // pred_check
        %p4037 = pneg %p183
      $region62: #{_basic_block_forward.4} parent=51 // pred_check_branch
        %4039 = sbr.rel (%p4037) target = $region64
      $region63: #{_basic_block_forward.4} parent=51 // pred_region
        %p4040 = scmp.lt.s32.totalorder %s19, 1
        %s4041 = scalar_select %p4040, %s19, 1
        %s4042 = scalar_lea.vmem %s6, %s4041
      $region64: #{_basic_block_forward.4} parent=51 // pred_fallthru
        _
    $region52: #{_basic_block_forward.4} parent=5 // pred_fallthru
      _
  $region6: #{_basic_block_forward.4} parent=0 // loop_footer
    %s17 = sadd.s32 1, %s13
  $region7: #{_basic_block_forward.4} parent=0 // loop_footer_branch
    %12 = sbr.rel target = $region3
  $region8: #{_basic_block_forward.4} parent=0 // loop_exit
    _

// kernel: _basic_block_forward.3
$region0: #{_basic_block_forward.3}
  #allocation0 [shape = 'u32[]', space=smem, size = 0x4, offset = 0x4, fixed_abs, tag = 'smem constant byte address 0x4 - core index']
  #allocation1 [shape = 'u32[144,128]{1,0:T(1,128)}', space=vmem, size = 0x12000, scoped, tag = 'internal scratch']
  #allocation2 [shape = 'f32[18,18,128]{2,1,0:T(8,128)}', space=vmem, size = 0x36000, scoped, tag = 'scratch operand']
  #allocation3 [shape = 'bf16[256,1152]{1,0:T(8,128)(2,1)}', space=vmem, size = 0x90000, scoped, tag = 'scratch operand']
  %s0 = inlined_call_operand.vmem [shape: f32[2,16,16,128], index: 0, kind: input, shape index: {}]
  %s1 = inlined_call_operand.vmem [shape: bf16[1152,128], index: 1, kind: input, shape index: {}]
  %s2 = inlined_call_operand.vmem [shape: f32[2,16,16,128], index: 2, kind: output, shape index: {0}]
  %s3 = inlined_call_operand.vmem [shape: f32[2,1,128], index: 3, kind: output, shape index: {1}]
  %s4 = inlined_call_operand.vmem [shape: f32[2,1,128], index: 4, kind: output, shape index: {2}]
  %5 = xla_tuple %s2, %s3, %s4
  %s6 = sld [smem:[#allocation0]]
  $region57: #{_basic_block_forward.3} parent=0
    _
  %s8 = ssub.s32 1, %s6
  %s9 = scalar_select 0, %s8, %s6
  loop: start=0, step=1, limit=4
  $region2: #{_basic_block_forward.3} parent=0 // loop_pre_header
    _
  $region3: #{_basic_block_forward.3} parent=0 // loop_header
    %s11 = sphi 0, %s15
    %p12 = scmp.ge.s32.totalorder %s11, 4
    %s21 = sphi 0, %s23
    %s24 = sphi 0, %s21
    %s25 = sphi 0, %s24
    %s41 = sphi 0, %s25
    %s45 = sphi 0, %s45
    %s47 = sphi 0, %s45
    %s48 = sphi 0, %s47
    %s62 = sphi 0, %s48
    %s68 = sphi 0, %s70
    %s71 = sphi 0, %s68
    %s72 = sphi 0, %s71
    %s88 = sphi 0, %s72
    %s94 = sphi 0, %s96
    %s97 = sphi 0, %s94
    %s98 = sphi 0, %s97
    %s114 = sphi 0, %s98
    %s120 = sphi 0, %s122
    %s123 = sphi 0, %s120
    %s124 = sphi 0, %s123
    %s140 = sphi 0, %s124
  $region4: #{_basic_block_forward.3} parent=0 // loop_header_branch
    %14 = sbr.rel (%p12) target = $region8
  $region5: #{_basic_block_forward.3} parent=0 // loop_body
    %s16 = ssub.s32 %s11, 1
    %s17 = ssub.s32 %s11, 2
    %s18 = sadd.s32 %s11, 1
    %s19 = ssub.s32 %s11, %s18
    %p20 = scmp.eq.s32.totalorder %s19, 0
    %s22 = sadd.s32 %s21, 1
    %s23 = scalar_select %p20, %s21, %s22
    %p26 = pneg %p20
    %p27 = scmp.eq.s32.totalorder %s11, 1
    %p28 = por %p26, %p27
    %p29 = scmp.ne.s32.totalorder %s21, %s24
    %p30 = scmp.eq.s32.totalorder %s11, 0
    %p31 = por %p29, %p30
    %p32 = scmp.ne.s32.totalorder %s21, %s24
    %p33 = scmp.eq.s32.totalorder %s16, 1
    %p34 = por %p32, %p33
    %p35 = scmp.ne.s32.totalorder %s24, %s25
    %p36 = scmp.eq.s32.totalorder %s16, 0
    %p37 = por %p35, %p36
    %p38 = scmp.ne.s32.totalorder %s24, %s25
    %p39 = scmp.eq.s32.totalorder %s17, 1
    %p40 = por %p38, %p39
    %p42 = scmp.ne.s32.totalorder %s25, %s41
    %p43 = scmp.eq.s32.totalorder %s17, 0
    %p44 = por %p42, %p43
    %s46 = sadd.s32 %s45, 1
    %p49 = scmp.eq.s32.totalorder %s11, 1
    %p50 = scmp.ne.s32.totalorder %s45, %s47
    %p51 = scmp.eq.s32.totalorder %s11, 0
    %p52 = por %p50, %p51
    %p53 = scmp.ne.s32.totalorder %s45, %s47
    %p54 = scmp.eq.s32.totalorder %s16, 1
    %p55 = por %p53, %p54
    %p56 = scmp.ne.s32.totalorder %s47, %s48
    %p57 = scmp.eq.s32.totalorder %s16, 0
    %p58 = por %p56, %p57
    %p59 = scmp.ne.s32.totalorder %s47, %s48
    %p60 = scmp.eq.s32.totalorder %s17, 1
    %p61 = por %p59, %p60
    %p63 = scmp.ne.s32.totalorder %s48, %s62
    %p64 = scmp.eq.s32.totalorder %s17, 0
    %p65 = por %p63, %p64
    %s66 = ssub.s32 %s11, %s18
    %p67 = scmp.eq.s32.totalorder %s66, 0
    %s69 = sadd.s32 %s68, 1
    %s70 = scalar_select %p67, %s68, %s69
    %p73 = pneg %p67
    %p74 = scmp.eq.s32.totalorder %s11, 1
    %p75 = por %p73, %p74
    %p76 = scmp.ne.s32.totalorder %s68, %s71
    %p77 = scmp.eq.s32.totalorder %s11, 0
    %p78 = por %p76, %p77
    %p79 = scmp.ne.s32.totalorder %s68, %s71
    %p80 = scmp.eq.s32.totalorder %s16, 1
    %p81 = por %p79, %p80
    %p82 = scmp.ne.s32.totalorder %s71, %s72
    %p83 = scmp.eq.s32.totalorder %s16, 0
    %p84 = por %p82, %p83
    %p85 = scmp.ne.s32.totalorder %s71, %s72
    %p86 = scmp.eq.s32.totalorder %s17, 1
    %p87 = por %p85, %p86
    %p89 = scmp.ne.s32.totalorder %s72, %s88
    %p90 = scmp.eq.s32.totalorder %s17, 0
    %p91 = por %p89, %p90
    %s92 = ssub.s32 %s11, %s18
    %p93 = scmp.eq.s32.totalorder %s92, 0
    %s95 = sadd.s32 %s94, 1
    %s96 = scalar_select %p93, %s94, %s95
    %p99 = pneg %p93
    %p100 = scmp.eq.s32.totalorder %s11, 1
    %p101 = por %p99, %p100
    %p102 = scmp.ne.s32.totalorder %s94, %s97
    %p103 = scmp.eq.s32.totalorder %s11, 0
    %p104 = por %p102, %p103
    %p105 = scmp.ne.s32.totalorder %s94, %s97
    %p106 = scmp.eq.s32.totalorder %s16, 1
    %p107 = por %p105, %p106
    %p108 = scmp.ne.s32.totalorder %s97, %s98
    %p109 = scmp.eq.s32.totalorder %s16, 0
    %p110 = por %p108, %p109
    %p111 = scmp.ne.s32.totalorder %s97, %s98
    %p112 = scmp.eq.s32.totalorder %s17, 1
    %p113 = por %p111, %p112
    %p115 = scmp.ne.s32.totalorder %s98, %s114
    %p116 = scmp.eq.s32.totalorder %s17, 0
    %p117 = por %p115, %p116
    %s118 = ssub.s32 %s11, %s18
    %p119 = scmp.eq.s32.totalorder %s118, 0
    %s121 = sadd.s32 %s120, 1
    %s122 = scalar_select %p119, %s120, %s121
    %p125 = pneg %p119
    %p126 = scmp.eq.s32.totalorder %s11, 1
    %p127 = por %p125, %p126
    %p128 = scmp.ne.s32.totalorder %s120, %s123
    %p129 = scmp.eq.s32.totalorder %s11, 0
    %p130 = por %p128, %p129
    %p131 = scmp.ne.s32.totalorder %s120, %s123
    %p132 = scmp.eq.s32.totalorder %s16, 1
    %p133 = por %p131, %p132
    %p134 = scmp.ne.s32.totalorder %s123, %s124
    %p135 = scmp.eq.s32.totalorder %s16, 0
    %p136 = por %p134, %p135
    %p137 = scmp.ne.s32.totalorder %s123, %s124
    %p138 = scmp.eq.s32.totalorder %s17, 1
    %p139 = por %p137, %p138
    %p141 = scmp.ne.s32.totalorder %s124, %s140
    %p142 = scmp.eq.s32.totalorder %s17, 0
    %p143 = por %p141, %p142
    %p144 = scmp.le.s32.totalorder 1, %s11
    %p145 = scmp.lt.s32.totalorder %s11, 3
    %p146 = pnand %p144, %p145
    %p147 = pneg %p146
    // Predicated region
    $region9: #{_basic_block_forward.3} parent=5 // pred_check
      _
    $region10: #{_basic_block_forward.3} parent=5 // pred_check_branch
      %149 = sbr.rel (%p146) target = $region12
    $region11: #{_basic_block_forward.3} parent=5 // pred_region
      %s150 = ssub.s32 %s11, 1
      // Predicated region
      $region13: #{_basic_block_forward.3} parent=11 // pred_check
        %p151 = pneg %p58
      $region14: #{_basic_block_forward.3} parent=11 // pred_check_branch
        %153 = sbr.rel (%p151) target = $region16
      $region15: #{_basic_block_forward.3} parent=11 // pred_region
        _
      $region16: #{_basic_block_forward.3} parent=11 // pred_fallthru
        _
    $region12: #{_basic_block_forward.3} parent=5 // pred_fallthru
      _
    %p154 = scmp.lt.s32.totalorder %s11, 2
    // Predicated region
    $region17: #{_basic_block_forward.3} parent=5 // pred_check
      %p155 = pneg %p154
    $region18: #{_basic_block_forward.3} parent=5 // pred_check_branch
      %157 = sbr.rel (%p155) target = $region20
    $region19: #{_basic_block_forward.3} parent=5 // pred_region
      // Predicated region
      $region21: #{_basic_block_forward.3} parent=19 // pred_check
        %p158 = pneg %p31
      $region22: #{_basic_block_forward.3} parent=19 // pred_check_branch
        %160 = sbr.rel (%p158) target = $region24
      $region23: #{_basic_block_forward.3} parent=19 // pred_region
        %p161 = scmp.lt.s32.totalorder %s11, 1
        %s162 = scalar_select %p161, %s11, 1
        %s163 = smul.addr %s162, 32
        %s164 = smul.addr %s163, 8
        %s165 = scalar_lea.vmem %s0, %s164
      $region24: #{_basic_block_forward.3} parent=19 // pred_fallthru
        _
    $region20: #{_basic_block_forward.3} parent=5 // pred_fallthru
      _
    %p166 = scmp.le.s32.totalorder 1, %s11
    %p167 = scmp.lt.s32.totalorder %s11, 3
    %p168 = pnand %p166, %p167
    %p169 = pneg %p168
    // Predicated region
    $region25: #{_basic_block_forward.3} parent=5 // pred_check
      _
    $region26: #{_basic_block_forward.3} parent=5 // pred_check_branch
      %171 = sbr.rel (%p168) target = $region28
    $region27: #{_basic_block_forward.3} parent=5 // pred_region
      %s172 = ssub.s32 %s11, 1
      %p173 = scmp.lt.s32.totalorder %s16, 1
      %s174 = scalar_select %p173, %s16, 1
      %s175 = smul.addr %s174, 32
      %s176 = smul.addr %s175, 8
      %s177 = scalar_lea.vmem %s0, %s176
      %p178 = pneg %p37
      %p179 = pneg %p34
      %p180 = pneg %p58
      %p181 = pneg %p55
      %p182 = pneg %p84
      %p183 = pneg %p81
      %p184 = scmp.lt.s32.totalorder %s16, 1
      %s185 = scalar_select %p184, %s16, 1
      %s186 = smul.addr %s185, 32
      %s187 = smul.addr %s186, 8
      %s188 = scalar_lea.vmem %s2, %s187
      %p189 = pneg %p110
      %p190 = pneg %p107
      %p191 = scmp.lt.s32.totalorder %s16, 1
      %s192 = scalar_select %p191, %s16, 1
      %s193 = scalar_lea.vmem %s3, %s192
      %p194 = pneg %p136
      %p195 = pneg %p133
      %p196 = scmp.lt.s32.totalorder %s16, 1
      %s197 = scalar_select %p196, %s16, 1
      %s198 = scalar_lea.vmem %s4, %s197
      %p199 = scmp.lt.s32.totalorder %s16, 1
      %s200 = scalar_select %p199, %s16, 1
      %s201 = smul.addr %s200, 32
      %s202 = smul.addr %s201, 8
      %s203 = scalar_lea.vmem %s0, %s202
      %p204 = scmp.lt.s32.totalorder %s16, 1
      %s205 = scalar_select %p204, %s16, 1
      %s206 = smul.addr %s205, 32
      %s207 = smul.addr %s206, 8
      %s208 = scalar_lea.vmem %s2, %s207
      %p209 = scmp.lt.s32.totalorder %s16, 1
      %s210 = scalar_select %p209, %s16, 1
      %s211 = scalar_lea.vmem %s3, %s210
      %p212 = scmp.lt.s32.totalorder %s16, 1
      %s213 = scalar_select %p212, %s16, 1
      %s214 = scalar_lea.vmem %s4, %s213
      %v216 = vld [vmem:[%s203] sm:$0xff]
      %v217 = vld [vmem:[%s203 + $0x8] sm:$0xff]
      %v218 = vld [vmem:[%s203 + $0x10] sm:$0xff]
      %v219 = vld [vmem:[%s203 + $0x18] sm:$0xff]
      %v220 = vld [vmem:[%s203 + $0x20] sm:$0xff]
      %v221 = vld [vmem:[%s203 + $0x28] sm:$0xff]
      %v222 = vld [vmem:[%s203 + $0x30] sm:$0xff]
      %v223 = vld [vmem:[%s203 + $0x38] sm:$0xff]
      %v224 = vld [vmem:[%s203 + $0x40] sm:$0xff]
      %v225 = vld [vmem:[%s203 + $0x48] sm:$0xff]
      %v226 = vld [vmem:[%s203 + $0x50] sm:$0xff]
      %v227 = vld [vmem:[%s203 + $0x58] sm:$0xff]
      %v228 = vld [vmem:[%s203 + $0x60] sm:$0xff]
      %v229 = vld [vmem:[%s203 + $0x68] sm:$0xff]
      %v230 = vld [vmem:[%s203 + $0x70] sm:$0xff]
      %v231 = vld [vmem:[%s203 + $0x78] sm:$0xff]
      %v232 = vld [vmem:[%s203 + $0x80] sm:$0xff]
      %v233 = vld [vmem:[%s203 + $0x88] sm:$0xff]
      %v234 = vld [vmem:[%s203 + $0x90] sm:$0xff]
      %v235 = vld [vmem:[%s203 + $0x98] sm:$0xff]
      %v236 = vld [vmem:[%s203 + $0xa0] sm:$0xff]
      %v237 = vld [vmem:[%s203 + $0xa8] sm:$0xff]
      %v238 = vld [vmem:[%s203 + $0xb0] sm:$0xff]
      %v239 = vld [vmem:[%s203 + $0xb8] sm:$0xff]
      %v240 = vld [vmem:[%s203 + $0xc0] sm:$0xff]
      %v241 = vld [vmem:[%s203 + $0xc8] sm:$0xff]
      %v242 = vld [vmem:[%s203 + $0xd0] sm:$0xff]
      %v243 = vld [vmem:[%s203 + $0xd8] sm:$0xff]
      %v244 = vld [vmem:[%s203 + $0xe0] sm:$0xff]
      %v245 = vld [vmem:[%s203 + $0xe8] sm:$0xff]
      %v246 = vld [vmem:[%s203 + $0xf0] sm:$0xff]
      %v247 = vld [vmem:[%s203 + $0xf8] sm:$0xff]
      %248 = vst [vmem:[#allocation2] sm:$0xff] 0.0
      %249 = vst [vmem:[#allocation2 + $0x8] sm:$0xff] 0.0
      %250 = vst [vmem:[#allocation2 + $0x10] sm:$0x3] 0.0
      %251 = vst [vmem:[#allocation2 + $0x18] sm:$0xff] 0.0
      %252 = vst [vmem:[#allocation2 + $0x20] sm:$0xff] 0.0
      %253 = vst [vmem:[#allocation2 + $0x28] sm:$0x3] 0.0
      %254 = vst [vmem:[#allocation2 + $0x30] sm:$0xff] 0.0
      %255 = vst [vmem:[#allocation2 + $0x38] sm:$0xff] 0.0
      %256 = vst [vmem:[#allocation2 + $0x40] sm:$0x3] 0.0
      %257 = vst [vmem:[#allocation2 + $0x48] sm:$0xff] 0.0
      %258 = vst [vmem:[#allocation2 + $0x50] sm:$0xff] 0.0
      %259 = vst [vmem:[#allocation2 + $0x58] sm:$0x3] 0.0
      %260 = vst [vmem:[#allocation2 + $0x60] sm:$0xff] 0.0
      %261 = vst [vmem:[#allocation2 + $0x68] sm:$0xff] 0.0
      %262 = vst [vmem:[#allocation2 + $0x70] sm:$0x3] 0.0
      %263 = vst [vmem:[#allocation2 + $0x78] sm:$0xff] 0.0
      %264 = vst [vmem:[#allocation2 + $0x80] sm:$0xff] 0.0
      %265 = vst [vmem:[#allocation2 + $0x88] sm:$0x3] 0.0
      %266 = vst [vmem:[#allocation2 + $0x90] sm:$0xff] 0.0
      %267 = vst [vmem:[#allocation2 + $0x98] sm:$0xff] 0.0
      %268 = vst [vmem:[#allocation2 + $0xa0] sm:$0x3] 0.0
      %269 = vst [vmem:[#allocation2 + $0xa8] sm:$0xff] 0.0
      %270 = vst [vmem:[#allocation2 + $0xb0] sm:$0xff] 0.0
      %271 = vst [vmem:[#allocation2 + $0xb8] sm:$0x3] 0.0
      %272 = vst [vmem:[#allocation2 + $0xc0] sm:$0xff] 0.0
      %273 = vst [vmem:[#allocation2 + $0xc8] sm:$0xff] 0.0
      %274 = vst [vmem:[#allocation2 + $0xd0] sm:$0x3] 0.0
      %275 = vst [vmem:[#allocation2 + $0xd8] sm:$0xff] 0.0
      %276 = vst [vmem:[#allocation2 + $0xe0] sm:$0xff] 0.0
      %277 = vst [vmem:[#allocation2 + $0xe8] sm:$0x3] 0.0
      %278 = vst [vmem:[#allocation2 + $0xf0] sm:$0xff] 0.0
      %279 = vst [vmem:[#allocation2 + $0xf8] sm:$0xff] 0.0
      %280 = vst [vmem:[#allocation2 + $0x100] sm:$0x3] 0.0
      %281 = vst [vmem:[#allocation2 + $0x108] sm:$0xff] 0.0
      %282 = vst [vmem:[#allocation2 + $0x110] sm:$0xff] 0.0
      %283 = vst [vmem:[#allocation2 + $0x118] sm:$0x3] 0.0
      %284 = vst [vmem:[#allocation2 + $0x120] sm:$0xff] 0.0
      %285 = vst [vmem:[#allocation2 + $0x128] sm:$0xff] 0.0
      %286 = vst [vmem:[#allocation2 + $0x130] sm:$0x3] 0.0
      %287 = vst [vmem:[#allocation2 + $0x138] sm:$0xff] 0.0
      %288 = vst [vmem:[#allocation2 + $0x140] sm:$0xff] 0.0
      %289 = vst [vmem:[#allocation2 + $0x148] sm:$0x3] 0.0
      %290 = vst [vmem:[#allocation2 + $0x150] sm:$0xff] 0.0
      %291 = vst [vmem:[#allocation2 + $0x158] sm:$0xff] 0.0
      %292 = vst [vmem:[#allocation2 + $0x160] sm:$0x3] 0.0
      %293 = vst [vmem:[#allocation2 + $0x168] sm:$0xff] 0.0
      %294 = vst [vmem:[#allocation2 + $0x170] sm:$0xff] 0.0
      %295 = vst [vmem:[#allocation2 + $0x178] sm:$0x3] 0.0
      %296 = vst [vmem:[#allocation2 + $0x180] sm:$0xff] 0.0
      %297 = vst [vmem:[#allocation2 + $0x188] sm:$0xff] 0.0
      %298 = vst [vmem:[#allocation2 + $0x190] sm:$0x3] 0.0
      %299 = vst [vmem:[#allocation2 + $0x198] sm:$0xff] 0.0
      %300 = vst [vmem:[#allocation2 + $0x1a0] sm:$0xff] 0.0
      %301 = vst [vmem:[#allocation2 + $0x1a8] sm:$0x3] 0.0
      %s302 = scalar_lea.vmem [#allocation2], 24
      %303 = vst [vmem:[%s302 + $0x1] sm:$0xff] %v216
      %304 = vst [vmem:[%s302 + $0x9] sm:$0xff] %v217
      %305 = vst [vmem:[%s302 + $0x19] sm:$0xff] %v218
      %306 = vst [vmem:[%s302 + $0x21] sm:$0xff] %v219
      %307 = vst [vmem:[%s302 + $0x31] sm:$0xff] %v220
      %308 = vst [vmem:[%s302 + $0x39] sm:$0xff] %v221
      %309 = vst [vmem:[%s302 + $0x49] sm:$0xff] %v222
      %310 = vst [vmem:[%s302 + $0x51] sm:$0xff] %v223
      %311 = vst [vmem:[%s302 + $0x61] sm:$0xff] %v224
      %312 = vst [vmem:[%s302 + $0x69] sm:$0xff] %v225
      %313 = vst [vmem:[%s302 + $0x79] sm:$0xff] %v226
      %314 = vst [vmem:[%s302 + $0x81] sm:$0xff] %v227
      %315 = vst [vmem:[%s302 + $0x91] sm:$0xff] %v228
      %316 = vst [vmem:[%s302 + $0x99] sm:$0xff] %v229
      %317 = vst [vmem:[%s302 + $0xa9] sm:$0xff] %v230
      %318 = vst [vmem:[%s302 + $0xb1] sm:$0xff] %v231
      %319 = vst [vmem:[%s302 + $0xc1] sm:$0xff] %v232
      %320 = vst [vmem:[%s302 + $0xc9] sm:$0xff] %v233
      %321 = vst [vmem:[%s302 + $0xd9] sm:$0xff] %v234
      %322 = vst [vmem:[%s302 + $0xe1] sm:$0xff] %v235
      %323 = vst [vmem:[%s302 + $0xf1] sm:$0xff] %v236
      %324 = vst [vmem:[%s302 + $0xf9] sm:$0xff] %v237
      %325 = vst [vmem:[%s302 + $0x109] sm:$0xff] %v238
      %326 = vst [vmem:[%s302 + $0x111] sm:$0xff] %v239
      %327 = vst [vmem:[%s302 + $0x121] sm:$0xff] %v240
      %328 = vst [vmem:[%s302 + $0x129] sm:$0xff] %v241
      %329 = vst [vmem:[%s302 + $0x139] sm:$0xff] %v242
      %330 = vst [vmem:[%s302 + $0x141] sm:$0xff] %v243
      %331 = vst [vmem:[%s302 + $0x151] sm:$0xff] %v244
      %332 = vst [vmem:[%s302 + $0x159] sm:$0xff] %v245
      %333 = vst [vmem:[%s302 + $0x169] sm:$0xff] %v246
      %334 = vst [vmem:[%s302 + $0x171] sm:$0xff] %v247
      %v335 = vld [vmem:[#allocation2] sm:$0xff]
      %v336 = vld [vmem:[#allocation2 + $0x8] sm:$0xff]
      %v337 = vld [vmem:[#allocation2 + $0x10] sm:$0x3]
      %v338 = vld [vmem:[#allocation2 + $0x18] sm:$0xff]
      %v339 = vld [vmem:[#allocation2 + $0x20] sm:$0xff]
      %v340 = vld [vmem:[#allocation2 + $0x28] sm:$0x3]
      %v341 = vld [vmem:[#allocation2 + $0x30] sm:$0xff]
      %v342 = vld [vmem:[#allocation2 + $0x38] sm:$0xff]
      %v343 = vld [vmem:[#allocation2 + $0x40] sm:$0x3]
      %v344 = vld [vmem:[#allocation2 + $0x48] sm:$0xff]
      %v345 = vld [vmem:[#allocation2 + $0x50] sm:$0xff]
      %v346 = vld [vmem:[#allocation2 + $0x58] sm:$0x3]
      %v347 = vld [vmem:[#allocation2 + $0x60] sm:$0xff]
      %v348 = vld [vmem:[#allocation2 + $0x68] sm:$0xff]
      %v349 = vld [vmem:[#allocation2 + $0x70] sm:$0x3]
      %v350 = vld [vmem:[#allocation2 + $0x78] sm:$0xff]
      %v351 = vld [vmem:[#allocation2 + $0x80] sm:$0xff]
      %v352 = vld [vmem:[#allocation2 + $0x88] sm:$0x3]
      %v353 = vld [vmem:[#allocation2 + $0x90] sm:$0xff]
      %v354 = vld [vmem:[#allocation2 + $0x98] sm:$0xff]
      %v355 = vld [vmem:[#allocation2 + $0xa0] sm:$0x3]
      %v356 = vld [vmem:[#allocation2 + $0xa8] sm:$0xff]
      %v357 = vld [vmem:[#allocation2 + $0xb0] sm:$0xff]
      %v358 = vld [vmem:[#allocation2 + $0xb8] sm:$0x3]
      %v359 = vld [vmem:[#allocation2 + $0xc0] sm:$0xff]
      %v360 = vld [vmem:[#allocation2 + $0xc8] sm:$0xff]
      %v361 = vld [vmem:[#allocation2 + $0xd0] sm:$0x3]
      %v362 = vld [vmem:[#allocation2 + $0xd8] sm:$0xff]
      %v363 = vld [vmem:[#allocation2 + $0xe0] sm:$0xff]
      %v364 = vld [vmem:[#allocation2 + $0xe8] sm:$0x3]
      %v365 = vld [vmem:[#allocation2 + $0xf0] sm:$0xff]
      %v366 = vld [vmem:[#allocation2 + $0xf8] sm:$0xff]
      %v367 = vld [vmem:[#allocation2 + $0x100] sm:$0x3]
      %v368 = vld [vmem:[#allocation2 + $0x108] sm:$0xff]
      %v369 = vld [vmem:[#allocation2 + $0x110] sm:$0xff]
      %v370 = vld [vmem:[#allocation2 + $0x118] sm:$0x3]
      %v371 = vld [vmem:[#allocation2 + $0x120] sm:$0xff]
      %v372 = vld [vmem:[#allocation2 + $0x128] sm:$0xff]
      %v373 = vld [vmem:[#allocation2 + $0x130] sm:$0x3]
      %v374 = vld [vmem:[#allocation2 + $0x138] sm:$0xff]
      %v375 = vld [vmem:[#allocation2 + $0x140] sm:$0xff]
      %v376 = vld [vmem:[#allocation2 + $0x148] sm:$0x3]
      %v377 = vld [vmem:[#allocation2 + $0x150] sm:$0xff]
      %v378 = vld [vmem:[#allocation2 + $0x158] sm:$0xff]
      %v379 = vld [vmem:[#allocation2 + $0x160] sm:$0x3]
      %v380 = vld [vmem:[#allocation2 + $0x168] sm:$0xff]
      %v381 = vld [vmem:[#allocation2 + $0x170] sm:$0xff]
      %v382 = vld [vmem:[#allocation2 + $0x178] sm:$0x3]
      %v383 = vld [vmem:[#allocation2 + $0x180] sm:$0xff]
      %v384 = vld [vmem:[#allocation2 + $0x188] sm:$0xff]
      %v385 = vld [vmem:[#allocation2 + $0x190] sm:$0x3]
      %v386 = vld [vmem:[#allocation2 + $0x198] sm:$0xff]
      %v387 = vld [vmem:[#allocation2 + $0x1a0] sm:$0xff]
      %v388 = vld [vmem:[#allocation2 + $0x1a8] sm:$0x3]
      %v389 = vpack.c.bf16 %v336, %v335
      %v390 = vpack.c.bf16 %v339, %v338
      %v391 = vpack.c.bf16 %v342, %v341
      %v392 = vpack.c.bf16 %v345, %v344
      %v393 = vpack.c.bf16 %v348, %v347
      %v394 = vpack.c.bf16 %v351, %v350
      %v395 = vpack.c.bf16 %v354, %v353
      %v396 = vpack.c.bf16 %v357, %v356
      %v397 = vpack.c.bf16 %v360, %v359
      %v398 = vpack.c.bf16 %v363, %v362
      %v399 = vpack.c.bf16 %v366, %v365
      %v400 = vpack.c.bf16 %v369, %v368
      %v401 = vpack.c.bf16 %v372, %v371
      %v402 = vpack.c.bf16 %v375, %v374
      %v403 = vpack.c.bf16 %v378, %v377
      %v404 = vpack.c.bf16 %v381, %v380
      %v421 = vunpack.c.l.b16 %v389
      %v422 = vunpack.c.h.b16 %v389
      %v423 = vunpack.c.l.b16 %v390
      %v424 = vunpack.c.h.b16 %v390
      %v425 = vunpack.c.l.b16 %v391
      %v426 = vunpack.c.h.b16 %v391
      %v427 = vunpack.c.l.b16 %v392
      %v428 = vunpack.c.h.b16 %v392
      %v429 = vunpack.c.l.b16 %v393
      %v430 = vunpack.c.h.b16 %v393
      %v431 = vunpack.c.l.b16 %v394
      %v432 = vunpack.c.h.b16 %v394
      %v433 = vunpack.c.l.b16 %v395
      %v434 = vunpack.c.h.b16 %v395
      %v435 = vunpack.c.l.b16 %v396
      %v436 = vunpack.c.h.b16 %v396
      %v437 = vunpack.c.l.b16 %v397
      %v438 = vunpack.c.h.b16 %v397
      %v439 = vunpack.c.l.b16 %v398
      %v440 = vunpack.c.h.b16 %v398
      %v441 = vunpack.c.l.b16 %v399
      %v442 = vunpack.c.h.b16 %v399
      %v443 = vunpack.c.l.b16 %v400
      %v444 = vunpack.c.h.b16 %v400
      %v445 = vunpack.c.l.b16 %v401
      %v446 = vunpack.c.h.b16 %v401
      %v447 = vunpack.c.l.b16 %v402
      %v448 = vunpack.c.h.b16 %v402
      %v449 = vunpack.c.l.b16 %v403
      %v450 = vunpack.c.h.b16 %v403
      %v451 = vunpack.c.l.b16 %v404
      %v452 = vunpack.c.h.b16 %v404
      %v453 = vpack.c.b16 %v421, %v421
      %v454 = vpack.c.b16 %v422, %v422
      %v455 = vpack.c.b16 %v423, %v423
      %v456 = vpack.c.b16 %v424, %v424
      %v457 = vpack.c.b16 %v425, %v425
      %v458 = vpack.c.b16 %v426, %v426
      %v459 = vpack.c.b16 %v427, %v427
      %v460 = vpack.c.b16 %v428, %v428
      %v461 = vpack.c.b16 %v429, %v429
      %v462 = vpack.c.b16 %v430, %v430
      %v463 = vpack.c.b16 %v431, %v431
      %v464 = vpack.c.b16 %v432, %v432
      %v465 = vpack.c.b16 %v433, %v433
      %v466 = vpack.c.b16 %v434, %v434
      %v467 = vpack.c.b16 %v435, %v435
      %v468 = vpack.c.b16 %v436, %v436
      %v469 = vpack.c.b16 %v437, %v437
      %v470 = vpack.c.b16 %v438, %v438
      %v471 = vpack.c.b16 %v439, %v439
      %v472 = vpack.c.b16 %v440, %v440
      %v473 = vpack.c.b16 %v441, %v441
      %v474 = vpack.c.b16 %v442, %v442
      %v475 = vpack.c.b16 %v443, %v443
      %v476 = vpack.c.b16 %v444, %v444
      %v477 = vpack.c.b16 %v445, %v445
      %v478 = vpack.c.b16 %v446, %v446
      %v479 = vpack.c.b16 %v447, %v447
      %v480 = vpack.c.b16 %v448, %v448
      %v481 = vpack.c.b16 %v449, %v449
      %v482 = vpack.c.b16 %v450, %v450
      %v483 = vpack.c.b16 %v451, %v451
      %v484 = vpack.c.b16 %v452, %v452
      %517 = vst [vmem:[#allocation3] sm:$0xf] %v453
      %518 = vst [vmem:[#allocation3 + $0x24] sm:$0xf] %v454
      %519 = vst [vmem:[#allocation3 + $0x48] sm:$0xf] %v455
      %520 = vst [vmem:[#allocation3 + $0x6c] sm:$0xf] %v456
      %521 = vst [vmem:[#allocation3 + $0x90] sm:$0xf] %v457
      %522 = vst [vmem:[#allocation3 + $0xb4] sm:$0xf] %v458
      %523 = vst [vmem:[#allocation3 + $0xd8] sm:$0xf] %v459
      %524 = vst [vmem:[#allocation3 + $0xfc] sm:$0xf] %v460
      %525 = vst [vmem:[#allocation3 + $0x120] sm:$0xf] %v461
      %526 = vst [vmem:[#allocation3 + $0x144] sm:$0xf] %v462
      %527 = vst [vmem:[#allocation3 + $0x168] sm:$0xf] %v463
      %528 = vst [vmem:[#allocation3 + $0x18c] sm:$0xf] %v464
      %529 = vst [vmem:[#allocation3 + $0x1b0] sm:$0xf] %v465
      %530 = vst [vmem:[#allocation3 + $0x1d4] sm:$0xf] %v466
      %531 = vst [vmem:[#allocation3 + $0x1f8] sm:$0xf] %v467
      %532 = vst [vmem:[#allocation3 + $0x21c] sm:$0xf] %v468
      %533 = vst [vmem:[#allocation3 + $0x240] sm:$0xf] %v469
      %534 = vst [vmem:[#allocation3 + $0x264] sm:$0xf] %v470
      %535 = vst [vmem:[#allocation3 + $0x288] sm:$0xf] %v471
      %536 = vst [vmem:[#allocation3 + $0x2ac] sm:$0xf] %v472
      %537 = vst [vmem:[#allocation3 + $0x2d0] sm:$0xf] %v473
      %538 = vst [vmem:[#allocation3 + $0x2f4] sm:$0xf] %v474
      %539 = vst [vmem:[#allocation3 + $0x318] sm:$0xf] %v475
      %540 = vst [vmem:[#allocation3 + $0x33c] sm:$0xf] %v476
      %541 = vst [vmem:[#allocation3 + $0x360] sm:$0xf] %v477
      %542 = vst [vmem:[#allocation3 + $0x384] sm:$0xf] %v478
      %543 = vst [vmem:[#allocation3 + $0x3a8] sm:$0xf] %v479
      %544 = vst [vmem:[#allocation3 + $0x3cc] sm:$0xf] %v480
      %545 = vst [vmem:[#allocation3 + $0x3f0] sm:$0xf] %v481
      %546 = vst [vmem:[#allocation3 + $0x414] sm:$0xf] %v482
      %547 = vst [vmem:[#allocation3 + $0x438] sm:$0xf] %v483
      %548 = vst [vmem:[#allocation3 + $0x45c] sm:$0xf] %v484
      %vm597 = vcmask 1046528
      %v598 = vrot.slane %v335, 1
      %v599 = vrot.slane %v336, 1
      %v600 = vsel %vm597, %v598, %v599
      %v601 = vrot.slane %v337, 1
      %v602 = vsel %vm597, %v599, %v601
      %v603 = vrot.slane %v338, 1
      %v604 = vrot.slane %v339, 1
      %v605 = vsel %vm597, %v603, %v604
      %v606 = vrot.slane %v340, 1
      %v607 = vsel %vm597, %v604, %v606
      %v608 = vrot.slane %v341, 1
      %v609 = vrot.slane %v342, 1
      %v610 = vsel %vm597, %v608, %v609
      %v611 = vrot.slane %v343, 1
      %v612 = vsel %vm597, %v609, %v611
      %v613 = vrot.slane %v344, 1
      %v614 = vrot.slane %v345, 1
      %v615 = vsel %vm597, %v613, %v614
      %v616 = vrot.slane %v346, 1
      %v617 = vsel %vm597, %v614, %v616
      %v618 = vrot.slane %v347, 1
      %v619 = vrot.slane %v348, 1
      %v620 = vsel %vm597, %v618, %v619
      %v621 = vrot.slane %v349, 1
      %v622 = vsel %vm597, %v619, %v621
      %v623 = vrot.slane %v350, 1
      %v624 = vrot.slane %v351, 1
      %v625 = vsel %vm597, %v623, %v624
      %v626 = vrot.slane %v352, 1
      %v627 = vsel %vm597, %v624, %v626
      %v628 = vrot.slane %v353, 1
      %v629 = vrot.slane %v354, 1
      %v630 = vsel %vm597, %v628, %v629
      %v631 = vrot.slane %v355, 1
      %v632 = vsel %vm597, %v629, %v631
      %v633 = vrot.slane %v356, 1
      %v634 = vrot.slane %v357, 1
      %v635 = vsel %vm597, %v633, %v634
      %v636 = vrot.slane %v358, 1
      %v637 = vsel %vm597, %v634, %v636
      %v638 = vrot.slane %v359, 1
      %v639 = vrot.slane %v360, 1
      %v640 = vsel %vm597, %v638, %v639
      %v641 = vrot.slane %v361, 1
      %v642 = vsel %vm597, %v639, %v641
      %v643 = vrot.slane %v362, 1
      %v644 = vrot.slane %v363, 1
      %v645 = vsel %vm597, %v643, %v644
      %v646 = vrot.slane %v364, 1
      %v647 = vsel %vm597, %v644, %v646
      %v648 = vrot.slane %v365, 1
      %v649 = vrot.slane %v366, 1
      %v650 = vsel %vm597, %v648, %v649
      %v651 = vrot.slane %v367, 1
      %v652 = vsel %vm597, %v649, %v651
      %v653 = vrot.slane %v368, 1
      %v654 = vrot.slane %v369, 1
      %v655 = vsel %vm597, %v653, %v654
      %v656 = vrot.slane %v370, 1
      %v657 = vsel %vm597, %v654, %v656
      %v658 = vrot.slane %v371, 1
      %v659 = vrot.slane %v372, 1
      %v660 = vsel %vm597, %v658, %v659
      %v661 = vrot.slane %v373, 1
      %v662 = vsel %vm597, %v659, %v661
      %v663 = vrot.slane %v374, 1
      %v664 = vrot.slane %v375, 1
      %v665 = vsel %vm597, %v663, %v664
      %v666 = vrot.slane %v376, 1
      %v667 = vsel %vm597, %v664, %v666
      %v668 = vrot.slane %v377, 1
      %v669 = vrot.slane %v378, 1
      %v670 = vsel %vm597, %v668, %v669
      %v671 = vrot.slane %v379, 1
      %v672 = vsel %vm597, %v669, %v671
      %v673 = vrot.slane %v380, 1
      %v674 = vrot.slane %v381, 1
      %v675 = vsel %vm597, %v673, %v674
      %v676 = vrot.slane %v382, 1
      %v677 = vsel %vm597, %v674, %v676
      %v710 = vpack.c.bf16 %v602, %v600
      %v711 = vpack.c.bf16 %v607, %v605
      %v712 = vpack.c.bf16 %v612, %v610
      %v713 = vpack.c.bf16 %v617, %v615
      %v714 = vpack.c.bf16 %v622, %v620
      %v715 = vpack.c.bf16 %v627, %v625
      %v716 = vpack.c.bf16 %v632, %v630
      %v717 = vpack.c.bf16 %v637, %v635
      %v718 = vpack.c.bf16 %v642, %v640
      %v719 = vpack.c.bf16 %v647, %v645
      %v720 = vpack.c.bf16 %v652, %v650
      %v721 = vpack.c.bf16 %v657, %v655
      %v722 = vpack.c.bf16 %v662, %v660
      %v723 = vpack.c.bf16 %v667, %v665
      %v724 = vpack.c.bf16 %v672, %v670
      %v725 = vpack.c.bf16 %v677, %v675
      %v742 = vunpack.c.l.b16 %v710
      %v743 = vunpack.c.h.b16 %v710
      %v744 = vunpack.c.l.b16 %v711
      %v745 = vunpack.c.h.b16 %v711
      %v746 = vunpack.c.l.b16 %v712
      %v747 = vunpack.c.h.b16 %v712
      %v748 = vunpack.c.l.b16 %v713
      %v749 = vunpack.c.h.b16 %v713
      %v750 = vunpack.c.l.b16 %v714
      %v751 = vunpack.c.h.b16 %v714
      %v752 = vunpack.c.l.b16 %v715
      %v753 = vunpack.c.h.b16 %v715
      %v754 = vunpack.c.l.b16 %v716
      %v755 = vunpack.c.h.b16 %v716
      %v756 = vunpack.c.l.b16 %v717
      %v757 = vunpack.c.h.b16 %v717
      %v758 = vunpack.c.l.b16 %v718
      %v759 = vunpack.c.h.b16 %v718
      %v760 = vunpack.c.l.b16 %v719
      %v761 = vunpack.c.h.b16 %v719
      %v762 = vunpack.c.l.b16 %v720
      %v763 = vunpack.c.h.b16 %v720
      %v764 = vunpack.c.l.b16 %v721
      %v765 = vunpack.c.h.b16 %v721
      %v766 = vunpack.c.l.b16 %v722
      %v767 = vunpack.c.h.b16 %v722
      %v768 = vunpack.c.l.b16 %v723
      %v769 = vunpack.c.h.b16 %v723
      %v770 = vunpack.c.l.b16 %v724
      %v771 = vunpack.c.h.b16 %v724
      %v772 = vunpack.c.l.b16 %v725
      %v773 = vunpack.c.h.b16 %v725
      %v774 = vpack.c.b16 %v742, %v742
      %v775 = vpack.c.b16 %v743, %v743
      %v776 = vpack.c.b16 %v744, %v744
      %v777 = vpack.c.b16 %v745, %v745
      %v778 = vpack.c.b16 %v746, %v746
      %v779 = vpack.c.b16 %v747, %v747
      %v780 = vpack.c.b16 %v748, %v748
      %v781 = vpack.c.b16 %v749, %v749
      %v782 = vpack.c.b16 %v750, %v750
      %v783 = vpack.c.b16 %v751, %v751
      %v784 = vpack.c.b16 %v752, %v752
      %v785 = vpack.c.b16 %v753, %v753
      %v786 = vpack.c.b16 %v754, %v754
      %v787 = vpack.c.b16 %v755, %v755
      %v788 = vpack.c.b16 %v756, %v756
      %v789 = vpack.c.b16 %v757, %v757
      %v790 = vpack.c.b16 %v758, %v758
      %v791 = vpack.c.b16 %v759, %v759
      %v792 = vpack.c.b16 %v760, %v760
      %v793 = vpack.c.b16 %v761, %v761
      %v794 = vpack.c.b16 %v762, %v762
      %v795 = vpack.c.b16 %v763, %v763
      %v796 = vpack.c.b16 %v764, %v764
      %v797 = vpack.c.b16 %v765, %v765
      %v798 = vpack.c.b16 %v766, %v766
      %v799 = vpack.c.b16 %v767, %v767
      %v800 = vpack.c.b16 %v768, %v768
      %v801 = vpack.c.b16 %v769, %v769
      %v802 = vpack.c.b16 %v770, %v770
      %v803 = vpack.c.b16 %v771, %v771
      %v804 = vpack.c.b16 %v772, %v772
      %v805 = vpack.c.b16 %v773, %v773
      %838 = vst [vmem:[#allocation3 + $0x4] sm:$0xf] %v774
      %839 = vst [vmem:[#allocation3 + $0x28] sm:$0xf] %v775
      %840 = vst [vmem:[#allocation3 + $0x4c] sm:$0xf] %v776
      %841 = vst [vmem:[#allocation3 + $0x70] sm:$0xf] %v777
      %842 = vst [vmem:[#allocation3 + $0x94] sm:$0xf] %v778
      %843 = vst [vmem:[#allocation3 + $0xb8] sm:$0xf] %v779
      %844 = vst [vmem:[#allocation3 + $0xdc] sm:$0xf] %v780
      %845 = vst [vmem:[#allocation3 + $0x100] sm:$0xf] %v781
      %846 = vst [vmem:[#allocation3 + $0x124] sm:$0xf] %v782
      %847 = vst [vmem:[#allocation3 + $0x148] sm:$0xf] %v783
      %848 = vst [vmem:[#allocation3 + $0x16c] sm:$0xf] %v784
      %849 = vst [vmem:[#allocation3 + $0x190] sm:$0xf] %v785
      %850 = vst [vmem:[#allocation3 + $0x1b4] sm:$0xf] %v786
      %851 = vst [vmem:[#allocation3 + $0x1d8] sm:$0xf] %v787
      %852 = vst [vmem:[#allocation3 + $0x1fc] sm:$0xf] %v788
      %853 = vst [vmem:[#allocation3 + $0x220] sm:$0xf] %v789
      %854 = vst [vmem:[#allocation3 + $0x244] sm:$0xf] %v790
      %855 = vst [vmem:[#allocation3 + $0x268] sm:$0xf] %v791
      %856 = vst [vmem:[#allocation3 + $0x28c] sm:$0xf] %v792
      %857 = vst [vmem:[#allocation3 + $0x2b0] sm:$0xf] %v793
      %858 = vst [vmem:[#allocation3 + $0x2d4] sm:$0xf] %v794
      %859 = vst [vmem:[#allocation3 + $0x2f8] sm:$0xf] %v795
      %860 = vst [vmem:[#allocation3 + $0x31c] sm:$0xf] %v796
      %861 = vst [vmem:[#allocation3 + $0x340] sm:$0xf] %v797
      %862 = vst [vmem:[#allocation3 + $0x364] sm:$0xf] %v798
      %863 = vst [vmem:[#allocation3 + $0x388] sm:$0xf] %v799
      %864 = vst [vmem:[#allocation3 + $0x3ac] sm:$0xf] %v800
      %865 = vst [vmem:[#allocation3 + $0x3d0] sm:$0xf] %v801
      %866 = vst [vmem:[#allocation3 + $0x3f4] sm:$0xf] %v802
      %867 = vst [vmem:[#allocation3 + $0x418] sm:$0xf] %v803
      %868 = vst [vmem:[#allocation3 + $0x43c] sm:$0xf] %v804
      %869 = vst [vmem:[#allocation3 + $0x460] sm:$0xf] %v805
      %vm870 = vcmask 1045504
      %v871 = vrot.slane %v335, 2
      %v872 = vrot.slane %v336, 2
      %v873 = vsel %vm870, %v871, %v872
      %v874 = vrot.slane %v337, 2
      %v875 = vsel %vm870, %v872, %v874
      %v876 = vrot.slane %v338, 2
      %v877 = vrot.slane %v339, 2
      %v878 = vsel %vm870, %v876, %v877
      %v879 = vrot.slane %v340, 2
      %v880 = vsel %vm870, %v877, %v879
      %v881 = vrot.slane %v341, 2
      %v882 = vrot.slane %v342, 2
      %v883 = vsel %vm870, %v881, %v882
      %v884 = vrot.slane %v343, 2
      %v885 = vsel %vm870, %v882, %v884
      %v886 = vrot.slane %v344, 2
      %v887 = vrot.slane %v345, 2
      %v888 = vsel %vm870, %v886, %v887
      %v889 = vrot.slane %v346, 2
      %v890 = vsel %vm870, %v887, %v889
      %v891 = vrot.slane %v347, 2
      %v892 = vrot.slane %v348, 2
      %v893 = vsel %vm870, %v891, %v892
      %v894 = vrot.slane %v349, 2
      %v895 = vsel %vm870, %v892, %v894
      %v896 = vrot.slane %v350, 2
      %v897 = vrot.slane %v351, 2
      %v898 = vsel %vm870, %v896, %v897
      %v899 = vrot.slane %v352, 2
      %v900 = vsel %vm870, %v897, %v899
      %v901 = vrot.slane %v353, 2
      %v902 = vrot.slane %v354, 2
      %v903 = vsel %vm870, %v901, %v902
      %v904 = vrot.slane %v355, 2
      %v905 = vsel %vm870, %v902, %v904
      %v906 = vrot.slane %v356, 2
      %v907 = vrot.slane %v357, 2
      %v908 = vsel %vm870, %v906, %v907
      %v909 = vrot.slane %v358, 2
      %v910 = vsel %vm870, %v907, %v909
      %v911 = vrot.slane %v359, 2
      %v912 = vrot.slane %v360, 2
      %v913 = vsel %vm870, %v911, %v912
      %v914 = vrot.slane %v361, 2
      %v915 = vsel %vm870, %v912, %v914
      %v916 = vrot.slane %v362, 2
      %v917 = vrot.slane %v363, 2
      %v918 = vsel %vm870, %v916, %v917
      %v919 = vrot.slane %v364, 2
      %v920 = vsel %vm870, %v917, %v919
      %v921 = vrot.slane %v365, 2
      %v922 = vrot.slane %v366, 2
      %v923 = vsel %vm870, %v921, %v922
      %v924 = vrot.slane %v367, 2
      %v925 = vsel %vm870, %v922, %v924
      %v926 = vrot.slane %v368, 2
      %v927 = vrot.slane %v369, 2
      %v928 = vsel %vm870, %v926, %v927
      %v929 = vrot.slane %v370, 2
      %v930 = vsel %vm870, %v927, %v929
      %v931 = vrot.slane %v371, 2
      %v932 = vrot.slane %v372, 2
      %v933 = vsel %vm870, %v931, %v932
      %v934 = vrot.slane %v373, 2
      %v935 = vsel %vm870, %v932, %v934
      %v936 = vrot.slane %v374, 2
      %v937 = vrot.slane %v375, 2
      %v938 = vsel %vm870, %v936, %v937
      %v939 = vrot.slane %v376, 2
      %v940 = vsel %vm870, %v937, %v939
      %v941 = vrot.slane %v377, 2
      %v942 = vrot.slane %v378, 2
      %v943 = vsel %vm870, %v941, %v942
      %v944 = vrot.slane %v379, 2
      %v945 = vsel %vm870, %v942, %v944
      %v946 = vrot.slane %v380, 2
      %v947 = vrot.slane %v381, 2
      %v948 = vsel %vm870, %v946, %v947
      %v949 = vrot.slane %v382, 2
      %v950 = vsel %vm870, %v947, %v949
      %v983 = vpack.c.bf16 %v875, %v873
      %v984 = vpack.c.bf16 %v880, %v878
      %v985 = vpack.c.bf16 %v885, %v883
      %v986 = vpack.c.bf16 %v890, %v888
      %v987 = vpack.c.bf16 %v895, %v893
      %v988 = vpack.c.bf16 %v900, %v898
      %v989 = vpack.c.bf16 %v905, %v903
      %v990 = vpack.c.bf16 %v910, %v908
      %v991 = vpack.c.bf16 %v915, %v913
      %v992 = vpack.c.bf16 %v920, %v918
      %v993 = vpack.c.bf16 %v925, %v923
      %v994 = vpack.c.bf16 %v930, %v928
      %v995 = vpack.c.bf16 %v935, %v933
      %v996 = vpack.c.bf16 %v940, %v938
      %v997 = vpack.c.bf16 %v945, %v943
      %v998 = vpack.c.bf16 %v950, %v948
      %v1015 = vunpack.c.l.b16 %v983
      %v1016 = vunpack.c.h.b16 %v983
      %v1017 = vunpack.c.l.b16 %v984
      %v1018 = vunpack.c.h.b16 %v984
      %v1019 = vunpack.c.l.b16 %v985
      %v1020 = vunpack.c.h.b16 %v985
      %v1021 = vunpack.c.l.b16 %v986
      %v1022 = vunpack.c.h.b16 %v986
      %v1023 = vunpack.c.l.b16 %v987
      %v1024 = vunpack.c.h.b16 %v987
      %v1025 = vunpack.c.l.b16 %v988
      %v1026 = vunpack.c.h.b16 %v988
      %v1027 = vunpack.c.l.b16 %v989
      %v1028 = vunpack.c.h.b16 %v989
      %v1029 = vunpack.c.l.b16 %v990
      %v1030 = vunpack.c.h.b16 %v990
      %v1031 = vunpack.c.l.b16 %v991
      %v1032 = vunpack.c.h.b16 %v991
      %v1033 = vunpack.c.l.b16 %v992
      %v1034 = vunpack.c.h.b16 %v992
      %v1035 = vunpack.c.l.b16 %v993
      %v1036 = vunpack.c.h.b16 %v993
      %v1037 = vunpack.c.l.b16 %v994
      %v1038 = vunpack.c.h.b16 %v994
      %v1039 = vunpack.c.l.b16 %v995
      %v1040 = vunpack.c.h.b16 %v995
      %v1041 = vunpack.c.l.b16 %v996
      %v1042 = vunpack.c.h.b16 %v996
      %v1043 = vunpack.c.l.b16 %v997
      %v1044 = vunpack.c.h.b16 %v997
      %v1045 = vunpack.c.l.b16 %v998
      %v1046 = vunpack.c.h.b16 %v998
      %v1047 = vpack.c.b16 %v1015, %v1015
      %v1048 = vpack.c.b16 %v1016, %v1016
      %v1049 = vpack.c.b16 %v1017, %v1017
      %v1050 = vpack.c.b16 %v1018, %v1018
      %v1051 = vpack.c.b16 %v1019, %v1019
      %v1052 = vpack.c.b16 %v1020, %v1020
      %v1053 = vpack.c.b16 %v1021, %v1021
      %v1054 = vpack.c.b16 %v1022, %v1022
      %v1055 = vpack.c.b16 %v1023, %v1023
      %v1056 = vpack.c.b16 %v1024, %v1024
      %v1057 = vpack.c.b16 %v1025, %v1025
      %v1058 = vpack.c.b16 %v1026, %v1026
      %v1059 = vpack.c.b16 %v1027, %v1027
      %v1060 = vpack.c.b16 %v1028, %v1028
      %v1061 = vpack.c.b16 %v1029, %v1029
      %v1062 = vpack.c.b16 %v1030, %v1030
      %v1063 = vpack.c.b16 %v1031, %v1031
      %v1064 = vpack.c.b16 %v1032, %v1032
      %v1065 = vpack.c.b16 %v1033, %v1033
      %v1066 = vpack.c.b16 %v1034, %v1034
      %v1067 = vpack.c.b16 %v1035, %v1035
      %v1068 = vpack.c.b16 %v1036, %v1036
      %v1069 = vpack.c.b16 %v1037, %v1037
      %v1070 = vpack.c.b16 %v1038, %v1038
      %v1071 = vpack.c.b16 %v1039, %v1039
      %v1072 = vpack.c.b16 %v1040, %v1040
      %v1073 = vpack.c.b16 %v1041, %v1041
      %v1074 = vpack.c.b16 %v1042, %v1042
      %v1075 = vpack.c.b16 %v1043, %v1043
      %v1076 = vpack.c.b16 %v1044, %v1044
      %v1077 = vpack.c.b16 %v1045, %v1045
      %v1078 = vpack.c.b16 %v1046, %v1046
      %1111 = vst [vmem:[#allocation3 + $0x8] sm:$0xf] %v1047
      %1112 = vst [vmem:[#allocation3 + $0x2c] sm:$0xf] %v1048
      %1113 = vst [vmem:[#allocation3 + $0x50] sm:$0xf] %v1049
      %1114 = vst [vmem:[#allocation3 + $0x74] sm:$0xf] %v1050
      %1115 = vst [vmem:[#allocation3 + $0x98] sm:$0xf] %v1051
      %1116 = vst [vmem:[#allocation3 + $0xbc] sm:$0xf] %v1052
      %1117 = vst [vmem:[#allocation3 + $0xe0] sm:$0xf] %v1053
      %1118 = vst [vmem:[#allocation3 + $0x104] sm:$0xf] %v1054
      %1119 = vst [vmem:[#allocation3 + $0x128] sm:$0xf] %v1055
      %1120 = vst [vmem:[#allocation3 + $0x14c] sm:$0xf] %v1056
      %1121 = vst [vmem:[#allocation3 + $0x170] sm:$0xf] %v1057
      %1122 = vst [vmem:[#allocation3 + $0x194] sm:$0xf] %v1058
      %1123 = vst [vmem:[#allocation3 + $0x1b8] sm:$0xf] %v1059
      %1124 = vst [vmem:[#allocation3 + $0x1dc] sm:$0xf] %v1060
      %1125 = vst [vmem:[#allocation3 + $0x200] sm:$0xf] %v1061
      %1126 = vst [vmem:[#allocation3 + $0x224] sm:$0xf] %v1062
      %1127 = vst [vmem:[#allocation3 + $0x248] sm:$0xf] %v1063
      %1128 = vst [vmem:[#allocation3 + $0x26c] sm:$0xf] %v1064
      %1129 = vst [vmem:[#allocation3 + $0x290] sm:$0xf] %v1065
      %1130 = vst [vmem:[#allocation3 + $0x2b4] sm:$0xf] %v1066
      %1131 = vst [vmem:[#allocation3 + $0x2d8] sm:$0xf] %v1067
      %1132 = vst [vmem:[#allocation3 + $0x2fc] sm:$0xf] %v1068
      %1133 = vst [vmem:[#allocation3 + $0x320] sm:$0xf] %v1069
      %1134 = vst [vmem:[#allocation3 + $0x344] sm:$0xf] %v1070
      %1135 = vst [vmem:[#allocation3 + $0x368] sm:$0xf] %v1071
      %1136 = vst [vmem:[#allocation3 + $0x38c] sm:$0xf] %v1072
      %1137 = vst [vmem:[#allocation3 + $0x3b0] sm:$0xf] %v1073
      %1138 = vst [vmem:[#allocation3 + $0x3d4] sm:$0xf] %v1074
      %1139 = vst [vmem:[#allocation3 + $0x3f8] sm:$0xf] %v1075
      %1140 = vst [vmem:[#allocation3 + $0x41c] sm:$0xf] %v1076
      %1141 = vst [vmem:[#allocation3 + $0x440] sm:$0xf] %v1077
      %1142 = vst [vmem:[#allocation3 + $0x464] sm:$0xf] %v1078
      %v1143 = vpack.c.bf16 %v384, %v383
      %v1145 = vunpack.c.l.b16 %v1143
      %v1146 = vunpack.c.h.b16 %v1143
      %v1147 = vpack.c.b16 %v1145, %v1145
      %v1148 = vpack.c.b16 %v1146, %v1146
      %1151 = vst [vmem:[#allocation3 + $0xc] sm:$0xf] %v455
      %1152 = vst [vmem:[#allocation3 + $0x30] sm:$0xf] %v456
      %1153 = vst [vmem:[#allocation3 + $0x54] sm:$0xf] %v457
      %1154 = vst [vmem:[#allocation3 + $0x78] sm:$0xf] %v458
      %1155 = vst [vmem:[#allocation3 + $0x9c] sm:$0xf] %v459
      %1156 = vst [vmem:[#allocation3 + $0xc0] sm:$0xf] %v460
      %1157 = vst [vmem:[#allocation3 + $0xe4] sm:$0xf] %v461
      %1158 = vst [vmem:[#allocation3 + $0x108] sm:$0xf] %v462
      %1159 = vst [vmem:[#allocation3 + $0x12c] sm:$0xf] %v463
      %1160 = vst [vmem:[#allocation3 + $0x150] sm:$0xf] %v464
      %1161 = vst [vmem:[#allocation3 + $0x174] sm:$0xf] %v465
      %1162 = vst [vmem:[#allocation3 + $0x198] sm:$0xf] %v466
      %1163 = vst [vmem:[#allocation3 + $0x1bc] sm:$0xf] %v467
      %1164 = vst [vmem:[#allocation3 + $0x1e0] sm:$0xf] %v468
      %1165 = vst [vmem:[#allocation3 + $0x204] sm:$0xf] %v469
      %1166 = vst [vmem:[#allocation3 + $0x228] sm:$0xf] %v470
      %1167 = vst [vmem:[#allocation3 + $0x24c] sm:$0xf] %v471
      %1168 = vst [vmem:[#allocation3 + $0x270] sm:$0xf] %v472
      %1169 = vst [vmem:[#allocation3 + $0x294] sm:$0xf] %v473
      %1170 = vst [vmem:[#allocation3 + $0x2b8] sm:$0xf] %v474
      %1171 = vst [vmem:[#allocation3 + $0x2dc] sm:$0xf] %v475
      %1172 = vst [vmem:[#allocation3 + $0x300] sm:$0xf] %v476
      %1173 = vst [vmem:[#allocation3 + $0x324] sm:$0xf] %v477
      %1174 = vst [vmem:[#allocation3 + $0x348] sm:$0xf] %v478
      %1175 = vst [vmem:[#allocation3 + $0x36c] sm:$0xf] %v479
      %1176 = vst [vmem:[#allocation3 + $0x390] sm:$0xf] %v480
      %1177 = vst [vmem:[#allocation3 + $0x3b4] sm:$0xf] %v481
      %1178 = vst [vmem:[#allocation3 + $0x3d8] sm:$0xf] %v482
      %1179 = vst [vmem:[#allocation3 + $0x3fc] sm:$0xf] %v483
      %1180 = vst [vmem:[#allocation3 + $0x420] sm:$0xf] %v484
      %1181 = vst [vmem:[#allocation3 + $0x444] sm:$0xf] %v1147
      %1182 = vst [vmem:[#allocation3 + $0x468] sm:$0xf] %v1148
      %v1186 = vrot.slane %v383, 1
      %v1187 = vrot.slane %v384, 1
      %v1188 = vsel %vm597, %v1186, %v1187
      %v1189 = vrot.slane %v385, 1
      %v1190 = vsel %vm597, %v1187, %v1189
      %v1193 = vpack.c.bf16 %v1190, %v1188
      %v1195 = vunpack.c.l.b16 %v1193
      %v1196 = vunpack.c.h.b16 %v1193
      %v1197 = vpack.c.b16 %v1195, %v1195
      %v1198 = vpack.c.b16 %v1196, %v1196
      %1201 = vst [vmem:[#allocation3 + $0x10] sm:$0xf] %v776
      %1202 = vst [vmem:[#allocation3 + $0x34] sm:$0xf] %v777
      %1203 = vst [vmem:[#allocation3 + $0x58] sm:$0xf] %v778
      %1204 = vst [vmem:[#allocation3 + $0x7c] sm:$0xf] %v779
      %1205 = vst [vmem:[#allocation3 + $0xa0] sm:$0xf] %v780
      %1206 = vst [vmem:[#allocation3 + $0xc4] sm:$0xf] %v781
      %1207 = vst [vmem:[#allocation3 + $0xe8] sm:$0xf] %v782
      %1208 = vst [vmem:[#allocation3 + $0x10c] sm:$0xf] %v783
      %1209 = vst [vmem:[#allocation3 + $0x130] sm:$0xf] %v784
      %1210 = vst [vmem:[#allocation3 + $0x154] sm:$0xf] %v785
      %1211 = vst [vmem:[#allocation3 + $0x178] sm:$0xf] %v786
      %1212 = vst [vmem:[#allocation3 + $0x19c] sm:$0xf] %v787
      %1213 = vst [vmem:[#allocation3 + $0x1c0] sm:$0xf] %v788
      %1214 = vst [vmem:[#allocation3 + $0x1e4] sm:$0xf] %v789
      %1215 = vst [vmem:[#allocation3 + $0x208] sm:$0xf] %v790
      %1216 = vst [vmem:[#allocation3 + $0x22c] sm:$0xf] %v791
      %1217 = vst [vmem:[#allocation3 + $0x250] sm:$0xf] %v792
      %1218 = vst [vmem:[#allocation3 + $0x274] sm:$0xf] %v793
      %1219 = vst [vmem:[#allocation3 + $0x298] sm:$0xf] %v794
      %1220 = vst [vmem:[#allocation3 + $0x2bc] sm:$0xf] %v795
      %1221 = vst [vmem:[#allocation3 + $0x2e0] sm:$0xf] %v796
      %1222 = vst [vmem:[#allocation3 + $0x304] sm:$0xf] %v797
      %1223 = vst [vmem:[#allocation3 + $0x328] sm:$0xf] %v798
      %1224 = vst [vmem:[#allocation3 + $0x34c] sm:$0xf] %v799
      %1225 = vst [vmem:[#allocation3 + $0x370] sm:$0xf] %v800
      %1226 = vst [vmem:[#allocation3 + $0x394] sm:$0xf] %v801
      %1227 = vst [vmem:[#allocation3 + $0x3b8] sm:$0xf] %v802
      %1228 = vst [vmem:[#allocation3 + $0x3dc] sm:$0xf] %v803
      %1229 = vst [vmem:[#allocation3 + $0x400] sm:$0xf] %v804
      %1230 = vst [vmem:[#allocation3 + $0x424] sm:$0xf] %v805
      %1231 = vst [vmem:[#allocation3 + $0x448] sm:$0xf] %v1197
      %1232 = vst [vmem:[#allocation3 + $0x46c] sm:$0xf] %v1198
      %v1233 = vrot.slane %v383, 2
      %v1234 = vrot.slane %v384, 2
      %v1235 = vsel %vm870, %v1233, %v1234
      %v1236 = vrot.slane %v385, 2
      %v1237 = vsel %vm870, %v1234, %v1236
      %v1240 = vpack.c.bf16 %v1237, %v1235
      %v1242 = vunpack.c.l.b16 %v1240
      %v1243 = vunpack.c.h.b16 %v1240
      %v1244 = vpack.c.b16 %v1242, %v1242
      %v1245 = vpack.c.b16 %v1243, %v1243
      %1248 = vst [vmem:[#allocation3 + $0x14] sm:$0xf] %v1049
      %1249 = vst [vmem:[#allocation3 + $0x38] sm:$0xf] %v1050
      %1250 = vst [vmem:[#allocation3 + $0x5c] sm:$0xf] %v1051
      %1251 = vst [vmem:[#allocation3 + $0x80] sm:$0xf] %v1052
      %1252 = vst [vmem:[#allocation3 + $0xa4] sm:$0xf] %v1053
      %1253 = vst [vmem:[#allocation3 + $0xc8] sm:$0xf] %v1054
      %1254 = vst [vmem:[#allocation3 + $0xec] sm:$0xf] %v1055
      %1255 = vst [vmem:[#allocation3 + $0x110] sm:$0xf] %v1056
      %1256 = vst [vmem:[#allocation3 + $0x134] sm:$0xf] %v1057
      %1257 = vst [vmem:[#allocation3 + $0x158] sm:$0xf] %v1058
      %1258 = vst [vmem:[#allocation3 + $0x17c] sm:$0xf] %v1059
      %1259 = vst [vmem:[#allocation3 + $0x1a0] sm:$0xf] %v1060
      %1260 = vst [vmem:[#allocation3 + $0x1c4] sm:$0xf] %v1061
      %1261 = vst [vmem:[#allocation3 + $0x1e8] sm:$0xf] %v1062
      %1262 = vst [vmem:[#allocation3 + $0x20c] sm:$0xf] %v1063
      %1263 = vst [vmem:[#allocation3 + $0x230] sm:$0xf] %v1064
      %1264 = vst [vmem:[#allocation3 + $0x254] sm:$0xf] %v1065
      %1265 = vst [vmem:[#allocation3 + $0x278] sm:$0xf] %v1066
      %1266 = vst [vmem:[#allocation3 + $0x29c] sm:$0xf] %v1067
      %1267 = vst [vmem:[#allocation3 + $0x2c0] sm:$0xf] %v1068
      %1268 = vst [vmem:[#allocation3 + $0x2e4] sm:$0xf] %v1069
      %1269 = vst [vmem:[#allocation3 + $0x308] sm:$0xf] %v1070
      %1270 = vst [vmem:[#allocation3 + $0x32c] sm:$0xf] %v1071
      %1271 = vst [vmem:[#allocation3 + $0x350] sm:$0xf] %v1072
      %1272 = vst [vmem:[#allocation3 + $0x374] sm:$0xf] %v1073
      %1273 = vst [vmem:[#allocation3 + $0x398] sm:$0xf] %v1074
      %1274 = vst [vmem:[#allocation3 + $0x3bc] sm:$0xf] %v1075
      %1275 = vst [vmem:[#allocation3 + $0x3e0] sm:$0xf] %v1076
      %1276 = vst [vmem:[#allocation3 + $0x404] sm:$0xf] %v1077
      %1277 = vst [vmem:[#allocation3 + $0x428] sm:$0xf] %v1078
      %1278 = vst [vmem:[#allocation3 + $0x44c] sm:$0xf] %v1244
      %1279 = vst [vmem:[#allocation3 + $0x470] sm:$0xf] %v1245
      %v1280 = vpack.c.bf16 %v387, %v386
      %v1282 = vunpack.c.l.b16 %v1280
      %v1283 = vunpack.c.h.b16 %v1280
      %v1284 = vpack.c.b16 %v1282, %v1282
      %v1285 = vpack.c.b16 %v1283, %v1283
      %1288 = vst [vmem:[#allocation3 + $0x18] sm:$0xf] %v457
      %1289 = vst [vmem:[#allocation3 + $0x3c] sm:$0xf] %v458
      %1290 = vst [vmem:[#allocation3 + $0x60] sm:$0xf] %v459
      %1291 = vst [vmem:[#allocation3 + $0x84] sm:$0xf] %v460
      %1292 = vst [vmem:[#allocation3 + $0xa8] sm:$0xf] %v461
      %1293 = vst [vmem:[#allocation3 + $0xcc] sm:$0xf] %v462
      %1294 = vst [vmem:[#allocation3 + $0xf0] sm:$0xf] %v463
      %1295 = vst [vmem:[#allocation3 + $0x114] sm:$0xf] %v464
      %1296 = vst [vmem:[#allocation3 + $0x138] sm:$0xf] %v465
      %1297 = vst [vmem:[#allocation3 + $0x15c] sm:$0xf] %v466
      %1298 = vst [vmem:[#allocation3 + $0x180] sm:$0xf] %v467
      %1299 = vst [vmem:[#allocation3 + $0x1a4] sm:$0xf] %v468
      %1300 = vst [vmem:[#allocation3 + $0x1c8] sm:$0xf] %v469
      %1301 = vst [vmem:[#allocation3 + $0x1ec] sm:$0xf] %v470
      %1302 = vst [vmem:[#allocation3 + $0x210] sm:$0xf] %v471
      %1303 = vst [vmem:[#allocation3 + $0x234] sm:$0xf] %v472
      %1304 = vst [vmem:[#allocation3 + $0x258] sm:$0xf] %v473
      %1305 = vst [vmem:[#allocation3 + $0x27c] sm:$0xf] %v474
      %1306 = vst [vmem:[#allocation3 + $0x2a0] sm:$0xf] %v475
      %1307 = vst [vmem:[#allocation3 + $0x2c4] sm:$0xf] %v476
      %1308 = vst [vmem:[#allocation3 + $0x2e8] sm:$0xf] %v477
      %1309 = vst [vmem:[#allocation3 + $0x30c] sm:$0xf] %v478
      %1310 = vst [vmem:[#allocation3 + $0x330] sm:$0xf] %v479
      %1311 = vst [vmem:[#allocation3 + $0x354] sm:$0xf] %v480
      %1312 = vst [vmem:[#allocation3 + $0x378] sm:$0xf] %v481
      %1313 = vst [vmem:[#allocation3 + $0x39c] sm:$0xf] %v482
      %1314 = vst [vmem:[#allocation3 + $0x3c0] sm:$0xf] %v483
      %1315 = vst [vmem:[#allocation3 + $0x3e4] sm:$0xf] %v484
      %1316 = vst [vmem:[#allocation3 + $0x408] sm:$0xf] %v1147
      %1317 = vst [vmem:[#allocation3 + $0x42c] sm:$0xf] %v1148
      %1318 = vst [vmem:[#allocation3 + $0x450] sm:$0xf] %v1284
      %1319 = vst [vmem:[#allocation3 + $0x474] sm:$0xf] %v1285
      %v1323 = vrot.slane %v386, 1
      %v1324 = vrot.slane %v387, 1
      %v1325 = vsel %vm597, %v1323, %v1324
      %v1326 = vrot.slane %v388, 1
      %v1327 = vsel %vm597, %v1324, %v1326
      %v1330 = vpack.c.bf16 %v1327, %v1325
      %v1332 = vunpack.c.l.b16 %v1330
      %v1333 = vunpack.c.h.b16 %v1330
      %v1334 = vpack.c.b16 %v1332, %v1332
      %v1335 = vpack.c.b16 %v1333, %v1333
      %1338 = vst [vmem:[#allocation3 + $0x1c] sm:$0xf] %v778
      %1339 = vst [vmem:[#allocation3 + $0x40] sm:$0xf] %v779
      %1340 = vst [vmem:[#allocation3 + $0x64] sm:$0xf] %v780
      %1341 = vst [vmem:[#allocation3 + $0x88] sm:$0xf] %v781
      %1342 = vst [vmem:[#allocation3 + $0xac] sm:$0xf] %v782
      %1343 = vst [vmem:[#allocation3 + $0xd0] sm:$0xf] %v783
      %1344 = vst [vmem:[#allocation3 + $0xf4] sm:$0xf] %v784
      %1345 = vst [vmem:[#allocation3 + $0x118] sm:$0xf] %v785
      %1346 = vst [vmem:[#allocation3 + $0x13c] sm:$0xf] %v786
      %1347 = vst [vmem:[#allocation3 + $0x160] sm:$0xf] %v787
      %1348 = vst [vmem:[#allocation3 + $0x184] sm:$0xf] %v788
      %1349 = vst [vmem:[#allocation3 + $0x1a8] sm:$0xf] %v789
      %1350 = vst [vmem:[#allocation3 + $0x1cc] sm:$0xf] %v790
      %1351 = vst [vmem:[#allocation3 + $0x1f0] sm:$0xf] %v791
      %1352 = vst [vmem:[#allocation3 + $0x214] sm:$0xf] %v792
      %1353 = vst [vmem:[#allocation3 + $0x238] sm:$0xf] %v793
      %1354 = vst [vmem:[#allocation3 + $0x25c] sm:$0xf] %v794
      %1355 = vst [vmem:[#allocation3 + $0x280] sm:$0xf] %v795
      %1356 = vst [vmem:[#allocation3 + $0x2a4] sm:$0xf] %v796
      %1357 = vst [vmem:[#allocation3 + $0x2c8] sm:$0xf] %v797
      %1358 = vst [vmem:[#allocation3 + $0x2ec] sm:$0xf] %v798
      %1359 = vst [vmem:[#allocation3 + $0x310] sm:$0xf] %v799
      %1360 = vst [vmem:[#allocation3 + $0x334] sm:$0xf] %v800
      %1361 = vst [vmem:[#allocation3 + $0x358] sm:$0xf] %v801
      %1362 = vst [vmem:[#allocation3 + $0x37c] sm:$0xf] %v802
      %1363 = vst [vmem:[#allocation3 + $0x3a0] sm:$0xf] %v803
      %1364 = vst [vmem:[#allocation3 + $0x3c4] sm:$0xf] %v804
      %1365 = vst [vmem:[#allocation3 + $0x3e8] sm:$0xf] %v805
      %1366 = vst [vmem:[#allocation3 + $0x40c] sm:$0xf] %v1197
      %1367 = vst [vmem:[#allocation3 + $0x430] sm:$0xf] %v1198
      %1368 = vst [vmem:[#allocation3 + $0x454] sm:$0xf] %v1334
      %1369 = vst [vmem:[#allocation3 + $0x478] sm:$0xf] %v1335
      %v1370 = vrot.slane %v386, 2
      %v1371 = vrot.slane %v387, 2
      %v1372 = vsel %vm870, %v1370, %v1371
      %v1373 = vrot.slane %v388, 2
      %v1374 = vsel %vm870, %v1371, %v1373
      %v1377 = vpack.c.bf16 %v1374, %v1372
      %v1379 = vunpack.c.l.b16 %v1377
      %v1380 = vunpack.c.h.b16 %v1377
      %v1381 = vpack.c.b16 %v1379, %v1379
      %v1382 = vpack.c.b16 %v1380, %v1380
      %1385 = vst [vmem:[#allocation3 + $0x20] sm:$0xf] %v1051
      %1386 = vst [vmem:[#allocation3 + $0x44] sm:$0xf] %v1052
      %1387 = vst [vmem:[#allocation3 + $0x68] sm:$0xf] %v1053
      %1388 = vst [vmem:[#allocation3 + $0x8c] sm:$0xf] %v1054
      %1389 = vst [vmem:[#allocation3 + $0xb0] sm:$0xf] %v1055
      %1390 = vst [vmem:[#allocation3 + $0xd4] sm:$0xf] %v1056
      %1391 = vst [vmem:[#allocation3 + $0xf8] sm:$0xf] %v1057
      %1392 = vst [vmem:[#allocation3 + $0x11c] sm:$0xf] %v1058
      %1393 = vst [vmem:[#allocation3 + $0x140] sm:$0xf] %v1059
      %1394 = vst [vmem:[#allocation3 + $0x164] sm:$0xf] %v1060
      %1395 = vst [vmem:[#allocation3 + $0x188] sm:$0xf] %v1061
      %1396 = vst [vmem:[#allocation3 + $0x1ac] sm:$0xf] %v1062
      %1397 = vst [vmem:[#allocation3 + $0x1d0] sm:$0xf] %v1063
      %1398 = vst [vmem:[#allocation3 + $0x1f4] sm:$0xf] %v1064
      %1399 = vst [vmem:[#allocation3 + $0x218] sm:$0xf] %v1065
      %1400 = vst [vmem:[#allocation3 + $0x23c] sm:$0xf] %v1066
      %1401 = vst [vmem:[#allocation3 + $0x260] sm:$0xf] %v1067
      %1402 = vst [vmem:[#allocation3 + $0x284] sm:$0xf] %v1068
      %1403 = vst [vmem:[#allocation3 + $0x2a8] sm:$0xf] %v1069
      %1404 = vst [vmem:[#allocation3 + $0x2cc] sm:$0xf] %v1070
      %1405 = vst [vmem:[#allocation3 + $0x2f0] sm:$0xf] %v1071
      %1406 = vst [vmem:[#allocation3 + $0x314] sm:$0xf] %v1072
      %1407 = vst [vmem:[#allocation3 + $0x338] sm:$0xf] %v1073
      %1408 = vst [vmem:[#allocation3 + $0x35c] sm:$0xf] %v1074
      %1409 = vst [vmem:[#allocation3 + $0x380] sm:$0xf] %v1075
      %1410 = vst [vmem:[#allocation3 + $0x3a4] sm:$0xf] %v1076
      %1411 = vst [vmem:[#allocation3 + $0x3c8] sm:$0xf] %v1077
      %1412 = vst [vmem:[#allocation3 + $0x3ec] sm:$0xf] %v1078
      %1413 = vst [vmem:[#allocation3 + $0x410] sm:$0xf] %v1244
      %1414 = vst [vmem:[#allocation3 + $0x434] sm:$0xf] %v1245
      %1415 = vst [vmem:[#allocation3 + $0x458] sm:$0xf] %v1381
      %1416 = vst [vmem:[#allocation3 + $0x47c] sm:$0xf] %v1382
      %v1417 = vld [vmem:[#allocation3] sm:$0xff]
      %v1418 = vld [vmem:[#allocation3 + $0x8] sm:$0xff]
      %v1419 = vld [vmem:[#allocation3 + $0x10] sm:$0xff]
      %v1420 = vld [vmem:[#allocation3 + $0x18] sm:$0xff]
      %v1421 = vld [vmem:[#allocation3 + $0x20] sm:$0xf]
      %v1422 = vld [vmem:[#allocation3 + $0x24] sm:$0xff]
      %v1423 = vld [vmem:[#allocation3 + $0x2c] sm:$0xff]
      %v1424 = vld [vmem:[#allocation3 + $0x34] sm:$0xff]
      %v1425 = vld [vmem:[#allocation3 + $0x3c] sm:$0xff]
      %v1426 = vld [vmem:[#allocation3 + $0x44] sm:$0xf]
      %v1427 = vld [vmem:[#allocation3 + $0x48] sm:$0xff]
      %v1428 = vld [vmem:[#allocation3 + $0x50] sm:$0xff]
      %v1429 = vld [vmem:[#allocation3 + $0x58] sm:$0xff]
      %v1430 = vld [vmem:[#allocation3 + $0x60] sm:$0xff]
      %v1431 = vld [vmem:[#allocation3 + $0x68] sm:$0xf]
      %v1432 = vld [vmem:[#allocation3 + $0x6c] sm:$0xff]
      %v1433 = vld [vmem:[#allocation3 + $0x74] sm:$0xff]
      %v1434 = vld [vmem:[#allocation3 + $0x7c] sm:$0xff]
      %v1435 = vld [vmem:[#allocation3 + $0x84] sm:$0xff]
      %v1436 = vld [vmem:[#allocation3 + $0x8c] sm:$0xf]
      %v1437 = vld [vmem:[#allocation3 + $0x90] sm:$0xff]
      %v1438 = vld [vmem:[#allocation3 + $0x98] sm:$0xff]
      %v1439 = vld [vmem:[#allocation3 + $0xa0] sm:$0xff]
      %v1440 = vld [vmem:[#allocation3 + $0xa8] sm:$0xff]
      %v1441 = vld [vmem:[#allocation3 + $0xb0] sm:$0xf]
      %v1442 = vld [vmem:[#allocation3 + $0xb4] sm:$0xff]
      %v1443 = vld [vmem:[#allocation3 + $0xbc] sm:$0xff]
      %v1444 = vld [vmem:[#allocation3 + $0xc4] sm:$0xff]
      %v1445 = vld [vmem:[#allocation3 + $0xcc] sm:$0xff]
      %v1446 = vld [vmem:[#allocation3 + $0xd4] sm:$0xf]
      %v1447 = vld [vmem:[#allocation3 + $0xd8] sm:$0xff]
      %v1448 = vld [vmem:[#allocation3 + $0xe0] sm:$0xff]
      %v1449 = vld [vmem:[#allocation3 + $0xe8] sm:$0xff]
      %v1450 = vld [vmem:[#allocation3 + $0xf0] sm:$0xff]
      %v1451 = vld [vmem:[#allocation3 + $0xf8] sm:$0xf]
      %v1452 = vld [vmem:[#allocation3 + $0xfc] sm:$0xff]
      %v1453 = vld [vmem:[#allocation3 + $0x104] sm:$0xff]
      %v1454 = vld [vmem:[#allocation3 + $0x10c] sm:$0xff]
      %v1455 = vld [vmem:[#allocation3 + $0x114] sm:$0xff]
      %v1456 = vld [vmem:[#allocation3 + $0x11c] sm:$0xf]
      %v1457 = vld [vmem:[#allocation3 + $0x120] sm:$0xff]
      %v1458 = vld [vmem:[#allocation3 + $0x128] sm:$0xff]
      %v1459 = vld [vmem:[#allocation3 + $0x130] sm:$0xff]
      %v1460 = vld [vmem:[#allocation3 + $0x138] sm:$0xff]
      %v1461 = vld [vmem:[#allocation3 + $0x140] sm:$0xf]
      %v1462 = vld [vmem:[#allocation3 + $0x144] sm:$0xff]
      %v1463 = vld [vmem:[#allocation3 + $0x14c] sm:$0xff]
      %v1464 = vld [vmem:[#allocation3 + $0x154] sm:$0xff]
      %v1465 = vld [vmem:[#allocation3 + $0x15c] sm:$0xff]
      %v1466 = vld [vmem:[#allocation3 + $0x164] sm:$0xf]
      %v1467 = vld [vmem:[#allocation3 + $0x168] sm:$0xff]
      %v1468 = vld [vmem:[#allocation3 + $0x170] sm:$0xff]
      %v1469 = vld [vmem:[#allocation3 + $0x178] sm:$0xff]
      %v1470 = vld [vmem:[#allocation3 + $0x180] sm:$0xff]
      %v1471 = vld [vmem:[#allocation3 + $0x188] sm:$0xf]
      %v1472 = vld [vmem:[#allocation3 + $0x18c] sm:$0xff]
      %v1473 = vld [vmem:[#allocation3 + $0x194] sm:$0xff]
      %v1474 = vld [vmem:[#allocation3 + $0x19c] sm:$0xff]
      %v1475 = vld [vmem:[#allocation3 + $0x1a4] sm:$0xff]
      %v1476 = vld [vmem:[#allocation3 + $0x1ac] sm:$0xf]
      %v1477 = vld [vmem:[#allocation3 + $0x1b0] sm:$0xff]
      %v1478 = vld [vmem:[#allocation3 + $0x1b8] sm:$0xff]
      %v1479 = vld [vmem:[#allocation3 + $0x1c0] sm:$0xff]
      %v1480 = vld [vmem:[#allocation3 + $0x1c8] sm:$0xff]
      %v1481 = vld [vmem:[#allocation3 + $0x1d0] sm:$0xf]
      %v1482 = vld [vmem:[#allocation3 + $0x1d4] sm:$0xff]
      %v1483 = vld [vmem:[#allocation3 + $0x1dc] sm:$0xff]
      %v1484 = vld [vmem:[#allocation3 + $0x1e4] sm:$0xff]
      %v1485 = vld [vmem:[#allocation3 + $0x1ec] sm:$0xff]
      %v1486 = vld [vmem:[#allocation3 + $0x1f4] sm:$0xf]
      %v1487 = vld [vmem:[#allocation3 + $0x1f8] sm:$0xff]
      %v1488 = vld [vmem:[#allocation3 + $0x200] sm:$0xff]
      %v1489 = vld [vmem:[#allocation3 + $0x208] sm:$0xff]
      %v1490 = vld [vmem:[#allocation3 + $0x210] sm:$0xff]
      %v1491 = vld [vmem:[#allocation3 + $0x218] sm:$0xf]
      %v1492 = vld [vmem:[#allocation3 + $0x21c] sm:$0xff]
      %v1493 = vld [vmem:[#allocation3 + $0x224] sm:$0xff]
      %v1494 = vld [vmem:[#allocation3 + $0x22c] sm:$0xff]
      %v1495 = vld [vmem:[#allocation3 + $0x234] sm:$0xff]
      %v1496 = vld [vmem:[#allocation3 + $0x23c] sm:$0xf]
      %v1497 = vld [vmem:[#allocation3 + $0x240] sm:$0xff]
      %v1498 = vld [vmem:[#allocation3 + $0x248] sm:$0xff]
      %v1499 = vld [vmem:[#allocation3 + $0x250] sm:$0xff]
      %v1500 = vld [vmem:[#allocation3 + $0x258] sm:$0xff]
      %v1501 = vld [vmem:[#allocation3 + $0x260] sm:$0xf]
      %v1502 = vld [vmem:[#allocation3 + $0x264] sm:$0xff]
      %v1503 = vld [vmem:[#allocation3 + $0x26c] sm:$0xff]
      %v1504 = vld [vmem:[#allocation3 + $0x274] sm:$0xff]
      %v1505 = vld [vmem:[#allocation3 + $0x27c] sm:$0xff]
      %v1506 = vld [vmem:[#allocation3 + $0x284] sm:$0xf]
      %v1507 = vld [vmem:[#allocation3 + $0x288] sm:$0xff]
      %v1508 = vld [vmem:[#allocation3 + $0x290] sm:$0xff]
      %v1509 = vld [vmem:[#allocation3 + $0x298] sm:$0xff]
      %v1510 = vld [vmem:[#allocation3 + $0x2a0] sm:$0xff]
      %v1511 = vld [vmem:[#allocation3 + $0x2a8] sm:$0xf]
      %v1512 = vld [vmem:[#allocation3 + $0x2ac] sm:$0xff]
      %v1513 = vld [vmem:[#allocation3 + $0x2b4] sm:$0xff]
      %v1514 = vld [vmem:[#allocation3 + $0x2bc] sm:$0xff]
      %v1515 = vld [vmem:[#allocation3 + $0x2c4] sm:$0xff]
      %v1516 = vld [vmem:[#allocation3 + $0x2cc] sm:$0xf]
      %v1517 = vld [vmem:[#allocation3 + $0x2d0] sm:$0xff]
      %v1518 = vld [vmem:[#allocation3 + $0x2d8] sm:$0xff]
      %v1519 = vld [vmem:[#allocation3 + $0x2e0] sm:$0xff]
      %v1520 = vld [vmem:[#allocation3 + $0x2e8] sm:$0xff]
      %v1521 = vld [vmem:[#allocation3 + $0x2f0] sm:$0xf]
      %v1522 = vld [vmem:[#allocation3 + $0x2f4] sm:$0xff]
      %v1523 = vld [vmem:[#allocation3 + $0x2fc] sm:$0xff]
      %v1524 = vld [vmem:[#allocation3 + $0x304] sm:$0xff]
      %v1525 = vld [vmem:[#allocation3 + $0x30c] sm:$0xff]
      %v1526 = vld [vmem:[#allocation3 + $0x314] sm:$0xf]
      %v1527 = vld [vmem:[#allocation3 + $0x318] sm:$0xff]
      %v1528 = vld [vmem:[#allocation3 + $0x320] sm:$0xff]
      %v1529 = vld [vmem:[#allocation3 + $0x328] sm:$0xff]
      %v1530 = vld [vmem:[#allocation3 + $0x330] sm:$0xff]
      %v1531 = vld [vmem:[#allocation3 + $0x338] sm:$0xf]
      %v1532 = vld [vmem:[#allocation3 + $0x33c] sm:$0xff]
      %v1533 = vld [vmem:[#allocation3 + $0x344] sm:$0xff]
      %v1534 = vld [vmem:[#allocation3 + $0x34c] sm:$0xff]
      %v1535 = vld [vmem:[#allocation3 + $0x354] sm:$0xff]
      %v1536 = vld [vmem:[#allocation3 + $0x35c] sm:$0xf]
      %v1537 = vld [vmem:[#allocation3 + $0x360] sm:$0xff]
      %v1538 = vld [vmem:[#allocation3 + $0x368] sm:$0xff]
      %v1539 = vld [vmem:[#allocation3 + $0x370] sm:$0xff]
      %v1540 = vld [vmem:[#allocation3 + $0x378] sm:$0xff]
      %v1541 = vld [vmem:[#allocation3 + $0x380] sm:$0xf]
      %v1542 = vld [vmem:[#allocation3 + $0x384] sm:$0xff]
      %v1543 = vld [vmem:[#allocation3 + $0x38c] sm:$0xff]
      %v1544 = vld [vmem:[#allocation3 + $0x394] sm:$0xff]
      %v1545 = vld [vmem:[#allocation3 + $0x39c] sm:$0xff]
      %v1546 = vld [vmem:[#allocation3 + $0x3a4] sm:$0xf]
      %v1547 = vld [vmem:[#allocation3 + $0x3a8] sm:$0xff]
      %v1548 = vld [vmem:[#allocation3 + $0x3b0] sm:$0xff]
      %v1549 = vld [vmem:[#allocation3 + $0x3b8] sm:$0xff]
      %v1550 = vld [vmem:[#allocation3 + $0x3c0] sm:$0xff]
      %v1551 = vld [vmem:[#allocation3 + $0x3c8] sm:$0xf]
      %v1552 = vld [vmem:[#allocation3 + $0x3cc] sm:$0xff]
      %v1553 = vld [vmem:[#allocation3 + $0x3d4] sm:$0xff]
      %v1554 = vld [vmem:[#allocation3 + $0x3dc] sm:$0xff]
      %v1555 = vld [vmem:[#allocation3 + $0x3e4] sm:$0xff]
      %v1556 = vld [vmem:[#allocation3 + $0x3ec] sm:$0xf]
      %v1557 = vld [vmem:[#allocation3 + $0x3f0] sm:$0xff]
      %v1558 = vld [vmem:[#allocation3 + $0x3f8] sm:$0xff]
      %v1559 = vld [vmem:[#allocation3 + $0x400] sm:$0xff]
      %v1560 = vld [vmem:[#allocation3 + $0x408] sm:$0xff]
      %v1561 = vld [vmem:[#allocation3 + $0x410] sm:$0xf]
      %v1562 = vld [vmem:[#allocation3 + $0x414] sm:$0xff]
      %v1563 = vld [vmem:[#allocation3 + $0x41c] sm:$0xff]
      %v1564 = vld [vmem:[#allocation3 + $0x424] sm:$0xff]
      %v1565 = vld [vmem:[#allocation3 + $0x42c] sm:$0xff]
      %v1566 = vld [vmem:[#allocation3 + $0x434] sm:$0xf]
      %v1567 = vld [vmem:[#allocation3 + $0x438] sm:$0xff]
      %v1568 = vld [vmem:[#allocation3 + $0x440] sm:$0xff]
      %v1569 = vld [vmem:[#allocation3 + $0x448] sm:$0xff]
      %v1570 = vld [vmem:[#allocation3 + $0x450] sm:$0xff]
      %v1571 = vld [vmem:[#allocation3 + $0x458] sm:$0xf]
      %v1572 = vld [vmem:[#allocation3 + $0x45c] sm:$0xff]
      %v1573 = vld [vmem:[#allocation3 + $0x464] sm:$0xff]
      %v1574 = vld [vmem:[#allocation3 + $0x46c] sm:$0xff]
      %v1575 = vld [vmem:[#allocation3 + $0x474] sm:$0xff]
      %v1576 = vld [vmem:[#allocation3 + $0x47c] sm:$0xf]
      %v1577 = vld [vmem:[%s1] sm:$0xf]
      %v1578 = vld [vmem:[%s1 + $0x4] sm:$0xf]
      %v1579 = vld [vmem:[%s1 + $0x8] sm:$0xf]
      %v1580 = vld [vmem:[%s1 + $0xc] sm:$0xf]
      %v1581 = vld [vmem:[%s1 + $0x10] sm:$0xf]
      %v1582 = vld [vmem:[%s1 + $0x14] sm:$0xf]
      %v1583 = vld [vmem:[%s1 + $0x18] sm:$0xf]
      %v1584 = vld [vmem:[%s1 + $0x1c] sm:$0xf]
      %v1585 = vld [vmem:[%s1 + $0x20] sm:$0xf]
      %v1586 = vld [vmem:[%s1 + $0x24] sm:$0xf]
      %v1587 = vld [vmem:[%s1 + $0x28] sm:$0xf]
      %v1588 = vld [vmem:[%s1 + $0x2c] sm:$0xf]
      %v1589 = vld [vmem:[%s1 + $0x30] sm:$0xf]
      %v1590 = vld [vmem:[%s1 + $0x34] sm:$0xf]
      %v1591 = vld [vmem:[%s1 + $0x38] sm:$0xf]
      %v1592 = vld [vmem:[%s1 + $0x3c] sm:$0xf]
      %v1593 = vld [vmem:[%s1 + $0x40] sm:$0xf]
      %v1594 = vld [vmem:[%s1 + $0x44] sm:$0xf]
      %v1595 = vld [vmem:[%s1 + $0x48] sm:$0xf]
      %v1596 = vld [vmem:[%s1 + $0x4c] sm:$0xf]
      %v1597 = vld [vmem:[%s1 + $0x50] sm:$0xf]
      %v1598 = vld [vmem:[%s1 + $0x54] sm:$0xf]
      %v1599 = vld [vmem:[%s1 + $0x58] sm:$0xf]
      %v1600 = vld [vmem:[%s1 + $0x5c] sm:$0xf]
      %v1601 = vld [vmem:[%s1 + $0x60] sm:$0xf]
      %v1602 = vld [vmem:[%s1 + $0x64] sm:$0xf]
      %v1603 = vld [vmem:[%s1 + $0x68] sm:$0xf]
      %v1604 = vld [vmem:[%s1 + $0x6c] sm:$0xf]
      %v1605 = vld [vmem:[%s1 + $0x70] sm:$0xf]
      %v1606 = vld [vmem:[%s1 + $0x74] sm:$0xf]
      %v1607 = vld [vmem:[%s1 + $0x78] sm:$0xf]
      %v1608 = vld [vmem:[%s1 + $0x7c] sm:$0xf]
      %v1609 = vld [vmem:[%s1 + $0x80] sm:$0xf]
      %v1610 = vld [vmem:[%s1 + $0x84] sm:$0xf]
      %v1611 = vld [vmem:[%s1 + $0x88] sm:$0xf]
      %v1612 = vld [vmem:[%s1 + $0x8c] sm:$0xf]
      %v1613 = vld [vmem:[%s1 + $0x90] sm:$0xf]
      %v1614 = vld [vmem:[%s1 + $0x94] sm:$0xf]
      %v1615 = vld [vmem:[%s1 + $0x98] sm:$0xf]
      %v1616 = vld [vmem:[%s1 + $0x9c] sm:$0xf]
      %v1617 = vld [vmem:[%s1 + $0xa0] sm:$0xf]
      %v1618 = vld [vmem:[%s1 + $0xa4] sm:$0xf]
      %v1619 = vld [vmem:[%s1 + $0xa8] sm:$0xf]
      %v1620 = vld [vmem:[%s1 + $0xac] sm:$0xf]
      %v1621 = vld [vmem:[%s1 + $0xb0] sm:$0xf]
      %v1622 = vld [vmem:[%s1 + $0xb4] sm:$0xf]
      %v1623 = vld [vmem:[%s1 + $0xb8] sm:$0xf]
      %v1624 = vld [vmem:[%s1 + $0xbc] sm:$0xf]
      %v1625 = vld [vmem:[%s1 + $0xc0] sm:$0xf]
      %v1626 = vld [vmem:[%s1 + $0xc4] sm:$0xf]
      %v1627 = vld [vmem:[%s1 + $0xc8] sm:$0xf]
      %v1628 = vld [vmem:[%s1 + $0xcc] sm:$0xf]
      %v1629 = vld [vmem:[%s1 + $0xd0] sm:$0xf]
      %v1630 = vld [vmem:[%s1 + $0xd4] sm:$0xf]
      %v1631 = vld [vmem:[%s1 + $0xd8] sm:$0xf]
      %v1632 = vld [vmem:[%s1 + $0xdc] sm:$0xf]
      %v1633 = vld [vmem:[%s1 + $0xe0] sm:$0xf]
      %v1634 = vld [vmem:[%s1 + $0xe4] sm:$0xf]
      %v1635 = vld [vmem:[%s1 + $0xe8] sm:$0xf]
      %v1636 = vld [vmem:[%s1 + $0xec] sm:$0xf]
      %v1637 = vld [vmem:[%s1 + $0xf0] sm:$0xf]
      %v1638 = vld [vmem:[%s1 + $0xf4] sm:$0xf]
      %v1639 = vld [vmem:[%s1 + $0xf8] sm:$0xf]
      %v1640 = vld [vmem:[%s1 + $0xfc] sm:$0xf]
      %v1641 = vld [vmem:[%s1 + $0x100] sm:$0xf]
      %v1642 = vld [vmem:[%s1 + $0x104] sm:$0xf]
      %v1643 = vld [vmem:[%s1 + $0x108] sm:$0xf]
      %v1644 = vld [vmem:[%s1 + $0x10c] sm:$0xf]
      %v1645 = vld [vmem:[%s1 + $0x110] sm:$0xf]
      %v1646 = vld [vmem:[%s1 + $0x114] sm:$0xf]
      %v1647 = vld [vmem:[%s1 + $0x118] sm:$0xf]
      %v1648 = vld [vmem:[%s1 + $0x11c] sm:$0xf]
      %v1649 = vld [vmem:[%s1 + $0x120] sm:$0xf]
      %v1650 = vld [vmem:[%s1 + $0x124] sm:$0xf]
      %v1651 = vld [vmem:[%s1 + $0x128] sm:$0xf]
      %v1652 = vld [vmem:[%s1 + $0x12c] sm:$0xf]
      %v1653 = vld [vmem:[%s1 + $0x130] sm:$0xf]
      %v1654 = vld [vmem:[%s1 + $0x134] sm:$0xf]
      %v1655 = vld [vmem:[%s1 + $0x138] sm:$0xf]
      %v1656 = vld [vmem:[%s1 + $0x13c] sm:$0xf]
      %v1657 = vld [vmem:[%s1 + $0x140] sm:$0xf]
      %v1658 = vld [vmem:[%s1 + $0x144] sm:$0xf]
      %v1659 = vld [vmem:[%s1 + $0x148] sm:$0xf]
      %v1660 = vld [vmem:[%s1 + $0x14c] sm:$0xf]
      %v1661 = vld [vmem:[%s1 + $0x150] sm:$0xf]
      %v1662 = vld [vmem:[%s1 + $0x154] sm:$0xf]
      %v1663 = vld [vmem:[%s1 + $0x158] sm:$0xf]
      %v1664 = vld [vmem:[%s1 + $0x15c] sm:$0xf]
      %v1665 = vld [vmem:[%s1 + $0x160] sm:$0xf]
      %v1666 = vld [vmem:[%s1 + $0x164] sm:$0xf]
      %v1667 = vld [vmem:[%s1 + $0x168] sm:$0xf]
      %v1668 = vld [vmem:[%s1 + $0x16c] sm:$0xf]
      %v1669 = vld [vmem:[%s1 + $0x170] sm:$0xf]
      %v1670 = vld [vmem:[%s1 + $0x174] sm:$0xf]
      %v1671 = vld [vmem:[%s1 + $0x178] sm:$0xf]
      %v1672 = vld [vmem:[%s1 + $0x17c] sm:$0xf]
      %v1673 = vld [vmem:[%s1 + $0x180] sm:$0xf]
      %v1674 = vld [vmem:[%s1 + $0x184] sm:$0xf]
      %v1675 = vld [vmem:[%s1 + $0x188] sm:$0xf]
      %v1676 = vld [vmem:[%s1 + $0x18c] sm:$0xf]
      %v1677 = vld [vmem:[%s1 + $0x190] sm:$0xf]
      %v1678 = vld [vmem:[%s1 + $0x194] sm:$0xf]
      %v1679 = vld [vmem:[%s1 + $0x198] sm:$0xf]
      %v1680 = vld [vmem:[%s1 + $0x19c] sm:$0xf]
      %v1681 = vld [vmem:[%s1 + $0x1a0] sm:$0xf]
      %v1682 = vld [vmem:[%s1 + $0x1a4] sm:$0xf]
      %v1683 = vld [vmem:[%s1 + $0x1a8] sm:$0xf]
      %v1684 = vld [vmem:[%s1 + $0x1ac] sm:$0xf]
      %v1685 = vld [vmem:[%s1 + $0x1b0] sm:$0xf]
      %v1686 = vld [vmem:[%s1 + $0x1b4] sm:$0xf]
      %v1687 = vld [vmem:[%s1 + $0x1b8] sm:$0xf]
      %v1688 = vld [vmem:[%s1 + $0x1bc] sm:$0xf]
      %v1689 = vld [vmem:[%s1 + $0x1c0] sm:$0xf]
      %v1690 = vld [vmem:[%s1 + $0x1c4] sm:$0xf]
      %v1691 = vld [vmem:[%s1 + $0x1c8] sm:$0xf]
      %v1692 = vld [vmem:[%s1 + $0x1cc] sm:$0xf]
      %v1693 = vld [vmem:[%s1 + $0x1d0] sm:$0xf]
      %v1694 = vld [vmem:[%s1 + $0x1d4] sm:$0xf]
      %v1695 = vld [vmem:[%s1 + $0x1d8] sm:$0xf]
      %v1696 = vld [vmem:[%s1 + $0x1dc] sm:$0xf]
      %v1697 = vld [vmem:[%s1 + $0x1e0] sm:$0xf]
      %v1698 = vld [vmem:[%s1 + $0x1e4] sm:$0xf]
      %v1699 = vld [vmem:[%s1 + $0x1e8] sm:$0xf]
      %v1700 = vld [vmem:[%s1 + $0x1ec] sm:$0xf]
      %v1701 = vld [vmem:[%s1 + $0x1f0] sm:$0xf]
      %v1702 = vld [vmem:[%s1 + $0x1f4] sm:$0xf]
      %v1703 = vld [vmem:[%s1 + $0x1f8] sm:$0xf]
      %v1704 = vld [vmem:[%s1 + $0x1fc] sm:$0xf]
      %v1705 = vld [vmem:[%s1 + $0x200] sm:$0xf]
      %v1706 = vld [vmem:[%s1 + $0x204] sm:$0xf]
      %v1707 = vld [vmem:[%s1 + $0x208] sm:$0xf]
      %v1708 = vld [vmem:[%s1 + $0x20c] sm:$0xf]
      %v1709 = vld [vmem:[%s1 + $0x210] sm:$0xf]
      %v1710 = vld [vmem:[%s1 + $0x214] sm:$0xf]
      %v1711 = vld [vmem:[%s1 + $0x218] sm:$0xf]
      %v1712 = vld [vmem:[%s1 + $0x21c] sm:$0xf]
      %v1713 = vld [vmem:[%s1 + $0x220] sm:$0xf]
      %v1714 = vld [vmem:[%s1 + $0x224] sm:$0xf]
      %v1715 = vld [vmem:[%s1 + $0x228] sm:$0xf]
      %v1716 = vld [vmem:[%s1 + $0x22c] sm:$0xf]
      %v1717 = vld [vmem:[%s1 + $0x230] sm:$0xf]
      %v1718 = vld [vmem:[%s1 + $0x234] sm:$0xf]
      %v1719 = vld [vmem:[%s1 + $0x238] sm:$0xf]
      %v1720 = vld [vmem:[%s1 + $0x23c] sm:$0xf]
      %v1881 = vunpack.c.l.b16 %v1417
      %v1882 = vunpack.c.h.b16 %v1417
      %v1883 = vunpack.c.l.b16 %v1418
      %v1884 = vunpack.c.h.b16 %v1418
      %v1885 = vunpack.c.l.b16 %v1419
      %v1886 = vunpack.c.h.b16 %v1419
      %v1887 = vunpack.c.l.b16 %v1420
      %v1888 = vunpack.c.h.b16 %v1420
      %v1889 = vunpack.c.l.b16 %v1421
      %v1890 = vunpack.c.l.b16 %v1422
      %v1891 = vunpack.c.h.b16 %v1422
      %v1892 = vunpack.c.l.b16 %v1423
      %v1893 = vunpack.c.h.b16 %v1423
      %v1894 = vunpack.c.l.b16 %v1424
      %v1895 = vunpack.c.h.b16 %v1424
      %v1896 = vunpack.c.l.b16 %v1425
      %v1897 = vunpack.c.h.b16 %v1425
      %v1898 = vunpack.c.l.b16 %v1426
      %v1899 = vunpack.c.l.b16 %v1427
      %v1900 = vunpack.c.h.b16 %v1427
      %v1901 = vunpack.c.l.b16 %v1428
      %v1902 = vunpack.c.h.b16 %v1428
      %v1903 = vunpack.c.l.b16 %v1429
      %v1904 = vunpack.c.h.b16 %v1429
      %v1905 = vunpack.c.l.b16 %v1430
      %v1906 = vunpack.c.h.b16 %v1430
      %v1907 = vunpack.c.l.b16 %v1431
      %v1908 = vunpack.c.l.b16 %v1432
      %v1909 = vunpack.c.h.b16 %v1432
      %v1910 = vunpack.c.l.b16 %v1433
      %v1911 = vunpack.c.h.b16 %v1433
      %v1912 = vunpack.c.l.b16 %v1434
      %v1913 = vunpack.c.h.b16 %v1434
      %v1914 = vunpack.c.l.b16 %v1435
      %v1915 = vunpack.c.h.b16 %v1435
      %v1916 = vunpack.c.l.b16 %v1436
      %v1917 = vunpack.c.l.b16 %v1437
      %v1918 = vunpack.c.h.b16 %v1437
      %v1919 = vunpack.c.l.b16 %v1438
      %v1920 = vunpack.c.h.b16 %v1438
      %v1921 = vunpack.c.l.b16 %v1439
      %v1922 = vunpack.c.h.b16 %v1439
      %v1923 = vunpack.c.l.b16 %v1440
      %v1924 = vunpack.c.h.b16 %v1440
      %v1925 = vunpack.c.l.b16 %v1441
      %v1926 = vunpack.c.l.b16 %v1442
      %v1927 = vunpack.c.h.b16 %v1442
      %v1928 = vunpack.c.l.b16 %v1443
      %v1929 = vunpack.c.h.b16 %v1443
      %v1930 = vunpack.c.l.b16 %v1444
      %v1931 = vunpack.c.h.b16 %v1444
      %v1932 = vunpack.c.l.b16 %v1445
      %v1933 = vunpack.c.h.b16 %v1445
      %v1934 = vunpack.c.l.b16 %v1446
      %v1935 = vunpack.c.l.b16 %v1447
      %v1936 = vunpack.c.h.b16 %v1447
      %v1937 = vunpack.c.l.b16 %v1448
      %v1938 = vunpack.c.h.b16 %v1448
      %v1939 = vunpack.c.l.b16 %v1449
      %v1940 = vunpack.c.h.b16 %v1449
      %v1941 = vunpack.c.l.b16 %v1450
      %v1942 = vunpack.c.h.b16 %v1450
      %v1943 = vunpack.c.l.b16 %v1451
      %v1944 = vunpack.c.l.b16 %v1452
      %v1945 = vunpack.c.h.b16 %v1452
      %v1946 = vunpack.c.l.b16 %v1453
      %v1947 = vunpack.c.h.b16 %v1453
      %v1948 = vunpack.c.l.b16 %v1454
      %v1949 = vunpack.c.h.b16 %v1454
      %v1950 = vunpack.c.l.b16 %v1455
      %v1951 = vunpack.c.h.b16 %v1455
      %v1952 = vunpack.c.l.b16 %v1456
      %v1953 = vunpack.c.l.b16 %v1457
      %v1954 = vunpack.c.h.b16 %v1457
      %v1955 = vunpack.c.l.b16 %v1458
      %v1956 = vunpack.c.h.b16 %v1458
      %v1957 = vunpack.c.l.b16 %v1459
      %v1958 = vunpack.c.h.b16 %v1459
      %v1959 = vunpack.c.l.b16 %v1460
      %v1960 = vunpack.c.h.b16 %v1460
      %v1961 = vunpack.c.l.b16 %v1461
      %v1962 = vunpack.c.l.b16 %v1462
      %v1963 = vunpack.c.h.b16 %v1462
      %v1964 = vunpack.c.l.b16 %v1463
      %v1965 = vunpack.c.h.b16 %v1463
      %v1966 = vunpack.c.l.b16 %v1464
      %v1967 = vunpack.c.h.b16 %v1464
      %v1968 = vunpack.c.l.b16 %v1465
      %v1969 = vunpack.c.h.b16 %v1465
      %v1970 = vunpack.c.l.b16 %v1466
      %v1971 = vunpack.c.l.b16 %v1467
      %v1972 = vunpack.c.h.b16 %v1467
      %v1973 = vunpack.c.l.b16 %v1468
      %v1974 = vunpack.c.h.b16 %v1468
      %v1975 = vunpack.c.l.b16 %v1469
      %v1976 = vunpack.c.h.b16 %v1469
      %v1977 = vunpack.c.l.b16 %v1470
      %v1978 = vunpack.c.h.b16 %v1470
      %v1979 = vunpack.c.l.b16 %v1471
      %v1980 = vunpack.c.l.b16 %v1472
      %v1981 = vunpack.c.h.b16 %v1472
      %v1982 = vunpack.c.l.b16 %v1473
      %v1983 = vunpack.c.h.b16 %v1473
      %v1984 = vunpack.c.l.b16 %v1474
      %v1985 = vunpack.c.h.b16 %v1474
      %v1986 = vunpack.c.l.b16 %v1475
      %v1987 = vunpack.c.h.b16 %v1475
      %v1988 = vunpack.c.l.b16 %v1476
      %v1989 = vunpack.c.l.b16 %v1477
      %v1990 = vunpack.c.h.b16 %v1477
      %v1991 = vunpack.c.l.b16 %v1478
      %v1992 = vunpack.c.h.b16 %v1478
      %v1993 = vunpack.c.l.b16 %v1479
      %v1994 = vunpack.c.h.b16 %v1479
      %v1995 = vunpack.c.l.b16 %v1480
      %v1996 = vunpack.c.h.b16 %v1480
      %v1997 = vunpack.c.l.b16 %v1481
      %v1998 = vunpack.c.l.b16 %v1482
      %v1999 = vunpack.c.h.b16 %v1482
      %v2000 = vunpack.c.l.b16 %v1483
      %v2001 = vunpack.c.h.b16 %v1483
      %v2002 = vunpack.c.l.b16 %v1484
      %v2003 = vunpack.c.h.b16 %v1484
      %v2004 = vunpack.c.l.b16 %v1485
      %v2005 = vunpack.c.h.b16 %v1485
      %v2006 = vunpack.c.l.b16 %v1486
      %v2007 = vunpack.c.l.b16 %v1487
      %v2008 = vunpack.c.h.b16 %v1487
      %v2009 = vunpack.c.l.b16 %v1488
      %v2010 = vunpack.c.h.b16 %v1488
      %v2011 = vunpack.c.l.b16 %v1489
      %v2012 = vunpack.c.h.b16 %v1489
      %v2013 = vunpack.c.l.b16 %v1490
      %v2014 = vunpack.c.h.b16 %v1490
      %v2015 = vunpack.c.l.b16 %v1491
      %v2016 = vunpack.c.l.b16 %v1492
      %v2017 = vunpack.c.h.b16 %v1492
      %v2018 = vunpack.c.l.b16 %v1493
      %v2019 = vunpack.c.h.b16 %v1493
      %v2020 = vunpack.c.l.b16 %v1494
      %v2021 = vunpack.c.h.b16 %v1494
      %v2022 = vunpack.c.l.b16 %v1495
      %v2023 = vunpack.c.h.b16 %v1495
      %v2024 = vunpack.c.l.b16 %v1496
      %v2025 = vunpack.c.l.b16 %v1497
      %v2026 = vunpack.c.h.b16 %v1497
      %v2027 = vunpack.c.l.b16 %v1498
      %v2028 = vunpack.c.h.b16 %v1498
      %v2029 = vunpack.c.l.b16 %v1499
      %v2030 = vunpack.c.h.b16 %v1499
      %v2031 = vunpack.c.l.b16 %v1500
      %v2032 = vunpack.c.h.b16 %v1500
      %v2033 = vunpack.c.l.b16 %v1501
      %v2034 = vunpack.c.l.b16 %v1502
      %v2035 = vunpack.c.h.b16 %v1502
      %v2036 = vunpack.c.l.b16 %v1503
      %v2037 = vunpack.c.h.b16 %v1503
      %v2038 = vunpack.c.l.b16 %v1504
      %v2039 = vunpack.c.h.b16 %v1504
      %v2040 = vunpack.c.l.b16 %v1505
      %v2041 = vunpack.c.h.b16 %v1505
      %v2042 = vunpack.c.l.b16 %v1506
      %v2043 = vunpack.c.l.b16 %v1507
      %v2044 = vunpack.c.h.b16 %v1507
      %v2045 = vunpack.c.l.b16 %v1508
      %v2046 = vunpack.c.h.b16 %v1508
      %v2047 = vunpack.c.l.b16 %v1509
      %v2048 = vunpack.c.h.b16 %v1509
      %v2049 = vunpack.c.l.b16 %v1510
      %v2050 = vunpack.c.h.b16 %v1510
      %v2051 = vunpack.c.l.b16 %v1511
      %v2052 = vunpack.c.l.b16 %v1512
      %v2053 = vunpack.c.h.b16 %v1512
      %v2054 = vunpack.c.l.b16 %v1513
      %v2055 = vunpack.c.h.b16 %v1513
      %v2056 = vunpack.c.l.b16 %v1514
      %v2057 = vunpack.c.h.b16 %v1514
      %v2058 = vunpack.c.l.b16 %v1515
      %v2059 = vunpack.c.h.b16 %v1515
      %v2060 = vunpack.c.l.b16 %v1516
      %v2061 = vunpack.c.l.b16 %v1517
      %v2062 = vunpack.c.h.b16 %v1517
      %v2063 = vunpack.c.l.b16 %v1518
      %v2064 = vunpack.c.h.b16 %v1518
      %v2065 = vunpack.c.l.b16 %v1519
      %v2066 = vunpack.c.h.b16 %v1519
      %v2067 = vunpack.c.l.b16 %v1520
      %v2068 = vunpack.c.h.b16 %v1520
      %v2069 = vunpack.c.l.b16 %v1521
      %v2070 = vunpack.c.l.b16 %v1522
      %v2071 = vunpack.c.h.b16 %v1522
      %v2072 = vunpack.c.l.b16 %v1523
      %v2073 = vunpack.c.h.b16 %v1523
      %v2074 = vunpack.c.l.b16 %v1524
      %v2075 = vunpack.c.h.b16 %v1524
      %v2076 = vunpack.c.l.b16 %v1525
      %v2077 = vunpack.c.h.b16 %v1525
      %v2078 = vunpack.c.l.b16 %v1526
      %v2079 = vunpack.c.l.b16 %v1527
      %v2080 = vunpack.c.h.b16 %v1527
      %v2081 = vunpack.c.l.b16 %v1528
      %v2082 = vunpack.c.h.b16 %v1528
      %v2083 = vunpack.c.l.b16 %v1529
      %v2084 = vunpack.c.h.b16 %v1529
      %v2085 = vunpack.c.l.b16 %v1530
      %v2086 = vunpack.c.h.b16 %v1530
      %v2087 = vunpack.c.l.b16 %v1531
      %v2088 = vunpack.c.l.b16 %v1532
      %v2089 = vunpack.c.h.b16 %v1532
      %v2090 = vunpack.c.l.b16 %v1533
      %v2091 = vunpack.c.h.b16 %v1533
      %v2092 = vunpack.c.l.b16 %v1534
      %v2093 = vunpack.c.h.b16 %v1534
      %v2094 = vunpack.c.l.b16 %v1535
      %v2095 = vunpack.c.h.b16 %v1535
      %v2096 = vunpack.c.l.b16 %v1536
      %v2097 = vunpack.c.l.b16 %v1537
      %v2098 = vunpack.c.h.b16 %v1537
      %v2099 = vunpack.c.l.b16 %v1538
      %v2100 = vunpack.c.h.b16 %v1538
      %v2101 = vunpack.c.l.b16 %v1539
      %v2102 = vunpack.c.h.b16 %v1539
      %v2103 = vunpack.c.l.b16 %v1540
      %v2104 = vunpack.c.h.b16 %v1540
      %v2105 = vunpack.c.l.b16 %v1541
      %v2106 = vunpack.c.l.b16 %v1542
      %v2107 = vunpack.c.h.b16 %v1542
      %v2108 = vunpack.c.l.b16 %v1543
      %v2109 = vunpack.c.h.b16 %v1543
      %v2110 = vunpack.c.l.b16 %v1544
      %v2111 = vunpack.c.h.b16 %v1544
      %v2112 = vunpack.c.l.b16 %v1545
      %v2113 = vunpack.c.h.b16 %v1545
      %v2114 = vunpack.c.l.b16 %v1546
      %v2115 = vunpack.c.l.b16 %v1547
      %v2116 = vunpack.c.h.b16 %v1547
      %v2117 = vunpack.c.l.b16 %v1548
      %v2118 = vunpack.c.h.b16 %v1548
      %v2119 = vunpack.c.l.b16 %v1549
      %v2120 = vunpack.c.h.b16 %v1549
      %v2121 = vunpack.c.l.b16 %v1550
      %v2122 = vunpack.c.h.b16 %v1550
      %v2123 = vunpack.c.l.b16 %v1551
      %v2124 = vunpack.c.l.b16 %v1552
      %v2125 = vunpack.c.h.b16 %v1552
      %v2126 = vunpack.c.l.b16 %v1553
      %v2127 = vunpack.c.h.b16 %v1553
      %v2128 = vunpack.c.l.b16 %v1554
      %v2129 = vunpack.c.h.b16 %v1554
      %v2130 = vunpack.c.l.b16 %v1555
      %v2131 = vunpack.c.h.b16 %v1555
      %v2132 = vunpack.c.l.b16 %v1556
      %v2133 = vunpack.c.l.b16 %v1557
      %v2134 = vunpack.c.h.b16 %v1557
      %v2135 = vunpack.c.l.b16 %v1558
      %v2136 = vunpack.c.h.b16 %v1558
      %v2137 = vunpack.c.l.b16 %v1559
      %v2138 = vunpack.c.h.b16 %v1559
      %v2139 = vunpack.c.l.b16 %v1560
      %v2140 = vunpack.c.h.b16 %v1560
      %v2141 = vunpack.c.l.b16 %v1561
      %v2142 = vunpack.c.l.b16 %v1562
      %v2143 = vunpack.c.h.b16 %v1562
      %v2144 = vunpack.c.l.b16 %v1563
      %v2145 = vunpack.c.h.b16 %v1563
      %v2146 = vunpack.c.l.b16 %v1564
      %v2147 = vunpack.c.h.b16 %v1564
      %v2148 = vunpack.c.l.b16 %v1565
      %v2149 = vunpack.c.h.b16 %v1565
      %v2150 = vunpack.c.l.b16 %v1566
      %v2151 = vunpack.c.l.b16 %v1567
      %v2152 = vunpack.c.h.b16 %v1567
      %v2153 = vunpack.c.l.b16 %v1568
      %v2154 = vunpack.c.h.b16 %v1568
      %v2155 = vunpack.c.l.b16 %v1569
      %v2156 = vunpack.c.h.b16 %v1569
      %v2157 = vunpack.c.l.b16 %v1570
      %v2158 = vunpack.c.h.b16 %v1570
      %v2159 = vunpack.c.l.b16 %v1571
      %v2160 = vunpack.c.l.b16 %v1572
      %v2161 = vunpack.c.h.b16 %v1572
      %v2162 = vunpack.c.l.b16 %v1573
      %v2163 = vunpack.c.h.b16 %v1573
      %v2164 = vunpack.c.l.b16 %v1574
      %v2165 = vunpack.c.h.b16 %v1574
      %v2166 = vunpack.c.l.b16 %v1575
      %v2167 = vunpack.c.h.b16 %v1575
      %v2168 = vunpack.c.l.b16 %v1576
      %v2169 = vpack.c.b16 %v1890, %v1881
      %v2170 = vpack.c.b16 %v1891, %v1882
      %v2171 = vpack.c.b16 %v1892, %v1883
      %v2172 = vpack.c.b16 %v1893, %v1884
      %v2173 = vpack.c.b16 %v1894, %v1885
      %v2174 = vpack.c.b16 %v1895, %v1886
      %v2175 = vpack.c.b16 %v1896, %v1887
      %v2176 = vpack.c.b16 %v1897, %v1888
      %v2177 = vpack.c.b16 %v1898, %v1889
      %v2178 = vpack.c.b16 %v1908, %v1899
      %v2179 = vpack.c.b16 %v1909, %v1900
      %v2180 = vpack.c.b16 %v1910, %v1901
      %v2181 = vpack.c.b16 %v1911, %v1902
      %v2182 = vpack.c.b16 %v1912, %v1903
      %v2183 = vpack.c.b16 %v1913, %v1904
      %v2184 = vpack.c.b16 %v1914, %v1905
      %v2185 = vpack.c.b16 %v1915, %v1906
      %v2186 = vpack.c.b16 %v1916, %v1907
      %v2187 = vpack.c.b16 %v1926, %v1917
      %v2188 = vpack.c.b16 %v1927, %v1918
      %v2189 = vpack.c.b16 %v1928, %v1919
      %v2190 = vpack.c.b16 %v1929, %v1920
      %v2191 = vpack.c.b16 %v1930, %v1921
      %v2192 = vpack.c.b16 %v1931, %v1922
      %v2193 = vpack.c.b16 %v1932, %v1923
      %v2194 = vpack.c.b16 %v1933, %v1924
      %v2195 = vpack.c.b16 %v1934, %v1925
      %v2196 = vpack.c.b16 %v1944, %v1935
      %v2197 = vpack.c.b16 %v1945, %v1936
      %v2198 = vpack.c.b16 %v1946, %v1937
      %v2199 = vpack.c.b16 %v1947, %v1938
      %v2200 = vpack.c.b16 %v1948, %v1939
      %v2201 = vpack.c.b16 %v1949, %v1940
      %v2202 = vpack.c.b16 %v1950, %v1941
      %v2203 = vpack.c.b16 %v1951, %v1942
      %v2204 = vpack.c.b16 %v1952, %v1943
      %v2205 = vpack.c.b16 %v1962, %v1953
      %v2206 = vpack.c.b16 %v1963, %v1954
      %v2207 = vpack.c.b16 %v1964, %v1955
      %v2208 = vpack.c.b16 %v1965, %v1956
      %v2209 = vpack.c.b16 %v1966, %v1957
      %v2210 = vpack.c.b16 %v1967, %v1958
      %v2211 = vpack.c.b16 %v1968, %v1959
      %v2212 = vpack.c.b16 %v1969, %v1960
      %v2213 = vpack.c.b16 %v1970, %v1961
      %v2214 = vpack.c.b16 %v1980, %v1971
      %v2215 = vpack.c.b16 %v1981, %v1972
      %v2216 = vpack.c.b16 %v1982, %v1973
      %v2217 = vpack.c.b16 %v1983, %v1974
      %v2218 = vpack.c.b16 %v1984, %v1975
      %v2219 = vpack.c.b16 %v1985, %v1976
      %v2220 = vpack.c.b16 %v1986, %v1977
      %v2221 = vpack.c.b16 %v1987, %v1978
      %v2222 = vpack.c.b16 %v1988, %v1979
      %v2223 = vpack.c.b16 %v1998, %v1989
      %v2224 = vpack.c.b16 %v1999, %v1990
      %v2225 = vpack.c.b16 %v2000, %v1991
      %v2226 = vpack.c.b16 %v2001, %v1992
      %v2227 = vpack.c.b16 %v2002, %v1993
      %v2228 = vpack.c.b16 %v2003, %v1994
      %v2229 = vpack.c.b16 %v2004, %v1995
      %v2230 = vpack.c.b16 %v2005, %v1996
      %v2231 = vpack.c.b16 %v2006, %v1997
      %v2232 = vpack.c.b16 %v2016, %v2007
      %v2233 = vpack.c.b16 %v2017, %v2008
      %v2234 = vpack.c.b16 %v2018, %v2009
      %v2235 = vpack.c.b16 %v2019, %v2010
      %v2236 = vpack.c.b16 %v2020, %v2011
      %v2237 = vpack.c.b16 %v2021, %v2012
      %v2238 = vpack.c.b16 %v2022, %v2013
      %v2239 = vpack.c.b16 %v2023, %v2014
      %v2240 = vpack.c.b16 %v2024, %v2015
      %v2241 = vpack.c.b16 %v2034, %v2025
      %v2242 = vpack.c.b16 %v2035, %v2026
      %v2243 = vpack.c.b16 %v2036, %v2027
      %v2244 = vpack.c.b16 %v2037, %v2028
      %v2245 = vpack.c.b16 %v2038, %v2029
      %v2246 = vpack.c.b16 %v2039, %v2030
      %v2247 = vpack.c.b16 %v2040, %v2031
      %v2248 = vpack.c.b16 %v2041, %v2032
      %v2249 = vpack.c.b16 %v2042, %v2033
      %v2250 = vpack.c.b16 %v2052, %v2043
      %v2251 = vpack.c.b16 %v2053, %v2044
      %v2252 = vpack.c.b16 %v2054, %v2045
      %v2253 = vpack.c.b16 %v2055, %v2046
      %v2254 = vpack.c.b16 %v2056, %v2047
      %v2255 = vpack.c.b16 %v2057, %v2048
      %v2256 = vpack.c.b16 %v2058, %v2049
      %v2257 = vpack.c.b16 %v2059, %v2050
      %v2258 = vpack.c.b16 %v2060, %v2051
      %v2259 = vpack.c.b16 %v2070, %v2061
      %v2260 = vpack.c.b16 %v2071, %v2062
      %v2261 = vpack.c.b16 %v2072, %v2063
      %v2262 = vpack.c.b16 %v2073, %v2064
      %v2263 = vpack.c.b16 %v2074, %v2065
      %v2264 = vpack.c.b16 %v2075, %v2066
      %v2265 = vpack.c.b16 %v2076, %v2067
      %v2266 = vpack.c.b16 %v2077, %v2068
      %v2267 = vpack.c.b16 %v2078, %v2069
      %v2268 = vpack.c.b16 %v2088, %v2079
      %v2269 = vpack.c.b16 %v2089, %v2080
      %v2270 = vpack.c.b16 %v2090, %v2081
      %v2271 = vpack.c.b16 %v2091, %v2082
      %v2272 = vpack.c.b16 %v2092, %v2083
      %v2273 = vpack.c.b16 %v2093, %v2084
      %v2274 = vpack.c.b16 %v2094, %v2085
      %v2275 = vpack.c.b16 %v2095, %v2086
      %v2276 = vpack.c.b16 %v2096, %v2087
      %v2277 = vpack.c.b16 %v2106, %v2097
      %v2278 = vpack.c.b16 %v2107, %v2098
      %v2279 = vpack.c.b16 %v2108, %v2099
      %v2280 = vpack.c.b16 %v2109, %v2100
      %v2281 = vpack.c.b16 %v2110, %v2101
      %v2282 = vpack.c.b16 %v2111, %v2102
      %v2283 = vpack.c.b16 %v2112, %v2103
      %v2284 = vpack.c.b16 %v2113, %v2104
      %v2285 = vpack.c.b16 %v2114, %v2105
      %v2286 = vpack.c.b16 %v2124, %v2115
      %v2287 = vpack.c.b16 %v2125, %v2116
      %v2288 = vpack.c.b16 %v2126, %v2117
      %v2289 = vpack.c.b16 %v2127, %v2118
      %v2290 = vpack.c.b16 %v2128, %v2119
      %v2291 = vpack.c.b16 %v2129, %v2120
      %v2292 = vpack.c.b16 %v2130, %v2121
      %v2293 = vpack.c.b16 %v2131, %v2122
      %v2294 = vpack.c.b16 %v2132, %v2123
      %v2295 = vpack.c.b16 %v2142, %v2133
      %v2296 = vpack.c.b16 %v2143, %v2134
      %v2297 = vpack.c.b16 %v2144, %v2135
      %v2298 = vpack.c.b16 %v2145, %v2136
      %v2299 = vpack.c.b16 %v2146, %v2137
      %v2300 = vpack.c.b16 %v2147, %v2138
      %v2301 = vpack.c.b16 %v2148, %v2139
      %v2302 = vpack.c.b16 %v2149, %v2140
      %v2303 = vpack.c.b16 %v2150, %v2141
      %v2304 = vpack.c.b16 %v2160, %v2151
      %v2305 = vpack.c.b16 %v2161, %v2152
      %v2306 = vpack.c.b16 %v2162, %v2153
      %v2307 = vpack.c.b16 %v2163, %v2154
      %v2308 = vpack.c.b16 %v2164, %v2155
      %v2309 = vpack.c.b16 %v2165, %v2156
      %v2310 = vpack.c.b16 %v2166, %v2157
      %v2311 = vpack.c.b16 %v2167, %v2158
      %v2312 = vpack.c.b16 %v2168, %v2159
      %v2601 = vunpack.c.l.b16 %v1577
      %v2602 = vunpack.c.l.b16 %v1578
      %v2603 = vunpack.c.l.b16 %v1579
      %v2604 = vunpack.c.l.b16 %v1580
      %v2605 = vunpack.c.l.b16 %v1581
      %v2606 = vunpack.c.l.b16 %v1582
      %v2607 = vunpack.c.l.b16 %v1583
      %v2608 = vunpack.c.l.b16 %v1584
      %v2609 = vunpack.c.l.b16 %v1585
      %v2610 = vunpack.c.l.b16 %v1586
      %v2611 = vunpack.c.l.b16 %v1587
      %v2612 = vunpack.c.l.b16 %v1588
      %v2613 = vunpack.c.l.b16 %v1589
      %v2614 = vunpack.c.l.b16 %v1590
      %v2615 = vunpack.c.l.b16 %v1591
      %v2616 = vunpack.c.l.b16 %v1592
      %v2617 = vunpack.c.l.b16 %v1593
      %v2618 = vunpack.c.l.b16 %v1594
      %v2619 = vunpack.c.l.b16 %v1595
      %v2620 = vunpack.c.l.b16 %v1596
      %v2621 = vunpack.c.l.b16 %v1597
      %v2622 = vunpack.c.l.b16 %v1598
      %v2623 = vunpack.c.l.b16 %v1599
      %v2624 = vunpack.c.l.b16 %v1600
      %v2625 = vunpack.c.l.b16 %v1601
      %v2626 = vunpack.c.l.b16 %v1602
      %v2627 = vunpack.c.l.b16 %v1603
      %v2628 = vunpack.c.l.b16 %v1604
      %v2629 = vunpack.c.l.b16 %v1605
      %v2630 = vunpack.c.l.b16 %v1606
      %v2631 = vunpack.c.l.b16 %v1607
      %v2632 = vunpack.c.l.b16 %v1608
      %v2633 = vunpack.c.l.b16 %v1609
      %v2634 = vunpack.c.l.b16 %v1610
      %v2635 = vunpack.c.l.b16 %v1611
      %v2636 = vunpack.c.l.b16 %v1612
      %v2637 = vunpack.c.l.b16 %v1613
      %v2638 = vunpack.c.l.b16 %v1614
      %v2639 = vunpack.c.l.b16 %v1615
      %v2640 = vunpack.c.l.b16 %v1616
      %v2641 = vunpack.c.l.b16 %v1617
      %v2642 = vunpack.c.l.b16 %v1618
      %v2643 = vunpack.c.l.b16 %v1619
      %v2644 = vunpack.c.l.b16 %v1620
      %v2645 = vunpack.c.l.b16 %v1621
      %v2646 = vunpack.c.l.b16 %v1622
      %v2647 = vunpack.c.l.b16 %v1623
      %v2648 = vunpack.c.l.b16 %v1624
      %v2649 = vunpack.c.l.b16 %v1625
      %v2650 = vunpack.c.l.b16 %v1626
      %v2651 = vunpack.c.l.b16 %v1627
      %v2652 = vunpack.c.l.b16 %v1628
      %v2653 = vunpack.c.l.b16 %v1629
      %v2654 = vunpack.c.l.b16 %v1630
      %v2655 = vunpack.c.l.b16 %v1631
      %v2656 = vunpack.c.l.b16 %v1632
      %v2657 = vunpack.c.l.b16 %v1633
      %v2658 = vunpack.c.l.b16 %v1634
      %v2659 = vunpack.c.l.b16 %v1635
      %v2660 = vunpack.c.l.b16 %v1636
      %v2661 = vunpack.c.l.b16 %v1637
      %v2662 = vunpack.c.l.b16 %v1638
      %v2663 = vunpack.c.l.b16 %v1639
      %v2664 = vunpack.c.l.b16 %v1640
      %v2665 = vunpack.c.l.b16 %v1641
      %v2666 = vunpack.c.l.b16 %v1642
      %v2667 = vunpack.c.l.b16 %v1643
      %v2668 = vunpack.c.l.b16 %v1644
      %v2669 = vunpack.c.l.b16 %v1645
      %v2670 = vunpack.c.l.b16 %v1646
      %v2671 = vunpack.c.l.b16 %v1647
      %v2672 = vunpack.c.l.b16 %v1648
      %v2673 = vunpack.c.l.b16 %v1649
      %v2674 = vunpack.c.l.b16 %v1650
      %v2675 = vunpack.c.l.b16 %v1651
      %v2676 = vunpack.c.l.b16 %v1652
      %v2677 = vunpack.c.l.b16 %v1653
      %v2678 = vunpack.c.l.b16 %v1654
      %v2679 = vunpack.c.l.b16 %v1655
      %v2680 = vunpack.c.l.b16 %v1656
      %v2681 = vunpack.c.l.b16 %v1657
      %v2682 = vunpack.c.l.b16 %v1658
      %v2683 = vunpack.c.l.b16 %v1659
      %v2684 = vunpack.c.l.b16 %v1660
      %v2685 = vunpack.c.l.b16 %v1661
      %v2686 = vunpack.c.l.b16 %v1662
      %v2687 = vunpack.c.l.b16 %v1663
      %v2688 = vunpack.c.l.b16 %v1664
      %v2689 = vunpack.c.l.b16 %v1665
      %v2690 = vunpack.c.l.b16 %v1666
      %v2691 = vunpack.c.l.b16 %v1667
      %v2692 = vunpack.c.l.b16 %v1668
      %v2693 = vunpack.c.l.b16 %v1669
      %v2694 = vunpack.c.l.b16 %v1670
      %v2695 = vunpack.c.l.b16 %v1671
      %v2696 = vunpack.c.l.b16 %v1672
      %v2697 = vunpack.c.l.b16 %v1673
      %v2698 = vunpack.c.l.b16 %v1674
      %v2699 = vunpack.c.l.b16 %v1675
      %v2700 = vunpack.c.l.b16 %v1676
      %v2701 = vunpack.c.l.b16 %v1677
      %v2702 = vunpack.c.l.b16 %v1678
      %v2703 = vunpack.c.l.b16 %v1679
      %v2704 = vunpack.c.l.b16 %v1680
      %v2705 = vunpack.c.l.b16 %v1681
      %v2706 = vunpack.c.l.b16 %v1682
      %v2707 = vunpack.c.l.b16 %v1683
      %v2708 = vunpack.c.l.b16 %v1684
      %v2709 = vunpack.c.l.b16 %v1685
      %v2710 = vunpack.c.l.b16 %v1686
      %v2711 = vunpack.c.l.b16 %v1687
      %v2712 = vunpack.c.l.b16 %v1688
      %v2713 = vunpack.c.l.b16 %v1689
      %v2714 = vunpack.c.l.b16 %v1690
      %v2715 = vunpack.c.l.b16 %v1691
      %v2716 = vunpack.c.l.b16 %v1692
      %v2717 = vunpack.c.l.b16 %v1693
      %v2718 = vunpack.c.l.b16 %v1694
      %v2719 = vunpack.c.l.b16 %v1695
      %v2720 = vunpack.c.l.b16 %v1696
      %v2721 = vunpack.c.l.b16 %v1697
      %v2722 = vunpack.c.l.b16 %v1698
      %v2723 = vunpack.c.l.b16 %v1699
      %v2724 = vunpack.c.l.b16 %v1700
      %v2725 = vunpack.c.l.b16 %v1701
      %v2726 = vunpack.c.l.b16 %v1702
      %v2727 = vunpack.c.l.b16 %v1703
      %v2728 = vunpack.c.l.b16 %v1704
      %v2729 = vunpack.c.l.b16 %v1705
      %v2730 = vunpack.c.l.b16 %v1706
      %v2731 = vunpack.c.l.b16 %v1707
      %v2732 = vunpack.c.l.b16 %v1708
      %v2733 = vunpack.c.l.b16 %v1709
      %v2734 = vunpack.c.l.b16 %v1710
      %v2735 = vunpack.c.l.b16 %v1711
      %v2736 = vunpack.c.l.b16 %v1712
      %v2737 = vunpack.c.l.b16 %v1713
      %v2738 = vunpack.c.l.b16 %v1714
      %v2739 = vunpack.c.l.b16 %v1715
      %v2740 = vunpack.c.l.b16 %v1716
      %v2741 = vunpack.c.l.b16 %v1717
      %v2742 = vunpack.c.l.b16 %v1718
      %v2743 = vunpack.c.l.b16 %v1719
      %v2744 = vunpack.c.l.b16 %v1720
      %v2745 = vpack.c.b16 %v2602, %v2601
      %v2746 = vpack.c.b16 %v2604, %v2603
      %v2747 = vpack.c.b16 %v2606, %v2605
      %v2748 = vpack.c.b16 %v2608, %v2607
      %v2749 = vpack.c.b16 %v2610, %v2609
      %v2750 = vpack.c.b16 %v2612, %v2611
      %v2751 = vpack.c.b16 %v2614, %v2613
      %v2752 = vpack.c.b16 %v2616, %v2615
      %v2753 = vpack.c.b16 %v2618, %v2617
      %v2754 = vpack.c.b16 %v2620, %v2619
      %v2755 = vpack.c.b16 %v2622, %v2621
      %v2756 = vpack.c.b16 %v2624, %v2623
      %v2757 = vpack.c.b16 %v2626, %v2625
      %v2758 = vpack.c.b16 %v2628, %v2627
      %v2759 = vpack.c.b16 %v2630, %v2629
      %v2760 = vpack.c.b16 %v2632, %v2631
      %v2761 = vpack.c.b16 %v2634, %v2633
      %v2762 = vpack.c.b16 %v2636, %v2635
      %v2763 = vpack.c.b16 %v2638, %v2637
      %v2764 = vpack.c.b16 %v2640, %v2639
      %v2765 = vpack.c.b16 %v2642, %v2641
      %v2766 = vpack.c.b16 %v2644, %v2643
      %v2767 = vpack.c.b16 %v2646, %v2645
      %v2768 = vpack.c.b16 %v2648, %v2647
      %v2769 = vpack.c.b16 %v2650, %v2649
      %v2770 = vpack.c.b16 %v2652, %v2651
      %v2771 = vpack.c.b16 %v2654, %v2653
      %v2772 = vpack.c.b16 %v2656, %v2655
      %v2773 = vpack.c.b16 %v2658, %v2657
      %v2774 = vpack.c.b16 %v2660, %v2659
      %v2775 = vpack.c.b16 %v2662, %v2661
      %v2776 = vpack.c.b16 %v2664, %v2663
      %v2777 = vpack.c.b16 %v2666, %v2665
      %v2778 = vpack.c.b16 %v2668, %v2667
      %v2779 = vpack.c.b16 %v2670, %v2669
      %v2780 = vpack.c.b16 %v2672, %v2671
      %v2781 = vpack.c.b16 %v2674, %v2673
      %v2782 = vpack.c.b16 %v2676, %v2675
      %v2783 = vpack.c.b16 %v2678, %v2677
      %v2784 = vpack.c.b16 %v2680, %v2679
      %v2785 = vpack.c.b16 %v2682, %v2681
      %v2786 = vpack.c.b16 %v2684, %v2683
      %v2787 = vpack.c.b16 %v2686, %v2685
      %v2788 = vpack.c.b16 %v2688, %v2687
      %v2789 = vpack.c.b16 %v2690, %v2689
      %v2790 = vpack.c.b16 %v2692, %v2691
      %v2791 = vpack.c.b16 %v2694, %v2693
      %v2792 = vpack.c.b16 %v2696, %v2695
      %v2793 = vpack.c.b16 %v2698, %v2697
      %v2794 = vpack.c.b16 %v2700, %v2699
      %v2795 = vpack.c.b16 %v2702, %v2701
      %v2796 = vpack.c.b16 %v2704, %v2703
      %v2797 = vpack.c.b16 %v2706, %v2705
      %v2798 = vpack.c.b16 %v2708, %v2707
      %v2799 = vpack.c.b16 %v2710, %v2709
      %v2800 = vpack.c.b16 %v2712, %v2711
      %v2801 = vpack.c.b16 %v2714, %v2713
      %v2802 = vpack.c.b16 %v2716, %v2715
      %v2803 = vpack.c.b16 %v2718, %v2717
      %v2804 = vpack.c.b16 %v2720, %v2719
      %v2805 = vpack.c.b16 %v2722, %v2721
      %v2806 = vpack.c.b16 %v2724, %v2723
      %v2807 = vpack.c.b16 %v2726, %v2725
      %v2808 = vpack.c.b16 %v2728, %v2727
      %v2809 = vpack.c.b16 %v2730, %v2729
      %v2810 = vpack.c.b16 %v2732, %v2731
      %v2811 = vpack.c.b16 %v2734, %v2733
      %v2812 = vpack.c.b16 %v2736, %v2735
      %v2813 = vpack.c.b16 %v2738, %v2737
      %v2814 = vpack.c.b16 %v2740, %v2739
      %v2815 = vpack.c.b16 %v2742, %v2741
      %v2816 = vpack.c.b16 %v2744, %v2743
      %2889 = vmatprep.subr.bf16.mxu0 0
      %2890 = vmatpush1.bf16.msra.mxu0 %v2752
      %2891 = vmatprep.subr.bf16.mxu0 0
      %2892 = vmatpush1.bf16.msra.mxu0 %v2751
      %2893 = vmatprep.subr.bf16.mxu0 0
      %2894 = vmatpush1.bf16.msra.mxu0 %v2750
      %2895 = vmatprep.subr.bf16.mxu0 0
      %2896 = vmatpush1.bf16.msra.mxu0 %v2749
      %2897 = vmatprep.subr.bf16.mxu0 0
      %2898 = vmatpush1.bf16.msra.mxu0 %v2748
      %2899 = vmatprep.subr.bf16.mxu0 0
      %2900 = vmatpush1.bf16.msra.mxu0 %v2747
      %2901 = vmatprep.subr.bf16.mxu0 0
      %2902 = vmatpush1.bf16.msra.mxu0 %v2746
      %2903 = vmatprep.subr.bf16.mxu0 0
      %2904 = vmatpush1.bf16.msra.mxu0 %v2745
      %2905 = vmatprep.subr.bf16.mxu0 0
      %2906 = vmatpush2.bf16.msra.mxu0 %v2760
      %2907 = vmatprep.subr.bf16.mxu0 0
      %2908 = vmatpush2.bf16.msra.mxu0 %v2759
      %2909 = vmatprep.subr.bf16.mxu0 0
      %2910 = vmatpush2.bf16.msra.mxu0 %v2758
      %2911 = vmatprep.subr.bf16.mxu0 0
      %2912 = vmatpush2.bf16.msra.mxu0 %v2757
      %2913 = vmatprep.subr.bf16.mxu0 0
      %2914 = vmatpush2.bf16.msra.mxu0 %v2756
      %2915 = vmatprep.subr.bf16.mxu0 0
      %2916 = vmatpush2.bf16.msra.mxu0 %v2755
      %2917 = vmatprep.subr.bf16.mxu0 0
      %2918 = vmatpush2.bf16.msra.mxu0 %v2754
      %2919 = vmatprep.subr.bf16.mxu0 0
      %2920 = vmatpush2.bf16.msra.mxu0 %v2753
      %2921 = vmatprep.mubr.bf16.mxu0 %v2170
      %2922 = vmatmul.mubr.bf16.gmra.mxu0 %v2169
      %v2923 = vpop.f32.mrf.mxu0
      %v2924 = vadd.f32 0.0, %v2923
      %v2925 = vpop.f32.mrf.mxu0
      %v2926 = vpop.f32.mrf.mxu0
      %v2927 = vadd.f32 0.0, %v2926
      %v2928 = vpop.f32.mrf.mxu0
      %2929 = vmatprep.mubr.bf16.mxu0 %v2179
      %2930 = vmatmul.mubr.bf16.gmra.mxu0 %v2178
      %v2931 = vpop.f32.mrf.mxu0
      %v2932 = vadd.f32 0.0, %v2931
      %v2933 = vpop.f32.mrf.mxu0
      %v2934 = vpop.f32.mrf.mxu0
      %v2935 = vadd.f32 0.0, %v2934
      %v2936 = vpop.f32.mrf.mxu0
      %2937 = vmatprep.mubr.bf16.mxu0 %v2188
      %2938 = vmatmul.mubr.bf16.gmra.mxu0 %v2187
      %v2939 = vpop.f32.mrf.mxu0
      %v2940 = vadd.f32 0.0, %v2939
      %v2941 = vpop.f32.mrf.mxu0
      %v2942 = vpop.f32.mrf.mxu0
      %v2943 = vadd.f32 0.0, %v2942
      %v2944 = vpop.f32.mrf.mxu0
      %2945 = vmatprep.mubr.bf16.mxu0 %v2197
      %2946 = vmatmul.mubr.bf16.gmra.mxu0 %v2196
      %v2947 = vpop.f32.mrf.mxu0
      %v2948 = vadd.f32 0.0, %v2947
      %v2949 = vpop.f32.mrf.mxu0
      %v2950 = vpop.f32.mrf.mxu0
      %v2951 = vadd.f32 0.0, %v2950
      %v2952 = vpop.f32.mrf.mxu0
      %2953 = vmatprep.mubr.bf16.mxu0 %v2206
      %2954 = vmatmul.mubr.bf16.gmra.mxu0 %v2205
      %v2955 = vpop.f32.mrf.mxu0
      %v2956 = vadd.f32 0.0, %v2955
      %v2957 = vpop.f32.mrf.mxu0
      %v2958 = vpop.f32.mrf.mxu0
      %v2959 = vadd.f32 0.0, %v2958
      %v2960 = vpop.f32.mrf.mxu0
      %2961 = vmatprep.mubr.bf16.mxu0 %v2215
      %2962 = vmatmul.mubr.bf16.gmra.mxu0 %v2214
      %v2963 = vpop.f32.mrf.mxu0
      %v2964 = vadd.f32 0.0, %v2963
      %v2965 = vpop.f32.mrf.mxu0
      %v2966 = vpop.f32.mrf.mxu0
      %v2967 = vadd.f32 0.0, %v2966
      %v2968 = vpop.f32.mrf.mxu0
      %2969 = vmatprep.mubr.bf16.mxu0 %v2224
      %2970 = vmatmul.mubr.bf16.gmra.mxu0 %v2223
      %v2971 = vpop.f32.mrf.mxu0
      %v2972 = vadd.f32 0.0, %v2971
      %v2973 = vpop.f32.mrf.mxu0
      %v2974 = vpop.f32.mrf.mxu0
      %v2975 = vadd.f32 0.0, %v2974
      %v2976 = vpop.f32.mrf.mxu0
      %2977 = vmatprep.mubr.bf16.mxu0 %v2233
      %2978 = vmatmul.mubr.bf16.gmra.mxu0 %v2232
      %v2979 = vpop.f32.mrf.mxu0
      %v2980 = vadd.f32 0.0, %v2979
      %v2981 = vpop.f32.mrf.mxu0
      %v2982 = vpop.f32.mrf.mxu0
      %v2983 = vadd.f32 0.0, %v2982
      %v2984 = vpop.f32.mrf.mxu0
      %2985 = vmatprep.mubr.bf16.mxu0 %v2242
      %2986 = vmatmul.mubr.bf16.gmra.mxu0 %v2241
      %v2987 = vpop.f32.mrf.mxu0
      %v2988 = vadd.f32 0.0, %v2987
      %v2989 = vpop.f32.mrf.mxu0
      %v2990 = vpop.f32.mrf.mxu0
      %v2991 = vadd.f32 0.0, %v2990
      %v2992 = vpop.f32.mrf.mxu0
      %2993 = vmatprep.mubr.bf16.mxu0 %v2251
      %2994 = vmatmul.mubr.bf16.gmra.mxu0 %v2250
      %v2995 = vpop.f32.mrf.mxu0
      %v2996 = vadd.f32 0.0, %v2995
      %v2997 = vpop.f32.mrf.mxu0
      %v2998 = vpop.f32.mrf.mxu0
      %v2999 = vadd.f32 0.0, %v2998
      %v3000 = vpop.f32.mrf.mxu0
      %3001 = vmatprep.mubr.bf16.mxu0 %v2260
      %3002 = vmatmul.mubr.bf16.gmra.mxu0 %v2259
      %v3003 = vpop.f32.mrf.mxu0
      %v3004 = vadd.f32 0.0, %v3003
      %v3005 = vpop.f32.mrf.mxu0
      %v3006 = vpop.f32.mrf.mxu0
      %v3007 = vadd.f32 0.0, %v3006
      %v3008 = vpop.f32.mrf.mxu0
      %3009 = vmatprep.mubr.bf16.mxu0 %v2269
      %3010 = vmatmul.mubr.bf16.gmra.mxu0 %v2268
      %v3011 = vpop.f32.mrf.mxu0
      %v3012 = vadd.f32 0.0, %v3011
      %v3013 = vpop.f32.mrf.mxu0
      %v3014 = vpop.f32.mrf.mxu0
      %v3015 = vadd.f32 0.0, %v3014
      %v3016 = vpop.f32.mrf.mxu0
      %3017 = vmatprep.mubr.bf16.mxu0 %v2278
      %3018 = vmatmul.mubr.bf16.gmra.mxu0 %v2277
      %v3019 = vpop.f32.mrf.mxu0
      %v3020 = vadd.f32 0.0, %v3019
      %v3021 = vpop.f32.mrf.mxu0
      %v3022 = vpop.f32.mrf.mxu0
      %v3023 = vadd.f32 0.0, %v3022
      %v3024 = vpop.f32.mrf.mxu0
      %3025 = vmatprep.mubr.bf16.mxu0 %v2287
      %3026 = vmatmul.mubr.bf16.gmra.mxu0 %v2286
      %v3027 = vpop.f32.mrf.mxu0
      %v3028 = vadd.f32 0.0, %v3027
      %v3029 = vpop.f32.mrf.mxu0
      %v3030 = vpop.f32.mrf.mxu0
      %v3031 = vadd.f32 0.0, %v3030
      %v3032 = vpop.f32.mrf.mxu0
      %3033 = vmatprep.mubr.bf16.mxu0 %v2296
      %3034 = vmatmul.mubr.bf16.gmra.mxu0 %v2295
      %v3035 = vpop.f32.mrf.mxu0
      %v3036 = vadd.f32 0.0, %v3035
      %v3037 = vpop.f32.mrf.mxu0
      %v3038 = vpop.f32.mrf.mxu0
      %v3039 = vadd.f32 0.0, %v3038
      %v3040 = vpop.f32.mrf.mxu0
      %3041 = vmatprep.mubr.bf16.mxu0 %v2305
      %3042 = vmatmul.mubr.bf16.gmra.mxu0 %v2304
      %v3043 = vpop.f32.mrf.mxu0
      %v3044 = vadd.f32 0.0, %v3043
      %v3045 = vpop.f32.mrf.mxu0
      %v3046 = vpop.f32.mrf.mxu0
      %v3047 = vadd.f32 0.0, %v3046
      %v3048 = vpop.f32.mrf.mxu0
      %3049 = vdwg.mxu0
      %3050 = vmatprep.subr.bf16.mxu0 0
      %3051 = vmatpush1.bf16.msra.mxu0 %v2768
      %3052 = vmatprep.subr.bf16.mxu0 0
      %3053 = vmatpush1.bf16.msra.mxu0 %v2767
      %3054 = vmatprep.subr.bf16.mxu0 0
      %3055 = vmatpush1.bf16.msra.mxu0 %v2766
      %3056 = vmatprep.subr.bf16.mxu0 0
      %3057 = vmatpush1.bf16.msra.mxu0 %v2765
      %3058 = vmatprep.subr.bf16.mxu0 0
      %3059 = vmatpush1.bf16.msra.mxu0 %v2764
      %3060 = vmatprep.subr.bf16.mxu0 0
      %3061 = vmatpush1.bf16.msra.mxu0 %v2763
      %3062 = vmatprep.subr.bf16.mxu0 0
      %3063 = vmatpush1.bf16.msra.mxu0 %v2762
      %3064 = vmatprep.subr.bf16.mxu0 0
      %3065 = vmatpush1.bf16.msra.mxu0 %v2761
      %3066 = vmatprep.subr.bf16.mxu0 0
      %3067 = vmatpush2.bf16.msra.mxu0 %v2776
      %3068 = vmatprep.subr.bf16.mxu0 0
      %3069 = vmatpush2.bf16.msra.mxu0 %v2775
      %3070 = vmatprep.subr.bf16.mxu0 0
      %3071 = vmatpush2.bf16.msra.mxu0 %v2774
      %3072 = vmatprep.subr.bf16.mxu0 0
      %3073 = vmatpush2.bf16.msra.mxu0 %v2773
      %3074 = vmatprep.subr.bf16.mxu0 0
      %3075 = vmatpush2.bf16.msra.mxu0 %v2772
      %3076 = vmatprep.subr.bf16.mxu0 0
      %3077 = vmatpush2.bf16.msra.mxu0 %v2771
      %3078 = vmatprep.subr.bf16.mxu0 0
      %3079 = vmatpush2.bf16.msra.mxu0 %v2770
      %3080 = vmatprep.subr.bf16.mxu0 0
      %3081 = vmatpush2.bf16.msra.mxu0 %v2769
      %3082 = vmatprep.mubr.bf16.mxu0 %v2172
      %3083 = vmatmul.mubr.bf16.gmra.mxu0 %v2171
      %v3084 = vpop.f32.mrf.mxu0
      %v3085 = vadd.f32 %v2924, %v3084
      %v3086 = vpop.f32.mrf.mxu0
      %v3087 = vpop.f32.mrf.mxu0
      %v3088 = vadd.f32 %v2927, %v3087
      %v3089 = vpop.f32.mrf.mxu0
      %3090 = vmatprep.mubr.bf16.mxu0 %v2181
      %3091 = vmatmul.mubr.bf16.gmra.mxu0 %v2180
      %v3092 = vpop.f32.mrf.mxu0
      %v3093 = vadd.f32 %v2932, %v3092
      %v3094 = vpop.f32.mrf.mxu0
      %v3095 = vpop.f32.mrf.mxu0
      %v3096 = vadd.f32 %v2935, %v3095
      %v3097 = vpop.f32.mrf.mxu0
      %3098 = vmatprep.mubr.bf16.mxu0 %v2190
      %3099 = vmatmul.mubr.bf16.gmra.mxu0 %v2189
      %v3100 = vpop.f32.mrf.mxu0
      %v3101 = vadd.f32 %v2940, %v3100
      %v3102 = vpop.f32.mrf.mxu0
      %v3103 = vpop.f32.mrf.mxu0
      %v3104 = vadd.f32 %v2943, %v3103
      %v3105 = vpop.f32.mrf.mxu0
      %3106 = vmatprep.mubr.bf16.mxu0 %v2199
      %3107 = vmatmul.mubr.bf16.gmra.mxu0 %v2198
      %v3108 = vpop.f32.mrf.mxu0
      %v3109 = vadd.f32 %v2948, %v3108
      %v3110 = vpop.f32.mrf.mxu0
      %v3111 = vpop.f32.mrf.mxu0
      %v3112 = vadd.f32 %v2951, %v3111
      %v3113 = vpop.f32.mrf.mxu0
      %3114 = vmatprep.mubr.bf16.mxu0 %v2208
      %3115 = vmatmul.mubr.bf16.gmra.mxu0 %v2207
      %v3116 = vpop.f32.mrf.mxu0
      %v3117 = vadd.f32 %v2956, %v3116
      %v3118 = vpop.f32.mrf.mxu0
      %v3119 = vpop.f32.mrf.mxu0
      %v3120 = vadd.f32 %v2959, %v3119
      %v3121 = vpop.f32.mrf.mxu0
      %3122 = vmatprep.mubr.bf16.mxu0 %v2217
      %3123 = vmatmul.mubr.bf16.gmra.mxu0 %v2216
      %v3124 = vpop.f32.mrf.mxu0
      %v3125 = vadd.f32 %v2964, %v3124
      %v3126 = vpop.f32.mrf.mxu0
      %v3127 = vpop.f32.mrf.mxu0
      %v3128 = vadd.f32 %v2967, %v3127
      %v3129 = vpop.f32.mrf.mxu0
      %3130 = vmatprep.mubr.bf16.mxu0 %v2226
      %3131 = vmatmul.mubr.bf16.gmra.mxu0 %v2225
      %v3132 = vpop.f32.mrf.mxu0
      %v3133 = vadd.f32 %v2972, %v3132
      %v3134 = vpop.f32.mrf.mxu0
      %v3135 = vpop.f32.mrf.mxu0
      %v3136 = vadd.f32 %v2975, %v3135
      %v3137 = vpop.f32.mrf.mxu0
      %3138 = vmatprep.mubr.bf16.mxu0 %v2235
      %3139 = vmatmul.mubr.bf16.gmra.mxu0 %v2234
      %v3140 = vpop.f32.mrf.mxu0
      %v3141 = vadd.f32 %v2980, %v3140
      %v3142 = vpop.f32.mrf.mxu0
      %v3143 = vpop.f32.mrf.mxu0
      %v3144 = vadd.f32 %v2983, %v3143
      %v3145 = vpop.f32.mrf.mxu0
      %3146 = vmatprep.mubr.bf16.mxu0 %v2244
      %3147 = vmatmul.mubr.bf16.gmra.mxu0 %v2243
      %v3148 = vpop.f32.mrf.mxu0
      %v3149 = vadd.f32 %v2988, %v3148
      %v3150 = vpop.f32.mrf.mxu0
      %v3151 = vpop.f32.mrf.mxu0
      %v3152 = vadd.f32 %v2991, %v3151
      %v3153 = vpop.f32.mrf.mxu0
      %3154 = vmatprep.mubr.bf16.mxu0 %v2253
      %3155 = vmatmul.mubr.bf16.gmra.mxu0 %v2252
      %v3156 = vpop.f32.mrf.mxu0
      %v3157 = vadd.f32 %v2996, %v3156
      %v3158 = vpop.f32.mrf.mxu0
      %v3159 = vpop.f32.mrf.mxu0
      %v3160 = vadd.f32 %v2999, %v3159
      %v3161 = vpop.f32.mrf.mxu0
      %3162 = vmatprep.mubr.bf16.mxu0 %v2262
      %3163 = vmatmul.mubr.bf16.gmra.mxu0 %v2261
      %v3164 = vpop.f32.mrf.mxu0
      %v3165 = vadd.f32 %v3004, %v3164
      %v3166 = vpop.f32.mrf.mxu0
      %v3167 = vpop.f32.mrf.mxu0
      %v3168 = vadd.f32 %v3007, %v3167
      %v3169 = vpop.f32.mrf.mxu0
      %3170 = vmatprep.mubr.bf16.mxu0 %v2271
      %3171 = vmatmul.mubr.bf16.gmra.mxu0 %v2270
      %v3172 = vpop.f32.mrf.mxu0
      %v3173 = vadd.f32 %v3012, %v3172
      %v3174 = vpop.f32.mrf.mxu0
      %v3175 = vpop.f32.mrf.mxu0
      %v3176 = vadd.f32 %v3015, %v3175
      %v3177 = vpop.f32.mrf.mxu0
      %3178 = vmatprep.mubr.bf16.mxu0 %v2280
      %3179 = vmatmul.mubr.bf16.gmra.mxu0 %v2279
      %v3180 = vpop.f32.mrf.mxu0
      %v3181 = vadd.f32 %v3020, %v3180
      %v3182 = vpop.f32.mrf.mxu0
      %v3183 = vpop.f32.mrf.mxu0
      %v3184 = vadd.f32 %v3023, %v3183
      %v3185 = vpop.f32.mrf.mxu0
      %3186 = vmatprep.mubr.bf16.mxu0 %v2289
      %3187 = vmatmul.mubr.bf16.gmra.mxu0 %v2288
      %v3188 = vpop.f32.mrf.mxu0
      %v3189 = vadd.f32 %v3028, %v3188
      %v3190 = vpop.f32.mrf.mxu0
      %v3191 = vpop.f32.mrf.mxu0
      %v3192 = vadd.f32 %v3031, %v3191
      %v3193 = vpop.f32.mrf.mxu0
      %3194 = vmatprep.mubr.bf16.mxu0 %v2298
      %3195 = vmatmul.mubr.bf16.gmra.mxu0 %v2297
      %v3196 = vpop.f32.mrf.mxu0
      %v3197 = vadd.f32 %v3036, %v3196
      %v3198 = vpop.f32.mrf.mxu0
      %v3199 = vpop.f32.mrf.mxu0
      %v3200 = vadd.f32 %v3039, %v3199
      %v3201 = vpop.f32.mrf.mxu0
      %3202 = vmatprep.mubr.bf16.mxu0 %v2307
      %3203 = vmatmul.mubr.bf16.gmra.mxu0 %v2306
      %v3204 = vpop.f32.mrf.mxu0
      %v3205 = vadd.f32 %v3044, %v3204
      %v3206 = vpop.f32.mrf.mxu0
      %v3207 = vpop.f32.mrf.mxu0
      %v3208 = vadd.f32 %v3047, %v3207
      %v3209 = vpop.f32.mrf.mxu0
      %3210 = vdwg.mxu0
      %3211 = vmatprep.subr.bf16.mxu0 0
      %3212 = vmatpush1.bf16.msra.mxu0 %v2784
      %3213 = vmatprep.subr.bf16.mxu0 0
      %3214 = vmatpush1.bf16.msra.mxu0 %v2783
      %3215 = vmatprep.subr.bf16.mxu0 0
      %3216 = vmatpush1.bf16.msra.mxu0 %v2782
      %3217 = vmatprep.subr.bf16.mxu0 0
      %3218 = vmatpush1.bf16.msra.mxu0 %v2781
      %3219 = vmatprep.subr.bf16.mxu0 0
      %3220 = vmatpush1.bf16.msra.mxu0 %v2780
      %3221 = vmatprep.subr.bf16.mxu0 0
      %3222 = vmatpush1.bf16.msra.mxu0 %v2779
      %3223 = vmatprep.subr.bf16.mxu0 0
      %3224 = vmatpush1.bf16.msra.mxu0 %v2778
      %3225 = vmatprep.subr.bf16.mxu0 0
      %3226 = vmatpush1.bf16.msra.mxu0 %v2777
      %3227 = vmatprep.subr.bf16.mxu0 0
      %3228 = vmatpush2.bf16.msra.mxu0 %v2792
      %3229 = vmatprep.subr.bf16.mxu0 0
      %3230 = vmatpush2.bf16.msra.mxu0 %v2791
      %3231 = vmatprep.subr.bf16.mxu0 0
      %3232 = vmatpush2.bf16.msra.mxu0 %v2790
      %3233 = vmatprep.subr.bf16.mxu0 0
      %3234 = vmatpush2.bf16.msra.mxu0 %v2789
      %3235 = vmatprep.subr.bf16.mxu0 0
      %3236 = vmatpush2.bf16.msra.mxu0 %v2788
      %3237 = vmatprep.subr.bf16.mxu0 0
      %3238 = vmatpush2.bf16.msra.mxu0 %v2787
      %3239 = vmatprep.subr.bf16.mxu0 0
      %3240 = vmatpush2.bf16.msra.mxu0 %v2786
      %3241 = vmatprep.subr.bf16.mxu0 0
      %3242 = vmatpush2.bf16.msra.mxu0 %v2785
      %3243 = vmatprep.mubr.bf16.mxu0 %v2174
      %3244 = vmatmul.mubr.bf16.gmra.mxu0 %v2173
      %v3245 = vpop.f32.mrf.mxu0
      %v3246 = vadd.f32 %v3085, %v3245
      %v3247 = vpop.f32.mrf.mxu0
      %v3248 = vpop.f32.mrf.mxu0
      %v3249 = vadd.f32 %v3088, %v3248
      %v3250 = vpop.f32.mrf.mxu0
      %3251 = vmatprep.mubr.bf16.mxu0 %v2183
      %3252 = vmatmul.mubr.bf16.gmra.mxu0 %v2182
      %v3253 = vpop.f32.mrf.mxu0
      %v3254 = vadd.f32 %v3093, %v3253
      %v3255 = vpop.f32.mrf.mxu0
      %v3256 = vpop.f32.mrf.mxu0
      %v3257 = vadd.f32 %v3096, %v3256
      %v3258 = vpop.f32.mrf.mxu0
      %3259 = vmatprep.mubr.bf16.mxu0 %v2192
      %3260 = vmatmul.mubr.bf16.gmra.mxu0 %v2191
      %v3261 = vpop.f32.mrf.mxu0
      %v3262 = vadd.f32 %v3101, %v3261
      %v3263 = vpop.f32.mrf.mxu0
      %v3264 = vpop.f32.mrf.mxu0
      %v3265 = vadd.f32 %v3104, %v3264
      %v3266 = vpop.f32.mrf.mxu0
      %3267 = vmatprep.mubr.bf16.mxu0 %v2201
      %3268 = vmatmul.mubr.bf16.gmra.mxu0 %v2200
      %v3269 = vpop.f32.mrf.mxu0
      %v3270 = vadd.f32 %v3109, %v3269
      %v3271 = vpop.f32.mrf.mxu0
      %v3272 = vpop.f32.mrf.mxu0
      %v3273 = vadd.f32 %v3112, %v3272
      %v3274 = vpop.f32.mrf.mxu0
      %3275 = vmatprep.mubr.bf16.mxu0 %v2210
      %3276 = vmatmul.mubr.bf16.gmra.mxu0 %v2209
      %v3277 = vpop.f32.mrf.mxu0
      %v3278 = vadd.f32 %v3117, %v3277
      %v3279 = vpop.f32.mrf.mxu0
      %v3280 = vpop.f32.mrf.mxu0
      %v3281 = vadd.f32 %v3120, %v3280
      %v3282 = vpop.f32.mrf.mxu0
      %3283 = vmatprep.mubr.bf16.mxu0 %v2219
      %3284 = vmatmul.mubr.bf16.gmra.mxu0 %v2218
      %v3285 = vpop.f32.mrf.mxu0
      %v3286 = vadd.f32 %v3125, %v3285
      %v3287 = vpop.f32.mrf.mxu0
      %v3288 = vpop.f32.mrf.mxu0
      %v3289 = vadd.f32 %v3128, %v3288
      %v3290 = vpop.f32.mrf.mxu0
      %3291 = vmatprep.mubr.bf16.mxu0 %v2228
      %3292 = vmatmul.mubr.bf16.gmra.mxu0 %v2227
      %v3293 = vpop.f32.mrf.mxu0
      %v3294 = vadd.f32 %v3133, %v3293
      %v3295 = vpop.f32.mrf.mxu0
      %v3296 = vpop.f32.mrf.mxu0
      %v3297 = vadd.f32 %v3136, %v3296
      %v3298 = vpop.f32.mrf.mxu0
      %3299 = vmatprep.mubr.bf16.mxu0 %v2237
      %3300 = vmatmul.mubr.bf16.gmra.mxu0 %v2236
      %v3301 = vpop.f32.mrf.mxu0
      %v3302 = vadd.f32 %v3141, %v3301
      %v3303 = vpop.f32.mrf.mxu0
      %v3304 = vpop.f32.mrf.mxu0
      %v3305 = vadd.f32 %v3144, %v3304
      %v3306 = vpop.f32.mrf.mxu0
      %3307 = vmatprep.mubr.bf16.mxu0 %v2246
      %3308 = vmatmul.mubr.bf16.gmra.mxu0 %v2245
      %v3309 = vpop.f32.mrf.mxu0
      %v3310 = vadd.f32 %v3149, %v3309
      %v3311 = vpop.f32.mrf.mxu0
      %v3312 = vpop.f32.mrf.mxu0
      %v3313 = vadd.f32 %v3152, %v3312
      %v3314 = vpop.f32.mrf.mxu0
      %3315 = vmatprep.mubr.bf16.mxu0 %v2255
      %3316 = vmatmul.mubr.bf16.gmra.mxu0 %v2254
      %v3317 = vpop.f32.mrf.mxu0
      %v3318 = vadd.f32 %v3157, %v3317
      %v3319 = vpop.f32.mrf.mxu0
      %v3320 = vpop.f32.mrf.mxu0
      %v3321 = vadd.f32 %v3160, %v3320
      %v3322 = vpop.f32.mrf.mxu0
      %3323 = vmatprep.mubr.bf16.mxu0 %v2264
      %3324 = vmatmul.mubr.bf16.gmra.mxu0 %v2263
      %v3325 = vpop.f32.mrf.mxu0
      %v3326 = vadd.f32 %v3165, %v3325
      %v3327 = vpop.f32.mrf.mxu0
      %v3328 = vpop.f32.mrf.mxu0
      %v3329 = vadd.f32 %v3168, %v3328
      %v3330 = vpop.f32.mrf.mxu0
      %3331 = vmatprep.mubr.bf16.mxu0 %v2273
      %3332 = vmatmul.mubr.bf16.gmra.mxu0 %v2272
      %v3333 = vpop.f32.mrf.mxu0
      %v3334 = vadd.f32 %v3173, %v3333
      %v3335 = vpop.f32.mrf.mxu0
      %v3336 = vpop.f32.mrf.mxu0
      %v3337 = vadd.f32 %v3176, %v3336
      %v3338 = vpop.f32.mrf.mxu0
      %3339 = vmatprep.mubr.bf16.mxu0 %v2282
      %3340 = vmatmul.mubr.bf16.gmra.mxu0 %v2281
      %v3341 = vpop.f32.mrf.mxu0
      %v3342 = vadd.f32 %v3181, %v3341
      %v3343 = vpop.f32.mrf.mxu0
      %v3344 = vpop.f32.mrf.mxu0
      %v3345 = vadd.f32 %v3184, %v3344
      %v3346 = vpop.f32.mrf.mxu0
      %3347 = vmatprep.mubr.bf16.mxu0 %v2291
      %3348 = vmatmul.mubr.bf16.gmra.mxu0 %v2290
      %v3349 = vpop.f32.mrf.mxu0
      %v3350 = vadd.f32 %v3189, %v3349
      %v3351 = vpop.f32.mrf.mxu0
      %v3352 = vpop.f32.mrf.mxu0
      %v3353 = vadd.f32 %v3192, %v3352
      %v3354 = vpop.f32.mrf.mxu0
      %3355 = vmatprep.mubr.bf16.mxu0 %v2300
      %3356 = vmatmul.mubr.bf16.gmra.mxu0 %v2299
      %v3357 = vpop.f32.mrf.mxu0
      %v3358 = vadd.f32 %v3197, %v3357
      %v3359 = vpop.f32.mrf.mxu0
      %v3360 = vpop.f32.mrf.mxu0
      %v3361 = vadd.f32 %v3200, %v3360
      %v3362 = vpop.f32.mrf.mxu0
      %3363 = vmatprep.mubr.bf16.mxu0 %v2309
      %3364 = vmatmul.mubr.bf16.gmra.mxu0 %v2308
      %v3365 = vpop.f32.mrf.mxu0
      %v3366 = vadd.f32 %v3205, %v3365
      %v3367 = vpop.f32.mrf.mxu0
      %v3368 = vpop.f32.mrf.mxu0
      %v3369 = vadd.f32 %v3208, %v3368
      %v3370 = vpop.f32.mrf.mxu0
      %3371 = vdwg.mxu0
      %3372 = vmatprep.subr.bf16.mxu0 0
      %3373 = vmatpush1.bf16.msra.mxu0 %v2800
      %3374 = vmatprep.subr.bf16.mxu0 0
      %3375 = vmatpush1.bf16.msra.mxu0 %v2799
      %3376 = vmatprep.subr.bf16.mxu0 0
      %3377 = vmatpush1.bf16.msra.mxu0 %v2798
      %3378 = vmatprep.subr.bf16.mxu0 0
      %3379 = vmatpush1.bf16.msra.mxu0 %v2797
      %3380 = vmatprep.subr.bf16.mxu0 0
      %3381 = vmatpush1.bf16.msra.mxu0 %v2796
      %3382 = vmatprep.subr.bf16.mxu0 0
      %3383 = vmatpush1.bf16.msra.mxu0 %v2795
      %3384 = vmatprep.subr.bf16.mxu0 0
      %3385 = vmatpush1.bf16.msra.mxu0 %v2794
      %3386 = vmatprep.subr.bf16.mxu0 0
      %3387 = vmatpush1.bf16.msra.mxu0 %v2793
      %3388 = vmatprep.subr.bf16.mxu0 0
      %3389 = vmatpush2.bf16.msra.mxu0 %v2808
      %3390 = vmatprep.subr.bf16.mxu0 0
      %3391 = vmatpush2.bf16.msra.mxu0 %v2807
      %3392 = vmatprep.subr.bf16.mxu0 0
      %3393 = vmatpush2.bf16.msra.mxu0 %v2806
      %3394 = vmatprep.subr.bf16.mxu0 0
      %3395 = vmatpush2.bf16.msra.mxu0 %v2805
      %3396 = vmatprep.subr.bf16.mxu0 0
      %3397 = vmatpush2.bf16.msra.mxu0 %v2804
      %3398 = vmatprep.subr.bf16.mxu0 0
      %3399 = vmatpush2.bf16.msra.mxu0 %v2803
      %3400 = vmatprep.subr.bf16.mxu0 0
      %3401 = vmatpush2.bf16.msra.mxu0 %v2802
      %3402 = vmatprep.subr.bf16.mxu0 0
      %3403 = vmatpush2.bf16.msra.mxu0 %v2801
      %3404 = vmatprep.mubr.bf16.mxu0 %v2176
      %3405 = vmatmul.mubr.bf16.gmra.mxu0 %v2175
      %v3406 = vpop.f32.mrf.mxu0
      %v3407 = vadd.f32 %v3246, %v3406
      %v3408 = vpop.f32.mrf.mxu0
      %v3409 = vpop.f32.mrf.mxu0
      %v3410 = vadd.f32 %v3249, %v3409
      %v3411 = vpop.f32.mrf.mxu0
      %3412 = vmatprep.mubr.bf16.mxu0 %v2185
      %3413 = vmatmul.mubr.bf16.gmra.mxu0 %v2184
      %v3414 = vpop.f32.mrf.mxu0
      %v3415 = vadd.f32 %v3254, %v3414
      %v3416 = vpop.f32.mrf.mxu0
      %v3417 = vpop.f32.mrf.mxu0
      %v3418 = vadd.f32 %v3257, %v3417
      %v3419 = vpop.f32.mrf.mxu0
      %3420 = vmatprep.mubr.bf16.mxu0 %v2194
      %3421 = vmatmul.mubr.bf16.gmra.mxu0 %v2193
      %v3422 = vpop.f32.mrf.mxu0
      %v3423 = vadd.f32 %v3262, %v3422
      %v3424 = vpop.f32.mrf.mxu0
      %v3425 = vpop.f32.mrf.mxu0
      %v3426 = vadd.f32 %v3265, %v3425
      %v3427 = vpop.f32.mrf.mxu0
      %3428 = vmatprep.mubr.bf16.mxu0 %v2203
      %3429 = vmatmul.mubr.bf16.gmra.mxu0 %v2202
      %v3430 = vpop.f32.mrf.mxu0
      %v3431 = vadd.f32 %v3270, %v3430
      %v3432 = vpop.f32.mrf.mxu0
      %v3433 = vpop.f32.mrf.mxu0
      %v3434 = vadd.f32 %v3273, %v3433
      %v3435 = vpop.f32.mrf.mxu0
      %3436 = vmatprep.mubr.bf16.mxu0 %v2212
      %3437 = vmatmul.mubr.bf16.gmra.mxu0 %v2211
      %v3438 = vpop.f32.mrf.mxu0
      %v3439 = vadd.f32 %v3278, %v3438
      %v3440 = vpop.f32.mrf.mxu0
      %v3441 = vpop.f32.mrf.mxu0
      %v3442 = vadd.f32 %v3281, %v3441
      %v3443 = vpop.f32.mrf.mxu0
      %3444 = vmatprep.mubr.bf16.mxu0 %v2221
      %3445 = vmatmul.mubr.bf16.gmra.mxu0 %v2220
      %v3446 = vpop.f32.mrf.mxu0
      %v3447 = vadd.f32 %v3286, %v3446
      %v3448 = vpop.f32.mrf.mxu0
      %v3449 = vpop.f32.mrf.mxu0
      %v3450 = vadd.f32 %v3289, %v3449
      %v3451 = vpop.f32.mrf.mxu0
      %3452 = vmatprep.mubr.bf16.mxu0 %v2230
      %3453 = vmatmul.mubr.bf16.gmra.mxu0 %v2229
      %v3454 = vpop.f32.mrf.mxu0
      %v3455 = vadd.f32 %v3294, %v3454
      %v3456 = vpop.f32.mrf.mxu0
      %v3457 = vpop.f32.mrf.mxu0
      %v3458 = vadd.f32 %v3297, %v3457
      %v3459 = vpop.f32.mrf.mxu0
      %3460 = vmatprep.mubr.bf16.mxu0 %v2239
      %3461 = vmatmul.mubr.bf16.gmra.mxu0 %v2238
      %v3462 = vpop.f32.mrf.mxu0
      %v3463 = vadd.f32 %v3302, %v3462
      %v3464 = vpop.f32.mrf.mxu0
      %v3465 = vpop.f32.mrf.mxu0
      %v3466 = vadd.f32 %v3305, %v3465
      %v3467 = vpop.f32.mrf.mxu0
      %3468 = vmatprep.mubr.bf16.mxu0 %v2248
      %3469 = vmatmul.mubr.bf16.gmra.mxu0 %v2247
      %v3470 = vpop.f32.mrf.mxu0
      %v3471 = vadd.f32 %v3310, %v3470
      %v3472 = vpop.f32.mrf.mxu0
      %v3473 = vpop.f32.mrf.mxu0
      %v3474 = vadd.f32 %v3313, %v3473
      %v3475 = vpop.f32.mrf.mxu0
      %3476 = vmatprep.mubr.bf16.mxu0 %v2257
      %3477 = vmatmul.mubr.bf16.gmra.mxu0 %v2256
      %v3478 = vpop.f32.mrf.mxu0
      %v3479 = vadd.f32 %v3318, %v3478
      %v3480 = vpop.f32.mrf.mxu0
      %v3481 = vpop.f32.mrf.mxu0
      %v3482 = vadd.f32 %v3321, %v3481
      %v3483 = vpop.f32.mrf.mxu0
      %3484 = vmatprep.mubr.bf16.mxu0 %v2266
      %3485 = vmatmul.mubr.bf16.gmra.mxu0 %v2265
      %v3486 = vpop.f32.mrf.mxu0
      %v3487 = vadd.f32 %v3326, %v3486
      %v3488 = vpop.f32.mrf.mxu0
      %v3489 = vpop.f32.mrf.mxu0
      %v3490 = vadd.f32 %v3329, %v3489
      %v3491 = vpop.f32.mrf.mxu0
      %3492 = vmatprep.mubr.bf16.mxu0 %v2275
      %3493 = vmatmul.mubr.bf16.gmra.mxu0 %v2274
      %v3494 = vpop.f32.mrf.mxu0
      %v3495 = vadd.f32 %v3334, %v3494
      %v3496 = vpop.f32.mrf.mxu0
      %v3497 = vpop.f32.mrf.mxu0
      %v3498 = vadd.f32 %v3337, %v3497
      %v3499 = vpop.f32.mrf.mxu0
      %3500 = vmatprep.mubr.bf16.mxu0 %v2284
      %3501 = vmatmul.mubr.bf16.gmra.mxu0 %v2283
      %v3502 = vpop.f32.mrf.mxu0
      %v3503 = vadd.f32 %v3342, %v3502
      %v3504 = vpop.f32.mrf.mxu0
      %v3505 = vpop.f32.mrf.mxu0
      %v3506 = vadd.f32 %v3345, %v3505
      %v3507 = vpop.f32.mrf.mxu0
      %3508 = vmatprep.mubr.bf16.mxu0 %v2293
      %3509 = vmatmul.mubr.bf16.gmra.mxu0 %v2292
      %v3510 = vpop.f32.mrf.mxu0
      %v3511 = vadd.f32 %v3350, %v3510
      %v3512 = vpop.f32.mrf.mxu0
      %v3513 = vpop.f32.mrf.mxu0
      %v3514 = vadd.f32 %v3353, %v3513
      %v3515 = vpop.f32.mrf.mxu0
      %3516 = vmatprep.mubr.bf16.mxu0 %v2302
      %3517 = vmatmul.mubr.bf16.gmra.mxu0 %v2301
      %v3518 = vpop.f32.mrf.mxu0
      %v3519 = vadd.f32 %v3358, %v3518
      %v3520 = vpop.f32.mrf.mxu0
      %v3521 = vpop.f32.mrf.mxu0
      %v3522 = vadd.f32 %v3361, %v3521
      %v3523 = vpop.f32.mrf.mxu0
      %3524 = vmatprep.mubr.bf16.mxu0 %v2311
      %3525 = vmatmul.mubr.bf16.gmra.mxu0 %v2310
      %v3526 = vpop.f32.mrf.mxu0
      %v3527 = vadd.f32 %v3366, %v3526
      %v3528 = vpop.f32.mrf.mxu0
      %v3529 = vpop.f32.mrf.mxu0
      %v3530 = vadd.f32 %v3369, %v3529
      %v3531 = vpop.f32.mrf.mxu0
      %3532 = vdwg.mxu0
      %3533 = vmatprep.subr.bf16.mxu0 0
      %3534 = vmatpush1.bf16.msra.mxu0 %v2816
      %3535 = vmatprep.subr.bf16.mxu0 0
      %3536 = vmatpush1.bf16.msra.mxu0 %v2815
      %3537 = vmatprep.subr.bf16.mxu0 0
      %3538 = vmatpush1.bf16.msra.mxu0 %v2814
      %3539 = vmatprep.subr.bf16.mxu0 0
      %3540 = vmatpush1.bf16.msra.mxu0 %v2813
      %3541 = vmatprep.subr.bf16.mxu0 0
      %3542 = vmatpush1.bf16.msra.mxu0 %v2812
      %3543 = vmatprep.subr.bf16.mxu0 0
      %3544 = vmatpush1.bf16.msra.mxu0 %v2811
      %3545 = vmatprep.subr.bf16.mxu0 0
      %3546 = vmatpush1.bf16.msra.mxu0 %v2810
      %3547 = vmatprep.subr.bf16.mxu0 0
      %3548 = vmatpush1.bf16.msra.mxu0 %v2809
      %3549 = vmatprep.subr.bf16.mxu0 0
      %3550 = vmatpush2.bf16.msra.mxu0 0
      %3551 = vmatprep.subr.bf16.mxu0 0
      %3552 = vmatpush2.bf16.msra.mxu0 0
      %3553 = vmatprep.subr.bf16.mxu0 0
      %3554 = vmatpush2.bf16.msra.mxu0 0
      %3555 = vmatprep.subr.bf16.mxu0 0
      %3556 = vmatpush2.bf16.msra.mxu0 0
      %3557 = vmatprep.subr.bf16.mxu0 0
      %3558 = vmatpush2.bf16.msra.mxu0 0
      %3559 = vmatprep.subr.bf16.mxu0 0
      %3560 = vmatpush2.bf16.msra.mxu0 0
      %3561 = vmatprep.subr.bf16.mxu0 0
      %3562 = vmatpush2.bf16.msra.mxu0 0
      %3563 = vmatprep.subr.bf16.mxu0 0
      %3564 = vmatpush2.bf16.msra.mxu0 0
      %3565 = vmatprep.mubr.bf16.mxu0 0
      %3566 = vmatmul.mubr.bf16.gmra.mxu0 %v2177
      %v3567 = vpop.f32.mrf.mxu0
      %v3568 = vadd.f32 %v3407, %v3567
      %v3569 = vpop.f32.mrf.mxu0
      %v3570 = vpop.f32.mrf.mxu0
      %v3571 = vadd.f32 %v3410, %v3570
      %v3572 = vpop.f32.mrf.mxu0
      %3573 = vmatprep.mubr.bf16.mxu0 0
      %3574 = vmatmul.mubr.bf16.gmra.mxu0 %v2186
      %v3575 = vpop.f32.mrf.mxu0
      %v3576 = vadd.f32 %v3415, %v3575
      %v3577 = vpop.f32.mrf.mxu0
      %v3578 = vpop.f32.mrf.mxu0
      %v3579 = vadd.f32 %v3418, %v3578
      %v3580 = vpop.f32.mrf.mxu0
      %3581 = vmatprep.mubr.bf16.mxu0 0
      %3582 = vmatmul.mubr.bf16.gmra.mxu0 %v2195
      %v3583 = vpop.f32.mrf.mxu0
      %v3584 = vadd.f32 %v3423, %v3583
      %v3585 = vpop.f32.mrf.mxu0
      %v3586 = vpop.f32.mrf.mxu0
      %v3587 = vadd.f32 %v3426, %v3586
      %v3588 = vpop.f32.mrf.mxu0
      %3589 = vmatprep.mubr.bf16.mxu0 0
      %3590 = vmatmul.mubr.bf16.gmra.mxu0 %v2204
      %v3591 = vpop.f32.mrf.mxu0
      %v3592 = vadd.f32 %v3431, %v3591
      %v3593 = vpop.f32.mrf.mxu0
      %v3594 = vpop.f32.mrf.mxu0
      %v3595 = vadd.f32 %v3434, %v3594
      %v3596 = vpop.f32.mrf.mxu0
      %3597 = vmatprep.mubr.bf16.mxu0 0
      %3598 = vmatmul.mubr.bf16.gmra.mxu0 %v2213
      %v3599 = vpop.f32.mrf.mxu0
      %v3600 = vadd.f32 %v3439, %v3599
      %v3601 = vpop.f32.mrf.mxu0
      %v3602 = vpop.f32.mrf.mxu0
      %v3603 = vadd.f32 %v3442, %v3602
      %v3604 = vpop.f32.mrf.mxu0
      %3605 = vmatprep.mubr.bf16.mxu0 0
      %3606 = vmatmul.mubr.bf16.gmra.mxu0 %v2222
      %v3607 = vpop.f32.mrf.mxu0
      %v3608 = vadd.f32 %v3447, %v3607
      %v3609 = vpop.f32.mrf.mxu0
      %v3610 = vpop.f32.mrf.mxu0
      %v3611 = vadd.f32 %v3450, %v3610
      %v3612 = vpop.f32.mrf.mxu0
      %3613 = vmatprep.mubr.bf16.mxu0 0
      %3614 = vmatmul.mubr.bf16.gmra.mxu0 %v2231
      %v3615 = vpop.f32.mrf.mxu0
      %v3616 = vadd.f32 %v3455, %v3615
      %v3617 = vpop.f32.mrf.mxu0
      %v3618 = vpop.f32.mrf.mxu0
      %v3619 = vadd.f32 %v3458, %v3618
      %v3620 = vpop.f32.mrf.mxu0
      %3621 = vmatprep.mubr.bf16.mxu0 0
      %3622 = vmatmul.mubr.bf16.gmra.mxu0 %v2240
      %v3623 = vpop.f32.mrf.mxu0
      %v3624 = vadd.f32 %v3463, %v3623
      %v3625 = vpop.f32.mrf.mxu0
      %v3626 = vpop.f32.mrf.mxu0
      %v3627 = vadd.f32 %v3466, %v3626
      %v3628 = vpop.f32.mrf.mxu0
      %3629 = vmatprep.mubr.bf16.mxu0 0
      %3630 = vmatmul.mubr.bf16.gmra.mxu0 %v2249
      %v3631 = vpop.f32.mrf.mxu0
      %v3632 = vadd.f32 %v3471, %v3631
      %v3633 = vpop.f32.mrf.mxu0
      %v3634 = vpop.f32.mrf.mxu0
      %v3635 = vadd.f32 %v3474, %v3634
      %v3636 = vpop.f32.mrf.mxu0
      %3637 = vmatprep.mubr.bf16.mxu0 0
      %3638 = vmatmul.mubr.bf16.gmra.mxu0 %v2258
      %v3639 = vpop.f32.mrf.mxu0
      %v3640 = vadd.f32 %v3479, %v3639
      %v3641 = vpop.f32.mrf.mxu0
      %v3642 = vpop.f32.mrf.mxu0
      %v3643 = vadd.f32 %v3482, %v3642
      %v3644 = vpop.f32.mrf.mxu0
      %3645 = vmatprep.mubr.bf16.mxu0 0
      %3646 = vmatmul.mubr.bf16.gmra.mxu0 %v2267
      %v3647 = vpop.f32.mrf.mxu0
      %v3648 = vadd.f32 %v3487, %v3647
      %v3649 = vpop.f32.mrf.mxu0
      %v3650 = vpop.f32.mrf.mxu0
      %v3651 = vadd.f32 %v3490, %v3650
      %v3652 = vpop.f32.mrf.mxu0
      %3653 = vmatprep.mubr.bf16.mxu0 0
      %3654 = vmatmul.mubr.bf16.gmra.mxu0 %v2276
      %v3655 = vpop.f32.mrf.mxu0
      %v3656 = vadd.f32 %v3495, %v3655
      %v3657 = vpop.f32.mrf.mxu0
      %v3658 = vpop.f32.mrf.mxu0
      %v3659 = vadd.f32 %v3498, %v3658
      %v3660 = vpop.f32.mrf.mxu0
      %3661 = vmatprep.mubr.bf16.mxu0 0
      %3662 = vmatmul.mubr.bf16.gmra.mxu0 %v2285
      %v3663 = vpop.f32.mrf.mxu0
      %v3664 = vadd.f32 %v3503, %v3663
      %v3665 = vpop.f32.mrf.mxu0
      %v3666 = vpop.f32.mrf.mxu0
      %v3667 = vadd.f32 %v3506, %v3666
      %v3668 = vpop.f32.mrf.mxu0
      %3669 = vmatprep.mubr.bf16.mxu0 0
      %3670 = vmatmul.mubr.bf16.gmra.mxu0 %v2294
      %v3671 = vpop.f32.mrf.mxu0
      %v3672 = vadd.f32 %v3511, %v3671
      %v3673 = vpop.f32.mrf.mxu0
      %v3674 = vpop.f32.mrf.mxu0
      %v3675 = vadd.f32 %v3514, %v3674
      %v3676 = vpop.f32.mrf.mxu0
      %3677 = vmatprep.mubr.bf16.mxu0 0
      %3678 = vmatmul.mubr.bf16.gmra.mxu0 %v2303
      %v3679 = vpop.f32.mrf.mxu0
      %v3680 = vadd.f32 %v3519, %v3679
      %v3681 = vpop.f32.mrf.mxu0
      %v3682 = vpop.f32.mrf.mxu0
      %v3683 = vadd.f32 %v3522, %v3682
      %v3684 = vpop.f32.mrf.mxu0
      %3685 = vmatprep.mubr.bf16.mxu0 0
      %3686 = vmatmul.mubr.bf16.gmra.mxu0 %v2312
      %v3687 = vpop.f32.mrf.mxu0
      %v3688 = vadd.f32 %v3527, %v3687
      %v3689 = vpop.f32.mrf.mxu0
      %v3690 = vpop.f32.mrf.mxu0
      %v3691 = vadd.f32 %v3530, %v3690
      %v3692 = vpop.f32.mrf.mxu0
      %3693 = vdwg.mxu0
      %3694 = vst [vmem:[%s208] sm:$0xff] %v3568
      %3695 = vst [vmem:[%s208 + $0x8] sm:$0xff] %v3571
      %3696 = vst [vmem:[%s208 + $0x10] sm:$0xff] %v3576
      %3697 = vst [vmem:[%s208 + $0x18] sm:$0xff] %v3579
      %3698 = vst [vmem:[%s208 + $0x20] sm:$0xff] %v3584
      %3699 = vst [vmem:[%s208 + $0x28] sm:$0xff] %v3587
      %3700 = vst [vmem:[%s208 + $0x30] sm:$0xff] %v3592
      %3701 = vst [vmem:[%s208 + $0x38] sm:$0xff] %v3595
      %3702 = vst [vmem:[%s208 + $0x40] sm:$0xff] %v3600
      %3703 = vst [vmem:[%s208 + $0x48] sm:$0xff] %v3603
      %3704 = vst [vmem:[%s208 + $0x50] sm:$0xff] %v3608
      %3705 = vst [vmem:[%s208 + $0x58] sm:$0xff] %v3611
      %3706 = vst [vmem:[%s208 + $0x60] sm:$0xff] %v3616
      %3707 = vst [vmem:[%s208 + $0x68] sm:$0xff] %v3619
      %3708 = vst [vmem:[%s208 + $0x70] sm:$0xff] %v3624
      %3709 = vst [vmem:[%s208 + $0x78] sm:$0xff] %v3627
      %3710 = vst [vmem:[%s208 + $0x80] sm:$0xff] %v3632
      %3711 = vst [vmem:[%s208 + $0x88] sm:$0xff] %v3635
      %3712 = vst [vmem:[%s208 + $0x90] sm:$0xff] %v3640
      %3713 = vst [vmem:[%s208 + $0x98] sm:$0xff] %v3643
      %3714 = vst [vmem:[%s208 + $0xa0] sm:$0xff] %v3648
      %3715 = vst [vmem:[%s208 + $0xa8] sm:$0xff] %v3651
      %3716 = vst [vmem:[%s208 + $0xb0] sm:$0xff] %v3656
      %3717 = vst [vmem:[%s208 + $0xb8] sm:$0xff] %v3659
      %3718 = vst [vmem:[%s208 + $0xc0] sm:$0xff] %v3664
      %3719 = vst [vmem:[%s208 + $0xc8] sm:$0xff] %v3667
      %3720 = vst [vmem:[%s208 + $0xd0] sm:$0xff] %v3672
      %3721 = vst [vmem:[%s208 + $0xd8] sm:$0xff] %v3675
      %3722 = vst [vmem:[%s208 + $0xe0] sm:$0xff] %v3680
      %3723 = vst [vmem:[%s208 + $0xe8] sm:$0xff] %v3683
      %3724 = vst [vmem:[%s208 + $0xf0] sm:$0xff] %v3688
      %3725 = vst [vmem:[%s208 + $0xf8] sm:$0xff] %v3691
      %v3726 = vadd.f32 %v3568, %v3571
      %v3727 = vadd.f32 %v3726, %v3576
      %v3728 = vadd.f32 %v3727, %v3579
      %v3729 = vadd.f32 %v3728, %v3584
      %v3730 = vadd.f32 %v3729, %v3587
      %v3731 = vadd.f32 %v3730, %v3592
      %v3732 = vadd.f32 %v3731, %v3595
      %v3733 = vadd.f32 %v3732, %v3600
      %v3734 = vadd.f32 %v3733, %v3603
      %v3735 = vadd.f32 %v3734, %v3608
      %v3736 = vadd.f32 %v3735, %v3611
      %v3737 = vadd.f32 %v3736, %v3616
      %v3738 = vadd.f32 %v3737, %v3619
      %v3739 = vadd.f32 %v3738, %v3624
      %v3740 = vadd.f32 %v3739, %v3627
      %v3741 = vadd.f32 %v3740, %v3632
      %v3742 = vadd.f32 %v3741, %v3635
      %v3743 = vadd.f32 %v3742, %v3640
      %v3744 = vadd.f32 %v3743, %v3643
      %v3745 = vadd.f32 %v3744, %v3648
      %v3746 = vadd.f32 %v3745, %v3651
      %v3747 = vadd.f32 %v3746, %v3656
      %v3748 = vadd.f32 %v3747, %v3659
      %v3749 = vadd.f32 %v3748, %v3664
      %v3750 = vadd.f32 %v3749, %v3667
      %v3751 = vadd.f32 %v3750, %v3672
      %v3752 = vadd.f32 %v3751, %v3675
      %v3753 = vadd.f32 %v3752, %v3680
      %v3754 = vadd.f32 %v3753, %v3683
      %v3755 = vadd.f32 %v3754, %v3688
      %v3756 = vadd.f32 %v3755, %v3691
      %v3757 = vrot.slane %v3756, 4
      %v3758 = vadd.f32 %v3756, %v3757
      %v3759 = vrot.slane %v3758, 2
      %v3760 = vadd.f32 %v3758, %v3759
      %v3761 = vrot.slane %v3760, 1
      %v3762 = vadd.f32 %v3760, %v3761
      %3763 = vst [vmem:[%s211] sm:$0x1] %v3762
      %v3764 = vmul.f32 %v3568, %v3568
      %v3765 = vmul.f32 %v3571, %v3571
      %v3766 = vmul.f32 %v3576, %v3576
      %v3767 = vmul.f32 %v3579, %v3579
      %v3768 = vmul.f32 %v3584, %v3584
      %v3769 = vmul.f32 %v3587, %v3587
      %v3770 = vmul.f32 %v3592, %v3592
      %v3771 = vmul.f32 %v3595, %v3595
      %v3772 = vmul.f32 %v3600, %v3600
      %v3773 = vmul.f32 %v3603, %v3603
      %v3774 = vmul.f32 %v3608, %v3608
      %v3775 = vmul.f32 %v3611, %v3611
      %v3776 = vmul.f32 %v3616, %v3616
      %v3777 = vmul.f32 %v3619, %v3619
      %v3778 = vmul.f32 %v3624, %v3624
      %v3779 = vmul.f32 %v3627, %v3627
      %v3780 = vmul.f32 %v3632, %v3632
      %v3781 = vmul.f32 %v3635, %v3635
      %v3782 = vmul.f32 %v3640, %v3640
      %v3783 = vmul.f32 %v3643, %v3643
      %v3784 = vmul.f32 %v3648, %v3648
      %v3785 = vmul.f32 %v3651, %v3651
      %v3786 = vmul.f32 %v3656, %v3656
      %v3787 = vmul.f32 %v3659, %v3659
      %v3788 = vmul.f32 %v3664, %v3664
      %v3789 = vmul.f32 %v3667, %v3667
      %v3790 = vmul.f32 %v3672, %v3672
      %v3791 = vmul.f32 %v3675, %v3675
      %v3792 = vmul.f32 %v3680, %v3680
      %v3793 = vmul.f32 %v3683, %v3683
      %v3794 = vmul.f32 %v3688, %v3688
      %v3795 = vmul.f32 %v3691, %v3691
      %v3796 = vadd.f32 %v3764, %v3765
      %v3797 = vadd.f32 %v3796, %v3766
      %v3798 = vadd.f32 %v3797, %v3767
      %v3799 = vadd.f32 %v3798, %v3768
      %v3800 = vadd.f32 %v3799, %v3769
      %v3801 = vadd.f32 %v3800, %v3770
      %v3802 = vadd.f32 %v3801, %v3771
      %v3803 = vadd.f32 %v3802, %v3772
      %v3804 = vadd.f32 %v3803, %v3773
      %v3805 = vadd.f32 %v3804, %v3774
      %v3806 = vadd.f32 %v3805, %v3775
      %v3807 = vadd.f32 %v3806, %v3776
      %v3808 = vadd.f32 %v3807, %v3777
      %v3809 = vadd.f32 %v3808, %v3778
      %v3810 = vadd.f32 %v3809, %v3779
      %v3811 = vadd.f32 %v3810, %v3780
      %v3812 = vadd.f32 %v3811, %v3781
      %v3813 = vadd.f32 %v3812, %v3782
      %v3814 = vadd.f32 %v3813, %v3783
      %v3815 = vadd.f32 %v3814, %v3784
      %v3816 = vadd.f32 %v3815, %v3785
      %v3817 = vadd.f32 %v3816, %v3786
      %v3818 = vadd.f32 %v3817, %v3787
      %v3819 = vadd.f32 %v3818, %v3788
      %v3820 = vadd.f32 %v3819, %v3789
      %v3821 = vadd.f32 %v3820, %v3790
      %v3822 = vadd.f32 %v3821, %v3791
      %v3823 = vadd.f32 %v3822, %v3792
      %v3824 = vadd.f32 %v3823, %v3793
      %v3825 = vadd.f32 %v3824, %v3794
      %v3826 = vadd.f32 %v3825, %v3795
      %v3827 = vrot.slane %v3826, 4
      %v3828 = vadd.f32 %v3826, %v3827
      %v3829 = vrot.slane %v3828, 2
      %v3830 = vadd.f32 %v3828, %v3829
      %v3831 = vrot.slane %v3830, 1
      %v3832 = vadd.f32 %v3830, %v3831
      %3833 = vst [vmem:[%s214] sm:$0x1] %v3832
      %p3834 = scmp.lt.s32.totalorder %s16, 1
      %s3835 = scalar_select %p3834, %s16, 1
      %s3836 = smul.addr %s3835, 32
      %s3837 = smul.addr %s3836, 8
      %s3838 = scalar_lea.vmem %s2, %s3837
      %p3839 = scmp.lt.s32.totalorder %s16, 1
      %s3840 = scalar_select %p3839, %s16, 1
      %s3841 = scalar_lea.vmem %s3, %s3840
      %p3842 = scmp.lt.s32.totalorder %s16, 1
      %s3843 = scalar_select %p3842, %s16, 1
      %s3844 = scalar_lea.vmem %s4, %s3843
      // Predicated region
      $region29: #{_basic_block_forward.3} parent=27 // pred_check
        %p3845 = pneg %p81
      $region30: #{_basic_block_forward.3} parent=27 // pred_check_branch
        %3847 = sbr.rel (%p3845) target = $region32
      $region31: #{_basic_block_forward.3} parent=27 // pred_region
        _
      $region32: #{_basic_block_forward.3} parent=27 // pred_fallthru
        _
      // Predicated region
      $region33: #{_basic_block_forward.3} parent=27 // pred_check
        %p3848 = pneg %p107
      $region34: #{_basic_block_forward.3} parent=27 // pred_check_branch
        %3850 = sbr.rel (%p3848) target = $region36
      $region35: #{_basic_block_forward.3} parent=27 // pred_region
        _
      $region36: #{_basic_block_forward.3} parent=27 // pred_fallthru
        _
      // Predicated region
      $region37: #{_basic_block_forward.3} parent=27 // pred_check
        %p3851 = pneg %p133
      $region38: #{_basic_block_forward.3} parent=27 // pred_check_branch
        %3853 = sbr.rel (%p3851) target = $region40
      $region39: #{_basic_block_forward.3} parent=27 // pred_region
        _
      $region40: #{_basic_block_forward.3} parent=27 // pred_fallthru
        _
    $region28: #{_basic_block_forward.3} parent=5 // pred_fallthru
      _
    %p3854 = scmp.le.s32.totalorder 2, %s11
    // Predicated region
    $region41: #{_basic_block_forward.3} parent=5 // pred_check
      %p3855 = pneg %p3854
    $region42: #{_basic_block_forward.3} parent=5 // pred_check_branch
      %3857 = sbr.rel (%p3855) target = $region44
    $region43: #{_basic_block_forward.3} parent=5 // pred_region
      %s3858 = ssub.s32 %s11, 2
      // Predicated region
      $region45: #{_basic_block_forward.3} parent=43 // pred_check
        %p3859 = pneg %p87
      $region46: #{_basic_block_forward.3} parent=43 // pred_check_branch
        %3861 = sbr.rel (%p3859) target = $region48
      $region47: #{_basic_block_forward.3} parent=43 // pred_region
        %p3862 = scmp.lt.s32.totalorder %s17, 1
        %s3863 = scalar_select %p3862, %s17, 1
        %s3864 = smul.addr %s3863, 32
        %s3865 = smul.addr %s3864, 8
        %s3866 = scalar_lea.vmem %s2, %s3865
      $region48: #{_basic_block_forward.3} parent=43 // pred_fallthru
        _
      // Predicated region
      $region49: #{_basic_block_forward.3} parent=43 // pred_check
        %p3867 = pneg %p113
      $region50: #{_basic_block_forward.3} parent=43 // pred_check_branch
        %3869 = sbr.rel (%p3867) target = $region52
      $region51: #{_basic_block_forward.3} parent=43 // pred_region
        %p3870 = scmp.lt.s32.totalorder %s17, 1
        %s3871 = scalar_select %p3870, %s17, 1
        %s3872 = scalar_lea.vmem %s3, %s3871
      $region52: #{_basic_block_forward.3} parent=43 // pred_fallthru
        _
      // Predicated region
      $region53: #{_basic_block_forward.3} parent=43 // pred_check
        %p3873 = pneg %p139
      $region54: #{_basic_block_forward.3} parent=43 // pred_check_branch
        %3875 = sbr.rel (%p3873) target = $region56
      $region55: #{_basic_block_forward.3} parent=43 // pred_region
        %p3876 = scmp.lt.s32.totalorder %s17, 1
        %s3877 = scalar_select %p3876, %s17, 1
        %s3878 = scalar_lea.vmem %s4, %s3877
      $region56: #{_basic_block_forward.3} parent=43 // pred_fallthru
        _
    $region44: #{_basic_block_forward.3} parent=5 // pred_fallthru
      _
  $region6: #{_basic_block_forward.3} parent=0 // loop_footer
    %s15 = sadd.s32 1, %s11
  $region7: #{_basic_block_forward.3} parent=0 // loop_footer_branch
    %10 = sbr.rel target = $region3
  $region8: #{_basic_block_forward.3} parent=0 // loop_exit
    _

</llo_original>
